<compile_context>
chip_gen: v7x
topology: tpu7x:2x2x1
jax: 0.10.0
libtpu: 0.0.40
codegen_flags: <defaults>
</compile_context>

<pallas_src>
import functools

import jax
import jax.numpy as jnp
from jax.experimental import pallas as pl
from jax.experimental.pallas import tpu as pltpu


# ----------------------------------------------------------------------------
# One LSTM cell step (gate columns ordered [i, f, o, g], each hp lanes wide)
# ----------------------------------------------------------------------------
def _lstm_step(h, c, pre, w_hh, hp):
    gates = jnp.dot(h, w_hh, preferred_element_type=jnp.float32) + pre   # (B, 4*hp)
    sg = jax.nn.sigmoid(gates[:, :3 * hp])          # fused [i | f | o] sigmoid
    gg = jnp.tanh(gates[:, 3 * hp:])                # g gate
    c_new = sg[:, hp:2 * hp] * c + sg[:, :hp] * gg
    h_new = sg[:, 2 * hp:] * jnp.tanh(c_new)
    return h_new, c_new


# ----------------------------------------------------------------------------
# Pallas kernel: both layers, both directions, all timesteps, plus the FC head
# ----------------------------------------------------------------------------
def _bicombolstm_kernel(hp, seq_len, bpad,
                        x_ref, w0, b0, whh0f, whh0b, b1,
                        w1t_hbm, w1b_hbm, whh1f_hbm, whh1b_hbm, fcw_hbm, fcb,
                        out_ref,
                        w1t, w1b, whh1f, whh1b, fcw,
                        p0f_ref, p0b_ref, p1f_ref, p1b_ref, hf0_ref, hb0_ref, dsem):
    T, B, g4 = seq_len, bpad, 4 * hp

    # ---- kick off DMA of everything not needed until after the layer-0 recurrence ----
    cp_w1t = pltpu.make_async_copy(w1t_hbm, w1t, dsem.at[0]); cp_w1t.start()
    cp_w1b = pltpu.make_async_copy(w1b_hbm, w1b, dsem.at[1]); cp_w1b.start()
    cp_h1f = pltpu.make_async_copy(whh1f_hbm, whh1f, dsem.at[2]); cp_h1f.start()
    cp_h1b = pltpu.make_async_copy(whh1b_hbm, whh1b, dsem.at[3]); cp_h1b.start()
    cp_fcw = pltpu.make_async_copy(fcw_hbm, fcw, dsem.at[4]); cp_fcw.start()

    # ---- layer-0 input projection for both directions: one hoisted matmul ----
    # x_ref rows are (t, b)-ordered: row t*Bpad + b.
    proj0 = jnp.dot(x_ref[...], w0[...], preferred_element_type=jnp.float32) + b0[...]
    p0f_ref[...] = proj0[:, :g4].reshape(T, B, g4)
    p0b_ref[...] = proj0[:, g4:].reshape(T, B, g4)

    whh0f_m = whh0f[...]
    whh0b_m = whh0b[...]

    # ---- layer-0 recurrence (fwd consumes time s, bwd consumes time T-1-s) ----
    zeros = jnp.zeros((B, hp), jnp.float32)
    h_f, c_f, h_b, c_b = zeros, zeros, zeros, zeros
    for s in range(T):                               # static unroll (T is small)
        t_b = T - 1 - s
        h_f, c_f = _lstm_step(h_f, c_f, p0f_ref[s], whh0f_m, hp)
        h_b, c_b = _lstm_step(h_b, c_b, p0b_ref[t_b], whh0b_m, hp)
        hf0_ref[s] = h_f                             # aligned (8, hp) tile stores
        hb0_ref[t_b] = h_b

    # ---- layer-1 input projection (layer-1/FC weight DMA hid behind the loop above) ---
    cp_w1t.wait(); cp_w1b.wait()
    hf_all = hf0_ref[...].reshape(T * B, hp)
    hb_all = hb0_ref[...].reshape(T * B, hp)
    proj1 = (jnp.dot(hf_all, w1t[...], preferred_element_type=jnp.float32)
             + jnp.dot(hb_all, w1b[...], preferred_element_type=jnp.float32)
             + b1[...])
    p1f_ref[...] = proj1[:, :g4].reshape(T, B, g4)
    p1b_ref[...] = proj1[:, g4:].reshape(T, B, g4)

    # ---- layer-1 recurrence ----
    cp_h1f.wait(); cp_h1b.wait()
    whh1f_m = whh1f[...]
    whh1b_m = whh1b[...]
    h_f, c_f, h_b, c_b = zeros, zeros, zeros, zeros
    for s in range(T):
        t_b = T - 1 - s
        h_f, c_f = _lstm_step(h_f, c_f, p1f_ref[s], whh1f_m, hp)
        h_b, c_b = _lstm_step(h_b, c_b, p1b_ref[t_b], whh1b_m, hp)

    # ---- FC head: feature = [fwd hidden @ T-1 | bwd hidden @ 0]; lane-dense output ----
    # == torch.cat((output[:, -1, :H], output[:, 0, H:]), dim=1); padded cols are 0.
    cp_fcw.wait()
    feat = jnp.concatenate([h_f, h_b], axis=1)       # (B, 2*hp), 128-lane aligned
    out_ref[...] = jnp.dot(feat, fcw[...], preferred_element_type=jnp.float32) + fcb[...]


# ----------------------------------------------------------------------------
# Wrapper-side parameter packing (PyTorch layout -> padded / permuted / split)
# ----------------------------------------------------------------------------
_GATE_PERM = ((0, 0), (1, 1), (2, 3), (3, 2))   # dst block, src block: [i,f,o,g] <- [i,f,g,o]


def _pack_gate_cols(w, h_dim, hp):
    """(4H, K) PyTorch weight (gate rows [i,f,g,o]) -> (K, 4*hp); column blocks
    [i,f,o,g], each zero-padded from H to hp lanes."""
    k = w.shape[1]
    out = jnp.zeros((4 * hp, k), jnp.float32)
    for dst, src in _GATE_PERM:
        out = out.at[dst * hp:dst * hp + h_dim].set(w[src * h_dim:(src + 1) * h_dim])
    return out.T


def _pack_gate_bias(b, h_dim, hp):
    out = jnp.zeros((4 * hp,), jnp.float32)
    for dst, src in _GATE_PERM:
        out = out.at[dst * hp:dst * hp + h_dim].set(b[src * h_dim:(src + 1) * h_dim])
    return out.reshape(1, 4 * hp)


def _pad_rows(m, n_rows):
    return jnp.zeros((n_rows, m.shape[1]), m.dtype).at[:m.shape[0]].set(m)


def _round_up(n, m):
    return ((n + m - 1) // m) * m


def pack_params(p, hidden, hp, d_pad, out_size, out_pad):
    H = hidden

    def whh(name):                                   # (hp, 4*hp), no block-diag zeros
        return _pad_rows(_pack_gate_cols(p[name], H, hp), hp)

    def bias(layer):                                 # (1, 8*hp): [fwd gates | bwd gates]
        bf = _pack_gate_bias(p[f"b_ih_f{layer}"] + p[f"b_hh_f{layer}"], H, hp)
        bb = _pack_gate_bias(p[f"b_ih_b{layer}"] + p[f"b_hh_b{layer}"], H, hp)
        return jnp.concatenate([bf, bb], axis=1)

    # layer 0: x @ [W_ih_f0 | W_ih_b0], input lanes padded to d_pad
    w0 = _pad_rows(jnp.concatenate([_pack_gate_cols(p["w_ih_f0"], H, hp),
                                    _pack_gate_cols(p["w_ih_b0"], H, hp)], axis=1),
                   d_pad)                            # (d_pad, 8*hp)

    # layer 1: split W_ih by which half of layer-0's output it consumes
    wf1 = _pack_gate_cols(p["w_ih_f1"], H, hp)       # (2H, 4*hp)
    wb1 = _pack_gate_cols(p["w_ih_b1"], H, hp)
    w1t = jnp.concatenate([_pad_rows(wf1[:H], hp), _pad_rows(wb1[:H], hp)], axis=1)
    w1b = jnp.concatenate([_pad_rows(wf1[H:], hp), _pad_rows(wb1[H:], hp)], axis=1)

    # FC head: rows 0:H act on the fwd hidden, rows hp:hp+H on the bwd hidden;
    # output lanes padded to out_pad (lane-dense store; wrapper slices).
    fcw_t = p["fc_w"].T                              # (2H, out)
    fcw = (jnp.zeros((2 * hp, out_pad), jnp.float32)
           .at[:H, :out_size].set(fcw_t[:H])
           .at[hp:hp + H, :out_size].set(fcw_t[H:]))
    fcb = jnp.zeros((1, out_pad), jnp.float32).at[0, :out_size].set(p["fc_b"])

    return (w0, bias(0), whh("w_hh_f0"), whh("w_hh_b0"), bias(1),
            w1t, w1b, whh("w_hh_f1"), whh("w_hh_b1"), fcw, fcb)


# ----------------------------------------------------------------------------
# Wrapper: pack params + single pallas_call (no grid; everything VMEM-resident)
# ----------------------------------------------------------------------------
def bidirectional_combo_lstm(x, params, hidden_size):
    B, T, D = x.shape
    hp = _round_up(hidden_size, 128)                 # pad each gate block to 128 lanes
    bpad = _round_up(B, 8)                           # pad batch to a full sublane tile
    d_pad = _round_up(D, 128)
    out_size = params["fc_b"].shape[0]
    out_pad = _round_up(out_size, 128)

    packed = pack_params(params, hidden_size, hp, d_pad, out_size, out_pad)

    # (t, b)-major rows, batch/lane padded with zeros (pad rows never mix into real rows).
    x_tb = (jnp.zeros((T, bpad, d_pad), jnp.float32)
            .at[:, :B, :D].set(jnp.transpose(x, (1, 0, 2)))
            .reshape(T * bpad, d_pad))

    vmem = pl.BlockSpec(memory_space=pltpu.MemorySpace.VMEM)
    hbm = pl.BlockSpec(memory_space=pl.ANY)          # manually DMA'd inside the kernel

    kernel = functools.partial(_bicombolstm_kernel, hp, T, bpad)
    out = pl.pallas_call(
        kernel,
        out_shape=jax.ShapeDtypeStruct((bpad, out_pad), jnp.float32),
        in_specs=[vmem, vmem, vmem, vmem, vmem, vmem,   # x, w0, b0, whh0f, whh0b, b1
                  hbm, hbm, hbm, hbm, hbm,              # w1t, w1b, whh1f, whh1b, fcw
                  vmem],                                # fcb
        out_specs=vmem,
        scratch_shapes=[
            pltpu.VMEM((hp, 8 * hp), jnp.float32),        # w1t  (manual DMA dst)
            pltpu.VMEM((hp, 8 * hp), jnp.float32),        # w1b
            pltpu.VMEM((hp, 4 * hp), jnp.float32),        # whh1f
            pltpu.VMEM((hp, 4 * hp), jnp.float32),        # whh1b
            pltpu.VMEM((2 * hp, out_pad), jnp.float32),   # fcw
            pltpu.VMEM((T, bpad, 4 * hp), jnp.float32),   # p0 fwd pre-activations
            pltpu.VMEM((T, bpad, 4 * hp), jnp.float32),   # p0 bwd pre-activations
            pltpu.VMEM((T, bpad, 4 * hp), jnp.float32),   # p1 fwd pre-activations
            pltpu.VMEM((T, bpad, 4 * hp), jnp.float32),   # p1 bwd pre-activations
            pltpu.VMEM((T, bpad, hp), jnp.float32),       # layer-0 fwd hidden
            pltpu.VMEM((T, bpad, hp), jnp.float32),       # layer-0 bwd hidden
            pltpu.SemaphoreType.DMA((5,)),
        ],
    )(x_tb, *packed)
    return out[:B, :out_size]


# ----------------------------------------------------------------------------
# Deterministic parameter init (PyTorch nn.LSTM / nn.Linear shapes & init scheme)
# ----------------------------------------------------------------------------
def init_params(key, input_size, hidden, output_size):
    keys = iter(jax.random.split(key, 24))

    def u(shape, bound):
        return jax.random.uniform(next(keys), shape, jnp.float32, -bound, bound)

    k = 1.0 / float(hidden) ** 0.5
    p = {}
    for layer, d_in in enumerate([input_size, 2 * hidden]):
        for tag in ("f", "b"):                       # forward / backward direction
            p[f"w_ih_{tag}{layer}"] = u((4 * hidden, d_in), k)
            p[f"w_hh_{tag}{layer}"] = u((4 * hidden, hidden), k)
            p[f"b_ih_{tag}{layer}"] = u((4 * hidden,), k)
            p[f"b_hh_{tag}{layer}"] = u((4 * hidden,), k)
    kf = 1.0 / float(2 * hidden) ** 0.5
    p["fc_w"] = u((output_size, 2 * hidden), kf)
    p["fc_b"] = u((output_size,), kf)
    return p


# ----------------------------------------------------------------------------
# Pure-JAX reference (PyTorch semantics, unpadded) for a correctness check
# ----------------------------------------------------------------------------
def _ref_cell(x_t, h, c, w_ih, w_hh, b, H):
    gates = x_t @ w_ih.T + h @ w_hh.T + b
    i = jax.nn.sigmoid(gates[:, :H])
    f = jax.nn.sigmoid(gates[:, H:2 * H])
    g = jnp.tanh(gates[:, 2 * H:3 * H])
    o = jax.nn.sigmoid(gates[:, 3 * H:])
    c = f * c + i * g
    return o * jnp.tanh(c), c


def reference(x, p, H):
    B, T, _ = x.shape

    def run_layer(xs, layer):
        bf = p[f"b_ih_f{layer}"] + p[f"b_hh_f{layer}"]
        bb = p[f"b_ih_b{layer}"] + p[f"b_hh_b{layer}"]
        h = jnp.zeros((B, H), jnp.float32)
        c = jnp.zeros((B, H), jnp.float32)
        fwd = []
        for t in range(T):
            h, c = _ref_cell(xs[t], h, c, p[f"w_ih_f{layer}"], p[f"w_hh_f{layer}"], bf, H)
            fwd.append(h)
        h = jnp.zeros((B, H), jnp.float32)
        c = jnp.zeros((B, H), jnp.float32)
        bwd = [None] * T
        for t in reversed(range(T)):
            h, c = _ref_cell(xs[t], h, c, p[f"w_ih_b{layer}"], p[f"w_hh_b{layer}"], bb, H)
            bwd[t] = h
        outs = [jnp.concatenate([fwd[t], bwd[t]], axis=1) for t in range(T)]
        return outs, fwd[-1], bwd[0]

    xs = [x[:, t, :] for t in range(T)]
    l0, _, _ = run_layer(xs, 0)
    _, hf, hb = run_layer(l0, 1)
    feat = jnp.concatenate([hf, hb], axis=1)
    return feat @ p["fc_w"].T + p["fc_b"]


if __name__ == "__main__":
    B, T = 2, 8
    input_size, hidden_size, output_size = 45, 50, 6

    key = jax.random.PRNGKey(0)
    k_x, k_p = jax.random.split(key)
    x = jax.random.normal(k_x, (B, T, input_size), jnp.float32)
    params = init_params(k_p, input_size, hidden_size, output_size)

    out = bidirectional_combo_lstm(x, params, hidden_size)
    out = jax.block_until_ready(out)

    ref = reference(x, params, hidden_size)
    assert out.shape == (B, output_size), out.shape
    assert jnp.allclose(out, ref, rtol=2e-4, atol=2e-4), (
        f"max abs err {float(jnp.max(jnp.abs(out - ref)))}")
    print("KERNEL_OK")
</pallas_src>

<mosaic_0001>
module attributes {stable_mosaic.version = 11 : i64} {
  func.func @_bicombolstm_kernel(%arg0: memref<64x128xf32, #tpu.memory_space<vmem>>, %arg1: memref<128x1024xf32, #tpu.memory_space<vmem>>, %arg2: memref<1x1024xf32, #tpu.memory_space<vmem>>, %arg3: memref<128x512xf32, #tpu.memory_space<vmem>>, %arg4: memref<128x512xf32, #tpu.memory_space<vmem>>, %arg5: memref<1x1024xf32, #tpu.memory_space<vmem>>, %arg6: memref<128x1024xf32, #tpu.memory_space<any>>, %arg7: memref<128x1024xf32, #tpu.memory_space<any>>, %arg8: memref<128x512xf32, #tpu.memory_space<any>>, %arg9: memref<128x512xf32, #tpu.memory_space<any>>, %arg10: memref<256x128xf32, #tpu.memory_space<any>>, %arg11: memref<1x128xf32, #tpu.memory_space<vmem>>, %arg12: memref<8x128xf32, #tpu.memory_space<vmem>>, %arg13: memref<128x1024xf32, #tpu.memory_space<vmem>>, %arg14: memref<128x1024xf32, #tpu.memory_space<vmem>>, %arg15: memref<128x512xf32, #tpu.memory_space<vmem>>, %arg16: memref<128x512xf32, #tpu.memory_space<vmem>>, %arg17: memref<256x128xf32, #tpu.memory_space<vmem>>, %arg18: memref<8x8x512xf32, #tpu.memory_space<vmem>>, %arg19: memref<8x8x512xf32, #tpu.memory_space<vmem>>, %arg20: memref<8x8x512xf32, #tpu.memory_space<vmem>>, %arg21: memref<8x8x512xf32, #tpu.memory_space<vmem>>, %arg22: memref<8x8x128xf32, #tpu.memory_space<vmem>>, %arg23: memref<8x8x128xf32, #tpu.memory_space<vmem>>, %arg24: memref<5x!tpu.dma_semaphore, #tpu.memory_space<semaphore_mem>>) attributes {dimension_semantics = [], scalar_prefetch = 0 : i64, scratch_operands = 12 : i64, tpu.core_type = #tpu.core_type<tc>} {
    %c0_i32 = arith.constant 0 : i32
    %0 = tpu.memref_slice %arg24[%c0_i32] : memref<5x!tpu.dma_semaphore, #tpu.memory_space<semaphore_mem>> -> memref<1x!tpu.dma_semaphore, #tpu.memory_space<semaphore_mem>>
    %1 = tpu.memref_squeeze %0 : memref<1x!tpu.dma_semaphore, #tpu.memory_space<semaphore_mem>> -> memref<!tpu.dma_semaphore, #tpu.memory_space<semaphore_mem>>
    tpu.enqueue_dma source(%arg6 : memref<128x1024xf32, #tpu.memory_space<any>>) target(%arg13 : memref<128x1024xf32, #tpu.memory_space<vmem>>) target_semaphore(%1 : memref<!tpu.dma_semaphore, #tpu.memory_space<semaphore_mem>>)
    %c1_i32 = arith.constant 1 : i32
    %2 = tpu.memref_slice %arg24[%c1_i32] : memref<5x!tpu.dma_semaphore, #tpu.memory_space<semaphore_mem>> -> memref<1x!tpu.dma_semaphore, #tpu.memory_space<semaphore_mem>>
    %3 = tpu.memref_squeeze %2 : memref<1x!tpu.dma_semaphore, #tpu.memory_space<semaphore_mem>> -> memref<!tpu.dma_semaphore, #tpu.memory_space<semaphore_mem>>
    tpu.enqueue_dma source(%arg7 : memref<128x1024xf32, #tpu.memory_space<any>>) target(%arg14 : memref<128x1024xf32, #tpu.memory_space<vmem>>) target_semaphore(%3 : memref<!tpu.dma_semaphore, #tpu.memory_space<semaphore_mem>>)
    %c2_i32 = arith.constant 2 : i32
    %4 = tpu.memref_slice %arg24[%c2_i32] : memref<5x!tpu.dma_semaphore, #tpu.memory_space<semaphore_mem>> -> memref<1x!tpu.dma_semaphore, #tpu.memory_space<semaphore_mem>>
    %5 = tpu.memref_squeeze %4 : memref<1x!tpu.dma_semaphore, #tpu.memory_space<semaphore_mem>> -> memref<!tpu.dma_semaphore, #tpu.memory_space<semaphore_mem>>
    tpu.enqueue_dma source(%arg8 : memref<128x512xf32, #tpu.memory_space<any>>) target(%arg15 : memref<128x512xf32, #tpu.memory_space<vmem>>) target_semaphore(%5 : memref<!tpu.dma_semaphore, #tpu.memory_space<semaphore_mem>>)
    %c3_i32 = arith.constant 3 : i32
    %6 = tpu.memref_slice %arg24[%c3_i32] : memref<5x!tpu.dma_semaphore, #tpu.memory_space<semaphore_mem>> -> memref<1x!tpu.dma_semaphore, #tpu.memory_space<semaphore_mem>>
    %7 = tpu.memref_squeeze %6 : memref<1x!tpu.dma_semaphore, #tpu.memory_space<semaphore_mem>> -> memref<!tpu.dma_semaphore, #tpu.memory_space<semaphore_mem>>
    tpu.enqueue_dma source(%arg9 : memref<128x512xf32, #tpu.memory_space<any>>) target(%arg16 : memref<128x512xf32, #tpu.memory_space<vmem>>) target_semaphore(%7 : memref<!tpu.dma_semaphore, #tpu.memory_space<semaphore_mem>>)
    %c4_i32 = arith.constant 4 : i32
    %8 = tpu.memref_slice %arg24[%c4_i32] : memref<5x!tpu.dma_semaphore, #tpu.memory_space<semaphore_mem>> -> memref<1x!tpu.dma_semaphore, #tpu.memory_space<semaphore_mem>>
    %9 = tpu.memref_squeeze %8 : memref<1x!tpu.dma_semaphore, #tpu.memory_space<semaphore_mem>> -> memref<!tpu.dma_semaphore, #tpu.memory_space<semaphore_mem>>
    tpu.enqueue_dma source(%arg10 : memref<256x128xf32, #tpu.memory_space<any>>) target(%arg17 : memref<256x128xf32, #tpu.memory_space<vmem>>) target_semaphore(%9 : memref<!tpu.dma_semaphore, #tpu.memory_space<semaphore_mem>>)
    %c0 = arith.constant 0 : index
    %c0_0 = arith.constant 0 : index
    %10 = vector.load %arg0[%c0, %c0_0] : memref<64x128xf32, #tpu.memory_space<vmem>>, vector<64x128xf32>
    %c0_1 = arith.constant 0 : index
    %c0_2 = arith.constant 0 : index
    %11 = vector.load %arg1[%c0_1, %c0_2] : memref<128x1024xf32, #tpu.memory_space<vmem>>, vector<128x1024xf32>
    %cst = arith.constant dense<0.000000e+00> : vector<64x1024xf32>
    %12 = tpu.matmul %10, %11, %cst {dimension_numbers = #tpu.dot_dimension_numbers<[1], [0], [0], [1], [0, 0, 1, 1], [], []>} : vector<64x128xf32>, vector<128x1024xf32>, vector<64x1024xf32> -> vector<64x1024xf32>
    %c0_3 = arith.constant 0 : index
    %c0_4 = arith.constant 0 : index
    %13 = vector.load %arg2[%c0_3, %c0_4] : memref<1x1024xf32, #tpu.memory_space<vmem>>, vector<1x1024xf32>
    %14 = vector.broadcast %13 : vector<1x1024xf32> to vector<64x1024xf32>
    %15 = arith.addf %12, %14 : vector<64x1024xf32>
    %16 = vector.extract_strided_slice %15 {offsets = [0, 0], sizes = [64, 512], strides = [1, 1]} : vector<64x1024xf32> to vector<64x512xf32>
    %17 = vector.shape_cast %16 : vector<64x512xf32> to vector<8x8x512xf32>
    %c0_5 = arith.constant 0 : index
    %c0_6 = arith.constant 0 : index
    %c0_7 = arith.constant 0 : index
    %18 = vector.load %arg18[%c0_5, %c0_6, %c0_7] : memref<8x8x512xf32, #tpu.memory_space<vmem>>, vector<8x8x512xf32>
    tpu.vector_store %arg18[%c0_5, %c0_6, %c0_7], %17 {strides = array<i32>} : memref<8x8x512xf32, #tpu.memory_space<vmem>>, vector<8x8x512xf32>,
    %19 = vector.extract_strided_slice %15 {offsets = [0, 512], sizes = [64, 512], strides = [1, 1]} : vector<64x1024xf32> to vector<64x512xf32>
    %20 = vector.shape_cast %19 : vector<64x512xf32> to vector<8x8x512xf32>
    %c0_8 = arith.constant 0 : index
    %c0_9 = arith.constant 0 : index
    %c0_10 = arith.constant 0 : index
    %21 = vector.load %arg19[%c0_8, %c0_9, %c0_10] : memref<8x8x512xf32, #tpu.memory_space<vmem>>, vector<8x8x512xf32>
    tpu.vector_store %arg19[%c0_8, %c0_9, %c0_10], %20 {strides = array<i32>} : memref<8x8x512xf32, #tpu.memory_space<vmem>>, vector<8x8x512xf32>,
    %c0_11 = arith.constant 0 : index
    %c0_12 = arith.constant 0 : index
    %22 = vector.load %arg3[%c0_11, %c0_12] : memref<128x512xf32, #tpu.memory_space<vmem>>, vector<128x512xf32>
    %c0_13 = arith.constant 0 : index
    %c0_14 = arith.constant 0 : index
    %23 = vector.load %arg4[%c0_13, %c0_14] : memref<128x512xf32, #tpu.memory_space<vmem>>, vector<128x512xf32>
    %cst_15 = arith.constant 0.000000e+00 : f32
    %24 = vector.broadcast %cst_15 : f32 to vector<8x128xf32>
    %c0_16 = arith.constant 0 : index
    %c0_17 = arith.constant 0 : index
    %c0_18 = arith.constant 0 : index
    %25 = vector.load %arg18[%c0_16, %c0_17, %c0_18] : memref<8x8x512xf32, #tpu.memory_space<vmem>>, vector<1x8x512xf32>
    %26 = vector.shape_cast %25 : vector<1x8x512xf32> to vector<8x512xf32>
    %cst_19 = arith.constant dense<0.000000e+00> : vector<8x512xf32>
    %27 = tpu.matmul %24, %22, %cst_19 {dimension_numbers = #tpu.dot_dimension_numbers<[1], [0], [0], [1], [0, 0, 1, 1], [], []>} : vector<8x128xf32>, vector<128x512xf32>, vector<8x512xf32> -> vector<8x512xf32>
    %28 = arith.addf %27, %26 : vector<8x512xf32>
    %29 = vector.extract_strided_slice %28 {offsets = [0, 0], sizes = [8, 384], strides = [1, 1]} : vector<8x512xf32> to vector<8x384xf32>
    %30 = arith.negf %29 : vector<8x384xf32>
    %31 = math.exp %30 : vector<8x384xf32>
    %cst_20 = arith.constant 1.000000e+00 : f32
    %32 = vector.broadcast %cst_20 : f32 to vector<8x384xf32>
    %33 = arith.addf %32, %31 : vector<8x384xf32>
    %34 = arith.divf %32, %33 : vector<8x384xf32>
    %35 = vector.extract_strided_slice %28 {offsets = [0, 384], sizes = [8, 128], strides = [1, 1]} : vector<8x512xf32> to vector<8x128xf32>
    %36 = math.tanh %35 : vector<8x128xf32>
    %37 = vector.extract_strided_slice %34 {offsets = [0, 128], sizes = [8, 128], strides = [1, 1]} : vector<8x384xf32> to vector<8x128xf32>
    %38 = arith.mulf %37, %24 : vector<8x128xf32>
    %39 = vector.extract_strided_slice %34 {offsets = [0, 0], sizes = [8, 128], strides = [1, 1]} : vector<8x384xf32> to vector<8x128xf32>
    %40 = arith.mulf %39, %36 : vector<8x128xf32>
    %41 = arith.addf %38, %40 : vector<8x128xf32>
    %42 = vector.extract_strided_slice %34 {offsets = [0, 256], sizes = [8, 128], strides = [1, 1]} : vector<8x384xf32> to vector<8x128xf32>
    %43 = math.tanh %41 : vector<8x128xf32>
    %44 = arith.mulf %42, %43 : vector<8x128xf32>
    %c7 = arith.constant 7 : index
    %c0_21 = arith.constant 0 : index
    %c0_22 = arith.constant 0 : index
    %45 = vector.load %arg19[%c7, %c0_21, %c0_22] : memref<8x8x512xf32, #tpu.memory_space<vmem>>, vector<1x8x512xf32>
    %46 = vector.shape_cast %45 : vector<1x8x512xf32> to vector<8x512xf32>
    %cst_23 = arith.constant dense<0.000000e+00> : vector<8x512xf32>
    %47 = tpu.matmul %24, %23, %cst_23 {dimension_numbers = #tpu.dot_dimension_numbers<[1], [0], [0], [1], [0, 0, 1, 1], [], []>} : vector<8x128xf32>, vector<128x512xf32>, vector<8x512xf32> -> vector<8x512xf32>
    %48 = arith.addf %47, %46 : vector<8x512xf32>
    %49 = vector.extract_strided_slice %48 {offsets = [0, 0], sizes = [8, 384], strides = [1, 1]} : vector<8x512xf32> to vector<8x384xf32>
    %50 = arith.negf %49 : vector<8x384xf32>
    %51 = math.exp %50 : vector<8x384xf32>
    %cst_24 = arith.constant 1.000000e+00 : f32
    %52 = vector.broadcast %cst_24 : f32 to vector<8x384xf32>
    %53 = arith.addf %52, %51 : vector<8x384xf32>
    %54 = arith.divf %52, %53 : vector<8x384xf32>
    %55 = vector.extract_strided_slice %48 {offsets = [0, 384], sizes = [8, 128], strides = [1, 1]} : vector<8x512xf32> to vector<8x128xf32>
    %56 = math.tanh %55 : vector<8x128xf32>
    %57 = vector.extract_strided_slice %54 {offsets = [0, 128], sizes = [8, 128], strides = [1, 1]} : vector<8x384xf32> to vector<8x128xf32>
    %58 = arith.mulf %57, %24 : vector<8x128xf32>
    %59 = vector.extract_strided_slice %54 {offsets = [0, 0], sizes = [8, 128], strides = [1, 1]} : vector<8x384xf32> to vector<8x128xf32>
    %60 = arith.mulf %59, %56 : vector<8x128xf32>
    %61 = arith.addf %58, %60 : vector<8x128xf32>
    %62 = vector.extract_strided_slice %54 {offsets = [0, 256], sizes = [8, 128], strides = [1, 1]} : vector<8x384xf32> to vector<8x128xf32>
    %63 = math.tanh %61 : vector<8x128xf32>
    %64 = arith.mulf %62, %63 : vector<8x128xf32>
    %c0_25 = arith.constant 0 : index
    %c0_26 = arith.constant 0 : index
    %c0_27 = arith.constant 0 : index
    %65 = vector.load %arg22[%c0_25, %c0_26, %c0_27] : memref<8x8x128xf32, #tpu.memory_space<vmem>>, vector<1x8x128xf32>
    %66 = vector.shape_cast %65 : vector<1x8x128xf32> to vector<8x128xf32>
    %67 = vector.shape_cast %44 : vector<8x128xf32> to vector<1x8x128xf32>
    tpu.vector_store %arg22[%c0_25, %c0_26, %c0_27], %67 {strides = array<i32>} : memref<8x8x128xf32, #tpu.memory_space<vmem>>, vector<1x8x128xf32>,
    %c7_28 = arith.constant 7 : index
    %c0_29 = arith.constant 0 : index
    %c0_30 = arith.constant 0 : index
    %68 = vector.load %arg23[%c7_28, %c0_29, %c0_30] : memref<8x8x128xf32, #tpu.memory_space<vmem>>, vector<1x8x128xf32>
    %69 = vector.shape_cast %68 : vector<1x8x128xf32> to vector<8x128xf32>
    %70 = vector.shape_cast %64 : vector<8x128xf32> to vector<1x8x128xf32>
    tpu.vector_store %arg23[%c7_28, %c0_29, %c0_30], %70 {strides = array<i32>} : memref<8x8x128xf32, #tpu.memory_space<vmem>>, vector<1x8x128xf32>,
    %c1 = arith.constant 1 : index
    %c0_31 = arith.constant 0 : index
    %c0_32 = arith.constant 0 : index
    %71 = vector.load %arg18[%c1, %c0_31, %c0_32] : memref<8x8x512xf32, #tpu.memory_space<vmem>>, vector<1x8x512xf32>
    %72 = vector.shape_cast %71 : vector<1x8x512xf32> to vector<8x512xf32>
    %cst_33 = arith.constant dense<0.000000e+00> : vector<8x512xf32>
    %73 = tpu.matmul %44, %22, %cst_33 {dimension_numbers = #tpu.dot_dimension_numbers<[1], [0], [0], [1], [0, 0, 1, 1], [], []>} : vector<8x128xf32>, vector<128x512xf32>, vector<8x512xf32> -> vector<8x512xf32>
    %74 = arith.addf %73, %72 : vector<8x512xf32>
    %75 = vector.extract_strided_slice %74 {offsets = [0, 0], sizes = [8, 384], strides = [1, 1]} : vector<8x512xf32> to vector<8x384xf32>
    %76 = arith.negf %75 : vector<8x384xf32>
    %77 = math.exp %76 : vector<8x384xf32>
    %cst_34 = arith.constant 1.000000e+00 : f32
    %78 = vector.broadcast %cst_34 : f32 to vector<8x384xf32>
    %79 = arith.addf %78, %77 : vector<8x384xf32>
    %80 = arith.divf %78, %79 : vector<8x384xf32>
    %81 = vector.extract_strided_slice %74 {offsets = [0, 384], sizes = [8, 128], strides = [1, 1]} : vector<8x512xf32> to vector<8x128xf32>
    %82 = math.tanh %81 : vector<8x128xf32>
    %83 = vector.extract_strided_slice %80 {offsets = [0, 128], sizes = [8, 128], strides = [1, 1]} : vector<8x384xf32> to vector<8x128xf32>
    %84 = arith.mulf %83, %41 : vector<8x128xf32>
    %85 = vector.extract_strided_slice %80 {offsets = [0, 0], sizes = [8, 128], strides = [1, 1]} : vector<8x384xf32> to vector<8x128xf32>
    %86 = arith.mulf %85, %82 : vector<8x128xf32>
    %87 = arith.addf %84, %86 : vector<8x128xf32>
    %88 = vector.extract_strided_slice %80 {offsets = [0, 256], sizes = [8, 128], strides = [1, 1]} : vector<8x384xf32> to vector<8x128xf32>
    %89 = math.tanh %87 : vector<8x128xf32>
    %90 = arith.mulf %88, %89 : vector<8x128xf32>
    %c6 = arith.constant 6 : index
    %c0_35 = arith.constant 0 : index
    %c0_36 = arith.constant 0 : index
    %91 = vector.load %arg19[%c6, %c0_35, %c0_36] : memref<8x8x512xf32, #tpu.memory_space<vmem>>, vector<1x8x512xf32>
    %92 = vector.shape_cast %91 : vector<1x8x512xf32> to vector<8x512xf32>
    %cst_37 = arith.constant dense<0.000000e+00> : vector<8x512xf32>
    %93 = tpu.matmul %64, %23, %cst_37 {dimension_numbers = #tpu.dot_dimension_numbers<[1], [0], [0], [1], [0, 0, 1, 1], [], []>} : vector<8x128xf32>, vector<128x512xf32>, vector<8x512xf32> -> vector<8x512xf32>
    %94 = arith.addf %93, %92 : vector<8x512xf32>
    %95 = vector.extract_strided_slice %94 {offsets = [0, 0], sizes = [8, 384], strides = [1, 1]} : vector<8x512xf32> to vector<8x384xf32>
    %96 = arith.negf %95 : vector<8x384xf32>
    %97 = math.exp %96 : vector<8x384xf32>
    %cst_38 = arith.constant 1.000000e+00 : f32
    %98 = vector.broadcast %cst_38 : f32 to vector<8x384xf32>
    %99 = arith.addf %98, %97 : vector<8x384xf32>
    %100 = arith.divf %98, %99 : vector<8x384xf32>
    %101 = vector.extract_strided_slice %94 {offsets = [0, 384], sizes = [8, 128], strides = [1, 1]} : vector<8x512xf32> to vector<8x128xf32>
    %102 = math.tanh %101 : vector<8x128xf32>
    %103 = vector.extract_strided_slice %100 {offsets = [0, 128], sizes = [8, 128], strides = [1, 1]} : vector<8x384xf32> to vector<8x128xf32>
    %104 = arith.mulf %103, %61 : vector<8x128xf32>
    %105 = vector.extract_strided_slice %100 {offsets = [0, 0], sizes = [8, 128], strides = [1, 1]} : vector<8x384xf32> to vector<8x128xf32>
    %106 = arith.mulf %105, %102 : vector<8x128xf32>
    %107 = arith.addf %104, %106 : vector<8x128xf32>
    %108 = vector.extract_strided_slice %100 {offsets = [0, 256], sizes = [8, 128], strides = [1, 1]} : vector<8x384xf32> to vector<8x128xf32>
    %109 = math.tanh %107 : vector<8x128xf32>
    %110 = arith.mulf %108, %109 : vector<8x128xf32>
    %c1_39 = arith.constant 1 : index
    %c0_40 = arith.constant 0 : index
    %c0_41 = arith.constant 0 : index
    %111 = vector.load %arg22[%c1_39, %c0_40, %c0_41] : memref<8x8x128xf32, #tpu.memory_space<vmem>>, vector<1x8x128xf32>
    %112 = vector.shape_cast %111 : vector<1x8x128xf32> to vector<8x128xf32>
    %113 = vector.shape_cast %90 : vector<8x128xf32> to vector<1x8x128xf32>
    tpu.vector_store %arg22[%c1_39, %c0_40, %c0_41], %113 {strides = array<i32>} : memref<8x8x128xf32, #tpu.memory_space<vmem>>, vector<1x8x128xf32>,
    %c6_42 = arith.constant 6 : index
    %c0_43 = arith.constant 0 : index
    %c0_44 = arith.constant 0 : index
    %114 = vector.load %arg23[%c6_42, %c0_43, %c0_44] : memref<8x8x128xf32, #tpu.memory_space<vmem>>, vector<1x8x128xf32>
    %115 = vector.shape_cast %114 : vector<1x8x128xf32> to vector<8x128xf32>
    %116 = vector.shape_cast %110 : vector<8x128xf32> to vector<1x8x128xf32>
    tpu.vector_store %arg23[%c6_42, %c0_43, %c0_44], %116 {strides = array<i32>} : memref<8x8x128xf32, #tpu.memory_space<vmem>>, vector<1x8x128xf32>,
    %c2 = arith.constant 2 : index
    %c0_45 = arith.constant 0 : index
    %c0_46 = arith.constant 0 : index
    %117 = vector.load %arg18[%c2, %c0_45, %c0_46] : memref<8x8x512xf32, #tpu.memory_space<vmem>>, vector<1x8x512xf32>
    %118 = vector.shape_cast %117 : vector<1x8x512xf32> to vector<8x512xf32>
    %cst_47 = arith.constant dense<0.000000e+00> : vector<8x512xf32>
    %119 = tpu.matmul %90, %22, %cst_47 {dimension_numbers = #tpu.dot_dimension_numbers<[1], [0], [0], [1], [0, 0, 1, 1], [], []>} : vector<8x128xf32>, vector<128x512xf32>, vector<8x512xf32> -> vector<8x512xf32>
    %120 = arith.addf %119, %118 : vector<8x512xf32>
    %121 = vector.extract_strided_slice %120 {offsets = [0, 0], sizes = [8, 384], strides = [1, 1]} : vector<8x512xf32> to vector<8x384xf32>
    %122 = arith.negf %121 : vector<8x384xf32>
    %123 = math.exp %122 : vector<8x384xf32>
    %cst_48 = arith.constant 1.000000e+00 : f32
    %124 = vector.broadcast %cst_48 : f32 to vector<8x384xf32>
    %125 = arith.addf %124, %123 : vector<8x384xf32>
    %126 = arith.divf %124, %125 : vector<8x384xf32>
    %127 = vector.extract_strided_slice %120 {offsets = [0, 384], sizes = [8, 128], strides = [1, 1]} : vector<8x512xf32> to vector<8x128xf32>
    %128 = math.tanh %127 : vector<8x128xf32>
    %129 = vector.extract_strided_slice %126 {offsets = [0, 128], sizes = [8, 128], strides = [1, 1]} : vector<8x384xf32> to vector<8x128xf32>
    %130 = arith.mulf %129, %87 : vector<8x128xf32>
    %131 = vector.extract_strided_slice %126 {offsets = [0, 0], sizes = [8, 128], strides = [1, 1]} : vector<8x384xf32> to vector<8x128xf32>
    %132 = arith.mulf %131, %128 : vector<8x128xf32>
    %133 = arith.addf %130, %132 : vector<8x128xf32>
    %134 = vector.extract_strided_slice %126 {offsets = [0, 256], sizes = [8, 128], strides = [1, 1]} : vector<8x384xf32> to vector<8x128xf32>
    %135 = math.tanh %133 : vector<8x128xf32>
    %136 = arith.mulf %134, %135 : vector<8x128xf32>
    %c5 = arith.constant 5 : index
    %c0_49 = arith.constant 0 : index
    %c0_50 = arith.constant 0 : index
    %137 = vector.load %arg19[%c5, %c0_49, %c0_50] : memref<8x8x512xf32, #tpu.memory_space<vmem>>, vector<1x8x512xf32>
    %138 = vector.shape_cast %137 : vector<1x8x512xf32> to vector<8x512xf32>
    %cst_51 = arith.constant dense<0.000000e+00> : vector<8x512xf32>
    %139 = tpu.matmul %110, %23, %cst_51 {dimension_numbers = #tpu.dot_dimension_numbers<[1], [0], [0], [1], [0, 0, 1, 1], [], []>} : vector<8x128xf32>, vector<128x512xf32>, vector<8x512xf32> -> vector<8x512xf32>
    %140 = arith.addf %139, %138 : vector<8x512xf32>
    %141 = vector.extract_strided_slice %140 {offsets = [0, 0], sizes = [8, 384], strides = [1, 1]} : vector<8x512xf32> to vector<8x384xf32>
    %142 = arith.negf %141 : vector<8x384xf32>
    %143 = math.exp %142 : vector<8x384xf32>
    %cst_52 = arith.constant 1.000000e+00 : f32
    %144 = vector.broadcast %cst_52 : f32 to vector<8x384xf32>
    %145 = arith.addf %144, %143 : vector<8x384xf32>
    %146 = arith.divf %144, %145 : vector<8x384xf32>
    %147 = vector.extract_strided_slice %140 {offsets = [0, 384], sizes = [8, 128], strides = [1, 1]} : vector<8x512xf32> to vector<8x128xf32>
    %148 = math.tanh %147 : vector<8x128xf32>
    %149 = vector.extract_strided_slice %146 {offsets = [0, 128], sizes = [8, 128], strides = [1, 1]} : vector<8x384xf32> to vector<8x128xf32>
    %150 = arith.mulf %149, %107 : vector<8x128xf32>
    %151 = vector.extract_strided_slice %146 {offsets = [0, 0], sizes = [8, 128], strides = [1, 1]} : vector<8x384xf32> to vector<8x128xf32>
    %152 = arith.mulf %151, %148 : vector<8x128xf32>
    %153 = arith.addf %150, %152 : vector<8x128xf32>
    %154 = vector.extract_strided_slice %146 {offsets = [0, 256], sizes = [8, 128], strides = [1, 1]} : vector<8x384xf32> to vector<8x128xf32>
    %155 = math.tanh %153 : vector<8x128xf32>
    %156 = arith.mulf %154, %155 : vector<8x128xf32>
    %c2_53 = arith.constant 2 : index
    %c0_54 = arith.constant 0 : index
    %c0_55 = arith.constant 0 : index
    %157 = vector.load %arg22[%c2_53, %c0_54, %c0_55] : memref<8x8x128xf32, #tpu.memory_space<vmem>>, vector<1x8x128xf32>
    %158 = vector.shape_cast %157 : vector<1x8x128xf32> to vector<8x128xf32>
    %159 = vector.shape_cast %136 : vector<8x128xf32> to vector<1x8x128xf32>
    tpu.vector_store %arg22[%c2_53, %c0_54, %c0_55], %159 {strides = array<i32>} : memref<8x8x128xf32, #tpu.memory_space<vmem>>, vector<1x8x128xf32>,
    %c5_56 = arith.constant 5 : index
    %c0_57 = arith.constant 0 : index
    %c0_58 = arith.constant 0 : index
    %160 = vector.load %arg23[%c5_56, %c0_57, %c0_58] : memref<8x8x128xf32, #tpu.memory_space<vmem>>, vector<1x8x128xf32>
    %161 = vector.shape_cast %160 : vector<1x8x128xf32> to vector<8x128xf32>
    %162 = vector.shape_cast %156 : vector<8x128xf32> to vector<1x8x128xf32>
    tpu.vector_store %arg23[%c5_56, %c0_57, %c0_58], %162 {strides = array<i32>} : memref<8x8x128xf32, #tpu.memory_space<vmem>>, vector<1x8x128xf32>,
    %c3 = arith.constant 3 : index
    %c0_59 = arith.constant 0 : index
    %c0_60 = arith.constant 0 : index
    %163 = vector.load %arg18[%c3, %c0_59, %c0_60] : memref<8x8x512xf32, #tpu.memory_space<vmem>>, vector<1x8x512xf32>
    %164 = vector.shape_cast %163 : vector<1x8x512xf32> to vector<8x512xf32>
    %cst_61 = arith.constant dense<0.000000e+00> : vector<8x512xf32>
    %165 = tpu.matmul %136, %22, %cst_61 {dimension_numbers = #tpu.dot_dimension_numbers<[1], [0], [0], [1], [0, 0, 1, 1], [], []>} : vector<8x128xf32>, vector<128x512xf32>, vector<8x512xf32> -> vector<8x512xf32>
    %166 = arith.addf %165, %164 : vector<8x512xf32>
    %167 = vector.extract_strided_slice %166 {offsets = [0, 0], sizes = [8, 384], strides = [1, 1]} : vector<8x512xf32> to vector<8x384xf32>
    %168 = arith.negf %167 : vector<8x384xf32>
    %169 = math.exp %168 : vector<8x384xf32>
    %cst_62 = arith.constant 1.000000e+00 : f32
    %170 = vector.broadcast %cst_62 : f32 to vector<8x384xf32>
    %171 = arith.addf %170, %169 : vector<8x384xf32>
    %172 = arith.divf %170, %171 : vector<8x384xf32>
    %173 = vector.extract_strided_slice %166 {offsets = [0, 384], sizes = [8, 128], strides = [1, 1]} : vector<8x512xf32> to vector<8x128xf32>
    %174 = math.tanh %173 : vector<8x128xf32>
    %175 = vector.extract_strided_slice %172 {offsets = [0, 128], sizes = [8, 128], strides = [1, 1]} : vector<8x384xf32> to vector<8x128xf32>
    %176 = arith.mulf %175, %133 : vector<8x128xf32>
    %177 = vector.extract_strided_slice %172 {offsets = [0, 0], sizes = [8, 128], strides = [1, 1]} : vector<8x384xf32> to vector<8x128xf32>
    %178 = arith.mulf %177, %174 : vector<8x128xf32>
    %179 = arith.addf %176, %178 : vector<8x128xf32>
    %180 = vector.extract_strided_slice %172 {offsets = [0, 256], sizes = [8, 128], strides = [1, 1]} : vector<8x384xf32> to vector<8x128xf32>
    %181 = math.tanh %179 : vector<8x128xf32>
    %182 = arith.mulf %180, %181 : vector<8x128xf32>
    %c4 = arith.constant 4 : index
    %c0_63 = arith.constant 0 : index
    %c0_64 = arith.constant 0 : index
    %183 = vector.load %arg19[%c4, %c0_63, %c0_64] : memref<8x8x512xf32, #tpu.memory_space<vmem>>, vector<1x8x512xf32>
    %184 = vector.shape_cast %183 : vector<1x8x512xf32> to vector<8x512xf32>
    %cst_65 = arith.constant dense<0.000000e+00> : vector<8x512xf32>
    %185 = tpu.matmul %156, %23, %cst_65 {dimension_numbers = #tpu.dot_dimension_numbers<[1], [0], [0], [1], [0, 0, 1, 1], [], []>} : vector<8x128xf32>, vector<128x512xf32>, vector<8x512xf32> -> vector<8x512xf32>
    %186 = arith.addf %185, %184 : vector<8x512xf32>
    %187 = vector.extract_strided_slice %186 {offsets = [0, 0], sizes = [8, 384], strides = [1, 1]} : vector<8x512xf32> to vector<8x384xf32>
    %188 = arith.negf %187 : vector<8x384xf32>
    %189 = math.exp %188 : vector<8x384xf32>
    %cst_66 = arith.constant 1.000000e+00 : f32
    %190 = vector.broadcast %cst_66 : f32 to vector<8x384xf32>
    %191 = arith.addf %190, %189 : vector<8x384xf32>
    %192 = arith.divf %190, %191 : vector<8x384xf32>
    %193 = vector.extract_strided_slice %186 {offsets = [0, 384], sizes = [8, 128], strides = [1, 1]} : vector<8x512xf32> to vector<8x128xf32>
    %194 = math.tanh %193 : vector<8x128xf32>
    %195 = vector.extract_strided_slice %192 {offsets = [0, 128], sizes = [8, 128], strides = [1, 1]} : vector<8x384xf32> to vector<8x128xf32>
    %196 = arith.mulf %195, %153 : vector<8x128xf32>
    %197 = vector.extract_strided_slice %192 {offsets = [0, 0], sizes = [8, 128], strides = [1, 1]} : vector<8x384xf32> to vector<8x128xf32>
    %198 = arith.mulf %197, %194 : vector<8x128xf32>
    %199 = arith.addf %196, %198 : vector<8x128xf32>
    %200 = vector.extract_strided_slice %192 {offsets = [0, 256], sizes = [8, 128], strides = [1, 1]} : vector<8x384xf32> to vector<8x128xf32>
    %201 = math.tanh %199 : vector<8x128xf32>
    %202 = arith.mulf %200, %201 : vector<8x128xf32>
    %c3_67 = arith.constant 3 : index
    %c0_68 = arith.constant 0 : index
    %c0_69 = arith.constant 0 : index
    %203 = vector.load %arg22[%c3_67, %c0_68, %c0_69] : memref<8x8x128xf32, #tpu.memory_space<vmem>>, vector<1x8x128xf32>
    %204 = vector.shape_cast %203 : vector<1x8x128xf32> to vector<8x128xf32>
    %205 = vector.shape_cast %182 : vector<8x128xf32> to vector<1x8x128xf32>
    tpu.vector_store %arg22[%c3_67, %c0_68, %c0_69], %205 {strides = array<i32>} : memref<8x8x128xf32, #tpu.memory_space<vmem>>, vector<1x8x128xf32>,
    %c4_70 = arith.constant 4 : index
    %c0_71 = arith.constant 0 : index
    %c0_72 = arith.constant 0 : index
    %206 = vector.load %arg23[%c4_70, %c0_71, %c0_72] : memref<8x8x128xf32, #tpu.memory_space<vmem>>, vector<1x8x128xf32>
    %207 = vector.shape_cast %206 : vector<1x8x128xf32> to vector<8x128xf32>
    %208 = vector.shape_cast %202 : vector<8x128xf32> to vector<1x8x128xf32>
    tpu.vector_store %arg23[%c4_70, %c0_71, %c0_72], %208 {strides = array<i32>} : memref<8x8x128xf32, #tpu.memory_space<vmem>>, vector<1x8x128xf32>,
    %c4_73 = arith.constant 4 : index
    %c0_74 = arith.constant 0 : index
    %c0_75 = arith.constant 0 : index
    %209 = vector.load %arg18[%c4_73, %c0_74, %c0_75] : memref<8x8x512xf32, #tpu.memory_space<vmem>>, vector<1x8x512xf32>
    %210 = vector.shape_cast %209 : vector<1x8x512xf32> to vector<8x512xf32>
    %cst_76 = arith.constant dense<0.000000e+00> : vector<8x512xf32>
    %211 = tpu.matmul %182, %22, %cst_76 {dimension_numbers = #tpu.dot_dimension_numbers<[1], [0], [0], [1], [0, 0, 1, 1], [], []>} : vector<8x128xf32>, vector<128x512xf32>, vector<8x512xf32> -> vector<8x512xf32>
    %212 = arith.addf %211, %210 : vector<8x512xf32>
    %213 = vector.extract_strided_slice %212 {offsets = [0, 0], sizes = [8, 384], strides = [1, 1]} : vector<8x512xf32> to vector<8x384xf32>
    %214 = arith.negf %213 : vector<8x384xf32>
    %215 = math.exp %214 : vector<8x384xf32>
    %cst_77 = arith.constant 1.000000e+00 : f32
    %216 = vector.broadcast %cst_77 : f32 to vector<8x384xf32>
    %217 = arith.addf %216, %215 : vector<8x384xf32>
    %218 = arith.divf %216, %217 : vector<8x384xf32>
    %219 = vector.extract_strided_slice %212 {offsets = [0, 384], sizes = [8, 128], strides = [1, 1]} : vector<8x512xf32> to vector<8x128xf32>
    %220 = math.tanh %219 : vector<8x128xf32>
    %221 = vector.extract_strided_slice %218 {offsets = [0, 128], sizes = [8, 128], strides = [1, 1]} : vector<8x384xf32> to vector<8x128xf32>
    %222 = arith.mulf %221, %179 : vector<8x128xf32>
    %223 = vector.extract_strided_slice %218 {offsets = [0, 0], sizes = [8, 128], strides = [1, 1]} : vector<8x384xf32> to vector<8x128xf32>
    %224 = arith.mulf %223, %220 : vector<8x128xf32>
    %225 = arith.addf %222, %224 : vector<8x128xf32>
    %226 = vector.extract_strided_slice %218 {offsets = [0, 256], sizes = [8, 128], strides = [1, 1]} : vector<8x384xf32> to vector<8x128xf32>
    %227 = math.tanh %225 : vector<8x128xf32>
    %228 = arith.mulf %226, %227 : vector<8x128xf32>
    %c3_78 = arith.constant 3 : index
    %c0_79 = arith.constant 0 : index
    %c0_80 = arith.constant 0 : index
    %229 = vector.load %arg19[%c3_78, %c0_79, %c0_80] : memref<8x8x512xf32, #tpu.memory_space<vmem>>, vector<1x8x512xf32>
    %230 = vector.shape_cast %229 : vector<1x8x512xf32> to vector<8x512xf32>
    %cst_81 = arith.constant dense<0.000000e+00> : vector<8x512xf32>
    %231 = tpu.matmul %202, %23, %cst_81 {dimension_numbers = #tpu.dot_dimension_numbers<[1], [0], [0], [1], [0, 0, 1, 1], [], []>} : vector<8x128xf32>, vector<128x512xf32>, vector<8x512xf32> -> vector<8x512xf32>
    %232 = arith.addf %231, %230 : vector<8x512xf32>
    %233 = vector.extract_strided_slice %232 {offsets = [0, 0], sizes = [8, 384], strides = [1, 1]} : vector<8x512xf32> to vector<8x384xf32>
    %234 = arith.negf %233 : vector<8x384xf32>
    %235 = math.exp %234 : vector<8x384xf32>
    %cst_82 = arith.constant 1.000000e+00 : f32
    %236 = vector.broadcast %cst_82 : f32 to vector<8x384xf32>
    %237 = arith.addf %236, %235 : vector<8x384xf32>
    %238 = arith.divf %236, %237 : vector<8x384xf32>
    %239 = vector.extract_strided_slice %232 {offsets = [0, 384], sizes = [8, 128], strides = [1, 1]} : vector<8x512xf32> to vector<8x128xf32>
    %240 = math.tanh %239 : vector<8x128xf32>
    %241 = vector.extract_strided_slice %238 {offsets = [0, 128], sizes = [8, 128], strides = [1, 1]} : vector<8x384xf32> to vector<8x128xf32>
    %242 = arith.mulf %241, %199 : vector<8x128xf32>
    %243 = vector.extract_strided_slice %238 {offsets = [0, 0], sizes = [8, 128], strides = [1, 1]} : vector<8x384xf32> to vector<8x128xf32>
    %244 = arith.mulf %243, %240 : vector<8x128xf32>
    %245 = arith.addf %242, %244 : vector<8x128xf32>
    %246 = vector.extract_strided_slice %238 {offsets = [0, 256], sizes = [8, 128], strides = [1, 1]} : vector<8x384xf32> to vector<8x128xf32>
    %247 = math.tanh %245 : vector<8x128xf32>
    %248 = arith.mulf %246, %247 : vector<8x128xf32>
    %c4_83 = arith.constant 4 : index
    %c0_84 = arith.constant 0 : index
    %c0_85 = arith.constant 0 : index
    %249 = vector.load %arg22[%c4_83, %c0_84, %c0_85] : memref<8x8x128xf32, #tpu.memory_space<vmem>>, vector<1x8x128xf32>
    %250 = vector.shape_cast %249 : vector<1x8x128xf32> to vector<8x128xf32>
    %251 = vector.shape_cast %228 : vector<8x128xf32> to vector<1x8x128xf32>
    tpu.vector_store %arg22[%c4_83, %c0_84, %c0_85], %251 {strides = array<i32>} : memref<8x8x128xf32, #tpu.memory_space<vmem>>, vector<1x8x128xf32>,
    %c3_86 = arith.constant 3 : index
    %c0_87 = arith.constant 0 : index
    %c0_88 = arith.constant 0 : index
    %252 = vector.load %arg23[%c3_86, %c0_87, %c0_88] : memref<8x8x128xf32, #tpu.memory_space<vmem>>, vector<1x8x128xf32>
    %253 = vector.shape_cast %252 : vector<1x8x128xf32> to vector<8x128xf32>
    %254 = vector.shape_cast %248 : vector<8x128xf32> to vector<1x8x128xf32>
    tpu.vector_store %arg23[%c3_86, %c0_87, %c0_88], %254 {strides = array<i32>} : memref<8x8x128xf32, #tpu.memory_space<vmem>>, vector<1x8x128xf32>,
    %c5_89 = arith.constant 5 : index
    %c0_90 = arith.constant 0 : index
    %c0_91 = arith.constant 0 : index
    %255 = vector.load %arg18[%c5_89, %c0_90, %c0_91] : memref<8x8x512xf32, #tpu.memory_space<vmem>>, vector<1x8x512xf32>
    %256 = vector.shape_cast %255 : vector<1x8x512xf32> to vector<8x512xf32>
    %cst_92 = arith.constant dense<0.000000e+00> : vector<8x512xf32>
    %257 = tpu.matmul %228, %22, %cst_92 {dimension_numbers = #tpu.dot_dimension_numbers<[1], [0], [0], [1], [0, 0, 1, 1], [], []>} : vector<8x128xf32>, vector<128x512xf32>, vector<8x512xf32> -> vector<8x512xf32>
    %258 = arith.addf %257, %256 : vector<8x512xf32>
    %259 = vector.extract_strided_slice %258 {offsets = [0, 0], sizes = [8, 384], strides = [1, 1]} : vector<8x512xf32> to vector<8x384xf32>
    %260 = arith.negf %259 : vector<8x384xf32>
    %261 = math.exp %260 : vector<8x384xf32>
    %cst_93 = arith.constant 1.000000e+00 : f32
    %262 = vector.broadcast %cst_93 : f32 to vector<8x384xf32>
    %263 = arith.addf %262, %261 : vector<8x384xf32>
    %264 = arith.divf %262, %263 : vector<8x384xf32>
    %265 = vector.extract_strided_slice %258 {offsets = [0, 384], sizes = [8, 128], strides = [1, 1]} : vector<8x512xf32> to vector<8x128xf32>
    %266 = math.tanh %265 : vector<8x128xf32>
    %267 = vector.extract_strided_slice %264 {offsets = [0, 128], sizes = [8, 128], strides = [1, 1]} : vector<8x384xf32> to vector<8x128xf32>
    %268 = arith.mulf %267, %225 : vector<8x128xf32>
    %269 = vector.extract_strided_slice %264 {offsets = [0, 0], sizes = [8, 128], strides = [1, 1]} : vector<8x384xf32> to vector<8x128xf32>
    %270 = arith.mulf %269, %266 : vector<8x128xf32>
    %271 = arith.addf %268, %270 : vector<8x128xf32>
    %272 = vector.extract_strided_slice %264 {offsets = [0, 256], sizes = [8, 128], strides = [1, 1]} : vector<8x384xf32> to vector<8x128xf32>
    %273 = math.tanh %271 : vector<8x128xf32>
    %274 = arith.mulf %272, %273 : vector<8x128xf32>
    %c2_94 = arith.constant 2 : index
    %c0_95 = arith.constant 0 : index
    %c0_96 = arith.constant 0 : index
    %275 = vector.load %arg19[%c2_94, %c0_95, %c0_96] : memref<8x8x512xf32, #tpu.memory_space<vmem>>, vector<1x8x512xf32>
    %276 = vector.shape_cast %275 : vector<1x8x512xf32> to vector<8x512xf32>
    %cst_97 = arith.constant dense<0.000000e+00> : vector<8x512xf32>
    %277 = tpu.matmul %248, %23, %cst_97 {dimension_numbers = #tpu.dot_dimension_numbers<[1], [0], [0], [1], [0, 0, 1, 1], [], []>} : vector<8x128xf32>, vector<128x512xf32>, vector<8x512xf32> -> vector<8x512xf32>
    %278 = arith.addf %277, %276 : vector<8x512xf32>
    %279 = vector.extract_strided_slice %278 {offsets = [0, 0], sizes = [8, 384], strides = [1, 1]} : vector<8x512xf32> to vector<8x384xf32>
    %280 = arith.negf %279 : vector<8x384xf32>
    %281 = math.exp %280 : vector<8x384xf32>
    %cst_98 = arith.constant 1.000000e+00 : f32
    %282 = vector.broadcast %cst_98 : f32 to vector<8x384xf32>
    %283 = arith.addf %282, %281 : vector<8x384xf32>
    %284 = arith.divf %282, %283 : vector<8x384xf32>
    %285 = vector.extract_strided_slice %278 {offsets = [0, 384], sizes = [8, 128], strides = [1, 1]} : vector<8x512xf32> to vector<8x128xf32>
    %286 = math.tanh %285 : vector<8x128xf32>
    %287 = vector.extract_strided_slice %284 {offsets = [0, 128], sizes = [8, 128], strides = [1, 1]} : vector<8x384xf32> to vector<8x128xf32>
    %288 = arith.mulf %287, %245 : vector<8x128xf32>
    %289 = vector.extract_strided_slice %284 {offsets = [0, 0], sizes = [8, 128], strides = [1, 1]} : vector<8x384xf32> to vector<8x128xf32>
    %290 = arith.mulf %289, %286 : vector<8x128xf32>
    %291 = arith.addf %288, %290 : vector<8x128xf32>
    %292 = vector.extract_strided_slice %284 {offsets = [0, 256], sizes = [8, 128], strides = [1, 1]} : vector<8x384xf32> to vector<8x128xf32>
    %293 = math.tanh %291 : vector<8x128xf32>
    %294 = arith.mulf %292, %293 : vector<8x128xf32>
    %c5_99 = arith.constant 5 : index
    %c0_100 = arith.constant 0 : index
    %c0_101 = arith.constant 0 : index
    %295 = vector.load %arg22[%c5_99, %c0_100, %c0_101] : memref<8x8x128xf32, #tpu.memory_space<vmem>>, vector<1x8x128xf32>
    %296 = vector.shape_cast %295 : vector<1x8x128xf32> to vector<8x128xf32>
    %297 = vector.shape_cast %274 : vector<8x128xf32> to vector<1x8x128xf32>
    tpu.vector_store %arg22[%c5_99, %c0_100, %c0_101], %297 {strides = array<i32>} : memref<8x8x128xf32, #tpu.memory_space<vmem>>, vector<1x8x128xf32>,
    %c2_102 = arith.constant 2 : index
    %c0_103 = arith.constant 0 : index
    %c0_104 = arith.constant 0 : index
    %298 = vector.load %arg23[%c2_102, %c0_103, %c0_104] : memref<8x8x128xf32, #tpu.memory_space<vmem>>, vector<1x8x128xf32>
    %299 = vector.shape_cast %298 : vector<1x8x128xf32> to vector<8x128xf32>
    %300 = vector.shape_cast %294 : vector<8x128xf32> to vector<1x8x128xf32>
    tpu.vector_store %arg23[%c2_102, %c0_103, %c0_104], %300 {strides = array<i32>} : memref<8x8x128xf32, #tpu.memory_space<vmem>>, vector<1x8x128xf32>,
    %c6_105 = arith.constant 6 : index
    %c0_106 = arith.constant 0 : index
    %c0_107 = arith.constant 0 : index
    %301 = vector.load %arg18[%c6_105, %c0_106, %c0_107] : memref<8x8x512xf32, #tpu.memory_space<vmem>>, vector<1x8x512xf32>
    %302 = vector.shape_cast %301 : vector<1x8x512xf32> to vector<8x512xf32>
    %cst_108 = arith.constant dense<0.000000e+00> : vector<8x512xf32>
    %303 = tpu.matmul %274, %22, %cst_108 {dimension_numbers = #tpu.dot_dimension_numbers<[1], [0], [0], [1], [0, 0, 1, 1], [], []>} : vector<8x128xf32>, vector<128x512xf32>, vector<8x512xf32> -> vector<8x512xf32>
    %304 = arith.addf %303, %302 : vector<8x512xf32>
    %305 = vector.extract_strided_slice %304 {offsets = [0, 0], sizes = [8, 384], strides = [1, 1]} : vector<8x512xf32> to vector<8x384xf32>
    %306 = arith.negf %305 : vector<8x384xf32>
    %307 = math.exp %306 : vector<8x384xf32>
    %cst_109 = arith.constant 1.000000e+00 : f32
    %308 = vector.broadcast %cst_109 : f32 to vector<8x384xf32>
    %309 = arith.addf %308, %307 : vector<8x384xf32>
    %310 = arith.divf %308, %309 : vector<8x384xf32>
    %311 = vector.extract_strided_slice %304 {offsets = [0, 384], sizes = [8, 128], strides = [1, 1]} : vector<8x512xf32> to vector<8x128xf32>
    %312 = math.tanh %311 : vector<8x128xf32>
    %313 = vector.extract_strided_slice %310 {offsets = [0, 128], sizes = [8, 128], strides = [1, 1]} : vector<8x384xf32> to vector<8x128xf32>
    %314 = arith.mulf %313, %271 : vector<8x128xf32>
    %315 = vector.extract_strided_slice %310 {offsets = [0, 0], sizes = [8, 128], strides = [1, 1]} : vector<8x384xf32> to vector<8x128xf32>
    %316 = arith.mulf %315, %312 : vector<8x128xf32>
    %317 = arith.addf %314, %316 : vector<8x128xf32>
    %318 = vector.extract_strided_slice %310 {offsets = [0, 256], sizes = [8, 128], strides = [1, 1]} : vector<8x384xf32> to vector<8x128xf32>
    %319 = math.tanh %317 : vector<8x128xf32>
    %320 = arith.mulf %318, %319 : vector<8x128xf32>
    %c1_110 = arith.constant 1 : index
    %c0_111 = arith.constant 0 : index
    %c0_112 = arith.constant 0 : index
    %321 = vector.load %arg19[%c1_110, %c0_111, %c0_112] : memref<8x8x512xf32, #tpu.memory_space<vmem>>, vector<1x8x512xf32>
    %322 = vector.shape_cast %321 : vector<1x8x512xf32> to vector<8x512xf32>
    %cst_113 = arith.constant dense<0.000000e+00> : vector<8x512xf32>
    %323 = tpu.matmul %294, %23, %cst_113 {dimension_numbers = #tpu.dot_dimension_numbers<[1], [0], [0], [1], [0, 0, 1, 1], [], []>} : vector<8x128xf32>, vector<128x512xf32>, vector<8x512xf32> -> vector<8x512xf32>
    %324 = arith.addf %323, %322 : vector<8x512xf32>
    %325 = vector.extract_strided_slice %324 {offsets = [0, 0], sizes = [8, 384], strides = [1, 1]} : vector<8x512xf32> to vector<8x384xf32>
    %326 = arith.negf %325 : vector<8x384xf32>
    %327 = math.exp %326 : vector<8x384xf32>
    %cst_114 = arith.constant 1.000000e+00 : f32
    %328 = vector.broadcast %cst_114 : f32 to vector<8x384xf32>
    %329 = arith.addf %328, %327 : vector<8x384xf32>
    %330 = arith.divf %328, %329 : vector<8x384xf32>
    %331 = vector.extract_strided_slice %324 {offsets = [0, 384], sizes = [8, 128], strides = [1, 1]} : vector<8x512xf32> to vector<8x128xf32>
    %332 = math.tanh %331 : vector<8x128xf32>
    %333 = vector.extract_strided_slice %330 {offsets = [0, 128], sizes = [8, 128], strides = [1, 1]} : vector<8x384xf32> to vector<8x128xf32>
    %334 = arith.mulf %333, %291 : vector<8x128xf32>
    %335 = vector.extract_strided_slice %330 {offsets = [0, 0], sizes = [8, 128], strides = [1, 1]} : vector<8x384xf32> to vector<8x128xf32>
    %336 = arith.mulf %335, %332 : vector<8x128xf32>
    %337 = arith.addf %334, %336 : vector<8x128xf32>
    %338 = vector.extract_strided_slice %330 {offsets = [0, 256], sizes = [8, 128], strides = [1, 1]} : vector<8x384xf32> to vector<8x128xf32>
    %339 = math.tanh %337 : vector<8x128xf32>
    %340 = arith.mulf %338, %339 : vector<8x128xf32>
    %c6_115 = arith.constant 6 : index
    %c0_116 = arith.constant 0 : index
    %c0_117 = arith.constant 0 : index
    %341 = vector.load %arg22[%c6_115, %c0_116, %c0_117] : memref<8x8x128xf32, #tpu.memory_space<vmem>>, vector<1x8x128xf32>
    %342 = vector.shape_cast %341 : vector<1x8x128xf32> to vector<8x128xf32>
    %343 = vector.shape_cast %320 : vector<8x128xf32> to vector<1x8x128xf32>
    tpu.vector_store %arg22[%c6_115, %c0_116, %c0_117], %343 {strides = array<i32>} : memref<8x8x128xf32, #tpu.memory_space<vmem>>, vector<1x8x128xf32>,
    %c1_118 = arith.constant 1 : index
    %c0_119 = arith.constant 0 : index
    %c0_120 = arith.constant 0 : index
    %344 = vector.load %arg23[%c1_118, %c0_119, %c0_120] : memref<8x8x128xf32, #tpu.memory_space<vmem>>, vector<1x8x128xf32>
    %345 = vector.shape_cast %344 : vector<1x8x128xf32> to vector<8x128xf32>
    %346 = vector.shape_cast %340 : vector<8x128xf32> to vector<1x8x128xf32>
    tpu.vector_store %arg23[%c1_118, %c0_119, %c0_120], %346 {strides = array<i32>} : memref<8x8x128xf32, #tpu.memory_space<vmem>>, vector<1x8x128xf32>,
    %c7_121 = arith.constant 7 : index
    %c0_122 = arith.constant 0 : index
    %c0_123 = arith.constant 0 : index
    %347 = vector.load %arg18[%c7_121, %c0_122, %c0_123] : memref<8x8x512xf32, #tpu.memory_space<vmem>>, vector<1x8x512xf32>
    %348 = vector.shape_cast %347 : vector<1x8x512xf32> to vector<8x512xf32>
    %cst_124 = arith.constant dense<0.000000e+00> : vector<8x512xf32>
    %349 = tpu.matmul %320, %22, %cst_124 {dimension_numbers = #tpu.dot_dimension_numbers<[1], [0], [0], [1], [0, 0, 1, 1], [], []>} : vector<8x128xf32>, vector<128x512xf32>, vector<8x512xf32> -> vector<8x512xf32>
    %350 = arith.addf %349, %348 : vector<8x512xf32>
    %351 = vector.extract_strided_slice %350 {offsets = [0, 0], sizes = [8, 384], strides = [1, 1]} : vector<8x512xf32> to vector<8x384xf32>
    %352 = arith.negf %351 : vector<8x384xf32>
    %353 = math.exp %352 : vector<8x384xf32>
    %cst_125 = arith.constant 1.000000e+00 : f32
    %354 = vector.broadcast %cst_125 : f32 to vector<8x384xf32>
    %355 = arith.addf %354, %353 : vector<8x384xf32>
    %356 = arith.divf %354, %355 : vector<8x384xf32>
    %357 = vector.extract_strided_slice %350 {offsets = [0, 384], sizes = [8, 128], strides = [1, 1]} : vector<8x512xf32> to vector<8x128xf32>
    %358 = math.tanh %357 : vector<8x128xf32>
    %359 = vector.extract_strided_slice %356 {offsets = [0, 128], sizes = [8, 128], strides = [1, 1]} : vector<8x384xf32> to vector<8x128xf32>
    %360 = arith.mulf %359, %317 : vector<8x128xf32>
    %361 = vector.extract_strided_slice %356 {offsets = [0, 0], sizes = [8, 128], strides = [1, 1]} : vector<8x384xf32> to vector<8x128xf32>
    %362 = arith.mulf %361, %358 : vector<8x128xf32>
    %363 = arith.addf %360, %362 : vector<8x128xf32>
    %364 = vector.extract_strided_slice %356 {offsets = [0, 256], sizes = [8, 128], strides = [1, 1]} : vector<8x384xf32> to vector<8x128xf32>
    %365 = math.tanh %363 : vector<8x128xf32>
    %366 = arith.mulf %364, %365 : vector<8x128xf32>
    %c0_126 = arith.constant 0 : index
    %c0_127 = arith.constant 0 : index
    %c0_128 = arith.constant 0 : index
    %367 = vector.load %arg19[%c0_126, %c0_127, %c0_128] : memref<8x8x512xf32, #tpu.memory_space<vmem>>, vector<1x8x512xf32>
    %368 = vector.shape_cast %367 : vector<1x8x512xf32> to vector<8x512xf32>
    %cst_129 = arith.constant dense<0.000000e+00> : vector<8x512xf32>
    %369 = tpu.matmul %340, %23, %cst_129 {dimension_numbers = #tpu.dot_dimension_numbers<[1], [0], [0], [1], [0, 0, 1, 1], [], []>} : vector<8x128xf32>, vector<128x512xf32>, vector<8x512xf32> -> vector<8x512xf32>
    %370 = arith.addf %369, %368 : vector<8x512xf32>
    %371 = vector.extract_strided_slice %370 {offsets = [0, 0], sizes = [8, 384], strides = [1, 1]} : vector<8x512xf32> to vector<8x384xf32>
    %372 = arith.negf %371 : vector<8x384xf32>
    %373 = math.exp %372 : vector<8x384xf32>
    %cst_130 = arith.constant 1.000000e+00 : f32
    %374 = vector.broadcast %cst_130 : f32 to vector<8x384xf32>
    %375 = arith.addf %374, %373 : vector<8x384xf32>
    %376 = arith.divf %374, %375 : vector<8x384xf32>
    %377 = vector.extract_strided_slice %370 {offsets = [0, 384], sizes = [8, 128], strides = [1, 1]} : vector<8x512xf32> to vector<8x128xf32>
    %378 = math.tanh %377 : vector<8x128xf32>
    %379 = vector.extract_strided_slice %376 {offsets = [0, 128], sizes = [8, 128], strides = [1, 1]} : vector<8x384xf32> to vector<8x128xf32>
    %380 = arith.mulf %379, %337 : vector<8x128xf32>
    %381 = vector.extract_strided_slice %376 {offsets = [0, 0], sizes = [8, 128], strides = [1, 1]} : vector<8x384xf32> to vector<8x128xf32>
    %382 = arith.mulf %381, %378 : vector<8x128xf32>
    %383 = arith.addf %380, %382 : vector<8x128xf32>
    %384 = vector.extract_strided_slice %376 {offsets = [0, 256], sizes = [8, 128], strides = [1, 1]} : vector<8x384xf32> to vector<8x128xf32>
    %385 = math.tanh %383 : vector<8x128xf32>
    %386 = arith.mulf %384, %385 : vector<8x128xf32>
    %c7_131 = arith.constant 7 : index
    %c0_132 = arith.constant 0 : index
    %c0_133 = arith.constant 0 : index
    %387 = vector.load %arg22[%c7_131, %c0_132, %c0_133] : memref<8x8x128xf32, #tpu.memory_space<vmem>>, vector<1x8x128xf32>
    %388 = vector.shape_cast %387 : vector<1x8x128xf32> to vector<8x128xf32>
    %389 = vector.shape_cast %366 : vector<8x128xf32> to vector<1x8x128xf32>
    tpu.vector_store %arg22[%c7_131, %c0_132, %c0_133], %389 {strides = array<i32>} : memref<8x8x128xf32, #tpu.memory_space<vmem>>, vector<1x8x128xf32>,
    %c0_134 = arith.constant 0 : index
    %c0_135 = arith.constant 0 : index
    %c0_136 = arith.constant 0 : index
    %390 = vector.load %arg23[%c0_134, %c0_135, %c0_136] : memref<8x8x128xf32, #tpu.memory_space<vmem>>, vector<1x8x128xf32>
    %391 = vector.shape_cast %390 : vector<1x8x128xf32> to vector<8x128xf32>
    %392 = vector.shape_cast %386 : vector<8x128xf32> to vector<1x8x128xf32>
    tpu.vector_store %arg23[%c0_134, %c0_135, %c0_136], %392 {strides = array<i32>} : memref<8x8x128xf32, #tpu.memory_space<vmem>>, vector<1x8x128xf32>,
    %c0_i32_137 = arith.constant 0 : i32
    %393 = tpu.memref_slice %arg24[%c0_i32_137] : memref<5x!tpu.dma_semaphore, #tpu.memory_space<semaphore_mem>> -> memref<1x!tpu.dma_semaphore, #tpu.memory_space<semaphore_mem>>
    %394 = tpu.memref_squeeze %393 : memref<1x!tpu.dma_semaphore, #tpu.memory_space<semaphore_mem>> -> memref<!tpu.dma_semaphore, #tpu.memory_space<semaphore_mem>>
    tpu.wait_dma2 semaphore(%394 : memref<!tpu.dma_semaphore, #tpu.memory_space<semaphore_mem>>) src(%arg6 : memref<128x1024xf32, #tpu.memory_space<any>>) dst(%arg13 : memref<128x1024xf32, #tpu.memory_space<vmem>>)
    %c1_i32_138 = arith.constant 1 : i32
    %395 = tpu.memref_slice %arg24[%c1_i32_138] : memref<5x!tpu.dma_semaphore, #tpu.memory_space<semaphore_mem>> -> memref<1x!tpu.dma_semaphore, #tpu.memory_space<semaphore_mem>>
    %396 = tpu.memref_squeeze %395 : memref<1x!tpu.dma_semaphore, #tpu.memory_space<semaphore_mem>> -> memref<!tpu.dma_semaphore, #tpu.memory_space<semaphore_mem>>
    tpu.wait_dma2 semaphore(%396 : memref<!tpu.dma_semaphore, #tpu.memory_space<semaphore_mem>>) src(%arg7 : memref<128x1024xf32, #tpu.memory_space<any>>) dst(%arg14 : memref<128x1024xf32, #tpu.memory_space<vmem>>)
    %c0_139 = arith.constant 0 : index
    %c0_140 = arith.constant 0 : index
    %c0_141 = arith.constant 0 : index
    %397 = vector.load %arg22[%c0_139, %c0_140, %c0_141] : memref<8x8x128xf32, #tpu.memory_space<vmem>>, vector<8x8x128xf32>
    %398 = vector.shape_cast %397 : vector<8x8x128xf32> to vector<64x128xf32>
    %c0_142 = arith.constant 0 : index
    %c0_143 = arith.constant 0 : index
    %c0_144 = arith.constant 0 : index
    %399 = vector.load %arg23[%c0_142, %c0_143, %c0_144] : memref<8x8x128xf32, #tpu.memory_space<vmem>>, vector<8x8x128xf32>
    %400 = vector.shape_cast %399 : vector<8x8x128xf32> to vector<64x128xf32>
    %c0_145 = arith.constant 0 : index
    %c0_146 = arith.constant 0 : index
    %401 = vector.load %arg13[%c0_145, %c0_146] : memref<128x1024xf32, #tpu.memory_space<vmem>>, vector<128x1024xf32>
    %cst_147 = arith.constant dense<0.000000e+00> : vector<64x1024xf32>
    %402 = tpu.matmul %398, %401, %cst_147 {dimension_numbers = #tpu.dot_dimension_numbers<[1], [0], [0], [1], [0, 0, 1, 1], [], []>} : vector<64x128xf32>, vector<128x1024xf32>, vector<64x1024xf32> -> vector<64x1024xf32>
    %c0_148 = arith.constant 0 : index
    %c0_149 = arith.constant 0 : index
    %403 = vector.load %arg14[%c0_148, %c0_149] : memref<128x1024xf32, #tpu.memory_space<vmem>>, vector<128x1024xf32>
    %cst_150 = arith.constant dense<0.000000e+00> : vector<64x1024xf32>
    %404 = tpu.matmul %400, %403, %cst_150 {dimension_numbers = #tpu.dot_dimension_numbers<[1], [0], [0], [1], [0, 0, 1, 1], [], []>} : vector<64x128xf32>, vector<128x1024xf32>, vector<64x1024xf32> -> vector<64x1024xf32>
    %405 = arith.addf %402, %404 : vector<64x1024xf32>
    %c0_151 = arith.constant 0 : index
    %c0_152 = arith.constant 0 : index
    %406 = vector.load %arg5[%c0_151, %c0_152] : memref<1x1024xf32, #tpu.memory_space<vmem>>, vector<1x1024xf32>
    %407 = vector.broadcast %406 : vector<1x1024xf32> to vector<64x1024xf32>
    %408 = arith.addf %405, %407 : vector<64x1024xf32>
    %409 = vector.extract_strided_slice %408 {offsets = [0, 0], sizes = [64, 512], strides = [1, 1]} : vector<64x1024xf32> to vector<64x512xf32>
    %410 = vector.shape_cast %409 : vector<64x512xf32> to vector<8x8x512xf32>
    %c0_153 = arith.constant 0 : index
    %c0_154 = arith.constant 0 : index
    %c0_155 = arith.constant 0 : index
    %411 = vector.load %arg20[%c0_153, %c0_154, %c0_155] : memref<8x8x512xf32, #tpu.memory_space<vmem>>, vector<8x8x512xf32>
    tpu.vector_store %arg20[%c0_153, %c0_154, %c0_155], %410 {strides = array<i32>} : memref<8x8x512xf32, #tpu.memory_space<vmem>>, vector<8x8x512xf32>,
    %412 = vector.extract_strided_slice %408 {offsets = [0, 512], sizes = [64, 512], strides = [1, 1]} : vector<64x1024xf32> to vector<64x512xf32>
    %413 = vector.shape_cast %412 : vector<64x512xf32> to vector<8x8x512xf32>
    %c0_156 = arith.constant 0 : index
    %c0_157 = arith.constant 0 : index
    %c0_158 = arith.constant 0 : index
    %414 = vector.load %arg21[%c0_156, %c0_157, %c0_158] : memref<8x8x512xf32, #tpu.memory_space<vmem>>, vector<8x8x512xf32>
    tpu.vector_store %arg21[%c0_156, %c0_157, %c0_158], %413 {strides = array<i32>} : memref<8x8x512xf32, #tpu.memory_space<vmem>>, vector<8x8x512xf32>,
    %c2_i32_159 = arith.constant 2 : i32
    %415 = tpu.memref_slice %arg24[%c2_i32_159] : memref<5x!tpu.dma_semaphore, #tpu.memory_space<semaphore_mem>> -> memref<1x!tpu.dma_semaphore, #tpu.memory_space<semaphore_mem>>
    %416 = tpu.memref_squeeze %415 : memref<1x!tpu.dma_semaphore, #tpu.memory_space<semaphore_mem>> -> memref<!tpu.dma_semaphore, #tpu.memory_space<semaphore_mem>>
    tpu.wait_dma2 semaphore(%416 : memref<!tpu.dma_semaphore, #tpu.memory_space<semaphore_mem>>) src(%arg8 : memref<128x512xf32, #tpu.memory_space<any>>) dst(%arg15 : memref<128x512xf32, #tpu.memory_space<vmem>>)
    %c3_i32_160 = arith.constant 3 : i32
    %417 = tpu.memref_slice %arg24[%c3_i32_160] : memref<5x!tpu.dma_semaphore, #tpu.memory_space<semaphore_mem>> -> memref<1x!tpu.dma_semaphore, #tpu.memory_space<semaphore_mem>>
    %418 = tpu.memref_squeeze %417 : memref<1x!tpu.dma_semaphore, #tpu.memory_space<semaphore_mem>> -> memref<!tpu.dma_semaphore, #tpu.memory_space<semaphore_mem>>
    tpu.wait_dma2 semaphore(%418 : memref<!tpu.dma_semaphore, #tpu.memory_space<semaphore_mem>>) src(%arg9 : memref<128x512xf32, #tpu.memory_space<any>>) dst(%arg16 : memref<128x512xf32, #tpu.memory_space<vmem>>)
    %c0_161 = arith.constant 0 : index
    %c0_162 = arith.constant 0 : index
    %419 = vector.load %arg15[%c0_161, %c0_162] : memref<128x512xf32, #tpu.memory_space<vmem>>, vector<128x512xf32>
    %c0_163 = arith.constant 0 : index
    %c0_164 = arith.constant 0 : index
    %420 = vector.load %arg16[%c0_163, %c0_164] : memref<128x512xf32, #tpu.memory_space<vmem>>, vector<128x512xf32>
    %c0_165 = arith.constant 0 : index
    %c0_166 = arith.constant 0 : index
    %c0_167 = arith.constant 0 : index
    %421 = vector.load %arg20[%c0_165, %c0_166, %c0_167] : memref<8x8x512xf32, #tpu.memory_space<vmem>>, vector<1x8x512xf32>
    %422 = vector.shape_cast %421 : vector<1x8x512xf32> to vector<8x512xf32>
    %cst_168 = arith.constant dense<0.000000e+00> : vector<8x512xf32>
    %423 = tpu.matmul %24, %419, %cst_168 {dimension_numbers = #tpu.dot_dimension_numbers<[1], [0], [0], [1], [0, 0, 1, 1], [], []>} : vector<8x128xf32>, vector<128x512xf32>, vector<8x512xf32> -> vector<8x512xf32>
    %424 = arith.addf %423, %422 : vector<8x512xf32>
    %425 = vector.extract_strided_slice %424 {offsets = [0, 0], sizes = [8, 384], strides = [1, 1]} : vector<8x512xf32> to vector<8x384xf32>
    %426 = arith.negf %425 : vector<8x384xf32>
    %427 = math.exp %426 : vector<8x384xf32>
    %cst_169 = arith.constant 1.000000e+00 : f32
    %428 = vector.broadcast %cst_169 : f32 to vector<8x384xf32>
    %429 = arith.addf %428, %427 : vector<8x384xf32>
    %430 = arith.divf %428, %429 : vector<8x384xf32>
    %431 = vector.extract_strided_slice %424 {offsets = [0, 384], sizes = [8, 128], strides = [1, 1]} : vector<8x512xf32> to vector<8x128xf32>
    %432 = math.tanh %431 : vector<8x128xf32>
    %433 = vector.extract_strided_slice %430 {offsets = [0, 128], sizes = [8, 128], strides = [1, 1]} : vector<8x384xf32> to vector<8x128xf32>
    %434 = arith.mulf %433, %24 : vector<8x128xf32>
    %435 = vector.extract_strided_slice %430 {offsets = [0, 0], sizes = [8, 128], strides = [1, 1]} : vector<8x384xf32> to vector<8x128xf32>
    %436 = arith.mulf %435, %432 : vector<8x128xf32>
    %437 = arith.addf %434, %436 : vector<8x128xf32>
    %438 = vector.extract_strided_slice %430 {offsets = [0, 256], sizes = [8, 128], strides = [1, 1]} : vector<8x384xf32> to vector<8x128xf32>
    %439 = math.tanh %437 : vector<8x128xf32>
    %440 = arith.mulf %438, %439 : vector<8x128xf32>
    %c7_170 = arith.constant 7 : index
    %c0_171 = arith.constant 0 : index
    %c0_172 = arith.constant 0 : index
    %441 = vector.load %arg21[%c7_170, %c0_171, %c0_172] : memref<8x8x512xf32, #tpu.memory_space<vmem>>, vector<1x8x512xf32>
    %442 = vector.shape_cast %441 : vector<1x8x512xf32> to vector<8x512xf32>
    %cst_173 = arith.constant dense<0.000000e+00> : vector<8x512xf32>
    %443 = tpu.matmul %24, %420, %cst_173 {dimension_numbers = #tpu.dot_dimension_numbers<[1], [0], [0], [1], [0, 0, 1, 1], [], []>} : vector<8x128xf32>, vector<128x512xf32>, vector<8x512xf32> -> vector<8x512xf32>
    %444 = arith.addf %443, %442 : vector<8x512xf32>
    %445 = vector.extract_strided_slice %444 {offsets = [0, 0], sizes = [8, 384], strides = [1, 1]} : vector<8x512xf32> to vector<8x384xf32>
    %446 = arith.negf %445 : vector<8x384xf32>
    %447 = math.exp %446 : vector<8x384xf32>
    %cst_174 = arith.constant 1.000000e+00 : f32
    %448 = vector.broadcast %cst_174 : f32 to vector<8x384xf32>
    %449 = arith.addf %448, %447 : vector<8x384xf32>
    %450 = arith.divf %448, %449 : vector<8x384xf32>
    %451 = vector.extract_strided_slice %444 {offsets = [0, 384], sizes = [8, 128], strides = [1, 1]} : vector<8x512xf32> to vector<8x128xf32>
    %452 = math.tanh %451 : vector<8x128xf32>
    %453 = vector.extract_strided_slice %450 {offsets = [0, 128], sizes = [8, 128], strides = [1, 1]} : vector<8x384xf32> to vector<8x128xf32>
    %454 = arith.mulf %453, %24 : vector<8x128xf32>
    %455 = vector.extract_strided_slice %450 {offsets = [0, 0], sizes = [8, 128], strides = [1, 1]} : vector<8x384xf32> to vector<8x128xf32>
    %456 = arith.mulf %455, %452 : vector<8x128xf32>
    %457 = arith.addf %454, %456 : vector<8x128xf32>
    %458 = vector.extract_strided_slice %450 {offsets = [0, 256], sizes = [8, 128], strides = [1, 1]} : vector<8x384xf32> to vector<8x128xf32>
    %459 = math.tanh %457 : vector<8x128xf32>
    %460 = arith.mulf %458, %459 : vector<8x128xf32>
    %c1_175 = arith.constant 1 : index
    %c0_176 = arith.constant 0 : index
    %c0_177 = arith.constant 0 : index
    %461 = vector.load %arg20[%c1_175, %c0_176, %c0_177] : memref<8x8x512xf32, #tpu.memory_space<vmem>>, vector<1x8x512xf32>
    %462 = vector.shape_cast %461 : vector<1x8x512xf32> to vector<8x512xf32>
    %cst_178 = arith.constant dense<0.000000e+00> : vector<8x512xf32>
    %463 = tpu.matmul %440, %419, %cst_178 {dimension_numbers = #tpu.dot_dimension_numbers<[1], [0], [0], [1], [0, 0, 1, 1], [], []>} : vector<8x128xf32>, vector<128x512xf32>, vector<8x512xf32> -> vector<8x512xf32>
    %464 = arith.addf %463, %462 : vector<8x512xf32>
    %465 = vector.extract_strided_slice %464 {offsets = [0, 0], sizes = [8, 384], strides = [1, 1]} : vector<8x512xf32> to vector<8x384xf32>
    %466 = arith.negf %465 : vector<8x384xf32>
    %467 = math.exp %466 : vector<8x384xf32>
    %cst_179 = arith.constant 1.000000e+00 : f32
    %468 = vector.broadcast %cst_179 : f32 to vector<8x384xf32>
    %469 = arith.addf %468, %467 : vector<8x384xf32>
    %470 = arith.divf %468, %469 : vector<8x384xf32>
    %471 = vector.extract_strided_slice %464 {offsets = [0, 384], sizes = [8, 128], strides = [1, 1]} : vector<8x512xf32> to vector<8x128xf32>
    %472 = math.tanh %471 : vector<8x128xf32>
    %473 = vector.extract_strided_slice %470 {offsets = [0, 128], sizes = [8, 128], strides = [1, 1]} : vector<8x384xf32> to vector<8x128xf32>
    %474 = arith.mulf %473, %437 : vector<8x128xf32>
    %475 = vector.extract_strided_slice %470 {offsets = [0, 0], sizes = [8, 128], strides = [1, 1]} : vector<8x384xf32> to vector<8x128xf32>
    %476 = arith.mulf %475, %472 : vector<8x128xf32>
    %477 = arith.addf %474, %476 : vector<8x128xf32>
    %478 = vector.extract_strided_slice %470 {offsets = [0, 256], sizes = [8, 128], strides = [1, 1]} : vector<8x384xf32> to vector<8x128xf32>
    %479 = math.tanh %477 : vector<8x128xf32>
    %480 = arith.mulf %478, %479 : vector<8x128xf32>
    %c6_180 = arith.constant 6 : index
    %c0_181 = arith.constant 0 : index
    %c0_182 = arith.constant 0 : index
    %481 = vector.load %arg21[%c6_180, %c0_181, %c0_182] : memref<8x8x512xf32, #tpu.memory_space<vmem>>, vector<1x8x512xf32>
    %482 = vector.shape_cast %481 : vector<1x8x512xf32> to vector<8x512xf32>
    %cst_183 = arith.constant dense<0.000000e+00> : vector<8x512xf32>
    %483 = tpu.matmul %460, %420, %cst_183 {dimension_numbers = #tpu.dot_dimension_numbers<[1], [0], [0], [1], [0, 0, 1, 1], [], []>} : vector<8x128xf32>, vector<128x512xf32>, vector<8x512xf32> -> vector<8x512xf32>
    %484 = arith.addf %483, %482 : vector<8x512xf32>
    %485 = vector.extract_strided_slice %484 {offsets = [0, 0], sizes = [8, 384], strides = [1, 1]} : vector<8x512xf32> to vector<8x384xf32>
    %486 = arith.negf %485 : vector<8x384xf32>
    %487 = math.exp %486 : vector<8x384xf32>
    %cst_184 = arith.constant 1.000000e+00 : f32
    %488 = vector.broadcast %cst_184 : f32 to vector<8x384xf32>
    %489 = arith.addf %488, %487 : vector<8x384xf32>
    %490 = arith.divf %488, %489 : vector<8x384xf32>
    %491 = vector.extract_strided_slice %484 {offsets = [0, 384], sizes = [8, 128], strides = [1, 1]} : vector<8x512xf32> to vector<8x128xf32>
    %492 = math.tanh %491 : vector<8x128xf32>
    %493 = vector.extract_strided_slice %490 {offsets = [0, 128], sizes = [8, 128], strides = [1, 1]} : vector<8x384xf32> to vector<8x128xf32>
    %494 = arith.mulf %493, %457 : vector<8x128xf32>
    %495 = vector.extract_strided_slice %490 {offsets = [0, 0], sizes = [8, 128], strides = [1, 1]} : vector<8x384xf32> to vector<8x128xf32>
    %496 = arith.mulf %495, %492 : vector<8x128xf32>
    %497 = arith.addf %494, %496 : vector<8x128xf32>
    %498 = vector.extract_strided_slice %490 {offsets = [0, 256], sizes = [8, 128], strides = [1, 1]} : vector<8x384xf32> to vector<8x128xf32>
    %499 = math.tanh %497 : vector<8x128xf32>
    %500 = arith.mulf %498, %499 : vector<8x128xf32>
    %c2_185 = arith.constant 2 : index
    %c0_186 = arith.constant 0 : index
    %c0_187 = arith.constant 0 : index
    %501 = vector.load %arg20[%c2_185, %c0_186, %c0_187] : memref<8x8x512xf32, #tpu.memory_space<vmem>>, vector<1x8x512xf32>
    %502 = vector.shape_cast %501 : vector<1x8x512xf32> to vector<8x512xf32>
    %cst_188 = arith.constant dense<0.000000e+00> : vector<8x512xf32>
    %503 = tpu.matmul %480, %419, %cst_188 {dimension_numbers = #tpu.dot_dimension_numbers<[1], [0], [0], [1], [0, 0, 1, 1], [], []>} : vector<8x128xf32>, vector<128x512xf32>, vector<8x512xf32> -> vector<8x512xf32>
    %504 = arith.addf %503, %502 : vector<8x512xf32>
    %505 = vector.extract_strided_slice %504 {offsets = [0, 0], sizes = [8, 384], strides = [1, 1]} : vector<8x512xf32> to vector<8x384xf32>
    %506 = arith.negf %505 : vector<8x384xf32>
    %507 = math.exp %506 : vector<8x384xf32>
    %cst_189 = arith.constant 1.000000e+00 : f32
    %508 = vector.broadcast %cst_189 : f32 to vector<8x384xf32>
    %509 = arith.addf %508, %507 : vector<8x384xf32>
    %510 = arith.divf %508, %509 : vector<8x384xf32>
    %511 = vector.extract_strided_slice %504 {offsets = [0, 384], sizes = [8, 128], strides = [1, 1]} : vector<8x512xf32> to vector<8x128xf32>
    %512 = math.tanh %511 : vector<8x128xf32>
    %513 = vector.extract_strided_slice %510 {offsets = [0, 128], sizes = [8, 128], strides = [1, 1]} : vector<8x384xf32> to vector<8x128xf32>
    %514 = arith.mulf %513, %477 : vector<8x128xf32>
    %515 = vector.extract_strided_slice %510 {offsets = [0, 0], sizes = [8, 128], strides = [1, 1]} : vector<8x384xf32> to vector<8x128xf32>
    %516 = arith.mulf %515, %512 : vector<8x128xf32>
    %517 = arith.addf %514, %516 : vector<8x128xf32>
    %518 = vector.extract_strided_slice %510 {offsets = [0, 256], sizes = [8, 128], strides = [1, 1]} : vector<8x384xf32> to vector<8x128xf32>
    %519 = math.tanh %517 : vector<8x128xf32>
    %520 = arith.mulf %518, %519 : vector<8x128xf32>
    %c5_190 = arith.constant 5 : index
    %c0_191 = arith.constant 0 : index
    %c0_192 = arith.constant 0 : index
    %521 = vector.load %arg21[%c5_190, %c0_191, %c0_192] : memref<8x8x512xf32, #tpu.memory_space<vmem>>, vector<1x8x512xf32>
    %522 = vector.shape_cast %521 : vector<1x8x512xf32> to vector<8x512xf32>
    %cst_193 = arith.constant dense<0.000000e+00> : vector<8x512xf32>
    %523 = tpu.matmul %500, %420, %cst_193 {dimension_numbers = #tpu.dot_dimension_numbers<[1], [0], [0], [1], [0, 0, 1, 1], [], []>} : vector<8x128xf32>, vector<128x512xf32>, vector<8x512xf32> -> vector<8x512xf32>
    %524 = arith.addf %523, %522 : vector<8x512xf32>
    %525 = vector.extract_strided_slice %524 {offsets = [0, 0], sizes = [8, 384], strides = [1, 1]} : vector<8x512xf32> to vector<8x384xf32>
    %526 = arith.negf %525 : vector<8x384xf32>
    %527 = math.exp %526 : vector<8x384xf32>
    %cst_194 = arith.constant 1.000000e+00 : f32
    %528 = vector.broadcast %cst_194 : f32 to vector<8x384xf32>
    %529 = arith.addf %528, %527 : vector<8x384xf32>
    %530 = arith.divf %528, %529 : vector<8x384xf32>
    %531 = vector.extract_strided_slice %524 {offsets = [0, 384], sizes = [8, 128], strides = [1, 1]} : vector<8x512xf32> to vector<8x128xf32>
    %532 = math.tanh %531 : vector<8x128xf32>
    %533 = vector.extract_strided_slice %530 {offsets = [0, 128], sizes = [8, 128], strides = [1, 1]} : vector<8x384xf32> to vector<8x128xf32>
    %534 = arith.mulf %533, %497 : vector<8x128xf32>
    %535 = vector.extract_strided_slice %530 {offsets = [0, 0], sizes = [8, 128], strides = [1, 1]} : vector<8x384xf32> to vector<8x128xf32>
    %536 = arith.mulf %535, %532 : vector<8x128xf32>
    %537 = arith.addf %534, %536 : vector<8x128xf32>
    %538 = vector.extract_strided_slice %530 {offsets = [0, 256], sizes = [8, 128], strides = [1, 1]} : vector<8x384xf32> to vector<8x128xf32>
    %539 = math.tanh %537 : vector<8x128xf32>
    %540 = arith.mulf %538, %539 : vector<8x128xf32>
    %c3_195 = arith.constant 3 : index
    %c0_196 = arith.constant 0 : index
    %c0_197 = arith.constant 0 : index
    %541 = vector.load %arg20[%c3_195, %c0_196, %c0_197] : memref<8x8x512xf32, #tpu.memory_space<vmem>>, vector<1x8x512xf32>
    %542 = vector.shape_cast %541 : vector<1x8x512xf32> to vector<8x512xf32>
    %cst_198 = arith.constant dense<0.000000e+00> : vector<8x512xf32>
    %543 = tpu.matmul %520, %419, %cst_198 {dimension_numbers = #tpu.dot_dimension_numbers<[1], [0], [0], [1], [0, 0, 1, 1], [], []>} : vector<8x128xf32>, vector<128x512xf32>, vector<8x512xf32> -> vector<8x512xf32>
    %544 = arith.addf %543, %542 : vector<8x512xf32>
    %545 = vector.extract_strided_slice %544 {offsets = [0, 0], sizes = [8, 384], strides = [1, 1]} : vector<8x512xf32> to vector<8x384xf32>
    %546 = arith.negf %545 : vector<8x384xf32>
    %547 = math.exp %546 : vector<8x384xf32>
    %cst_199 = arith.constant 1.000000e+00 : f32
    %548 = vector.broadcast %cst_199 : f32 to vector<8x384xf32>
    %549 = arith.addf %548, %547 : vector<8x384xf32>
    %550 = arith.divf %548, %549 : vector<8x384xf32>
    %551 = vector.extract_strided_slice %544 {offsets = [0, 384], sizes = [8, 128], strides = [1, 1]} : vector<8x512xf32> to vector<8x128xf32>
    %552 = math.tanh %551 : vector<8x128xf32>
    %553 = vector.extract_strided_slice %550 {offsets = [0, 128], sizes = [8, 128], strides = [1, 1]} : vector<8x384xf32> to vector<8x128xf32>
    %554 = arith.mulf %553, %517 : vector<8x128xf32>
    %555 = vector.extract_strided_slice %550 {offsets = [0, 0], sizes = [8, 128], strides = [1, 1]} : vector<8x384xf32> to vector<8x128xf32>
    %556 = arith.mulf %555, %552 : vector<8x128xf32>
    %557 = arith.addf %554, %556 : vector<8x128xf32>
    %558 = vector.extract_strided_slice %550 {offsets = [0, 256], sizes = [8, 128], strides = [1, 1]} : vector<8x384xf32> to vector<8x128xf32>
    %559 = math.tanh %557 : vector<8x128xf32>
    %560 = arith.mulf %558, %559 : vector<8x128xf32>
    %c4_200 = arith.constant 4 : index
    %c0_201 = arith.constant 0 : index
    %c0_202 = arith.constant 0 : index
    %561 = vector.load %arg21[%c4_200, %c0_201, %c0_202] : memref<8x8x512xf32, #tpu.memory_space<vmem>>, vector<1x8x512xf32>
    %562 = vector.shape_cast %561 : vector<1x8x512xf32> to vector<8x512xf32>
    %cst_203 = arith.constant dense<0.000000e+00> : vector<8x512xf32>
    %563 = tpu.matmul %540, %420, %cst_203 {dimension_numbers = #tpu.dot_dimension_numbers<[1], [0], [0], [1], [0, 0, 1, 1], [], []>} : vector<8x128xf32>, vector<128x512xf32>, vector<8x512xf32> -> vector<8x512xf32>
    %564 = arith.addf %563, %562 : vector<8x512xf32>
    %565 = vector.extract_strided_slice %564 {offsets = [0, 0], sizes = [8, 384], strides = [1, 1]} : vector<8x512xf32> to vector<8x384xf32>
    %566 = arith.negf %565 : vector<8x384xf32>
    %567 = math.exp %566 : vector<8x384xf32>
    %cst_204 = arith.constant 1.000000e+00 : f32
    %568 = vector.broadcast %cst_204 : f32 to vector<8x384xf32>
    %569 = arith.addf %568, %567 : vector<8x384xf32>
    %570 = arith.divf %568, %569 : vector<8x384xf32>
    %571 = vector.extract_strided_slice %564 {offsets = [0, 384], sizes = [8, 128], strides = [1, 1]} : vector<8x512xf32> to vector<8x128xf32>
    %572 = math.tanh %571 : vector<8x128xf32>
    %573 = vector.extract_strided_slice %570 {offsets = [0, 128], sizes = [8, 128], strides = [1, 1]} : vector<8x384xf32> to vector<8x128xf32>
    %574 = arith.mulf %573, %537 : vector<8x128xf32>
    %575 = vector.extract_strided_slice %570 {offsets = [0, 0], sizes = [8, 128], strides = [1, 1]} : vector<8x384xf32> to vector<8x128xf32>
    %576 = arith.mulf %575, %572 : vector<8x128xf32>
    %577 = arith.addf %574, %576 : vector<8x128xf32>
    %578 = vector.extract_strided_slice %570 {offsets = [0, 256], sizes = [8, 128], strides = [1, 1]} : vector<8x384xf32> to vector<8x128xf32>
    %579 = math.tanh %577 : vector<8x128xf32>
    %580 = arith.mulf %578, %579 : vector<8x128xf32>
    %c4_205 = arith.constant 4 : index
    %c0_206 = arith.constant 0 : index
    %c0_207 = arith.constant 0 : index
    %581 = vector.load %arg20[%c4_205, %c0_206, %c0_207] : memref<8x8x512xf32, #tpu.memory_space<vmem>>, vector<1x8x512xf32>
    %582 = vector.shape_cast %581 : vector<1x8x512xf32> to vector<8x512xf32>
    %cst_208 = arith.constant dense<0.000000e+00> : vector<8x512xf32>
    %583 = tpu.matmul %560, %419, %cst_208 {dimension_numbers = #tpu.dot_dimension_numbers<[1], [0], [0], [1], [0, 0, 1, 1], [], []>} : vector<8x128xf32>, vector<128x512xf32>, vector<8x512xf32> -> vector<8x512xf32>
    %584 = arith.addf %583, %582 : vector<8x512xf32>
    %585 = vector.extract_strided_slice %584 {offsets = [0, 0], sizes = [8, 384], strides = [1, 1]} : vector<8x512xf32> to vector<8x384xf32>
    %586 = arith.negf %585 : vector<8x384xf32>
    %587 = math.exp %586 : vector<8x384xf32>
    %cst_209 = arith.constant 1.000000e+00 : f32
    %588 = vector.broadcast %cst_209 : f32 to vector<8x384xf32>
    %589 = arith.addf %588, %587 : vector<8x384xf32>
    %590 = arith.divf %588, %589 : vector<8x384xf32>
    %591 = vector.extract_strided_slice %584 {offsets = [0, 384], sizes = [8, 128], strides = [1, 1]} : vector<8x512xf32> to vector<8x128xf32>
    %592 = math.tanh %591 : vector<8x128xf32>
    %593 = vector.extract_strided_slice %590 {offsets = [0, 128], sizes = [8, 128], strides = [1, 1]} : vector<8x384xf32> to vector<8x128xf32>
    %594 = arith.mulf %593, %557 : vector<8x128xf32>
    %595 = vector.extract_strided_slice %590 {offsets = [0, 0], sizes = [8, 128], strides = [1, 1]} : vector<8x384xf32> to vector<8x128xf32>
    %596 = arith.mulf %595, %592 : vector<8x128xf32>
    %597 = arith.addf %594, %596 : vector<8x128xf32>
    %598 = vector.extract_strided_slice %590 {offsets = [0, 256], sizes = [8, 128], strides = [1, 1]} : vector<8x384xf32> to vector<8x128xf32>
    %599 = math.tanh %597 : vector<8x128xf32>
    %600 = arith.mulf %598, %599 : vector<8x128xf32>
    %c3_210 = arith.constant 3 : index
    %c0_211 = arith.constant 0 : index
    %c0_212 = arith.constant 0 : index
    %601 = vector.load %arg21[%c3_210, %c0_211, %c0_212] : memref<8x8x512xf32, #tpu.memory_space<vmem>>, vector<1x8x512xf32>
    %602 = vector.shape_cast %601 : vector<1x8x512xf32> to vector<8x512xf32>
    %cst_213 = arith.constant dense<0.000000e+00> : vector<8x512xf32>
    %603 = tpu.matmul %580, %420, %cst_213 {dimension_numbers = #tpu.dot_dimension_numbers<[1], [0], [0], [1], [0, 0, 1, 1], [], []>} : vector<8x128xf32>, vector<128x512xf32>, vector<8x512xf32> -> vector<8x512xf32>
    %604 = arith.addf %603, %602 : vector<8x512xf32>
    %605 = vector.extract_strided_slice %604 {offsets = [0, 0], sizes = [8, 384], strides = [1, 1]} : vector<8x512xf32> to vector<8x384xf32>
    %606 = arith.negf %605 : vector<8x384xf32>
    %607 = math.exp %606 : vector<8x384xf32>
    %cst_214 = arith.constant 1.000000e+00 : f32
    %608 = vector.broadcast %cst_214 : f32 to vector<8x384xf32>
    %609 = arith.addf %608, %607 : vector<8x384xf32>
    %610 = arith.divf %608, %609 : vector<8x384xf32>
    %611 = vector.extract_strided_slice %604 {offsets = [0, 384], sizes = [8, 128], strides = [1, 1]} : vector<8x512xf32> to vector<8x128xf32>
    %612 = math.tanh %611 : vector<8x128xf32>
    %613 = vector.extract_strided_slice %610 {offsets = [0, 128], sizes = [8, 128], strides = [1, 1]} : vector<8x384xf32> to vector<8x128xf32>
    %614 = arith.mulf %613, %577 : vector<8x128xf32>
    %615 = vector.extract_strided_slice %610 {offsets = [0, 0], sizes = [8, 128], strides = [1, 1]} : vector<8x384xf32> to vector<8x128xf32>
    %616 = arith.mulf %615, %612 : vector<8x128xf32>
    %617 = arith.addf %614, %616 : vector<8x128xf32>
    %618 = vector.extract_strided_slice %610 {offsets = [0, 256], sizes = [8, 128], strides = [1, 1]} : vector<8x384xf32> to vector<8x128xf32>
    %619 = math.tanh %617 : vector<8x128xf32>
    %620 = arith.mulf %618, %619 : vector<8x128xf32>
    %c5_215 = arith.constant 5 : index
    %c0_216 = arith.constant 0 : index
    %c0_217 = arith.constant 0 : index
    %621 = vector.load %arg20[%c5_215, %c0_216, %c0_217] : memref<8x8x512xf32, #tpu.memory_space<vmem>>, vector<1x8x512xf32>
    %622 = vector.shape_cast %621 : vector<1x8x512xf32> to vector<8x512xf32>
    %cst_218 = arith.constant dense<0.000000e+00> : vector<8x512xf32>
    %623 = tpu.matmul %600, %419, %cst_218 {dimension_numbers = #tpu.dot_dimension_numbers<[1], [0], [0], [1], [0, 0, 1, 1], [], []>} : vector<8x128xf32>, vector<128x512xf32>, vector<8x512xf32> -> vector<8x512xf32>
    %624 = arith.addf %623, %622 : vector<8x512xf32>
    %625 = vector.extract_strided_slice %624 {offsets = [0, 0], sizes = [8, 384], strides = [1, 1]} : vector<8x512xf32> to vector<8x384xf32>
    %626 = arith.negf %625 : vector<8x384xf32>
    %627 = math.exp %626 : vector<8x384xf32>
    %cst_219 = arith.constant 1.000000e+00 : f32
    %628 = vector.broadcast %cst_219 : f32 to vector<8x384xf32>
    %629 = arith.addf %628, %627 : vector<8x384xf32>
    %630 = arith.divf %628, %629 : vector<8x384xf32>
    %631 = vector.extract_strided_slice %624 {offsets = [0, 384], sizes = [8, 128], strides = [1, 1]} : vector<8x512xf32> to vector<8x128xf32>
    %632 = math.tanh %631 : vector<8x128xf32>
    %633 = vector.extract_strided_slice %630 {offsets = [0, 128], sizes = [8, 128], strides = [1, 1]} : vector<8x384xf32> to vector<8x128xf32>
    %634 = arith.mulf %633, %597 : vector<8x128xf32>
    %635 = vector.extract_strided_slice %630 {offsets = [0, 0], sizes = [8, 128], strides = [1, 1]} : vector<8x384xf32> to vector<8x128xf32>
    %636 = arith.mulf %635, %632 : vector<8x128xf32>
    %637 = arith.addf %634, %636 : vector<8x128xf32>
    %638 = vector.extract_strided_slice %630 {offsets = [0, 256], sizes = [8, 128], strides = [1, 1]} : vector<8x384xf32> to vector<8x128xf32>
    %639 = math.tanh %637 : vector<8x128xf32>
    %640 = arith.mulf %638, %639 : vector<8x128xf32>
    %c2_220 = arith.constant 2 : index
    %c0_221 = arith.constant 0 : index
    %c0_222 = arith.constant 0 : index
    %641 = vector.load %arg21[%c2_220, %c0_221, %c0_222] : memref<8x8x512xf32, #tpu.memory_space<vmem>>, vector<1x8x512xf32>
    %642 = vector.shape_cast %641 : vector<1x8x512xf32> to vector<8x512xf32>
    %cst_223 = arith.constant dense<0.000000e+00> : vector<8x512xf32>
    %643 = tpu.matmul %620, %420, %cst_223 {dimension_numbers = #tpu.dot_dimension_numbers<[1], [0], [0], [1], [0, 0, 1, 1], [], []>} : vector<8x128xf32>, vector<128x512xf32>, vector<8x512xf32> -> vector<8x512xf32>
    %644 = arith.addf %643, %642 : vector<8x512xf32>
    %645 = vector.extract_strided_slice %644 {offsets = [0, 0], sizes = [8, 384], strides = [1, 1]} : vector<8x512xf32> to vector<8x384xf32>
    %646 = arith.negf %645 : vector<8x384xf32>
    %647 = math.exp %646 : vector<8x384xf32>
    %cst_224 = arith.constant 1.000000e+00 : f32
    %648 = vector.broadcast %cst_224 : f32 to vector<8x384xf32>
    %649 = arith.addf %648, %647 : vector<8x384xf32>
    %650 = arith.divf %648, %649 : vector<8x384xf32>
    %651 = vector.extract_strided_slice %644 {offsets = [0, 384], sizes = [8, 128], strides = [1, 1]} : vector<8x512xf32> to vector<8x128xf32>
    %652 = math.tanh %651 : vector<8x128xf32>
    %653 = vector.extract_strided_slice %650 {offsets = [0, 128], sizes = [8, 128], strides = [1, 1]} : vector<8x384xf32> to vector<8x128xf32>
    %654 = arith.mulf %653, %617 : vector<8x128xf32>
    %655 = vector.extract_strided_slice %650 {offsets = [0, 0], sizes = [8, 128], strides = [1, 1]} : vector<8x384xf32> to vector<8x128xf32>
    %656 = arith.mulf %655, %652 : vector<8x128xf32>
    %657 = arith.addf %654, %656 : vector<8x128xf32>
    %658 = vector.extract_strided_slice %650 {offsets = [0, 256], sizes = [8, 128], strides = [1, 1]} : vector<8x384xf32> to vector<8x128xf32>
    %659 = math.tanh %657 : vector<8x128xf32>
    %660 = arith.mulf %658, %659 : vector<8x128xf32>
    %c6_225 = arith.constant 6 : index
    %c0_226 = arith.constant 0 : index
    %c0_227 = arith.constant 0 : index
    %661 = vector.load %arg20[%c6_225, %c0_226, %c0_227] : memref<8x8x512xf32, #tpu.memory_space<vmem>>, vector<1x8x512xf32>
    %662 = vector.shape_cast %661 : vector<1x8x512xf32> to vector<8x512xf32>
    %cst_228 = arith.constant dense<0.000000e+00> : vector<8x512xf32>
    %663 = tpu.matmul %640, %419, %cst_228 {dimension_numbers = #tpu.dot_dimension_numbers<[1], [0], [0], [1], [0, 0, 1, 1], [], []>} : vector<8x128xf32>, vector<128x512xf32>, vector<8x512xf32> -> vector<8x512xf32>
    %664 = arith.addf %663, %662 : vector<8x512xf32>
    %665 = vector.extract_strided_slice %664 {offsets = [0, 0], sizes = [8, 384], strides = [1, 1]} : vector<8x512xf32> to vector<8x384xf32>
    %666 = arith.negf %665 : vector<8x384xf32>
    %667 = math.exp %666 : vector<8x384xf32>
    %cst_229 = arith.constant 1.000000e+00 : f32
    %668 = vector.broadcast %cst_229 : f32 to vector<8x384xf32>
    %669 = arith.addf %668, %667 : vector<8x384xf32>
    %670 = arith.divf %668, %669 : vector<8x384xf32>
    %671 = vector.extract_strided_slice %664 {offsets = [0, 384], sizes = [8, 128], strides = [1, 1]} : vector<8x512xf32> to vector<8x128xf32>
    %672 = math.tanh %671 : vector<8x128xf32>
    %673 = vector.extract_strided_slice %670 {offsets = [0, 128], sizes = [8, 128], strides = [1, 1]} : vector<8x384xf32> to vector<8x128xf32>
    %674 = arith.mulf %673, %637 : vector<8x128xf32>
    %675 = vector.extract_strided_slice %670 {offsets = [0, 0], sizes = [8, 128], strides = [1, 1]} : vector<8x384xf32> to vector<8x128xf32>
    %676 = arith.mulf %675, %672 : vector<8x128xf32>
    %677 = arith.addf %674, %676 : vector<8x128xf32>
    %678 = vector.extract_strided_slice %670 {offsets = [0, 256], sizes = [8, 128], strides = [1, 1]} : vector<8x384xf32> to vector<8x128xf32>
    %679 = math.tanh %677 : vector<8x128xf32>
    %680 = arith.mulf %678, %679 : vector<8x128xf32>
    %c1_230 = arith.constant 1 : index
    %c0_231 = arith.constant 0 : index
    %c0_232 = arith.constant 0 : index
    %681 = vector.load %arg21[%c1_230, %c0_231, %c0_232] : memref<8x8x512xf32, #tpu.memory_space<vmem>>, vector<1x8x512xf32>
    %682 = vector.shape_cast %681 : vector<1x8x512xf32> to vector<8x512xf32>
    %cst_233 = arith.constant dense<0.000000e+00> : vector<8x512xf32>
    %683 = tpu.matmul %660, %420, %cst_233 {dimension_numbers = #tpu.dot_dimension_numbers<[1], [0], [0], [1], [0, 0, 1, 1], [], []>} : vector<8x128xf32>, vector<128x512xf32>, vector<8x512xf32> -> vector<8x512xf32>
    %684 = arith.addf %683, %682 : vector<8x512xf32>
    %685 = vector.extract_strided_slice %684 {offsets = [0, 0], sizes = [8, 384], strides = [1, 1]} : vector<8x512xf32> to vector<8x384xf32>
    %686 = arith.negf %685 : vector<8x384xf32>
    %687 = math.exp %686 : vector<8x384xf32>
    %cst_234 = arith.constant 1.000000e+00 : f32
    %688 = vector.broadcast %cst_234 : f32 to vector<8x384xf32>
    %689 = arith.addf %688, %687 : vector<8x384xf32>
    %690 = arith.divf %688, %689 : vector<8x384xf32>
    %691 = vector.extract_strided_slice %684 {offsets = [0, 384], sizes = [8, 128], strides = [1, 1]} : vector<8x512xf32> to vector<8x128xf32>
    %692 = math.tanh %691 : vector<8x128xf32>
    %693 = vector.extract_strided_slice %690 {offsets = [0, 128], sizes = [8, 128], strides = [1, 1]} : vector<8x384xf32> to vector<8x128xf32>
    %694 = arith.mulf %693, %657 : vector<8x128xf32>
    %695 = vector.extract_strided_slice %690 {offsets = [0, 0], sizes = [8, 128], strides = [1, 1]} : vector<8x384xf32> to vector<8x128xf32>
    %696 = arith.mulf %695, %692 : vector<8x128xf32>
    %697 = arith.addf %694, %696 : vector<8x128xf32>
    %698 = vector.extract_strided_slice %690 {offsets = [0, 256], sizes = [8, 128], strides = [1, 1]} : vector<8x384xf32> to vector<8x128xf32>
    %699 = math.tanh %697 : vector<8x128xf32>
    %700 = arith.mulf %698, %699 : vector<8x128xf32>
    %c7_235 = arith.constant 7 : index
    %c0_236 = arith.constant 0 : index
    %c0_237 = arith.constant 0 : index
    %701 = vector.load %arg20[%c7_235, %c0_236, %c0_237] : memref<8x8x512xf32, #tpu.memory_space<vmem>>, vector<1x8x512xf32>
    %702 = vector.shape_cast %701 : vector<1x8x512xf32> to vector<8x512xf32>
    %cst_238 = arith.constant dense<0.000000e+00> : vector<8x512xf32>
    %703 = tpu.matmul %680, %419, %cst_238 {dimension_numbers = #tpu.dot_dimension_numbers<[1], [0], [0], [1], [0, 0, 1, 1], [], []>} : vector<8x128xf32>, vector<128x512xf32>, vector<8x512xf32> -> vector<8x512xf32>
    %704 = arith.addf %703, %702 : vector<8x512xf32>
    %705 = vector.extract_strided_slice %704 {offsets = [0, 0], sizes = [8, 384], strides = [1, 1]} : vector<8x512xf32> to vector<8x384xf32>
    %706 = arith.negf %705 : vector<8x384xf32>
    %707 = math.exp %706 : vector<8x384xf32>
    %cst_239 = arith.constant 1.000000e+00 : f32
    %708 = vector.broadcast %cst_239 : f32 to vector<8x384xf32>
    %709 = arith.addf %708, %707 : vector<8x384xf32>
    %710 = arith.divf %708, %709 : vector<8x384xf32>
    %711 = vector.extract_strided_slice %704 {offsets = [0, 384], sizes = [8, 128], strides = [1, 1]} : vector<8x512xf32> to vector<8x128xf32>
    %712 = math.tanh %711 : vector<8x128xf32>
    %713 = vector.extract_strided_slice %710 {offsets = [0, 128], sizes = [8, 128], strides = [1, 1]} : vector<8x384xf32> to vector<8x128xf32>
    %714 = arith.mulf %713, %677 : vector<8x128xf32>
    %715 = vector.extract_strided_slice %710 {offsets = [0, 0], sizes = [8, 128], strides = [1, 1]} : vector<8x384xf32> to vector<8x128xf32>
    %716 = arith.mulf %715, %712 : vector<8x128xf32>
    %717 = arith.addf %714, %716 : vector<8x128xf32>
    %718 = vector.extract_strided_slice %710 {offsets = [0, 256], sizes = [8, 128], strides = [1, 1]} : vector<8x384xf32> to vector<8x128xf32>
    %719 = math.tanh %717 : vector<8x128xf32>
    %720 = arith.mulf %718, %719 : vector<8x128xf32>
    %c0_240 = arith.constant 0 : index
    %c0_241 = arith.constant 0 : index
    %c0_242 = arith.constant 0 : index
    %721 = vector.load %arg21[%c0_240, %c0_241, %c0_242] : memref<8x8x512xf32, #tpu.memory_space<vmem>>, vector<1x8x512xf32>
    %722 = vector.shape_cast %721 : vector<1x8x512xf32> to vector<8x512xf32>
    %cst_243 = arith.constant dense<0.000000e+00> : vector<8x512xf32>
    %723 = tpu.matmul %700, %420, %cst_243 {dimension_numbers = #tpu.dot_dimension_numbers<[1], [0], [0], [1], [0, 0, 1, 1], [], []>} : vector<8x128xf32>, vector<128x512xf32>, vector<8x512xf32> -> vector<8x512xf32>
    %724 = arith.addf %723, %722 : vector<8x512xf32>
    %725 = vector.extract_strided_slice %724 {offsets = [0, 0], sizes = [8, 384], strides = [1, 1]} : vector<8x512xf32> to vector<8x384xf32>
    %726 = arith.negf %725 : vector<8x384xf32>
    %727 = math.exp %726 : vector<8x384xf32>
    %cst_244 = arith.constant 1.000000e+00 : f32
    %728 = vector.broadcast %cst_244 : f32 to vector<8x384xf32>
    %729 = arith.addf %728, %727 : vector<8x384xf32>
    %730 = arith.divf %728, %729 : vector<8x384xf32>
    %731 = vector.extract_strided_slice %724 {offsets = [0, 384], sizes = [8, 128], strides = [1, 1]} : vector<8x512xf32> to vector<8x128xf32>
    %732 = math.tanh %731 : vector<8x128xf32>
    %733 = vector.extract_strided_slice %730 {offsets = [0, 128], sizes = [8, 128], strides = [1, 1]} : vector<8x384xf32> to vector<8x128xf32>
    %734 = arith.mulf %733, %697 : vector<8x128xf32>
    %735 = vector.extract_strided_slice %730 {offsets = [0, 0], sizes = [8, 128], strides = [1, 1]} : vector<8x384xf32> to vector<8x128xf32>
    %736 = arith.mulf %735, %732 : vector<8x128xf32>
    %737 = arith.addf %734, %736 : vector<8x128xf32>
    %738 = vector.extract_strided_slice %730 {offsets = [0, 256], sizes = [8, 128], strides = [1, 1]} : vector<8x384xf32> to vector<8x128xf32>
    %739 = math.tanh %737 : vector<8x128xf32>
    %740 = arith.mulf %738, %739 : vector<8x128xf32>
    %c4_i32_245 = arith.constant 4 : i32
    %741 = tpu.memref_slice %arg24[%c4_i32_245] : memref<5x!tpu.dma_semaphore, #tpu.memory_space<semaphore_mem>> -> memref<1x!tpu.dma_semaphore, #tpu.memory_space<semaphore_mem>>
    %742 = tpu.memref_squeeze %741 : memref<1x!tpu.dma_semaphore, #tpu.memory_space<semaphore_mem>> -> memref<!tpu.dma_semaphore, #tpu.memory_space<semaphore_mem>>
    tpu.wait_dma2 semaphore(%742 : memref<!tpu.dma_semaphore, #tpu.memory_space<semaphore_mem>>) src(%arg10 : memref<256x128xf32, #tpu.memory_space<any>>) dst(%arg17 : memref<256x128xf32, #tpu.memory_space<vmem>>)
    %743 = tpu.concatenate %720, %740 in 1 : vector<8x128xf32>, vector<8x128xf32> -> vector<8x256xf32>
    %c0_246 = arith.constant 0 : index
    %c0_247 = arith.constant 0 : index
    %744 = vector.load %arg17[%c0_246, %c0_247] : memref<256x128xf32, #tpu.memory_space<vmem>>, vector<256x128xf32>
    %cst_248 = arith.constant dense<0.000000e+00> : vector<8x128xf32>
    %745 = tpu.matmul %743, %744, %cst_248 {dimension_numbers = #tpu.dot_dimension_numbers<[1], [0], [0], [1], [0, 0, 1, 1], [], []>} : vector<8x256xf32>, vector<256x128xf32>, vector<8x128xf32> -> vector<8x128xf32>
    %c0_249 = arith.constant 0 : index
    %c0_250 = arith.constant 0 : index
    %746 = vector.load %arg11[%c0_249, %c0_250] : memref<1x128xf32, #tpu.memory_space<vmem>>, vector<1x128xf32>
    %747 = vector.broadcast %746 : vector<1x128xf32> to vector<8x128xf32>
    %748 = arith.addf %745, %747 : vector<8x128xf32>
    %c0_251 = arith.constant 0 : index
    %c0_252 = arith.constant 0 : index
    %749 = vector.load %arg12[%c0_251, %c0_252] : memref<8x128xf32, #tpu.memory_space<vmem>>, vector<8x128xf32>
    tpu.vector_store %arg12[%c0_251, %c0_252], %748 {strides = array<i32>} : memref<8x128xf32, #tpu.memory_space<vmem>>, vector<8x128xf32>,
    return
  }
}

</mosaic_0001>

<llo_original>
// kernel: tpu_custom_call.1
$region0: #{tpu_custom_call.1}
  #allocation0 [shape = 'u32[]', space=smem, size = 0x4, offset = 0x4, fixed_abs, tag = 'smem constant byte address 0x4 - core index']
  #allocation1 [shape = 'u32[144,128]{1,0:T(1,128)}', space=vmem, size = 0x12000, scoped, tag = 'internal scratch']
  #allocation2 [shape = 'f32[128,1024]{1,0:T(8,128)}', space=vmem, size = 0x80000, scoped, tag = 'scratch operand']
  #allocation3 [shape = 'f32[128,1024]{1,0:T(8,128)}', space=vmem, size = 0x80000, scoped, tag = 'scratch operand']
  #allocation4 [shape = 'f32[128,512]{1,0:T(8,128)}', space=vmem, size = 0x40000, scoped, tag = 'scratch operand']
  #allocation5 [shape = 'f32[128,512]{1,0:T(8,128)}', space=vmem, size = 0x40000, scoped, tag = 'scratch operand']
  #allocation6 [shape = 'f32[256,128]{1,0:T(8,128)}', space=vmem, size = 0x20000, scoped, tag = 'scratch operand']
  #allocation7 [shape = 'f32[8,8,512]{2,1,0:T(8,128)}', space=vmem, size = 0x20000, scoped, tag = 'scratch operand']
  #allocation8 [shape = 'f32[8,8,512]{2,1,0:T(8,128)}', space=vmem, size = 0x20000, scoped, tag = 'scratch operand']
  #allocation9 [shape = 'f32[8,8,512]{2,1,0:T(8,128)}', space=vmem, size = 0x20000, scoped, tag = 'scratch operand']
  #allocation10 [shape = 'f32[8,8,512]{2,1,0:T(8,128)}', space=vmem, size = 0x20000, scoped, tag = 'scratch operand']
  #allocation11 [shape = 'f32[8,8,128]{2,1,0:T(8,128)}', space=vmem, size = 0x8000, scoped, tag = 'scratch operand']
  #allocation12 [shape = 'f32[8,8,128]{2,1,0:T(8,128)}', space=vmem, size = 0x8000, scoped, tag = 'scratch operand']
  #allocation13 [shape = 's32[5]{0}', space=sflag, size = 0x14, scoped, tag = 'scratch operand']
  #allocation24 [shape = 's32[]', space=sflag, size = 0x4, offset = 0, fixed_abs, tag = 'sflag constant byte address 0x0 - dummy sync flag']
  #allocation25 [shape = 's32[]', space=sflag, size = 0x4, offset = 0, fixed_abs, tag = 'sflag constant byte address 0x0 - dummy sync flag']
  #allocation26 [shape = 'u32[]', space=smem, size = 0x4, offset = 0x44, fixed_abs, tag = 'smem constant byte address 0x44 - assertion arg 0']
  #allocation27 [shape = 'u32[]', space=smem, size = 0x4, offset = 0x48, fixed_abs, tag = 'smem constant byte address 0x48 - assertion arg 1']
  #allocation28 [shape = 's32[]', space=sflag, size = 0x4, offset = 0, fixed_abs, tag = 'sflag constant byte address 0x0 - dummy sync flag']
  #allocation29 [shape = 's32[]', space=sflag, size = 0x4, offset = 0, fixed_abs, tag = 'sflag constant byte address 0x0 - dummy sync flag']
  #allocation30 [shape = 's32[]', space=sflag, size = 0x4, offset = 0, fixed_abs, tag = 'sflag constant byte address 0x0 - dummy sync flag']
  #allocation31 [shape = 's32[]', space=sflag, size = 0x4, offset = 0, fixed_abs, tag = 'sflag constant byte address 0x0 - dummy sync flag']
  #allocation32 [shape = 's32[]', space=sflag, size = 0x4, offset = 0, fixed_abs, tag = 'sflag constant byte address 0x0 - dummy sync flag']
  #allocation33 [shape = 's32[]', space=sflag, size = 0x4, offset = 0, fixed_abs, tag = 'sflag constant byte address 0x0 - dummy sync flag']
  #allocation34 [shape = 's32[]', space=sflag, size = 0x4, offset = 0, fixed_abs, tag = 'sflag constant byte address 0x0 - dummy sync flag']
  #allocation35 [shape = 's32[]', space=sflag, size = 0x4, offset = 0, fixed_abs, tag = 'sflag constant byte address 0x0 - dummy sync flag']
  %s0 = inlined_call_operand.hbm [shape: f32[64,128], index: 0, kind: input, shape index: {}]
  %s1 = inlined_call_operand.hbm [shape: f32[128,1024], index: 1, kind: input, shape index: {}]
  %s2 = inlined_call_operand.hbm [shape: f32[1,1024], index: 2, kind: input, shape index: {}]
  %s3 = inlined_call_operand.hbm [shape: f32[128,512], index: 3, kind: input, shape index: {}]
  %s4 = inlined_call_operand.hbm [shape: f32[128,512], index: 4, kind: input, shape index: {}]
  %s5 = inlined_call_operand.vmem [shape: f32[1,1024], index: 5, kind: input, shape index: {}]
  %s6 = inlined_call_operand.hbm [shape: f32[128,1024], index: 6, kind: input, shape index: {}]
  %s7 = inlined_call_operand.hbm [shape: f32[128,1024], index: 7, kind: input, shape index: {}]
  %s8 = inlined_call_operand.hbm [shape: f32[128,512], index: 8, kind: input, shape index: {}]
  %s9 = inlined_call_operand.hbm [shape: f32[128,512], index: 9, kind: input, shape index: {}]
  %s10 = inlined_call_operand.hbm [shape: f32[256,128], index: 10, kind: input, shape index: {}]
  %s11 = inlined_call_operand.vmem [shape: f32[1,128], index: 11, kind: input, shape index: {}]
  %s12 = inlined_call_operand.hbm [shape: f32[8,128], index: 12, kind: output, shape index: {}]
  %s13 = sld [smem:[#allocation0]]
  $region78: #{tpu_custom_call.1} parent=0
    _
  %s15 = ssub.s32 1, %s13
  %s16 = scalar_select 0, %s15, %s13
  $region1: #{tpu_custom_call.1} parent=0
    #allocation14 [shape = 'u8[32768]{0}', space=vmem, size = 0x8000, scoped, tag = 'input window, operand 0, single buffered']
    #allocation15 [shape = 's32[1]{0}', space=sflag, size = 0x4, scoped, tag = 'scoped memory for tpu_custom_call.1']
    #allocation16 [shape = 's32[1]{0}', space=sflag, size = 0x4, scoped, tag = 'scoped memory for tpu_custom_call.1']
    #allocation17 [shape = 'u8[524288]{0}', space=vmem, size = 0x80000, scoped, tag = 'input window, operand 1, single buffered']
    #allocation18 [shape = 's32[1]{0}', space=sflag, size = 0x4, scoped, tag = 'scoped memory for tpu_custom_call.1']
    #allocation19 [shape = 'u8[4096]{0}', space=vmem, size = 0x1000, scoped, tag = 'input window, operand 2, single buffered']
    #allocation20 [shape = 'u8[262144]{0}', space=vmem, size = 0x40000, scoped, tag = 'input window, operand 3, single buffered']
    #allocation21 [shape = 's32[1]{0}', space=sflag, size = 0x4, scoped, tag = 'scoped memory for tpu_custom_call.1']
    #allocation22 [shape = 'u8[262144]{0}', space=vmem, size = 0x40000, scoped, tag = 'input window, operand 4, single buffered']
    #allocation23 [shape = 'u8[4096]{0}', space=vmem, size = 0x1000, scoped, tag = 'output window, operand 0, single buffered']
    %17 = vsyncpa [#allocation15], 0
    %18 = vsyncpa [#allocation18], 0
    %19 = vsyncpa [#allocation21], 0
    %20 = vsyncpa [#allocation16], 0
    // Predicated region
    $region2: #{tpu_custom_call.1} parent=1 // pred_check
      _
    $region3: #{tpu_custom_call.1} parent=1 // pred_check_branch
      %22 = sbr.rel (0) target = $region5
    $region4: #{tpu_custom_call.1} parent=1 // pred_region
      %s24 = ssub.s32 1024, 1024
      %25 = vsyncadd [#allocation15], %s24
      %s26 = sshll.u32 [#allocation14], 4
      %s27 = int_to_ptr.vmem [resolvable:$true] %s26
      %32 = dma.hbm_to_vmem [thread:$0]  %s0, 1024, %s27, [#allocation15], 128, 128, 8
    $region5: #{tpu_custom_call.1} parent=1 // pred_fallthru
      _
    // Predicated region
    $region6: #{tpu_custom_call.1} parent=1 // pred_check
      _
    $region7: #{tpu_custom_call.1} parent=1 // pred_check_branch
      %34 = sbr.rel (0) target = $region9
    $region8: #{tpu_custom_call.1} parent=1 // pred_region
      %s36 = ssub.s32 16384, 16384
      %37 = vsyncadd [#allocation18], %s36
      %s38 = sshll.u32 [#allocation17], 4
      %s39 = int_to_ptr.vmem [resolvable:$true] %s38
      %44 = dma.hbm_to_vmem [thread:$0]  %s1, 16384, %s39, [#allocation18], 1024, 1024, 64
    $region9: #{tpu_custom_call.1} parent=1 // pred_fallthru
      _
    // Predicated region
    $region10: #{tpu_custom_call.1} parent=1 // pred_check
      _
    $region11: #{tpu_custom_call.1} parent=1 // pred_check_branch
      %46 = sbr.rel (0) target = $region13
    $region12: #{tpu_custom_call.1} parent=1 // pred_region
      %s48 = ssub.s32 128, 128
      %49 = vsyncadd [#allocation18], %s48
      %s51 = sshll.u32 [#allocation19], 4
      %s52 = int_to_ptr.vmem [resolvable:$true] %s51
      %54 = dma.hbm_to_vmem [thread:$0]  %s2, 128, %s52, [#allocation18]
    $region13: #{tpu_custom_call.1} parent=1 // pred_fallthru
      _
    // Predicated region
    $region14: #{tpu_custom_call.1} parent=1 // pred_check
      _
    $region15: #{tpu_custom_call.1} parent=1 // pred_check_branch
      %56 = sbr.rel (0) target = $region17
    $region16: #{tpu_custom_call.1} parent=1 // pred_region
      %s58 = ssub.s32 8192, 8192
      %59 = vsyncadd [#allocation21], %s58
      %s60 = sshll.u32 [#allocation20], 4
      %s61 = int_to_ptr.vmem [resolvable:$true] %s60
      %66 = dma.hbm_to_vmem [thread:$0]  %s3, 8192, %s61, [#allocation21], 512, 512, 32
    $region17: #{tpu_custom_call.1} parent=1 // pred_fallthru
      _
    // Predicated region
    $region18: #{tpu_custom_call.1} parent=1 // pred_check
      _
    $region19: #{tpu_custom_call.1} parent=1 // pred_check_branch
      %68 = sbr.rel (0) target = $region21
    $region20: #{tpu_custom_call.1} parent=1 // pred_region
      %s70 = ssub.s32 8192, 8192
      %71 = vsyncadd [#allocation21], %s70
      %s72 = sshll.u32 [#allocation22], 4
      %s73 = int_to_ptr.vmem [resolvable:$true] %s72
      %78 = dma.hbm_to_vmem [thread:$0]  %s4, 8192, %s73, [#allocation21], 512, 512, 32
    $region21: #{tpu_custom_call.1} parent=1 // pred_fallthru
      _
    // Predicated region
    $region22: #{tpu_custom_call.1} parent=1 // pred_check
      _
    $region23: #{tpu_custom_call.1} parent=1 // pred_check_branch
      %80 = sbr.rel (0) target = $region25
    $region24: #{tpu_custom_call.1} parent=1 // pred_region
      _
    $region25: #{tpu_custom_call.1} parent=1 // pred_fallthru
      _
    // Predicated region
    $region26: #{tpu_custom_call.1} parent=1 // pred_check
      _
    $region27: #{tpu_custom_call.1} parent=1 // pred_check_branch
      %82 = sbr.rel (0) target = $region29
    $region28: #{tpu_custom_call.1} parent=1 // pred_region
      _
    $region29: #{tpu_custom_call.1} parent=1 // pred_fallthru
      _
    // Predicated region
    $region30: #{tpu_custom_call.1} parent=1 // pred_check
      _
    $region31: #{tpu_custom_call.1} parent=1 // pred_check_branch
      %84 = sbr.rel (0) target = $region33
    $region32: #{tpu_custom_call.1} parent=1 // pred_region
      %85 = dma.done [#allocation15], 1024
    $region33: #{tpu_custom_call.1} parent=1 // pred_fallthru
      _
    // Predicated region
    $region34: #{tpu_custom_call.1} parent=1 // pred_check
      _
    $region35: #{tpu_custom_call.1} parent=1 // pred_check_branch
      %87 = sbr.rel (0) target = $region37
    $region36: #{tpu_custom_call.1} parent=1 // pred_region
      %88 = dma.done [#allocation18], 16384
    $region37: #{tpu_custom_call.1} parent=1 // pred_fallthru
      _
    // Predicated region
    $region38: #{tpu_custom_call.1} parent=1 // pred_check
      _
    $region39: #{tpu_custom_call.1} parent=1 // pred_check_branch
      %90 = sbr.rel (0) target = $region41
    $region40: #{tpu_custom_call.1} parent=1 // pred_region
      %91 = dma.done [#allocation18], 128
    $region41: #{tpu_custom_call.1} parent=1 // pred_fallthru
      _
    // Predicated region
    $region42: #{tpu_custom_call.1} parent=1 // pred_check
      _
    $region43: #{tpu_custom_call.1} parent=1 // pred_check_branch
      %93 = sbr.rel (0) target = $region45
    $region44: #{tpu_custom_call.1} parent=1 // pred_region
      %94 = dma.done [#allocation21], 8192
    $region45: #{tpu_custom_call.1} parent=1 // pred_fallthru
      _
    // Predicated region
    $region46: #{tpu_custom_call.1} parent=1 // pred_check
      _
    $region47: #{tpu_custom_call.1} parent=1 // pred_check_branch
      %96 = sbr.rel (0) target = $region49
    $region48: #{tpu_custom_call.1} parent=1 // pred_region
      %97 = dma.done [#allocation21], 8192
    $region49: #{tpu_custom_call.1} parent=1 // pred_fallthru
      _
    // Predicated region
    $region50: #{tpu_custom_call.1} parent=1 // pred_check
      _
    $region51: #{tpu_custom_call.1} parent=1 // pred_check_branch
      %99 = sbr.rel target = $region53
    $region52: #{tpu_custom_call.1} parent=1 // pred_region
      %100 = sst [smem:[#allocation26]] [#allocation25]
      %101 = sst [smem:[#allocation27]] [#allocation24]
    $region53: #{tpu_custom_call.1} parent=1 // pred_fallthru
      _
    %103 = shalt.err (0)
    %s105 = sshll.u32 [#allocation2], 4
    %s106 = int_to_ptr.vmem [resolvable:$true] %s105
    %108 = dma.hbm_to_vmem [thread:$0]  %s6, 16384, %s106, [#allocation13]
    %s109 = scalar_lea.sflag [#allocation13], 1
    // Predicated region
    $region54: #{tpu_custom_call.1} parent=1 // pred_check
      _
    $region55: #{tpu_custom_call.1} parent=1 // pred_check_branch
      %111 = sbr.rel target = $region57
    $region56: #{tpu_custom_call.1} parent=1 // pred_region
      %112 = sst [smem:[#allocation26]] [#allocation29]
      %113 = sst [smem:[#allocation27]] [#allocation28]
    $region57: #{tpu_custom_call.1} parent=1 // pred_fallthru
      _
    %115 = shalt.err (0)
    %s117 = sshll.u32 [#allocation3], 4
    %s118 = int_to_ptr.vmem [resolvable:$true] %s117
    %120 = dma.hbm_to_vmem [thread:$0]  %s7, 16384, %s118, %s109
    %s121 = scalar_lea.sflag [#allocation13], 2
    // Predicated region
    $region58: #{tpu_custom_call.1} parent=1 // pred_check
      _
    $region59: #{tpu_custom_call.1} parent=1 // pred_check_branch
      %123 = sbr.rel target = $region61
    $region60: #{tpu_custom_call.1} parent=1 // pred_region
      %124 = sst [smem:[#allocation26]] [#allocation31]
      %125 = sst [smem:[#allocation27]] [#allocation30]
    $region61: #{tpu_custom_call.1} parent=1 // pred_fallthru
      _
    %127 = shalt.err (0)
    %s129 = sshll.u32 [#allocation4], 4
    %s130 = int_to_ptr.vmem [resolvable:$true] %s129
    %132 = dma.hbm_to_vmem [thread:$0]  %s8, 8192, %s130, %s121
    %s133 = scalar_lea.sflag [#allocation13], 3
    // Predicated region
    $region62: #{tpu_custom_call.1} parent=1 // pred_check
      _
    $region63: #{tpu_custom_call.1} parent=1 // pred_check_branch
      %135 = sbr.rel target = $region65
    $region64: #{tpu_custom_call.1} parent=1 // pred_region
      %136 = sst [smem:[#allocation26]] [#allocation33]
      %137 = sst [smem:[#allocation27]] [#allocation32]
    $region65: #{tpu_custom_call.1} parent=1 // pred_fallthru
      _
    %139 = shalt.err (0)
    %s141 = sshll.u32 [#allocation5], 4
    %s142 = int_to_ptr.vmem [resolvable:$true] %s141
    %144 = dma.hbm_to_vmem [thread:$0]  %s9, 8192, %s142, %s133
    %s145 = scalar_lea.sflag [#allocation13], 4
    // Predicated region
    $region66: #{tpu_custom_call.1} parent=1 // pred_check
      _
    $region67: #{tpu_custom_call.1} parent=1 // pred_check_branch
      %147 = sbr.rel target = $region69
    $region68: #{tpu_custom_call.1} parent=1 // pred_region
      %148 = sst [smem:[#allocation26]] [#allocation35]
      %149 = sst [smem:[#allocation27]] [#allocation34]
    $region69: #{tpu_custom_call.1} parent=1 // pred_fallthru
      _
    %151 = shalt.err (0)
    %s153 = sshll.u32 [#allocation6], 4
    %s154 = int_to_ptr.vmem [resolvable:$true] %s153
    %156 = dma.hbm_to_vmem [thread:$0]  %s10, 4096, %s154, %s145
    %v157 = vld [vmem:[#allocation14] sm:$0xff]
    %v158 = vld [vmem:[#allocation14 + $0x8] sm:$0xff]
    %v159 = vld [vmem:[#allocation14 + $0x10] sm:$0xff]
    %v160 = vld [vmem:[#allocation14 + $0x18] sm:$0xff]
    %v161 = vld [vmem:[#allocation14 + $0x20] sm:$0xff]
    %v162 = vld [vmem:[#allocation14 + $0x28] sm:$0xff]
    %v163 = vld [vmem:[#allocation14 + $0x30] sm:$0xff]
    %v164 = vld [vmem:[#allocation14 + $0x38] sm:$0xff]
    %v165 = vld [vmem:[#allocation17] sm:$0xff]
    %v166 = vld [vmem:[#allocation17 + $0x8] sm:$0xff]
    %v167 = vld [vmem:[#allocation17 + $0x10] sm:$0xff]
    %v168 = vld [vmem:[#allocation17 + $0x18] sm:$0xff]
    %v169 = vld [vmem:[#allocation17 + $0x20] sm:$0xff]
    %v170 = vld [vmem:[#allocation17 + $0x28] sm:$0xff]
    %v171 = vld [vmem:[#allocation17 + $0x30] sm:$0xff]
    %v172 = vld [vmem:[#allocation17 + $0x38] sm:$0xff]
    %v173 = vld [vmem:[#allocation17 + $0x40] sm:$0xff]
    %v174 = vld [vmem:[#allocation17 + $0x48] sm:$0xff]
    %v175 = vld [vmem:[#allocation17 + $0x50] sm:$0xff]
    %v176 = vld [vmem:[#allocation17 + $0x58] sm:$0xff]
    %v177 = vld [vmem:[#allocation17 + $0x60] sm:$0xff]
    %v178 = vld [vmem:[#allocation17 + $0x68] sm:$0xff]
    %v179 = vld [vmem:[#allocation17 + $0x70] sm:$0xff]
    %v180 = vld [vmem:[#allocation17 + $0x78] sm:$0xff]
    %v181 = vld [vmem:[#allocation17 + $0x80] sm:$0xff]
    %v182 = vld [vmem:[#allocation17 + $0x88] sm:$0xff]
    %v183 = vld [vmem:[#allocation17 + $0x90] sm:$0xff]
    %v184 = vld [vmem:[#allocation17 + $0x98] sm:$0xff]
    %v185 = vld [vmem:[#allocation17 + $0xa0] sm:$0xff]
    %v186 = vld [vmem:[#allocation17 + $0xa8] sm:$0xff]
    %v187 = vld [vmem:[#allocation17 + $0xb0] sm:$0xff]
    %v188 = vld [vmem:[#allocation17 + $0xb8] sm:$0xff]
    %v189 = vld [vmem:[#allocation17 + $0xc0] sm:$0xff]
    %v190 = vld [vmem:[#allocation17 + $0xc8] sm:$0xff]
    %v191 = vld [vmem:[#allocation17 + $0xd0] sm:$0xff]
    %v192 = vld [vmem:[#allocation17 + $0xd8] sm:$0xff]
    %v193 = vld [vmem:[#allocation17 + $0xe0] sm:$0xff]
    %v194 = vld [vmem:[#allocation17 + $0xe8] sm:$0xff]
    %v195 = vld [vmem:[#allocation17 + $0xf0] sm:$0xff]
    %v196 = vld [vmem:[#allocation17 + $0xf8] sm:$0xff]
    %v197 = vld [vmem:[#allocation17 + $0x100] sm:$0xff]
    %v198 = vld [vmem:[#allocation17 + $0x108] sm:$0xff]
    %v199 = vld [vmem:[#allocation17 + $0x110] sm:$0xff]
    %v200 = vld [vmem:[#allocation17 + $0x118] sm:$0xff]
    %v201 = vld [vmem:[#allocation17 + $0x120] sm:$0xff]
    %v202 = vld [vmem:[#allocation17 + $0x128] sm:$0xff]
    %v203 = vld [vmem:[#allocation17 + $0x130] sm:$0xff]
    %v204 = vld [vmem:[#allocation17 + $0x138] sm:$0xff]
    %v205 = vld [vmem:[#allocation17 + $0x140] sm:$0xff]
    %v206 = vld [vmem:[#allocation17 + $0x148] sm:$0xff]
    %v207 = vld [vmem:[#allocation17 + $0x150] sm:$0xff]
    %v208 = vld [vmem:[#allocation17 + $0x158] sm:$0xff]
    %v209 = vld [vmem:[#allocation17 + $0x160] sm:$0xff]
    %v210 = vld [vmem:[#allocation17 + $0x168] sm:$0xff]
    %v211 = vld [vmem:[#allocation17 + $0x170] sm:$0xff]
    %v212 = vld [vmem:[#allocation17 + $0x178] sm:$0xff]
    %v213 = vld [vmem:[#allocation17 + $0x180] sm:$0xff]
    %v214 = vld [vmem:[#allocation17 + $0x188] sm:$0xff]
    %v215 = vld [vmem:[#allocation17 + $0x190] sm:$0xff]
    %v216 = vld [vmem:[#allocation17 + $0x198] sm:$0xff]
    %v217 = vld [vmem:[#allocation17 + $0x1a0] sm:$0xff]
    %v218 = vld [vmem:[#allocation17 + $0x1a8] sm:$0xff]
    %v219 = vld [vmem:[#allocation17 + $0x1b0] sm:$0xff]
    %v220 = vld [vmem:[#allocation17 + $0x1b8] sm:$0xff]
    %v221 = vld [vmem:[#allocation17 + $0x1c0] sm:$0xff]
    %v222 = vld [vmem:[#allocation17 + $0x1c8] sm:$0xff]
    %v223 = vld [vmem:[#allocation17 + $0x1d0] sm:$0xff]
    %v224 = vld [vmem:[#allocation17 + $0x1d8] sm:$0xff]
    %v225 = vld [vmem:[#allocation17 + $0x1e0] sm:$0xff]
    %v226 = vld [vmem:[#allocation17 + $0x1e8] sm:$0xff]
    %v227 = vld [vmem:[#allocation17 + $0x1f0] sm:$0xff]
    %v228 = vld [vmem:[#allocation17 + $0x1f8] sm:$0xff]
    %v229 = vld [vmem:[#allocation17 + $0x200] sm:$0xff]
    %v230 = vld [vmem:[#allocation17 + $0x208] sm:$0xff]
    %v231 = vld [vmem:[#allocation17 + $0x210] sm:$0xff]
    %v232 = vld [vmem:[#allocation17 + $0x218] sm:$0xff]
    %v233 = vld [vmem:[#allocation17 + $0x220] sm:$0xff]
    %v234 = vld [vmem:[#allocation17 + $0x228] sm:$0xff]
    %v235 = vld [vmem:[#allocation17 + $0x230] sm:$0xff]
    %v236 = vld [vmem:[#allocation17 + $0x238] sm:$0xff]
    %v237 = vld [vmem:[#allocation17 + $0x240] sm:$0xff]
    %v238 = vld [vmem:[#allocation17 + $0x248] sm:$0xff]
    %v239 = vld [vmem:[#allocation17 + $0x250] sm:$0xff]
    %v240 = vld [vmem:[#allocation17 + $0x258] sm:$0xff]
    %v241 = vld [vmem:[#allocation17 + $0x260] sm:$0xff]
    %v242 = vld [vmem:[#allocation17 + $0x268] sm:$0xff]
    %v243 = vld [vmem:[#allocation17 + $0x270] sm:$0xff]
    %v244 = vld [vmem:[#allocation17 + $0x278] sm:$0xff]
    %v245 = vld [vmem:[#allocation17 + $0x280] sm:$0xff]
    %v246 = vld [vmem:[#allocation17 + $0x288] sm:$0xff]
    %v247 = vld [vmem:[#allocation17 + $0x290] sm:$0xff]
    %v248 = vld [vmem:[#allocation17 + $0x298] sm:$0xff]
    %v249 = vld [vmem:[#allocation17 + $0x2a0] sm:$0xff]
    %v250 = vld [vmem:[#allocation17 + $0x2a8] sm:$0xff]
    %v251 = vld [vmem:[#allocation17 + $0x2b0] sm:$0xff]
    %v252 = vld [vmem:[#allocation17 + $0x2b8] sm:$0xff]
    %v253 = vld [vmem:[#allocation17 + $0x2c0] sm:$0xff]
    %v254 = vld [vmem:[#allocation17 + $0x2c8] sm:$0xff]
    %v255 = vld [vmem:[#allocation17 + $0x2d0] sm:$0xff]
    %v256 = vld [vmem:[#allocation17 + $0x2d8] sm:$0xff]
    %v257 = vld [vmem:[#allocation17 + $0x2e0] sm:$0xff]
    %v258 = vld [vmem:[#allocation17 + $0x2e8] sm:$0xff]
    %v259 = vld [vmem:[#allocation17 + $0x2f0] sm:$0xff]
    %v260 = vld [vmem:[#allocation17 + $0x2f8] sm:$0xff]
    %v261 = vld [vmem:[#allocation17 + $0x300] sm:$0xff]
    %v262 = vld [vmem:[#allocation17 + $0x308] sm:$0xff]
    %v263 = vld [vmem:[#allocation17 + $0x310] sm:$0xff]
    %v264 = vld [vmem:[#allocation17 + $0x318] sm:$0xff]
    %v265 = vld [vmem:[#allocation17 + $0x320] sm:$0xff]
    %v266 = vld [vmem:[#allocation17 + $0x328] sm:$0xff]
    %v267 = vld [vmem:[#allocation17 + $0x330] sm:$0xff]
    %v268 = vld [vmem:[#allocation17 + $0x338] sm:$0xff]
    %v269 = vld [vmem:[#allocation17 + $0x340] sm:$0xff]
    %v270 = vld [vmem:[#allocation17 + $0x348] sm:$0xff]
    %v271 = vld [vmem:[#allocation17 + $0x350] sm:$0xff]
    %v272 = vld [vmem:[#allocation17 + $0x358] sm:$0xff]
    %v273 = vld [vmem:[#allocation17 + $0x360] sm:$0xff]
    %v274 = vld [vmem:[#allocation17 + $0x368] sm:$0xff]
    %v275 = vld [vmem:[#allocation17 + $0x370] sm:$0xff]
    %v276 = vld [vmem:[#allocation17 + $0x378] sm:$0xff]
    %v277 = vld [vmem:[#allocation17 + $0x380] sm:$0xff]
    %v278 = vld [vmem:[#allocation17 + $0x388] sm:$0xff]
    %v279 = vld [vmem:[#allocation17 + $0x390] sm:$0xff]
    %v280 = vld [vmem:[#allocation17 + $0x398] sm:$0xff]
    %v281 = vld [vmem:[#allocation17 + $0x3a0] sm:$0xff]
    %v282 = vld [vmem:[#allocation17 + $0x3a8] sm:$0xff]
    %v283 = vld [vmem:[#allocation17 + $0x3b0] sm:$0xff]
    %v284 = vld [vmem:[#allocation17 + $0x3b8] sm:$0xff]
    %v285 = vld [vmem:[#allocation17 + $0x3c0] sm:$0xff]
    %v286 = vld [vmem:[#allocation17 + $0x3c8] sm:$0xff]
    %v287 = vld [vmem:[#allocation17 + $0x3d0] sm:$0xff]
    %v288 = vld [vmem:[#allocation17 + $0x3d8] sm:$0xff]
    %v289 = vld [vmem:[#allocation17 + $0x3e0] sm:$0xff]
    %v290 = vld [vmem:[#allocation17 + $0x3e8] sm:$0xff]
    %v291 = vld [vmem:[#allocation17 + $0x3f0] sm:$0xff]
    %v292 = vld [vmem:[#allocation17 + $0x3f8] sm:$0xff]
    %v293 = vld [vmem:[#allocation19] sm:$0xff]
    %v295 = vlaneseq
    %v296 = vshrl.u32 %v295, 7
    %v297 = vsub.s32 0, %v296
    %v298 = vrot.slane %v293, %v297
    %v299 = vlaneseq
    %v300 = vshrl.u32 %v299, 7
    %v301 = vsub.s32 1, %v300
    %v302 = vrot.slane %v293, %v301
    %v303 = vlaneseq
    %v304 = vshrl.u32 %v303, 7
    %v305 = vsub.s32 2, %v304
    %v306 = vrot.slane %v293, %v305
    %v307 = vlaneseq
    %v308 = vshrl.u32 %v307, 7
    %v309 = vsub.s32 3, %v308
    %v310 = vrot.slane %v293, %v309
    %v311 = vlaneseq
    %v312 = vshrl.u32 %v311, 7
    %v313 = vsub.s32 4, %v312
    %v314 = vrot.slane %v293, %v313
    %v315 = vlaneseq
    %v316 = vshrl.u32 %v315, 7
    %v317 = vsub.s32 5, %v316
    %v318 = vrot.slane %v293, %v317
    %v319 = vlaneseq
    %v320 = vshrl.u32 %v319, 7
    %v321 = vsub.s32 6, %v320
    %v322 = vrot.slane %v293, %v321
    %v323 = vlaneseq
    %v324 = vshrl.u32 %v323, 7
    %v325 = vsub.s32 7, %v324
    %v326 = vrot.slane %v293, %v325
    %335 = vmatprep.subr.mxu0 %v166
    %336 = vmatpush1.msra.mxu0 %v165
    %337 = vmatprep.subr.mxu0 %v174
    %338 = vmatpush1.msra.mxu0 %v173
    %339 = vmatprep.subr.mxu0 %v182
    %340 = vmatpush1.msra.mxu0 %v181
    %341 = vmatprep.subr.mxu0 %v190
    %342 = vmatpush1.msra.mxu0 %v189
    %343 = vmatprep.subr.mxu0 %v198
    %344 = vmatpush1.msra.mxu0 %v197
    %345 = vmatprep.subr.mxu0 %v206
    %346 = vmatpush1.msra.mxu0 %v205
    %347 = vmatprep.subr.mxu0 %v214
    %348 = vmatpush1.msra.mxu0 %v213
    %349 = vmatprep.subr.mxu0 %v222
    %350 = vmatpush1.msra.mxu0 %v221
    %351 = vmatprep.subr.mxu0 %v230
    %352 = vmatpush1.msra.mxu0 %v229
    %353 = vmatprep.subr.mxu0 %v238
    %354 = vmatpush1.msra.mxu0 %v237
    %355 = vmatprep.subr.mxu0 %v246
    %356 = vmatpush1.msra.mxu0 %v245
    %357 = vmatprep.subr.mxu0 %v254
    %358 = vmatpush1.msra.mxu0 %v253
    %359 = vmatprep.subr.mxu0 %v262
    %360 = vmatpush1.msra.mxu0 %v261
    %361 = vmatprep.subr.mxu0 %v270
    %362 = vmatpush1.msra.mxu0 %v269
    %363 = vmatprep.subr.mxu0 %v278
    %364 = vmatpush1.msra.mxu0 %v277
    %365 = vmatprep.subr.mxu0 %v286
    %366 = vmatpush1.msra.mxu0 %v285
    %367 = vmatprep.subr.mxu0 0.0
    %368 = vmatpush1.msra.mxu0 0.0
    %369 = vmatprep.subr.mxu0 0.0
    %370 = vmatpush1.msra.mxu0 0.0
    %371 = vmatprep.subr.mxu0 0.0
    %372 = vmatpush1.msra.mxu0 0.0
    %373 = vmatprep.subr.mxu0 0.0
    %374 = vmatpush1.msra.mxu0 0.0
    %375 = vmatprep.subr.mxu0 0.0
    %376 = vmatpush1.msra.mxu0 0.0
    %377 = vmatprep.subr.mxu0 0.0
    %378 = vmatpush1.msra.mxu0 0.0
    %379 = vmatprep.subr.mxu0 0.0
    %380 = vmatpush1.msra.mxu0 0.0
    %381 = vmatprep.subr.mxu0 0.0
    %382 = vmatpush1.msra.mxu0 0.0
    %383 = vmatprep.subr.mxu0 0.0
    %384 = vmatpush1.msra.mxu0 0.0
    %385 = vmatprep.subr.mxu0 0.0
    %386 = vmatpush1.msra.mxu0 0.0
    %387 = vmatprep.subr.mxu0 0.0
    %388 = vmatpush1.msra.mxu0 0.0
    %389 = vmatprep.subr.mxu0 0.0
    %390 = vmatpush1.msra.mxu0 0.0
    %391 = vmatprep.subr.mxu0 0.0
    %392 = vmatpush1.msra.mxu0 0.0
    %393 = vmatprep.subr.mxu0 0.0
    %394 = vmatpush1.msra.mxu0 0.0
    %395 = vmatprep.subr.mxu0 0.0
    %396 = vmatpush1.msra.mxu0 0.0
    %397 = vmatprep.subr.mxu0 0.0
    %398 = vmatpush1.msra.mxu0 0.0
    %399 = vmatprep.mubr.f32.mxu0 0.0
    %400 = vmatmul.mubr.f32.gmra.mrb[0].mxu0 %v157
    %v401 = vpop.f32.mrb[0].mxu0
    %v402 = vadd.f32 %v298, %v401
    %v403 = vpop.f32.mrb[0].mxu0
    %v404 = vadd.f32 %v302, %v403
    %405 = vmatprep.mubr.f32.mxu0 0.0
    %406 = vmatmul.mubr.f32.gmra.mrb[0].mxu0 %v158
    %v407 = vpop.f32.mrb[0].mxu0
    %v408 = vadd.f32 %v298, %v407
    %v409 = vpop.f32.mrb[0].mxu0
    %v410 = vadd.f32 %v302, %v409
    %411 = vmatprep.mubr.f32.mxu0 0.0
    %412 = vmatmul.mubr.f32.gmra.mrb[0].mxu0 %v159
    %v413 = vpop.f32.mrb[0].mxu0
    %v414 = vadd.f32 %v298, %v413
    %v415 = vpop.f32.mrb[0].mxu0
    %v416 = vadd.f32 %v302, %v415
    %417 = vmatprep.mubr.f32.mxu0 0.0
    %418 = vmatmul.mubr.f32.gmra.mrb[0].mxu0 %v160
    %v419 = vpop.f32.mrb[0].mxu0
    %v420 = vadd.f32 %v298, %v419
    %v421 = vpop.f32.mrb[0].mxu0
    %v422 = vadd.f32 %v302, %v421
    %423 = vmatprep.mubr.f32.mxu0 0.0
    %424 = vmatmul.mubr.f32.gmra.mrb[0].mxu0 %v161
    %v425 = vpop.f32.mrb[0].mxu0
    %v426 = vadd.f32 %v298, %v425
    %v427 = vpop.f32.mrb[0].mxu0
    %v428 = vadd.f32 %v302, %v427
    %429 = vmatprep.mubr.f32.mxu0 0.0
    %430 = vmatmul.mubr.f32.gmra.mrb[0].mxu0 %v162
    %v431 = vpop.f32.mrb[0].mxu0
    %v432 = vadd.f32 %v298, %v431
    %v433 = vpop.f32.mrb[0].mxu0
    %v434 = vadd.f32 %v302, %v433
    %435 = vmatprep.mubr.f32.mxu0 0.0
    %436 = vmatmul.mubr.f32.gmra.mrb[0].mxu0 %v163
    %v437 = vpop.f32.mrb[0].mxu0
    %v438 = vadd.f32 %v298, %v437
    %v439 = vpop.f32.mrb[0].mxu0
    %v440 = vadd.f32 %v302, %v439
    %441 = vmatprep.mubr.f32.mxu0 0.0
    %442 = vmatmul.mubr.f32.gmra.mrb[0].mxu0 %v164
    %v443 = vpop.f32.mrb[0].mxu0
    %v444 = vadd.f32 %v298, %v443
    %v445 = vpop.f32.mrb[0].mxu0
    %v446 = vadd.f32 %v302, %v445
    %447 = vdwg.mxu0
    %448 = vmatprep.subr.mxu0 %v168
    %449 = vmatpush1.msra.mxu0 %v167
    %450 = vmatprep.subr.mxu0 %v176
    %451 = vmatpush1.msra.mxu0 %v175
    %452 = vmatprep.subr.mxu0 %v184
    %453 = vmatpush1.msra.mxu0 %v183
    %454 = vmatprep.subr.mxu0 %v192
    %455 = vmatpush1.msra.mxu0 %v191
    %456 = vmatprep.subr.mxu0 %v200
    %457 = vmatpush1.msra.mxu0 %v199
    %458 = vmatprep.subr.mxu0 %v208
    %459 = vmatpush1.msra.mxu0 %v207
    %460 = vmatprep.subr.mxu0 %v216
    %461 = vmatpush1.msra.mxu0 %v215
    %462 = vmatprep.subr.mxu0 %v224
    %463 = vmatpush1.msra.mxu0 %v223
    %464 = vmatprep.subr.mxu0 %v232
    %465 = vmatpush1.msra.mxu0 %v231
    %466 = vmatprep.subr.mxu0 %v240
    %467 = vmatpush1.msra.mxu0 %v239
    %468 = vmatprep.subr.mxu0 %v248
    %469 = vmatpush1.msra.mxu0 %v247
    %470 = vmatprep.subr.mxu0 %v256
    %471 = vmatpush1.msra.mxu0 %v255
    %472 = vmatprep.subr.mxu0 %v264
    %473 = vmatpush1.msra.mxu0 %v263
    %474 = vmatprep.subr.mxu0 %v272
    %475 = vmatpush1.msra.mxu0 %v271
    %476 = vmatprep.subr.mxu0 %v280
    %477 = vmatpush1.msra.mxu0 %v279
    %478 = vmatprep.subr.mxu0 %v288
    %479 = vmatpush1.msra.mxu0 %v287
    %480 = vmatprep.subr.mxu0 0.0
    %481 = vmatpush1.msra.mxu0 0.0
    %482 = vmatprep.subr.mxu0 0.0
    %483 = vmatpush1.msra.mxu0 0.0
    %484 = vmatprep.subr.mxu0 0.0
    %485 = vmatpush1.msra.mxu0 0.0
    %486 = vmatprep.subr.mxu0 0.0
    %487 = vmatpush1.msra.mxu0 0.0
    %488 = vmatprep.subr.mxu0 0.0
    %489 = vmatpush1.msra.mxu0 0.0
    %490 = vmatprep.subr.mxu0 0.0
    %491 = vmatpush1.msra.mxu0 0.0
    %492 = vmatprep.subr.mxu0 0.0
    %493 = vmatpush1.msra.mxu0 0.0
    %494 = vmatprep.subr.mxu0 0.0
    %495 = vmatpush1.msra.mxu0 0.0
    %496 = vmatprep.subr.mxu0 0.0
    %497 = vmatpush1.msra.mxu0 0.0
    %498 = vmatprep.subr.mxu0 0.0
    %499 = vmatpush1.msra.mxu0 0.0
    %500 = vmatprep.subr.mxu0 0.0
    %501 = vmatpush1.msra.mxu0 0.0
    %502 = vmatprep.subr.mxu0 0.0
    %503 = vmatpush1.msra.mxu0 0.0
    %504 = vmatprep.subr.mxu0 0.0
    %505 = vmatpush1.msra.mxu0 0.0
    %506 = vmatprep.subr.mxu0 0.0
    %507 = vmatpush1.msra.mxu0 0.0
    %508 = vmatprep.subr.mxu0 0.0
    %509 = vmatpush1.msra.mxu0 0.0
    %510 = vmatprep.subr.mxu0 0.0
    %511 = vmatpush1.msra.mxu0 0.0
    %512 = vmatprep.mubr.f32.mxu0 0.0
    %513 = vmatmul.mubr.f32.gmra.mrb[0].mxu0 %v157
    %v514 = vpop.f32.mrb[0].mxu0
    %v515 = vadd.f32 %v306, %v514
    %v516 = vpop.f32.mrb[0].mxu0
    %v517 = vadd.f32 %v310, %v516
    %518 = vmatprep.mubr.f32.mxu0 0.0
    %519 = vmatmul.mubr.f32.gmra.mrb[0].mxu0 %v158
    %v520 = vpop.f32.mrb[0].mxu0
    %v521 = vadd.f32 %v306, %v520
    %v522 = vpop.f32.mrb[0].mxu0
    %v523 = vadd.f32 %v310, %v522
    %524 = vmatprep.mubr.f32.mxu0 0.0
    %525 = vmatmul.mubr.f32.gmra.mrb[0].mxu0 %v159
    %v526 = vpop.f32.mrb[0].mxu0
    %v527 = vadd.f32 %v306, %v526
    %v528 = vpop.f32.mrb[0].mxu0
    %v529 = vadd.f32 %v310, %v528
    %530 = vmatprep.mubr.f32.mxu0 0.0
    %531 = vmatmul.mubr.f32.gmra.mrb[0].mxu0 %v160
    %v532 = vpop.f32.mrb[0].mxu0
    %v533 = vadd.f32 %v306, %v532
    %v534 = vpop.f32.mrb[0].mxu0
    %v535 = vadd.f32 %v310, %v534
    %536 = vmatprep.mubr.f32.mxu0 0.0
    %537 = vmatmul.mubr.f32.gmra.mrb[0].mxu0 %v161
    %v538 = vpop.f32.mrb[0].mxu0
    %v539 = vadd.f32 %v306, %v538
    %v540 = vpop.f32.mrb[0].mxu0
    %v541 = vadd.f32 %v310, %v540
    %542 = vmatprep.mubr.f32.mxu0 0.0
    %543 = vmatmul.mubr.f32.gmra.mrb[0].mxu0 %v162
    %v544 = vpop.f32.mrb[0].mxu0
    %v545 = vadd.f32 %v306, %v544
    %v546 = vpop.f32.mrb[0].mxu0
    %v547 = vadd.f32 %v310, %v546
    %548 = vmatprep.mubr.f32.mxu0 0.0
    %549 = vmatmul.mubr.f32.gmra.mrb[0].mxu0 %v163
    %v550 = vpop.f32.mrb[0].mxu0
    %v551 = vadd.f32 %v306, %v550
    %v552 = vpop.f32.mrb[0].mxu0
    %v553 = vadd.f32 %v310, %v552
    %554 = vmatprep.mubr.f32.mxu0 0.0
    %555 = vmatmul.mubr.f32.gmra.mrb[0].mxu0 %v164
    %v556 = vpop.f32.mrb[0].mxu0
    %v557 = vadd.f32 %v306, %v556
    %v558 = vpop.f32.mrb[0].mxu0
    %v559 = vadd.f32 %v310, %v558
    %560 = vdwg.mxu0
    %561 = vmatprep.subr.mxu0 %v170
    %562 = vmatpush1.msra.mxu0 %v169
    %563 = vmatprep.subr.mxu0 %v178
    %564 = vmatpush1.msra.mxu0 %v177
    %565 = vmatprep.subr.mxu0 %v186
    %566 = vmatpush1.msra.mxu0 %v185
    %567 = vmatprep.subr.mxu0 %v194
    %568 = vmatpush1.msra.mxu0 %v193
    %569 = vmatprep.subr.mxu0 %v202
    %570 = vmatpush1.msra.mxu0 %v201
    %571 = vmatprep.subr.mxu0 %v210
    %572 = vmatpush1.msra.mxu0 %v209
    %573 = vmatprep.subr.mxu0 %v218
    %574 = vmatpush1.msra.mxu0 %v217
    %575 = vmatprep.subr.mxu0 %v226
    %576 = vmatpush1.msra.mxu0 %v225
    %577 = vmatprep.subr.mxu0 %v234
    %578 = vmatpush1.msra.mxu0 %v233
    %579 = vmatprep.subr.mxu0 %v242
    %580 = vmatpush1.msra.mxu0 %v241
    %581 = vmatprep.subr.mxu0 %v250
    %582 = vmatpush1.msra.mxu0 %v249
    %583 = vmatprep.subr.mxu0 %v258
    %584 = vmatpush1.msra.mxu0 %v257
    %585 = vmatprep.subr.mxu0 %v266
    %586 = vmatpush1.msra.mxu0 %v265
    %587 = vmatprep.subr.mxu0 %v274
    %588 = vmatpush1.msra.mxu0 %v273
    %589 = vmatprep.subr.mxu0 %v282
    %590 = vmatpush1.msra.mxu0 %v281
    %591 = vmatprep.subr.mxu0 %v290
    %592 = vmatpush1.msra.mxu0 %v289
    %593 = vmatprep.subr.mxu0 0.0
    %594 = vmatpush1.msra.mxu0 0.0
    %595 = vmatprep.subr.mxu0 0.0
    %596 = vmatpush1.msra.mxu0 0.0
    %597 = vmatprep.subr.mxu0 0.0
    %598 = vmatpush1.msra.mxu0 0.0
    %599 = vmatprep.subr.mxu0 0.0
    %600 = vmatpush1.msra.mxu0 0.0
    %601 = vmatprep.subr.mxu0 0.0
    %602 = vmatpush1.msra.mxu0 0.0
    %603 = vmatprep.subr.mxu0 0.0
    %604 = vmatpush1.msra.mxu0 0.0
    %605 = vmatprep.subr.mxu0 0.0
    %606 = vmatpush1.msra.mxu0 0.0
    %607 = vmatprep.subr.mxu0 0.0
    %608 = vmatpush1.msra.mxu0 0.0
    %609 = vmatprep.subr.mxu0 0.0
    %610 = vmatpush1.msra.mxu0 0.0
    %611 = vmatprep.subr.mxu0 0.0
    %612 = vmatpush1.msra.mxu0 0.0
    %613 = vmatprep.subr.mxu0 0.0
    %614 = vmatpush1.msra.mxu0 0.0
    %615 = vmatprep.subr.mxu0 0.0
    %616 = vmatpush1.msra.mxu0 0.0
    %617 = vmatprep.subr.mxu0 0.0
    %618 = vmatpush1.msra.mxu0 0.0
    %619 = vmatprep.subr.mxu0 0.0
    %620 = vmatpush1.msra.mxu0 0.0
    %621 = vmatprep.subr.mxu0 0.0
    %622 = vmatpush1.msra.mxu0 0.0
    %623 = vmatprep.subr.mxu0 0.0
    %624 = vmatpush1.msra.mxu0 0.0
    %625 = vmatprep.mubr.f32.mxu0 0.0
    %626 = vmatmul.mubr.f32.gmra.mrb[0].mxu0 %v157
    %v627 = vpop.f32.mrb[0].mxu0
    %v628 = vadd.f32 %v314, %v627
    %v629 = vpop.f32.mrb[0].mxu0
    %v630 = vadd.f32 %v318, %v629
    %631 = vmatprep.mubr.f32.mxu0 0.0
    %632 = vmatmul.mubr.f32.gmra.mrb[0].mxu0 %v158
    %v633 = vpop.f32.mrb[0].mxu0
    %v634 = vadd.f32 %v314, %v633
    %v635 = vpop.f32.mrb[0].mxu0
    %v636 = vadd.f32 %v318, %v635
    %637 = vmatprep.mubr.f32.mxu0 0.0
    %638 = vmatmul.mubr.f32.gmra.mrb[0].mxu0 %v159
    %v639 = vpop.f32.mrb[0].mxu0
    %v640 = vadd.f32 %v314, %v639
    %v641 = vpop.f32.mrb[0].mxu0
    %v642 = vadd.f32 %v318, %v641
    %643 = vmatprep.mubr.f32.mxu0 0.0
    %644 = vmatmul.mubr.f32.gmra.mrb[0].mxu0 %v160
    %v645 = vpop.f32.mrb[0].mxu0
    %v646 = vadd.f32 %v314, %v645
    %v647 = vpop.f32.mrb[0].mxu0
    %v648 = vadd.f32 %v318, %v647
    %649 = vmatprep.mubr.f32.mxu0 0.0
    %650 = vmatmul.mubr.f32.gmra.mrb[0].mxu0 %v161
    %v651 = vpop.f32.mrb[0].mxu0
    %v652 = vadd.f32 %v314, %v651
    %v653 = vpop.f32.mrb[0].mxu0
    %v654 = vadd.f32 %v318, %v653
    %655 = vmatprep.mubr.f32.mxu0 0.0
    %656 = vmatmul.mubr.f32.gmra.mrb[0].mxu0 %v162
    %v657 = vpop.f32.mrb[0].mxu0
    %v658 = vadd.f32 %v314, %v657
    %v659 = vpop.f32.mrb[0].mxu0
    %v660 = vadd.f32 %v318, %v659
    %661 = vmatprep.mubr.f32.mxu0 0.0
    %662 = vmatmul.mubr.f32.gmra.mrb[0].mxu0 %v163
    %v663 = vpop.f32.mrb[0].mxu0
    %v664 = vadd.f32 %v314, %v663
    %v665 = vpop.f32.mrb[0].mxu0
    %v666 = vadd.f32 %v318, %v665
    %667 = vmatprep.mubr.f32.mxu0 0.0
    %668 = vmatmul.mubr.f32.gmra.mrb[0].mxu0 %v164
    %v669 = vpop.f32.mrb[0].mxu0
    %v670 = vadd.f32 %v314, %v669
    %v671 = vpop.f32.mrb[0].mxu0
    %v672 = vadd.f32 %v318, %v671
    %673 = vdwg.mxu0
    %674 = vmatprep.subr.mxu0 %v172
    %675 = vmatpush1.msra.mxu0 %v171
    %676 = vmatprep.subr.mxu0 %v180
    %677 = vmatpush1.msra.mxu0 %v179
    %678 = vmatprep.subr.mxu0 %v188
    %679 = vmatpush1.msra.mxu0 %v187
    %680 = vmatprep.subr.mxu0 %v196
    %681 = vmatpush1.msra.mxu0 %v195
    %682 = vmatprep.subr.mxu0 %v204
    %683 = vmatpush1.msra.mxu0 %v203
    %684 = vmatprep.subr.mxu0 %v212
    %685 = vmatpush1.msra.mxu0 %v211
    %686 = vmatprep.subr.mxu0 %v220
    %687 = vmatpush1.msra.mxu0 %v219
    %688 = vmatprep.subr.mxu0 %v228
    %689 = vmatpush1.msra.mxu0 %v227
    %690 = vmatprep.subr.mxu0 %v236
    %691 = vmatpush1.msra.mxu0 %v235
    %692 = vmatprep.subr.mxu0 %v244
    %693 = vmatpush1.msra.mxu0 %v243
    %694 = vmatprep.subr.mxu0 %v252
    %695 = vmatpush1.msra.mxu0 %v251
    %696 = vmatprep.subr.mxu0 %v260
    %697 = vmatpush1.msra.mxu0 %v259
    %698 = vmatprep.subr.mxu0 %v268
    %699 = vmatpush1.msra.mxu0 %v267
    %700 = vmatprep.subr.mxu0 %v276
    %701 = vmatpush1.msra.mxu0 %v275
    %702 = vmatprep.subr.mxu0 %v284
    %703 = vmatpush1.msra.mxu0 %v283
    %704 = vmatprep.subr.mxu0 %v292
    %705 = vmatpush1.msra.mxu0 %v291
    %706 = vmatprep.subr.mxu0 0.0
    %707 = vmatpush1.msra.mxu0 0.0
    %708 = vmatprep.subr.mxu0 0.0
    %709 = vmatpush1.msra.mxu0 0.0
    %710 = vmatprep.subr.mxu0 0.0
    %711 = vmatpush1.msra.mxu0 0.0
    %712 = vmatprep.subr.mxu0 0.0
    %713 = vmatpush1.msra.mxu0 0.0
    %714 = vmatprep.subr.mxu0 0.0
    %715 = vmatpush1.msra.mxu0 0.0
    %716 = vmatprep.subr.mxu0 0.0
    %717 = vmatpush1.msra.mxu0 0.0
    %718 = vmatprep.subr.mxu0 0.0
    %719 = vmatpush1.msra.mxu0 0.0
    %720 = vmatprep.subr.mxu0 0.0
    %721 = vmatpush1.msra.mxu0 0.0
    %722 = vmatprep.subr.mxu0 0.0
    %723 = vmatpush1.msra.mxu0 0.0
    %724 = vmatprep.subr.mxu0 0.0
    %725 = vmatpush1.msra.mxu0 0.0
    %726 = vmatprep.subr.mxu0 0.0
    %727 = vmatpush1.msra.mxu0 0.0
    %728 = vmatprep.subr.mxu0 0.0
    %729 = vmatpush1.msra.mxu0 0.0
    %730 = vmatprep.subr.mxu0 0.0
    %731 = vmatpush1.msra.mxu0 0.0
    %732 = vmatprep.subr.mxu0 0.0
    %733 = vmatpush1.msra.mxu0 0.0
    %734 = vmatprep.subr.mxu0 0.0
    %735 = vmatpush1.msra.mxu0 0.0
    %736 = vmatprep.subr.mxu0 0.0
    %737 = vmatpush1.msra.mxu0 0.0
    %738 = vmatprep.mubr.f32.mxu0 0.0
    %739 = vmatmul.mubr.f32.gmra.mrb[0].mxu0 %v157
    %v740 = vpop.f32.mrb[0].mxu0
    %v741 = vadd.f32 %v322, %v740
    %v742 = vpop.f32.mrb[0].mxu0
    %v743 = vadd.f32 %v326, %v742
    %744 = vmatprep.mubr.f32.mxu0 0.0
    %745 = vmatmul.mubr.f32.gmra.mrb[0].mxu0 %v158
    %v746 = vpop.f32.mrb[0].mxu0
    %v747 = vadd.f32 %v322, %v746
    %v748 = vpop.f32.mrb[0].mxu0
    %v749 = vadd.f32 %v326, %v748
    %750 = vmatprep.mubr.f32.mxu0 0.0
    %751 = vmatmul.mubr.f32.gmra.mrb[0].mxu0 %v159
    %v752 = vpop.f32.mrb[0].mxu0
    %v753 = vadd.f32 %v322, %v752
    %v754 = vpop.f32.mrb[0].mxu0
    %v755 = vadd.f32 %v326, %v754
    %756 = vmatprep.mubr.f32.mxu0 0.0
    %757 = vmatmul.mubr.f32.gmra.mrb[0].mxu0 %v160
    %v758 = vpop.f32.mrb[0].mxu0
    %v759 = vadd.f32 %v322, %v758
    %v760 = vpop.f32.mrb[0].mxu0
    %v761 = vadd.f32 %v326, %v760
    %762 = vmatprep.mubr.f32.mxu0 0.0
    %763 = vmatmul.mubr.f32.gmra.mrb[0].mxu0 %v161
    %v764 = vpop.f32.mrb[0].mxu0
    %v765 = vadd.f32 %v322, %v764
    %v766 = vpop.f32.mrb[0].mxu0
    %v767 = vadd.f32 %v326, %v766
    %768 = vmatprep.mubr.f32.mxu0 0.0
    %769 = vmatmul.mubr.f32.gmra.mrb[0].mxu0 %v162
    %v770 = vpop.f32.mrb[0].mxu0
    %v771 = vadd.f32 %v322, %v770
    %v772 = vpop.f32.mrb[0].mxu0
    %v773 = vadd.f32 %v326, %v772
    %774 = vmatprep.mubr.f32.mxu0 0.0
    %775 = vmatmul.mubr.f32.gmra.mrb[0].mxu0 %v163
    %v776 = vpop.f32.mrb[0].mxu0
    %v777 = vadd.f32 %v322, %v776
    %v778 = vpop.f32.mrb[0].mxu0
    %v779 = vadd.f32 %v326, %v778
    %780 = vmatprep.mubr.f32.mxu0 0.0
    %781 = vmatmul.mubr.f32.gmra.mrb[0].mxu0 %v164
    %v782 = vpop.f32.mrb[0].mxu0
    %v783 = vadd.f32 %v322, %v782
    %v784 = vpop.f32.mrb[0].mxu0
    %v785 = vadd.f32 %v326, %v784
    %786 = vdwg.mxu0
    %787 = vst [vmem:[#allocation7] sm:$0xff] %v402
    %788 = vst [vmem:[#allocation7 + $0x8] sm:$0xff] %v404
    %789 = vst [vmem:[#allocation7 + $0x10] sm:$0xff] %v515
    %790 = vst [vmem:[#allocation7 + $0x18] sm:$0xff] %v517
    %791 = vst [vmem:[#allocation7 + $0x20] sm:$0xff] %v408
    %792 = vst [vmem:[#allocation7 + $0x28] sm:$0xff] %v410
    %793 = vst [vmem:[#allocation7 + $0x30] sm:$0xff] %v521
    %794 = vst [vmem:[#allocation7 + $0x38] sm:$0xff] %v523
    %795 = vst [vmem:[#allocation7 + $0x40] sm:$0xff] %v414
    %796 = vst [vmem:[#allocation7 + $0x48] sm:$0xff] %v416
    %797 = vst [vmem:[#allocation7 + $0x50] sm:$0xff] %v527
    %798 = vst [vmem:[#allocation7 + $0x58] sm:$0xff] %v529
    %799 = vst [vmem:[#allocation7 + $0x60] sm:$0xff] %v420
    %800 = vst [vmem:[#allocation7 + $0x68] sm:$0xff] %v422
    %801 = vst [vmem:[#allocation7 + $0x70] sm:$0xff] %v533
    %802 = vst [vmem:[#allocation7 + $0x78] sm:$0xff] %v535
    %803 = vst [vmem:[#allocation7 + $0x80] sm:$0xff] %v426
    %804 = vst [vmem:[#allocation7 + $0x88] sm:$0xff] %v428
    %805 = vst [vmem:[#allocation7 + $0x90] sm:$0xff] %v539
    %806 = vst [vmem:[#allocation7 + $0x98] sm:$0xff] %v541
    %807 = vst [vmem:[#allocation7 + $0xa0] sm:$0xff] %v432
    %808 = vst [vmem:[#allocation7 + $0xa8] sm:$0xff] %v434
    %809 = vst [vmem:[#allocation7 + $0xb0] sm:$0xff] %v545
    %810 = vst [vmem:[#allocation7 + $0xb8] sm:$0xff] %v547
    %811 = vst [vmem:[#allocation7 + $0xc0] sm:$0xff] %v438
    %812 = vst [vmem:[#allocation7 + $0xc8] sm:$0xff] %v440
    %813 = vst [vmem:[#allocation7 + $0xd0] sm:$0xff] %v551
    %814 = vst [vmem:[#allocation7 + $0xd8] sm:$0xff] %v553
    %815 = vst [vmem:[#allocation7 + $0xe0] sm:$0xff] %v444
    %816 = vst [vmem:[#allocation7 + $0xe8] sm:$0xff] %v446
    %817 = vst [vmem:[#allocation7 + $0xf0] sm:$0xff] %v557
    %818 = vst [vmem:[#allocation7 + $0xf8] sm:$0xff] %v559
    %819 = vst [vmem:[#allocation8] sm:$0xff] %v628
    %820 = vst [vmem:[#allocation8 + $0x8] sm:$0xff] %v630
    %821 = vst [vmem:[#allocation8 + $0x10] sm:$0xff] %v741
    %822 = vst [vmem:[#allocation8 + $0x18] sm:$0xff] %v743
    %823 = vst [vmem:[#allocation8 + $0x20] sm:$0xff] %v634
    %824 = vst [vmem:[#allocation8 + $0x28] sm:$0xff] %v636
    %825 = vst [vmem:[#allocation8 + $0x30] sm:$0xff] %v747
    %826 = vst [vmem:[#allocation8 + $0x38] sm:$0xff] %v749
    %827 = vst [vmem:[#allocation8 + $0x40] sm:$0xff] %v640
    %828 = vst [vmem:[#allocation8 + $0x48] sm:$0xff] %v642
    %829 = vst [vmem:[#allocation8 + $0x50] sm:$0xff] %v753
    %830 = vst [vmem:[#allocation8 + $0x58] sm:$0xff] %v755
    %831 = vst [vmem:[#allocation8 + $0x60] sm:$0xff] %v646
    %832 = vst [vmem:[#allocation8 + $0x68] sm:$0xff] %v648
    %833 = vst [vmem:[#allocation8 + $0x70] sm:$0xff] %v759
    %834 = vst [vmem:[#allocation8 + $0x78] sm:$0xff] %v761
    %835 = vst [vmem:[#allocation8 + $0x80] sm:$0xff] %v652
    %836 = vst [vmem:[#allocation8 + $0x88] sm:$0xff] %v654
    %837 = vst [vmem:[#allocation8 + $0x90] sm:$0xff] %v765
    %838 = vst [vmem:[#allocation8 + $0x98] sm:$0xff] %v767
    %839 = vst [vmem:[#allocation8 + $0xa0] sm:$0xff] %v658
    %840 = vst [vmem:[#allocation8 + $0xa8] sm:$0xff] %v660
    %841 = vst [vmem:[#allocation8 + $0xb0] sm:$0xff] %v771
    %842 = vst [vmem:[#allocation8 + $0xb8] sm:$0xff] %v773
    %843 = vst [vmem:[#allocation8 + $0xc0] sm:$0xff] %v664
    %844 = vst [vmem:[#allocation8 + $0xc8] sm:$0xff] %v666
    %845 = vst [vmem:[#allocation8 + $0xd0] sm:$0xff] %v777
    %846 = vst [vmem:[#allocation8 + $0xd8] sm:$0xff] %v779
    %847 = vst [vmem:[#allocation8 + $0xe0] sm:$0xff] %v670
    %848 = vst [vmem:[#allocation8 + $0xe8] sm:$0xff] %v672
    %849 = vst [vmem:[#allocation8 + $0xf0] sm:$0xff] %v783
    %850 = vst [vmem:[#allocation8 + $0xf8] sm:$0xff] %v785
    %v851 = vld [vmem:[#allocation20] sm:$0xff]
    %v852 = vld [vmem:[#allocation20 + $0x8] sm:$0xff]
    %v853 = vld [vmem:[#allocation20 + $0x10] sm:$0xff]
    %v854 = vld [vmem:[#allocation20 + $0x18] sm:$0xff]
    %v855 = vld [vmem:[#allocation20 + $0x20] sm:$0xff]
    %v856 = vld [vmem:[#allocation20 + $0x28] sm:$0xff]
    %v857 = vld [vmem:[#allocation20 + $0x30] sm:$0xff]
    %v858 = vld [vmem:[#allocation20 + $0x38] sm:$0xff]
    %v859 = vld [vmem:[#allocation20 + $0x40] sm:$0xff]
    %v860 = vld [vmem:[#allocation20 + $0x48] sm:$0xff]
    %v861 = vld [vmem:[#allocation20 + $0x50] sm:$0xff]
    %v862 = vld [vmem:[#allocation20 + $0x58] sm:$0xff]
    %v863 = vld [vmem:[#allocation20 + $0x60] sm:$0xff]
    %v864 = vld [vmem:[#allocation20 + $0x68] sm:$0xff]
    %v865 = vld [vmem:[#allocation20 + $0x70] sm:$0xff]
    %v866 = vld [vmem:[#allocation20 + $0x78] sm:$0xff]
    %v867 = vld [vmem:[#allocation20 + $0x80] sm:$0xff]
    %v868 = vld [vmem:[#allocation20 + $0x88] sm:$0xff]
    %v869 = vld [vmem:[#allocation20 + $0x90] sm:$0xff]
    %v870 = vld [vmem:[#allocation20 + $0x98] sm:$0xff]
    %v871 = vld [vmem:[#allocation20 + $0xa0] sm:$0xff]
    %v872 = vld [vmem:[#allocation20 + $0xa8] sm:$0xff]
    %v873 = vld [vmem:[#allocation20 + $0xb0] sm:$0xff]
    %v874 = vld [vmem:[#allocation20 + $0xb8] sm:$0xff]
    %v875 = vld [vmem:[#allocation20 + $0xc0] sm:$0xff]
    %v876 = vld [vmem:[#allocation20 + $0xc8] sm:$0xff]
    %v877 = vld [vmem:[#allocation20 + $0xd0] sm:$0xff]
    %v878 = vld [vmem:[#allocation20 + $0xd8] sm:$0xff]
    %v879 = vld [vmem:[#allocation20 + $0xe0] sm:$0xff]
    %v880 = vld [vmem:[#allocation20 + $0xe8] sm:$0xff]
    %v881 = vld [vmem:[#allocation20 + $0xf0] sm:$0xff]
    %v882 = vld [vmem:[#allocation20 + $0xf8] sm:$0xff]
    %v883 = vld [vmem:[#allocation20 + $0x100] sm:$0xff]
    %v884 = vld [vmem:[#allocation20 + $0x108] sm:$0xff]
    %v885 = vld [vmem:[#allocation20 + $0x110] sm:$0xff]
    %v886 = vld [vmem:[#allocation20 + $0x118] sm:$0xff]
    %v887 = vld [vmem:[#allocation20 + $0x120] sm:$0xff]
    %v888 = vld [vmem:[#allocation20 + $0x128] sm:$0xff]
    %v889 = vld [vmem:[#allocation20 + $0x130] sm:$0xff]
    %v890 = vld [vmem:[#allocation20 + $0x138] sm:$0xff]
    %v891 = vld [vmem:[#allocation20 + $0x140] sm:$0xff]
    %v892 = vld [vmem:[#allocation20 + $0x148] sm:$0xff]
    %v893 = vld [vmem:[#allocation20 + $0x150] sm:$0xff]
    %v894 = vld [vmem:[#allocation20 + $0x158] sm:$0xff]
    %v895 = vld [vmem:[#allocation20 + $0x160] sm:$0xff]
    %v896 = vld [vmem:[#allocation20 + $0x168] sm:$0xff]
    %v897 = vld [vmem:[#allocation20 + $0x170] sm:$0xff]
    %v898 = vld [vmem:[#allocation20 + $0x178] sm:$0xff]
    %v899 = vld [vmem:[#allocation20 + $0x180] sm:$0xff]
    %v900 = vld [vmem:[#allocation20 + $0x188] sm:$0xff]
    %v901 = vld [vmem:[#allocation20 + $0x190] sm:$0xff]
    %v902 = vld [vmem:[#allocation20 + $0x198] sm:$0xff]
    %v903 = vld [vmem:[#allocation20 + $0x1a0] sm:$0xff]
    %v904 = vld [vmem:[#allocation20 + $0x1a8] sm:$0xff]
    %v905 = vld [vmem:[#allocation20 + $0x1b0] sm:$0xff]
    %v906 = vld [vmem:[#allocation20 + $0x1b8] sm:$0xff]
    %v907 = vld [vmem:[#allocation20 + $0x1c0] sm:$0xff]
    %v908 = vld [vmem:[#allocation20 + $0x1c8] sm:$0xff]
    %v909 = vld [vmem:[#allocation20 + $0x1d0] sm:$0xff]
    %v910 = vld [vmem:[#allocation20 + $0x1d8] sm:$0xff]
    %v911 = vld [vmem:[#allocation20 + $0x1e0] sm:$0xff]
    %v912 = vld [vmem:[#allocation20 + $0x1e8] sm:$0xff]
    %v913 = vld [vmem:[#allocation20 + $0x1f0] sm:$0xff]
    %v914 = vld [vmem:[#allocation20 + $0x1f8] sm:$0xff]
    %v915 = vld [vmem:[#allocation22] sm:$0xff]
    %v916 = vld [vmem:[#allocation22 + $0x8] sm:$0xff]
    %v917 = vld [vmem:[#allocation22 + $0x10] sm:$0xff]
    %v918 = vld [vmem:[#allocation22 + $0x18] sm:$0xff]
    %v919 = vld [vmem:[#allocation22 + $0x20] sm:$0xff]
    %v920 = vld [vmem:[#allocation22 + $0x28] sm:$0xff]
    %v921 = vld [vmem:[#allocation22 + $0x30] sm:$0xff]
    %v922 = vld [vmem:[#allocation22 + $0x38] sm:$0xff]
    %v923 = vld [vmem:[#allocation22 + $0x40] sm:$0xff]
    %v924 = vld [vmem:[#allocation22 + $0x48] sm:$0xff]
    %v925 = vld [vmem:[#allocation22 + $0x50] sm:$0xff]
    %v926 = vld [vmem:[#allocation22 + $0x58] sm:$0xff]
    %v927 = vld [vmem:[#allocation22 + $0x60] sm:$0xff]
    %v928 = vld [vmem:[#allocation22 + $0x68] sm:$0xff]
    %v929 = vld [vmem:[#allocation22 + $0x70] sm:$0xff]
    %v930 = vld [vmem:[#allocation22 + $0x78] sm:$0xff]
    %v931 = vld [vmem:[#allocation22 + $0x80] sm:$0xff]
    %v932 = vld [vmem:[#allocation22 + $0x88] sm:$0xff]
    %v933 = vld [vmem:[#allocation22 + $0x90] sm:$0xff]
    %v934 = vld [vmem:[#allocation22 + $0x98] sm:$0xff]
    %v935 = vld [vmem:[#allocation22 + $0xa0] sm:$0xff]
    %v936 = vld [vmem:[#allocation22 + $0xa8] sm:$0xff]
    %v937 = vld [vmem:[#allocation22 + $0xb0] sm:$0xff]
    %v938 = vld [vmem:[#allocation22 + $0xb8] sm:$0xff]
    %v939 = vld [vmem:[#allocation22 + $0xc0] sm:$0xff]
    %v940 = vld [vmem:[#allocation22 + $0xc8] sm:$0xff]
    %v941 = vld [vmem:[#allocation22 + $0xd0] sm:$0xff]
    %v942 = vld [vmem:[#allocation22 + $0xd8] sm:$0xff]
    %v943 = vld [vmem:[#allocation22 + $0xe0] sm:$0xff]
    %v944 = vld [vmem:[#allocation22 + $0xe8] sm:$0xff]
    %v945 = vld [vmem:[#allocation22 + $0xf0] sm:$0xff]
    %v946 = vld [vmem:[#allocation22 + $0xf8] sm:$0xff]
    %v947 = vld [vmem:[#allocation22 + $0x100] sm:$0xff]
    %v948 = vld [vmem:[#allocation22 + $0x108] sm:$0xff]
    %v949 = vld [vmem:[#allocation22 + $0x110] sm:$0xff]
    %v950 = vld [vmem:[#allocation22 + $0x118] sm:$0xff]
    %v951 = vld [vmem:[#allocation22 + $0x120] sm:$0xff]
    %v952 = vld [vmem:[#allocation22 + $0x128] sm:$0xff]
    %v953 = vld [vmem:[#allocation22 + $0x130] sm:$0xff]
    %v954 = vld [vmem:[#allocation22 + $0x138] sm:$0xff]
    %v955 = vld [vmem:[#allocation22 + $0x140] sm:$0xff]
    %v956 = vld [vmem:[#allocation22 + $0x148] sm:$0xff]
    %v957 = vld [vmem:[#allocation22 + $0x150] sm:$0xff]
    %v958 = vld [vmem:[#allocation22 + $0x158] sm:$0xff]
    %v959 = vld [vmem:[#allocation22 + $0x160] sm:$0xff]
    %v960 = vld [vmem:[#allocation22 + $0x168] sm:$0xff]
    %v961 = vld [vmem:[#allocation22 + $0x170] sm:$0xff]
    %v962 = vld [vmem:[#allocation22 + $0x178] sm:$0xff]
    %v963 = vld [vmem:[#allocation22 + $0x180] sm:$0xff]
    %v964 = vld [vmem:[#allocation22 + $0x188] sm:$0xff]
    %v965 = vld [vmem:[#allocation22 + $0x190] sm:$0xff]
    %v966 = vld [vmem:[#allocation22 + $0x198] sm:$0xff]
    %v967 = vld [vmem:[#allocation22 + $0x1a0] sm:$0xff]
    %v968 = vld [vmem:[#allocation22 + $0x1a8] sm:$0xff]
    %v969 = vld [vmem:[#allocation22 + $0x1b0] sm:$0xff]
    %v970 = vld [vmem:[#allocation22 + $0x1b8] sm:$0xff]
    %v971 = vld [vmem:[#allocation22 + $0x1c0] sm:$0xff]
    %v972 = vld [vmem:[#allocation22 + $0x1c8] sm:$0xff]
    %v973 = vld [vmem:[#allocation22 + $0x1d0] sm:$0xff]
    %v974 = vld [vmem:[#allocation22 + $0x1d8] sm:$0xff]
    %v975 = vld [vmem:[#allocation22 + $0x1e0] sm:$0xff]
    %v976 = vld [vmem:[#allocation22 + $0x1e8] sm:$0xff]
    %v977 = vld [vmem:[#allocation22 + $0x1f0] sm:$0xff]
    %v978 = vld [vmem:[#allocation22 + $0x1f8] sm:$0xff]
    %v979 = vld [vmem:[#allocation7] sm:$0xff]
    %v980 = vld [vmem:[#allocation7 + $0x8] sm:$0xff]
    %v981 = vld [vmem:[#allocation7 + $0x10] sm:$0xff]
    %v982 = vld [vmem:[#allocation7 + $0x18] sm:$0xff]
    %983 = vmatprep.subr.mxu0 %v852
    %984 = vmatpush1.msra.mxu0 %v851
    %985 = vmatprep.subr.mxu0 %v856
    %986 = vmatpush1.msra.mxu0 %v855
    %987 = vmatprep.subr.mxu0 %v860
    %988 = vmatpush1.msra.mxu0 %v859
    %989 = vmatprep.subr.mxu0 %v864
    %990 = vmatpush1.msra.mxu0 %v863
    %991 = vmatprep.subr.mxu0 %v868
    %992 = vmatpush1.msra.mxu0 %v867
    %993 = vmatprep.subr.mxu0 %v872
    %994 = vmatpush1.msra.mxu0 %v871
    %995 = vmatprep.subr.mxu0 %v876
    %996 = vmatpush1.msra.mxu0 %v875
    %997 = vmatprep.subr.mxu0 %v880
    %998 = vmatpush1.msra.mxu0 %v879
    %999 = vmatprep.subr.mxu0 %v884
    %1000 = vmatpush1.msra.mxu0 %v883
    %1001 = vmatprep.subr.mxu0 %v888
    %1002 = vmatpush1.msra.mxu0 %v887
    %1003 = vmatprep.subr.mxu0 %v892
    %1004 = vmatpush1.msra.mxu0 %v891
    %1005 = vmatprep.subr.mxu0 %v896
    %1006 = vmatpush1.msra.mxu0 %v895
    %1007 = vmatprep.subr.mxu0 %v900
    %1008 = vmatpush1.msra.mxu0 %v899
    %1009 = vmatprep.subr.mxu0 %v904
    %1010 = vmatpush1.msra.mxu0 %v903
    %1011 = vmatprep.subr.mxu0 %v908
    %1012 = vmatpush1.msra.mxu0 %v907
    %1013 = vmatprep.subr.mxu0 %v912
    %1014 = vmatpush1.msra.mxu0 %v911
    %1015 = vmatprep.subr.mxu0 0.0
    %1016 = vmatpush1.msra.mxu0 0.0
    %1017 = vmatprep.subr.mxu0 0.0
    %1018 = vmatpush1.msra.mxu0 0.0
    %1019 = vmatprep.subr.mxu0 0.0
    %1020 = vmatpush1.msra.mxu0 0.0
    %1021 = vmatprep.subr.mxu0 0.0
    %1022 = vmatpush1.msra.mxu0 0.0
    %1023 = vmatprep.subr.mxu0 0.0
    %1024 = vmatpush1.msra.mxu0 0.0
    %1025 = vmatprep.subr.mxu0 0.0
    %1026 = vmatpush1.msra.mxu0 0.0
    %1027 = vmatprep.subr.mxu0 0.0
    %1028 = vmatpush1.msra.mxu0 0.0
    %1029 = vmatprep.subr.mxu0 0.0
    %1030 = vmatpush1.msra.mxu0 0.0
    %1031 = vmatprep.subr.mxu0 0.0
    %1032 = vmatpush1.msra.mxu0 0.0
    %1033 = vmatprep.subr.mxu0 0.0
    %1034 = vmatpush1.msra.mxu0 0.0
    %1035 = vmatprep.subr.mxu0 0.0
    %1036 = vmatpush1.msra.mxu0 0.0
    %1037 = vmatprep.subr.mxu0 0.0
    %1038 = vmatpush1.msra.mxu0 0.0
    %1039 = vmatprep.subr.mxu0 0.0
    %1040 = vmatpush1.msra.mxu0 0.0
    %1041 = vmatprep.subr.mxu0 0.0
    %1042 = vmatpush1.msra.mxu0 0.0
    %1043 = vmatprep.subr.mxu0 0.0
    %1044 = vmatpush1.msra.mxu0 0.0
    %1045 = vmatprep.subr.mxu0 0.0
    %1046 = vmatpush1.msra.mxu0 0.0
    %1047 = vmatprep.mubr.f32.mxu0 0.0
    %1048 = vmatmul.mubr.f32.gmra.mrb[0].mxu0 0.0
    %v1049 = vpop.f32.mrb[0].mxu0
    %v1050 = vadd.f32 %v979, %v1049
    %v1051 = vpop.f32.mrb[0].mxu0
    %v1052 = vadd.f32 %v980, %v1051
    %1053 = vdwg.mxu0
    %1054 = vmatprep.subr.mxu0 %v854
    %1055 = vmatpush1.msra.mxu0 %v853
    %1056 = vmatprep.subr.mxu0 %v858
    %1057 = vmatpush1.msra.mxu0 %v857
    %1058 = vmatprep.subr.mxu0 %v862
    %1059 = vmatpush1.msra.mxu0 %v861
    %1060 = vmatprep.subr.mxu0 %v866
    %1061 = vmatpush1.msra.mxu0 %v865
    %1062 = vmatprep.subr.mxu0 %v870
    %1063 = vmatpush1.msra.mxu0 %v869
    %1064 = vmatprep.subr.mxu0 %v874
    %1065 = vmatpush1.msra.mxu0 %v873
    %1066 = vmatprep.subr.mxu0 %v878
    %1067 = vmatpush1.msra.mxu0 %v877
    %1068 = vmatprep.subr.mxu0 %v882
    %1069 = vmatpush1.msra.mxu0 %v881
    %1070 = vmatprep.subr.mxu0 %v886
    %1071 = vmatpush1.msra.mxu0 %v885
    %1072 = vmatprep.subr.mxu0 %v890
    %1073 = vmatpush1.msra.mxu0 %v889
    %1074 = vmatprep.subr.mxu0 %v894
    %1075 = vmatpush1.msra.mxu0 %v893
    %1076 = vmatprep.subr.mxu0 %v898
    %1077 = vmatpush1.msra.mxu0 %v897
    %1078 = vmatprep.subr.mxu0 %v902
    %1079 = vmatpush1.msra.mxu0 %v901
    %1080 = vmatprep.subr.mxu0 %v906
    %1081 = vmatpush1.msra.mxu0 %v905
    %1082 = vmatprep.subr.mxu0 %v910
    %1083 = vmatpush1.msra.mxu0 %v909
    %1084 = vmatprep.subr.mxu0 %v914
    %1085 = vmatpush1.msra.mxu0 %v913
    %1086 = vmatprep.subr.mxu0 0.0
    %1087 = vmatpush1.msra.mxu0 0.0
    %1088 = vmatprep.subr.mxu0 0.0
    %1089 = vmatpush1.msra.mxu0 0.0
    %1090 = vmatprep.subr.mxu0 0.0
    %1091 = vmatpush1.msra.mxu0 0.0
    %1092 = vmatprep.subr.mxu0 0.0
    %1093 = vmatpush1.msra.mxu0 0.0
    %1094 = vmatprep.subr.mxu0 0.0
    %1095 = vmatpush1.msra.mxu0 0.0
    %1096 = vmatprep.subr.mxu0 0.0
    %1097 = vmatpush1.msra.mxu0 0.0
    %1098 = vmatprep.subr.mxu0 0.0
    %1099 = vmatpush1.msra.mxu0 0.0
    %1100 = vmatprep.subr.mxu0 0.0
    %1101 = vmatpush1.msra.mxu0 0.0
    %1102 = vmatprep.subr.mxu0 0.0
    %1103 = vmatpush1.msra.mxu0 0.0
    %1104 = vmatprep.subr.mxu0 0.0
    %1105 = vmatpush1.msra.mxu0 0.0
    %1106 = vmatprep.subr.mxu0 0.0
    %1107 = vmatpush1.msra.mxu0 0.0
    %1108 = vmatprep.subr.mxu0 0.0
    %1109 = vmatpush1.msra.mxu0 0.0
    %1110 = vmatprep.subr.mxu0 0.0
    %1111 = vmatpush1.msra.mxu0 0.0
    %1112 = vmatprep.subr.mxu0 0.0
    %1113 = vmatpush1.msra.mxu0 0.0
    %1114 = vmatprep.subr.mxu0 0.0
    %1115 = vmatpush1.msra.mxu0 0.0
    %1116 = vmatprep.subr.mxu0 0.0
    %1117 = vmatpush1.msra.mxu0 0.0
    %1118 = vmatprep.mubr.f32.mxu0 0.0
    %1119 = vmatmul.mubr.f32.gmra.mrb[0].mxu0 0.0
    %v1120 = vpop.f32.mrb[0].mxu0
    %v1121 = vadd.f32 %v981, %v1120
    %v1122 = vpop.f32.mrb[0].mxu0
    %v1123 = vadd.f32 %v982, %v1122
    %1124 = vdwg.mxu0
    %v1125 = vxor.u32 %v1050, 2147483648
    %v1126 = vxor.u32 %v1052, 2147483648
    %v1127 = vxor.u32 %v1121, 2147483648
    %v1128 = vmul.f32 %v1125, 1.442695
    %v1129 = vpow.pop %v1128
    %v1130 = vmul.f32 %v1126, 1.442695
    %v1131 = vpow.pop %v1130
    %v1132 = vmul.f32 %v1127, 1.442695
    %v1133 = vpow.pop %v1132
    %v1134 = vadd.f32 %v1129, 1.0
    %v1135 = vadd.f32 %v1131, 1.0
    %v1136 = vadd.f32 %v1133, 1.0
    %v1137 = vrcp.pop %v1134
    %v1138 = vmul.f32 1.0, %v1137
    %v1139 = vrcp.pop %v1135
    %v1140 = vmul.f32 1.0, %v1139
    %v1141 = vrcp.pop %v1136
    %v1142 = vmul.f32 1.0, %v1141
    %v1143 = vtanh.pop %v1123
    %v1144 = vmul.f32 %v1140, 0.0
    %v1145 = vmul.f32 %v1138, %v1143
    %v1146 = vadd.f32 %v1144, %v1145
    %v1147 = vtanh.pop %v1146
    %v1148 = vmul.f32 %v1142, %v1147
    %s1149 = scalar_lea.vmem [#allocation8], 224
    %v1150 = vld [vmem:[%s1149] sm:$0xff]
    %v1151 = vld [vmem:[%s1149 + $0x8] sm:$0xff]
    %v1152 = vld [vmem:[%s1149 + $0x10] sm:$0xff]
    %v1153 = vld [vmem:[%s1149 + $0x18] sm:$0xff]
    %1154 = vmatprep.subr.mxu0 %v916
    %1155 = vmatpush1.msra.mxu0 %v915
    %1156 = vmatprep.subr.mxu0 %v920
    %1157 = vmatpush1.msra.mxu0 %v919
    %1158 = vmatprep.subr.mxu0 %v924
    %1159 = vmatpush1.msra.mxu0 %v923
    %1160 = vmatprep.subr.mxu0 %v928
    %1161 = vmatpush1.msra.mxu0 %v927
    %1162 = vmatprep.subr.mxu0 %v932
    %1163 = vmatpush1.msra.mxu0 %v931
    %1164 = vmatprep.subr.mxu0 %v936
    %1165 = vmatpush1.msra.mxu0 %v935
    %1166 = vmatprep.subr.mxu0 %v940
    %1167 = vmatpush1.msra.mxu0 %v939
    %1168 = vmatprep.subr.mxu0 %v944
    %1169 = vmatpush1.msra.mxu0 %v943
    %1170 = vmatprep.subr.mxu0 %v948
    %1171 = vmatpush1.msra.mxu0 %v947
    %1172 = vmatprep.subr.mxu0 %v952
    %1173 = vmatpush1.msra.mxu0 %v951
    %1174 = vmatprep.subr.mxu0 %v956
    %1175 = vmatpush1.msra.mxu0 %v955
    %1176 = vmatprep.subr.mxu0 %v960
    %1177 = vmatpush1.msra.mxu0 %v959
    %1178 = vmatprep.subr.mxu0 %v964
    %1179 = vmatpush1.msra.mxu0 %v963
    %1180 = vmatprep.subr.mxu0 %v968
    %1181 = vmatpush1.msra.mxu0 %v967
    %1182 = vmatprep.subr.mxu0 %v972
    %1183 = vmatpush1.msra.mxu0 %v971
    %1184 = vmatprep.subr.mxu0 %v976
    %1185 = vmatpush1.msra.mxu0 %v975
    %1186 = vmatprep.subr.mxu0 0.0
    %1187 = vmatpush1.msra.mxu0 0.0
    %1188 = vmatprep.subr.mxu0 0.0
    %1189 = vmatpush1.msra.mxu0 0.0
    %1190 = vmatprep.subr.mxu0 0.0
    %1191 = vmatpush1.msra.mxu0 0.0
    %1192 = vmatprep.subr.mxu0 0.0
    %1193 = vmatpush1.msra.mxu0 0.0
    %1194 = vmatprep.subr.mxu0 0.0
    %1195 = vmatpush1.msra.mxu0 0.0
    %1196 = vmatprep.subr.mxu0 0.0
    %1197 = vmatpush1.msra.mxu0 0.0
    %1198 = vmatprep.subr.mxu0 0.0
    %1199 = vmatpush1.msra.mxu0 0.0
    %1200 = vmatprep.subr.mxu0 0.0
    %1201 = vmatpush1.msra.mxu0 0.0
    %1202 = vmatprep.subr.mxu0 0.0
    %1203 = vmatpush1.msra.mxu0 0.0
    %1204 = vmatprep.subr.mxu0 0.0
    %1205 = vmatpush1.msra.mxu0 0.0
    %1206 = vmatprep.subr.mxu0 0.0
    %1207 = vmatpush1.msra.mxu0 0.0
    %1208 = vmatprep.subr.mxu0 0.0
    %1209 = vmatpush1.msra.mxu0 0.0
    %1210 = vmatprep.subr.mxu0 0.0
    %1211 = vmatpush1.msra.mxu0 0.0
    %1212 = vmatprep.subr.mxu0 0.0
    %1213 = vmatpush1.msra.mxu0 0.0
    %1214 = vmatprep.subr.mxu0 0.0
    %1215 = vmatpush1.msra.mxu0 0.0
    %1216 = vmatprep.subr.mxu0 0.0
    %1217 = vmatpush1.msra.mxu0 0.0
    %1218 = vmatprep.mubr.f32.mxu0 0.0
    %1219 = vmatmul.mubr.f32.gmra.mrb[0].mxu0 0.0
    %v1220 = vpop.f32.mrb[0].mxu0
    %v1221 = vadd.f32 %v1150, %v1220
    %v1222 = vpop.f32.mrb[0].mxu0
    %v1223 = vadd.f32 %v1151, %v1222
    %1224 = vdwg.mxu0
    %1225 = vmatprep.subr.mxu0 %v918
    %1226 = vmatpush1.msra.mxu0 %v917
    %1227 = vmatprep.subr.mxu0 %v922
    %1228 = vmatpush1.msra.mxu0 %v921
    %1229 = vmatprep.subr.mxu0 %v926
    %1230 = vmatpush1.msra.mxu0 %v925
    %1231 = vmatprep.subr.mxu0 %v930
    %1232 = vmatpush1.msra.mxu0 %v929
    %1233 = vmatprep.subr.mxu0 %v934
    %1234 = vmatpush1.msra.mxu0 %v933
    %1235 = vmatprep.subr.mxu0 %v938
    %1236 = vmatpush1.msra.mxu0 %v937
    %1237 = vmatprep.subr.mxu0 %v942
    %1238 = vmatpush1.msra.mxu0 %v941
    %1239 = vmatprep.subr.mxu0 %v946
    %1240 = vmatpush1.msra.mxu0 %v945
    %1241 = vmatprep.subr.mxu0 %v950
    %1242 = vmatpush1.msra.mxu0 %v949
    %1243 = vmatprep.subr.mxu0 %v954
    %1244 = vmatpush1.msra.mxu0 %v953
    %1245 = vmatprep.subr.mxu0 %v958
    %1246 = vmatpush1.msra.mxu0 %v957
    %1247 = vmatprep.subr.mxu0 %v962
    %1248 = vmatpush1.msra.mxu0 %v961
    %1249 = vmatprep.subr.mxu0 %v966
    %1250 = vmatpush1.msra.mxu0 %v965
    %1251 = vmatprep.subr.mxu0 %v970
    %1252 = vmatpush1.msra.mxu0 %v969
    %1253 = vmatprep.subr.mxu0 %v974
    %1254 = vmatpush1.msra.mxu0 %v973
    %1255 = vmatprep.subr.mxu0 %v978
    %1256 = vmatpush1.msra.mxu0 %v977
    %1257 = vmatprep.subr.mxu0 0.0
    %1258 = vmatpush1.msra.mxu0 0.0
    %1259 = vmatprep.subr.mxu0 0.0
    %1260 = vmatpush1.msra.mxu0 0.0
    %1261 = vmatprep.subr.mxu0 0.0
    %1262 = vmatpush1.msra.mxu0 0.0
    %1263 = vmatprep.subr.mxu0 0.0
    %1264 = vmatpush1.msra.mxu0 0.0
    %1265 = vmatprep.subr.mxu0 0.0
    %1266 = vmatpush1.msra.mxu0 0.0
    %1267 = vmatprep.subr.mxu0 0.0
    %1268 = vmatpush1.msra.mxu0 0.0
    %1269 = vmatprep.subr.mxu0 0.0
    %1270 = vmatpush1.msra.mxu0 0.0
    %1271 = vmatprep.subr.mxu0 0.0
    %1272 = vmatpush1.msra.mxu0 0.0
    %1273 = vmatprep.subr.mxu0 0.0
    %1274 = vmatpush1.msra.mxu0 0.0
    %1275 = vmatprep.subr.mxu0 0.0
    %1276 = vmatpush1.msra.mxu0 0.0
    %1277 = vmatprep.subr.mxu0 0.0
    %1278 = vmatpush1.msra.mxu0 0.0
    %1279 = vmatprep.subr.mxu0 0.0
    %1280 = vmatpush1.msra.mxu0 0.0
    %1281 = vmatprep.subr.mxu0 0.0
    %1282 = vmatpush1.msra.mxu0 0.0
    %1283 = vmatprep.subr.mxu0 0.0
    %1284 = vmatpush1.msra.mxu0 0.0
    %1285 = vmatprep.subr.mxu0 0.0
    %1286 = vmatpush1.msra.mxu0 0.0
    %1287 = vmatprep.subr.mxu0 0.0
    %1288 = vmatpush1.msra.mxu0 0.0
    %1289 = vmatprep.mubr.f32.mxu0 0.0
    %1290 = vmatmul.mubr.f32.gmra.mrb[0].mxu0 0.0
    %v1291 = vpop.f32.mrb[0].mxu0
    %v1292 = vadd.f32 %v1152, %v1291
    %v1293 = vpop.f32.mrb[0].mxu0
    %v1294 = vadd.f32 %v1153, %v1293
    %1295 = vdwg.mxu0
    %v1296 = vxor.u32 %v1221, 2147483648
    %v1297 = vxor.u32 %v1223, 2147483648
    %v1298 = vxor.u32 %v1292, 2147483648
    %v1299 = vmul.f32 %v1296, 1.442695
    %v1300 = vpow.pop %v1299
    %v1301 = vmul.f32 %v1297, 1.442695
    %v1302 = vpow.pop %v1301
    %v1303 = vmul.f32 %v1298, 1.442695
    %v1304 = vpow.pop %v1303
    %v1305 = vadd.f32 %v1300, 1.0
    %v1306 = vadd.f32 %v1302, 1.0
    %v1307 = vadd.f32 %v1304, 1.0
    %v1308 = vrcp.pop %v1305
    %v1309 = vmul.f32 1.0, %v1308
    %v1310 = vrcp.pop %v1306
    %v1311 = vmul.f32 1.0, %v1310
    %v1312 = vrcp.pop %v1307
    %v1313 = vmul.f32 1.0, %v1312
    %v1314 = vtanh.pop %v1294
    %v1315 = vmul.f32 %v1311, 0.0
    %v1316 = vmul.f32 %v1309, %v1314
    %v1317 = vadd.f32 %v1315, %v1316
    %v1318 = vtanh.pop %v1317
    %v1319 = vmul.f32 %v1313, %v1318
    %1320 = vst [vmem:[#allocation11] sm:$0xff] %v1148
    %s1321 = scalar_lea.vmem [#allocation12], 56
    %1322 = vst [vmem:[%s1321] sm:$0xff] %v1319
    %s1323 = scalar_lea.vmem [#allocation7], 32
    %v1324 = vld [vmem:[%s1323] sm:$0xff]
    %v1325 = vld [vmem:[%s1323 + $0x8] sm:$0xff]
    %v1326 = vld [vmem:[%s1323 + $0x10] sm:$0xff]
    %v1327 = vld [vmem:[%s1323 + $0x18] sm:$0xff]
    %1328 = vmatprep.subr.mxu0 %v852
    %1329 = vmatpush1.msra.mxu0 %v851
    %1330 = vmatprep.subr.mxu0 %v856
    %1331 = vmatpush1.msra.mxu0 %v855
    %1332 = vmatprep.subr.mxu0 %v860
    %1333 = vmatpush1.msra.mxu0 %v859
    %1334 = vmatprep.subr.mxu0 %v864
    %1335 = vmatpush1.msra.mxu0 %v863
    %1336 = vmatprep.subr.mxu0 %v868
    %1337 = vmatpush1.msra.mxu0 %v867
    %1338 = vmatprep.subr.mxu0 %v872
    %1339 = vmatpush1.msra.mxu0 %v871
    %1340 = vmatprep.subr.mxu0 %v876
    %1341 = vmatpush1.msra.mxu0 %v875
    %1342 = vmatprep.subr.mxu0 %v880
    %1343 = vmatpush1.msra.mxu0 %v879
    %1344 = vmatprep.subr.mxu0 %v884
    %1345 = vmatpush1.msra.mxu0 %v883
    %1346 = vmatprep.subr.mxu0 %v888
    %1347 = vmatpush1.msra.mxu0 %v887
    %1348 = vmatprep.subr.mxu0 %v892
    %1349 = vmatpush1.msra.mxu0 %v891
    %1350 = vmatprep.subr.mxu0 %v896
    %1351 = vmatpush1.msra.mxu0 %v895
    %1352 = vmatprep.subr.mxu0 %v900
    %1353 = vmatpush1.msra.mxu0 %v899
    %1354 = vmatprep.subr.mxu0 %v904
    %1355 = vmatpush1.msra.mxu0 %v903
    %1356 = vmatprep.subr.mxu0 %v908
    %1357 = vmatpush1.msra.mxu0 %v907
    %1358 = vmatprep.subr.mxu0 %v912
    %1359 = vmatpush1.msra.mxu0 %v911
    %1360 = vmatprep.subr.mxu0 0.0
    %1361 = vmatpush1.msra.mxu0 0.0
    %1362 = vmatprep.subr.mxu0 0.0
    %1363 = vmatpush1.msra.mxu0 0.0
    %1364 = vmatprep.subr.mxu0 0.0
    %1365 = vmatpush1.msra.mxu0 0.0
    %1366 = vmatprep.subr.mxu0 0.0
    %1367 = vmatpush1.msra.mxu0 0.0
    %1368 = vmatprep.subr.mxu0 0.0
    %1369 = vmatpush1.msra.mxu0 0.0
    %1370 = vmatprep.subr.mxu0 0.0
    %1371 = vmatpush1.msra.mxu0 0.0
    %1372 = vmatprep.subr.mxu0 0.0
    %1373 = vmatpush1.msra.mxu0 0.0
    %1374 = vmatprep.subr.mxu0 0.0
    %1375 = vmatpush1.msra.mxu0 0.0
    %1376 = vmatprep.subr.mxu0 0.0
    %1377 = vmatpush1.msra.mxu0 0.0
    %1378 = vmatprep.subr.mxu0 0.0
    %1379 = vmatpush1.msra.mxu0 0.0
    %1380 = vmatprep.subr.mxu0 0.0
    %1381 = vmatpush1.msra.mxu0 0.0
    %1382 = vmatprep.subr.mxu0 0.0
    %1383 = vmatpush1.msra.mxu0 0.0
    %1384 = vmatprep.subr.mxu0 0.0
    %1385 = vmatpush1.msra.mxu0 0.0
    %1386 = vmatprep.subr.mxu0 0.0
    %1387 = vmatpush1.msra.mxu0 0.0
    %1388 = vmatprep.subr.mxu0 0.0
    %1389 = vmatpush1.msra.mxu0 0.0
    %1390 = vmatprep.subr.mxu0 0.0
    %1391 = vmatpush1.msra.mxu0 0.0
    %1392 = vmatprep.mubr.f32.mxu0 0.0
    %1393 = vmatmul.mubr.f32.gmra.mrb[0].mxu0 %v1148
    %v1394 = vpop.f32.mrb[0].mxu0
    %v1395 = vadd.f32 %v1324, %v1394
    %v1396 = vpop.f32.mrb[0].mxu0
    %v1397 = vadd.f32 %v1325, %v1396
    %1398 = vdwg.mxu0
    %1399 = vmatprep.subr.mxu0 %v854
    %1400 = vmatpush1.msra.mxu0 %v853
    %1401 = vmatprep.subr.mxu0 %v858
    %1402 = vmatpush1.msra.mxu0 %v857
    %1403 = vmatprep.subr.mxu0 %v862
    %1404 = vmatpush1.msra.mxu0 %v861
    %1405 = vmatprep.subr.mxu0 %v866
    %1406 = vmatpush1.msra.mxu0 %v865
    %1407 = vmatprep.subr.mxu0 %v870
    %1408 = vmatpush1.msra.mxu0 %v869
    %1409 = vmatprep.subr.mxu0 %v874
    %1410 = vmatpush1.msra.mxu0 %v873
    %1411 = vmatprep.subr.mxu0 %v878
    %1412 = vmatpush1.msra.mxu0 %v877
    %1413 = vmatprep.subr.mxu0 %v882
    %1414 = vmatpush1.msra.mxu0 %v881
    %1415 = vmatprep.subr.mxu0 %v886
    %1416 = vmatpush1.msra.mxu0 %v885
    %1417 = vmatprep.subr.mxu0 %v890
    %1418 = vmatpush1.msra.mxu0 %v889
    %1419 = vmatprep.subr.mxu0 %v894
    %1420 = vmatpush1.msra.mxu0 %v893
    %1421 = vmatprep.subr.mxu0 %v898
    %1422 = vmatpush1.msra.mxu0 %v897
    %1423 = vmatprep.subr.mxu0 %v902
    %1424 = vmatpush1.msra.mxu0 %v901
    %1425 = vmatprep.subr.mxu0 %v906
    %1426 = vmatpush1.msra.mxu0 %v905
    %1427 = vmatprep.subr.mxu0 %v910
    %1428 = vmatpush1.msra.mxu0 %v909
    %1429 = vmatprep.subr.mxu0 %v914
    %1430 = vmatpush1.msra.mxu0 %v913
    %1431 = vmatprep.subr.mxu0 0.0
    %1432 = vmatpush1.msra.mxu0 0.0
    %1433 = vmatprep.subr.mxu0 0.0
    %1434 = vmatpush1.msra.mxu0 0.0
    %1435 = vmatprep.subr.mxu0 0.0
    %1436 = vmatpush1.msra.mxu0 0.0
    %1437 = vmatprep.subr.mxu0 0.0
    %1438 = vmatpush1.msra.mxu0 0.0
    %1439 = vmatprep.subr.mxu0 0.0
    %1440 = vmatpush1.msra.mxu0 0.0
    %1441 = vmatprep.subr.mxu0 0.0
    %1442 = vmatpush1.msra.mxu0 0.0
    %1443 = vmatprep.subr.mxu0 0.0
    %1444 = vmatpush1.msra.mxu0 0.0
    %1445 = vmatprep.subr.mxu0 0.0
    %1446 = vmatpush1.msra.mxu0 0.0
    %1447 = vmatprep.subr.mxu0 0.0
    %1448 = vmatpush1.msra.mxu0 0.0
    %1449 = vmatprep.subr.mxu0 0.0
    %1450 = vmatpush1.msra.mxu0 0.0
    %1451 = vmatprep.subr.mxu0 0.0
    %1452 = vmatpush1.msra.mxu0 0.0
    %1453 = vmatprep.subr.mxu0 0.0
    %1454 = vmatpush1.msra.mxu0 0.0
    %1455 = vmatprep.subr.mxu0 0.0
    %1456 = vmatpush1.msra.mxu0 0.0
    %1457 = vmatprep.subr.mxu0 0.0
    %1458 = vmatpush1.msra.mxu0 0.0
    %1459 = vmatprep.subr.mxu0 0.0
    %1460 = vmatpush1.msra.mxu0 0.0
    %1461 = vmatprep.subr.mxu0 0.0
    %1462 = vmatpush1.msra.mxu0 0.0
    %1463 = vmatprep.mubr.f32.mxu0 0.0
    %1464 = vmatmul.mubr.f32.gmra.mrb[0].mxu0 %v1148
    %v1465 = vpop.f32.mrb[0].mxu0
    %v1466 = vadd.f32 %v1326, %v1465
    %v1467 = vpop.f32.mrb[0].mxu0
    %v1468 = vadd.f32 %v1327, %v1467
    %1469 = vdwg.mxu0
    %v1470 = vxor.u32 %v1395, 2147483648
    %v1471 = vxor.u32 %v1397, 2147483648
    %v1472 = vxor.u32 %v1466, 2147483648
    %v1473 = vmul.f32 %v1470, 1.442695
    %v1474 = vpow.pop %v1473
    %v1475 = vmul.f32 %v1471, 1.442695
    %v1476 = vpow.pop %v1475
    %v1477 = vmul.f32 %v1472, 1.442695
    %v1478 = vpow.pop %v1477
    %v1479 = vadd.f32 %v1474, 1.0
    %v1480 = vadd.f32 %v1476, 1.0
    %v1481 = vadd.f32 %v1478, 1.0
    %v1482 = vrcp.pop %v1479
    %v1483 = vmul.f32 1.0, %v1482
    %v1484 = vrcp.pop %v1480
    %v1485 = vmul.f32 1.0, %v1484
    %v1486 = vrcp.pop %v1481
    %v1487 = vmul.f32 1.0, %v1486
    %v1488 = vtanh.pop %v1468
    %v1489 = vmul.f32 %v1485, %v1146
    %v1490 = vmul.f32 %v1483, %v1488
    %v1491 = vadd.f32 %v1489, %v1490
    %v1492 = vtanh.pop %v1491
    %v1493 = vmul.f32 %v1487, %v1492
    %s1494 = scalar_lea.vmem [#allocation8], 192
    %v1495 = vld [vmem:[%s1494] sm:$0xff]
    %v1496 = vld [vmem:[%s1494 + $0x8] sm:$0xff]
    %v1497 = vld [vmem:[%s1494 + $0x10] sm:$0xff]
    %v1498 = vld [vmem:[%s1494 + $0x18] sm:$0xff]
    %1499 = vmatprep.subr.mxu0 %v916
    %1500 = vmatpush1.msra.mxu0 %v915
    %1501 = vmatprep.subr.mxu0 %v920
    %1502 = vmatpush1.msra.mxu0 %v919
    %1503 = vmatprep.subr.mxu0 %v924
    %1504 = vmatpush1.msra.mxu0 %v923
    %1505 = vmatprep.subr.mxu0 %v928
    %1506 = vmatpush1.msra.mxu0 %v927
    %1507 = vmatprep.subr.mxu0 %v932
    %1508 = vmatpush1.msra.mxu0 %v931
    %1509 = vmatprep.subr.mxu0 %v936
    %1510 = vmatpush1.msra.mxu0 %v935
    %1511 = vmatprep.subr.mxu0 %v940
    %1512 = vmatpush1.msra.mxu0 %v939
    %1513 = vmatprep.subr.mxu0 %v944
    %1514 = vmatpush1.msra.mxu0 %v943
    %1515 = vmatprep.subr.mxu0 %v948
    %1516 = vmatpush1.msra.mxu0 %v947
    %1517 = vmatprep.subr.mxu0 %v952
    %1518 = vmatpush1.msra.mxu0 %v951
    %1519 = vmatprep.subr.mxu0 %v956
    %1520 = vmatpush1.msra.mxu0 %v955
    %1521 = vmatprep.subr.mxu0 %v960
    %1522 = vmatpush1.msra.mxu0 %v959
    %1523 = vmatprep.subr.mxu0 %v964
    %1524 = vmatpush1.msra.mxu0 %v963
    %1525 = vmatprep.subr.mxu0 %v968
    %1526 = vmatpush1.msra.mxu0 %v967
    %1527 = vmatprep.subr.mxu0 %v972
    %1528 = vmatpush1.msra.mxu0 %v971
    %1529 = vmatprep.subr.mxu0 %v976
    %1530 = vmatpush1.msra.mxu0 %v975
    %1531 = vmatprep.subr.mxu0 0.0
    %1532 = vmatpush1.msra.mxu0 0.0
    %1533 = vmatprep.subr.mxu0 0.0
    %1534 = vmatpush1.msra.mxu0 0.0
    %1535 = vmatprep.subr.mxu0 0.0
    %1536 = vmatpush1.msra.mxu0 0.0
    %1537 = vmatprep.subr.mxu0 0.0
    %1538 = vmatpush1.msra.mxu0 0.0
    %1539 = vmatprep.subr.mxu0 0.0
    %1540 = vmatpush1.msra.mxu0 0.0
    %1541 = vmatprep.subr.mxu0 0.0
    %1542 = vmatpush1.msra.mxu0 0.0
    %1543 = vmatprep.subr.mxu0 0.0
    %1544 = vmatpush1.msra.mxu0 0.0
    %1545 = vmatprep.subr.mxu0 0.0
    %1546 = vmatpush1.msra.mxu0 0.0
    %1547 = vmatprep.subr.mxu0 0.0
    %1548 = vmatpush1.msra.mxu0 0.0
    %1549 = vmatprep.subr.mxu0 0.0
    %1550 = vmatpush1.msra.mxu0 0.0
    %1551 = vmatprep.subr.mxu0 0.0
    %1552 = vmatpush1.msra.mxu0 0.0
    %1553 = vmatprep.subr.mxu0 0.0
    %1554 = vmatpush1.msra.mxu0 0.0
    %1555 = vmatprep.subr.mxu0 0.0
    %1556 = vmatpush1.msra.mxu0 0.0
    %1557 = vmatprep.subr.mxu0 0.0
    %1558 = vmatpush1.msra.mxu0 0.0
    %1559 = vmatprep.subr.mxu0 0.0
    %1560 = vmatpush1.msra.mxu0 0.0
    %1561 = vmatprep.subr.mxu0 0.0
    %1562 = vmatpush1.msra.mxu0 0.0
    %1563 = vmatprep.mubr.f32.mxu0 0.0
    %1564 = vmatmul.mubr.f32.gmra.mrb[0].mxu0 %v1319
    %v1565 = vpop.f32.mrb[0].mxu0
    %v1566 = vadd.f32 %v1495, %v1565
    %v1567 = vpop.f32.mrb[0].mxu0
    %v1568 = vadd.f32 %v1496, %v1567
    %1569 = vdwg.mxu0
    %1570 = vmatprep.subr.mxu0 %v918
    %1571 = vmatpush1.msra.mxu0 %v917
    %1572 = vmatprep.subr.mxu0 %v922
    %1573 = vmatpush1.msra.mxu0 %v921
    %1574 = vmatprep.subr.mxu0 %v926
    %1575 = vmatpush1.msra.mxu0 %v925
    %1576 = vmatprep.subr.mxu0 %v930
    %1577 = vmatpush1.msra.mxu0 %v929
    %1578 = vmatprep.subr.mxu0 %v934
    %1579 = vmatpush1.msra.mxu0 %v933
    %1580 = vmatprep.subr.mxu0 %v938
    %1581 = vmatpush1.msra.mxu0 %v937
    %1582 = vmatprep.subr.mxu0 %v942
    %1583 = vmatpush1.msra.mxu0 %v941
    %1584 = vmatprep.subr.mxu0 %v946
    %1585 = vmatpush1.msra.mxu0 %v945
    %1586 = vmatprep.subr.mxu0 %v950
    %1587 = vmatpush1.msra.mxu0 %v949
    %1588 = vmatprep.subr.mxu0 %v954
    %1589 = vmatpush1.msra.mxu0 %v953
    %1590 = vmatprep.subr.mxu0 %v958
    %1591 = vmatpush1.msra.mxu0 %v957
    %1592 = vmatprep.subr.mxu0 %v962
    %1593 = vmatpush1.msra.mxu0 %v961
    %1594 = vmatprep.subr.mxu0 %v966
    %1595 = vmatpush1.msra.mxu0 %v965
    %1596 = vmatprep.subr.mxu0 %v970
    %1597 = vmatpush1.msra.mxu0 %v969
    %1598 = vmatprep.subr.mxu0 %v974
    %1599 = vmatpush1.msra.mxu0 %v973
    %1600 = vmatprep.subr.mxu0 %v978
    %1601 = vmatpush1.msra.mxu0 %v977
    %1602 = vmatprep.subr.mxu0 0.0
    %1603 = vmatpush1.msra.mxu0 0.0
    %1604 = vmatprep.subr.mxu0 0.0
    %1605 = vmatpush1.msra.mxu0 0.0
    %1606 = vmatprep.subr.mxu0 0.0
    %1607 = vmatpush1.msra.mxu0 0.0
    %1608 = vmatprep.subr.mxu0 0.0
    %1609 = vmatpush1.msra.mxu0 0.0
    %1610 = vmatprep.subr.mxu0 0.0
    %1611 = vmatpush1.msra.mxu0 0.0
    %1612 = vmatprep.subr.mxu0 0.0
    %1613 = vmatpush1.msra.mxu0 0.0
    %1614 = vmatprep.subr.mxu0 0.0
    %1615 = vmatpush1.msra.mxu0 0.0
    %1616 = vmatprep.subr.mxu0 0.0
    %1617 = vmatpush1.msra.mxu0 0.0
    %1618 = vmatprep.subr.mxu0 0.0
    %1619 = vmatpush1.msra.mxu0 0.0
    %1620 = vmatprep.subr.mxu0 0.0
    %1621 = vmatpush1.msra.mxu0 0.0
    %1622 = vmatprep.subr.mxu0 0.0
    %1623 = vmatpush1.msra.mxu0 0.0
    %1624 = vmatprep.subr.mxu0 0.0
    %1625 = vmatpush1.msra.mxu0 0.0
    %1626 = vmatprep.subr.mxu0 0.0
    %1627 = vmatpush1.msra.mxu0 0.0
    %1628 = vmatprep.subr.mxu0 0.0
    %1629 = vmatpush1.msra.mxu0 0.0
    %1630 = vmatprep.subr.mxu0 0.0
    %1631 = vmatpush1.msra.mxu0 0.0
    %1632 = vmatprep.subr.mxu0 0.0
    %1633 = vmatpush1.msra.mxu0 0.0
    %1634 = vmatprep.mubr.f32.mxu0 0.0
    %1635 = vmatmul.mubr.f32.gmra.mrb[0].mxu0 %v1319
    %v1636 = vpop.f32.mrb[0].mxu0
    %v1637 = vadd.f32 %v1497, %v1636
    %v1638 = vpop.f32.mrb[0].mxu0
    %v1639 = vadd.f32 %v1498, %v1638
    %1640 = vdwg.mxu0
    %v1641 = vxor.u32 %v1566, 2147483648
    %v1642 = vxor.u32 %v1568, 2147483648
    %v1643 = vxor.u32 %v1637, 2147483648
    %v1644 = vmul.f32 %v1641, 1.442695
    %v1645 = vpow.pop %v1644
    %v1646 = vmul.f32 %v1642, 1.442695
    %v1647 = vpow.pop %v1646
    %v1648 = vmul.f32 %v1643, 1.442695
    %v1649 = vpow.pop %v1648
    %v1650 = vadd.f32 %v1645, 1.0
    %v1651 = vadd.f32 %v1647, 1.0
    %v1652 = vadd.f32 %v1649, 1.0
    %v1653 = vrcp.pop %v1650
    %v1654 = vmul.f32 1.0, %v1653
    %v1655 = vrcp.pop %v1651
    %v1656 = vmul.f32 1.0, %v1655
    %v1657 = vrcp.pop %v1652
    %v1658 = vmul.f32 1.0, %v1657
    %v1659 = vtanh.pop %v1639
    %v1660 = vmul.f32 %v1656, %v1317
    %v1661 = vmul.f32 %v1654, %v1659
    %v1662 = vadd.f32 %v1660, %v1661
    %v1663 = vtanh.pop %v1662
    %v1664 = vmul.f32 %v1658, %v1663
    %s1665 = scalar_lea.vmem [#allocation11], 8
    %1666 = vst [vmem:[%s1665] sm:$0xff] %v1493
    %s1667 = scalar_lea.vmem [#allocation12], 48
    %1668 = vst [vmem:[%s1667] sm:$0xff] %v1664
    %s1669 = scalar_lea.vmem [#allocation7], 64
    %v1670 = vld [vmem:[%s1669] sm:$0xff]
    %v1671 = vld [vmem:[%s1669 + $0x8] sm:$0xff]
    %v1672 = vld [vmem:[%s1669 + $0x10] sm:$0xff]
    %v1673 = vld [vmem:[%s1669 + $0x18] sm:$0xff]
    %1674 = vmatprep.subr.mxu0 %v852
    %1675 = vmatpush1.msra.mxu0 %v851
    %1676 = vmatprep.subr.mxu0 %v856
    %1677 = vmatpush1.msra.mxu0 %v855
    %1678 = vmatprep.subr.mxu0 %v860
    %1679 = vmatpush1.msra.mxu0 %v859
    %1680 = vmatprep.subr.mxu0 %v864
    %1681 = vmatpush1.msra.mxu0 %v863
    %1682 = vmatprep.subr.mxu0 %v868
    %1683 = vmatpush1.msra.mxu0 %v867
    %1684 = vmatprep.subr.mxu0 %v872
    %1685 = vmatpush1.msra.mxu0 %v871
    %1686 = vmatprep.subr.mxu0 %v876
    %1687 = vmatpush1.msra.mxu0 %v875
    %1688 = vmatprep.subr.mxu0 %v880
    %1689 = vmatpush1.msra.mxu0 %v879
    %1690 = vmatprep.subr.mxu0 %v884
    %1691 = vmatpush1.msra.mxu0 %v883
    %1692 = vmatprep.subr.mxu0 %v888
    %1693 = vmatpush1.msra.mxu0 %v887
    %1694 = vmatprep.subr.mxu0 %v892
    %1695 = vmatpush1.msra.mxu0 %v891
    %1696 = vmatprep.subr.mxu0 %v896
    %1697 = vmatpush1.msra.mxu0 %v895
    %1698 = vmatprep.subr.mxu0 %v900
    %1699 = vmatpush1.msra.mxu0 %v899
    %1700 = vmatprep.subr.mxu0 %v904
    %1701 = vmatpush1.msra.mxu0 %v903
    %1702 = vmatprep.subr.mxu0 %v908
    %1703 = vmatpush1.msra.mxu0 %v907
    %1704 = vmatprep.subr.mxu0 %v912
    %1705 = vmatpush1.msra.mxu0 %v911
    %1706 = vmatprep.subr.mxu0 0.0
    %1707 = vmatpush1.msra.mxu0 0.0
    %1708 = vmatprep.subr.mxu0 0.0
    %1709 = vmatpush1.msra.mxu0 0.0
    %1710 = vmatprep.subr.mxu0 0.0
    %1711 = vmatpush1.msra.mxu0 0.0
    %1712 = vmatprep.subr.mxu0 0.0
    %1713 = vmatpush1.msra.mxu0 0.0
    %1714 = vmatprep.subr.mxu0 0.0
    %1715 = vmatpush1.msra.mxu0 0.0
    %1716 = vmatprep.subr.mxu0 0.0
    %1717 = vmatpush1.msra.mxu0 0.0
    %1718 = vmatprep.subr.mxu0 0.0
    %1719 = vmatpush1.msra.mxu0 0.0
    %1720 = vmatprep.subr.mxu0 0.0
    %1721 = vmatpush1.msra.mxu0 0.0
    %1722 = vmatprep.subr.mxu0 0.0
    %1723 = vmatpush1.msra.mxu0 0.0
    %1724 = vmatprep.subr.mxu0 0.0
    %1725 = vmatpush1.msra.mxu0 0.0
    %1726 = vmatprep.subr.mxu0 0.0
    %1727 = vmatpush1.msra.mxu0 0.0
    %1728 = vmatprep.subr.mxu0 0.0
    %1729 = vmatpush1.msra.mxu0 0.0
    %1730 = vmatprep.subr.mxu0 0.0
    %1731 = vmatpush1.msra.mxu0 0.0
    %1732 = vmatprep.subr.mxu0 0.0
    %1733 = vmatpush1.msra.mxu0 0.0
    %1734 = vmatprep.subr.mxu0 0.0
    %1735 = vmatpush1.msra.mxu0 0.0
    %1736 = vmatprep.subr.mxu0 0.0
    %1737 = vmatpush1.msra.mxu0 0.0
    %1738 = vmatprep.mubr.f32.mxu0 0.0
    %1739 = vmatmul.mubr.f32.gmra.mrb[0].mxu0 %v1493
    %v1740 = vpop.f32.mrb[0].mxu0
    %v1741 = vadd.f32 %v1670, %v1740
    %v1742 = vpop.f32.mrb[0].mxu0
    %v1743 = vadd.f32 %v1671, %v1742
    %1744 = vdwg.mxu0
    %1745 = vmatprep.subr.mxu0 %v854
    %1746 = vmatpush1.msra.mxu0 %v853
    %1747 = vmatprep.subr.mxu0 %v858
    %1748 = vmatpush1.msra.mxu0 %v857
    %1749 = vmatprep.subr.mxu0 %v862
    %1750 = vmatpush1.msra.mxu0 %v861
    %1751 = vmatprep.subr.mxu0 %v866
    %1752 = vmatpush1.msra.mxu0 %v865
    %1753 = vmatprep.subr.mxu0 %v870
    %1754 = vmatpush1.msra.mxu0 %v869
    %1755 = vmatprep.subr.mxu0 %v874
    %1756 = vmatpush1.msra.mxu0 %v873
    %1757 = vmatprep.subr.mxu0 %v878
    %1758 = vmatpush1.msra.mxu0 %v877
    %1759 = vmatprep.subr.mxu0 %v882
    %1760 = vmatpush1.msra.mxu0 %v881
    %1761 = vmatprep.subr.mxu0 %v886
    %1762 = vmatpush1.msra.mxu0 %v885
    %1763 = vmatprep.subr.mxu0 %v890
    %1764 = vmatpush1.msra.mxu0 %v889
    %1765 = vmatprep.subr.mxu0 %v894
    %1766 = vmatpush1.msra.mxu0 %v893
    %1767 = vmatprep.subr.mxu0 %v898
    %1768 = vmatpush1.msra.mxu0 %v897
    %1769 = vmatprep.subr.mxu0 %v902
    %1770 = vmatpush1.msra.mxu0 %v901
    %1771 = vmatprep.subr.mxu0 %v906
    %1772 = vmatpush1.msra.mxu0 %v905
    %1773 = vmatprep.subr.mxu0 %v910
    %1774 = vmatpush1.msra.mxu0 %v909
    %1775 = vmatprep.subr.mxu0 %v914
    %1776 = vmatpush1.msra.mxu0 %v913
    %1777 = vmatprep.subr.mxu0 0.0
    %1778 = vmatpush1.msra.mxu0 0.0
    %1779 = vmatprep.subr.mxu0 0.0
    %1780 = vmatpush1.msra.mxu0 0.0
    %1781 = vmatprep.subr.mxu0 0.0
    %1782 = vmatpush1.msra.mxu0 0.0
    %1783 = vmatprep.subr.mxu0 0.0
    %1784 = vmatpush1.msra.mxu0 0.0
    %1785 = vmatprep.subr.mxu0 0.0
    %1786 = vmatpush1.msra.mxu0 0.0
    %1787 = vmatprep.subr.mxu0 0.0
    %1788 = vmatpush1.msra.mxu0 0.0
    %1789 = vmatprep.subr.mxu0 0.0
    %1790 = vmatpush1.msra.mxu0 0.0
    %1791 = vmatprep.subr.mxu0 0.0
    %1792 = vmatpush1.msra.mxu0 0.0
    %1793 = vmatprep.subr.mxu0 0.0
    %1794 = vmatpush1.msra.mxu0 0.0
    %1795 = vmatprep.subr.mxu0 0.0
    %1796 = vmatpush1.msra.mxu0 0.0
    %1797 = vmatprep.subr.mxu0 0.0
    %1798 = vmatpush1.msra.mxu0 0.0
    %1799 = vmatprep.subr.mxu0 0.0
    %1800 = vmatpush1.msra.mxu0 0.0
    %1801 = vmatprep.subr.mxu0 0.0
    %1802 = vmatpush1.msra.mxu0 0.0
    %1803 = vmatprep.subr.mxu0 0.0
    %1804 = vmatpush1.msra.mxu0 0.0
    %1805 = vmatprep.subr.mxu0 0.0
    %1806 = vmatpush1.msra.mxu0 0.0
    %1807 = vmatprep.subr.mxu0 0.0
    %1808 = vmatpush1.msra.mxu0 0.0
    %1809 = vmatprep.mubr.f32.mxu0 0.0
    %1810 = vmatmul.mubr.f32.gmra.mrb[0].mxu0 %v1493
    %v1811 = vpop.f32.mrb[0].mxu0
    %v1812 = vadd.f32 %v1672, %v1811
    %v1813 = vpop.f32.mrb[0].mxu0
    %v1814 = vadd.f32 %v1673, %v1813
    %1815 = vdwg.mxu0
    %v1816 = vxor.u32 %v1741, 2147483648
    %v1817 = vxor.u32 %v1743, 2147483648
    %v1818 = vxor.u32 %v1812, 2147483648
    %v1819 = vmul.f32 %v1816, 1.442695
    %v1820 = vpow.pop %v1819
    %v1821 = vmul.f32 %v1817, 1.442695
    %v1822 = vpow.pop %v1821
    %v1823 = vmul.f32 %v1818, 1.442695
    %v1824 = vpow.pop %v1823
    %v1825 = vadd.f32 %v1820, 1.0
    %v1826 = vadd.f32 %v1822, 1.0
    %v1827 = vadd.f32 %v1824, 1.0
    %v1828 = vrcp.pop %v1825
    %v1829 = vmul.f32 1.0, %v1828
    %v1830 = vrcp.pop %v1826
    %v1831 = vmul.f32 1.0, %v1830
    %v1832 = vrcp.pop %v1827
    %v1833 = vmul.f32 1.0, %v1832
    %v1834 = vtanh.pop %v1814
    %v1835 = vmul.f32 %v1831, %v1491
    %v1836 = vmul.f32 %v1829, %v1834
    %v1837 = vadd.f32 %v1835, %v1836
    %v1838 = vtanh.pop %v1837
    %v1839 = vmul.f32 %v1833, %v1838
    %s1840 = scalar_lea.vmem [#allocation8], 160
    %v1841 = vld [vmem:[%s1840] sm:$0xff]
    %v1842 = vld [vmem:[%s1840 + $0x8] sm:$0xff]
    %v1843 = vld [vmem:[%s1840 + $0x10] sm:$0xff]
    %v1844 = vld [vmem:[%s1840 + $0x18] sm:$0xff]
    %1845 = vmatprep.subr.mxu0 %v916
    %1846 = vmatpush1.msra.mxu0 %v915
    %1847 = vmatprep.subr.mxu0 %v920
    %1848 = vmatpush1.msra.mxu0 %v919
    %1849 = vmatprep.subr.mxu0 %v924
    %1850 = vmatpush1.msra.mxu0 %v923
    %1851 = vmatprep.subr.mxu0 %v928
    %1852 = vmatpush1.msra.mxu0 %v927
    %1853 = vmatprep.subr.mxu0 %v932
    %1854 = vmatpush1.msra.mxu0 %v931
    %1855 = vmatprep.subr.mxu0 %v936
    %1856 = vmatpush1.msra.mxu0 %v935
    %1857 = vmatprep.subr.mxu0 %v940
    %1858 = vmatpush1.msra.mxu0 %v939
    %1859 = vmatprep.subr.mxu0 %v944
    %1860 = vmatpush1.msra.mxu0 %v943
    %1861 = vmatprep.subr.mxu0 %v948
    %1862 = vmatpush1.msra.mxu0 %v947
    %1863 = vmatprep.subr.mxu0 %v952
    %1864 = vmatpush1.msra.mxu0 %v951
    %1865 = vmatprep.subr.mxu0 %v956
    %1866 = vmatpush1.msra.mxu0 %v955
    %1867 = vmatprep.subr.mxu0 %v960
    %1868 = vmatpush1.msra.mxu0 %v959
    %1869 = vmatprep.subr.mxu0 %v964
    %1870 = vmatpush1.msra.mxu0 %v963
    %1871 = vmatprep.subr.mxu0 %v968
    %1872 = vmatpush1.msra.mxu0 %v967
    %1873 = vmatprep.subr.mxu0 %v972
    %1874 = vmatpush1.msra.mxu0 %v971
    %1875 = vmatprep.subr.mxu0 %v976
    %1876 = vmatpush1.msra.mxu0 %v975
    %1877 = vmatprep.subr.mxu0 0.0
    %1878 = vmatpush1.msra.mxu0 0.0
    %1879 = vmatprep.subr.mxu0 0.0
    %1880 = vmatpush1.msra.mxu0 0.0
    %1881 = vmatprep.subr.mxu0 0.0
    %1882 = vmatpush1.msra.mxu0 0.0
    %1883 = vmatprep.subr.mxu0 0.0
    %1884 = vmatpush1.msra.mxu0 0.0
    %1885 = vmatprep.subr.mxu0 0.0
    %1886 = vmatpush1.msra.mxu0 0.0
    %1887 = vmatprep.subr.mxu0 0.0
    %1888 = vmatpush1.msra.mxu0 0.0
    %1889 = vmatprep.subr.mxu0 0.0
    %1890 = vmatpush1.msra.mxu0 0.0
    %1891 = vmatprep.subr.mxu0 0.0
    %1892 = vmatpush1.msra.mxu0 0.0
    %1893 = vmatprep.subr.mxu0 0.0
    %1894 = vmatpush1.msra.mxu0 0.0
    %1895 = vmatprep.subr.mxu0 0.0
    %1896 = vmatpush1.msra.mxu0 0.0
    %1897 = vmatprep.subr.mxu0 0.0
    %1898 = vmatpush1.msra.mxu0 0.0
    %1899 = vmatprep.subr.mxu0 0.0
    %1900 = vmatpush1.msra.mxu0 0.0
    %1901 = vmatprep.subr.mxu0 0.0
    %1902 = vmatpush1.msra.mxu0 0.0
    %1903 = vmatprep.subr.mxu0 0.0
    %1904 = vmatpush1.msra.mxu0 0.0
    %1905 = vmatprep.subr.mxu0 0.0
    %1906 = vmatpush1.msra.mxu0 0.0
    %1907 = vmatprep.subr.mxu0 0.0
    %1908 = vmatpush1.msra.mxu0 0.0
    %1909 = vmatprep.mubr.f32.mxu0 0.0
    %1910 = vmatmul.mubr.f32.gmra.mrb[0].mxu0 %v1664
    %v1911 = vpop.f32.mrb[0].mxu0
    %v1912 = vadd.f32 %v1841, %v1911
    %v1913 = vpop.f32.mrb[0].mxu0
    %v1914 = vadd.f32 %v1842, %v1913
    %1915 = vdwg.mxu0
    %1916 = vmatprep.subr.mxu0 %v918
    %1917 = vmatpush1.msra.mxu0 %v917
    %1918 = vmatprep.subr.mxu0 %v922
    %1919 = vmatpush1.msra.mxu0 %v921
    %1920 = vmatprep.subr.mxu0 %v926
    %1921 = vmatpush1.msra.mxu0 %v925
    %1922 = vmatprep.subr.mxu0 %v930
    %1923 = vmatpush1.msra.mxu0 %v929
    %1924 = vmatprep.subr.mxu0 %v934
    %1925 = vmatpush1.msra.mxu0 %v933
    %1926 = vmatprep.subr.mxu0 %v938
    %1927 = vmatpush1.msra.mxu0 %v937
    %1928 = vmatprep.subr.mxu0 %v942
    %1929 = vmatpush1.msra.mxu0 %v941
    %1930 = vmatprep.subr.mxu0 %v946
    %1931 = vmatpush1.msra.mxu0 %v945
    %1932 = vmatprep.subr.mxu0 %v950
    %1933 = vmatpush1.msra.mxu0 %v949
    %1934 = vmatprep.subr.mxu0 %v954
    %1935 = vmatpush1.msra.mxu0 %v953
    %1936 = vmatprep.subr.mxu0 %v958
    %1937 = vmatpush1.msra.mxu0 %v957
    %1938 = vmatprep.subr.mxu0 %v962
    %1939 = vmatpush1.msra.mxu0 %v961
    %1940 = vmatprep.subr.mxu0 %v966
    %1941 = vmatpush1.msra.mxu0 %v965
    %1942 = vmatprep.subr.mxu0 %v970
    %1943 = vmatpush1.msra.mxu0 %v969
    %1944 = vmatprep.subr.mxu0 %v974
    %1945 = vmatpush1.msra.mxu0 %v973
    %1946 = vmatprep.subr.mxu0 %v978
    %1947 = vmatpush1.msra.mxu0 %v977
    %1948 = vmatprep.subr.mxu0 0.0
    %1949 = vmatpush1.msra.mxu0 0.0
    %1950 = vmatprep.subr.mxu0 0.0
    %1951 = vmatpush1.msra.mxu0 0.0
    %1952 = vmatprep.subr.mxu0 0.0
    %1953 = vmatpush1.msra.mxu0 0.0
    %1954 = vmatprep.subr.mxu0 0.0
    %1955 = vmatpush1.msra.mxu0 0.0
    %1956 = vmatprep.subr.mxu0 0.0
    %1957 = vmatpush1.msra.mxu0 0.0
    %1958 = vmatprep.subr.mxu0 0.0
    %1959 = vmatpush1.msra.mxu0 0.0
    %1960 = vmatprep.subr.mxu0 0.0
    %1961 = vmatpush1.msra.mxu0 0.0
    %1962 = vmatprep.subr.mxu0 0.0
    %1963 = vmatpush1.msra.mxu0 0.0
    %1964 = vmatprep.subr.mxu0 0.0
    %1965 = vmatpush1.msra.mxu0 0.0
    %1966 = vmatprep.subr.mxu0 0.0
    %1967 = vmatpush1.msra.mxu0 0.0
    %1968 = vmatprep.subr.mxu0 0.0
    %1969 = vmatpush1.msra.mxu0 0.0
    %1970 = vmatprep.subr.mxu0 0.0
    %1971 = vmatpush1.msra.mxu0 0.0
    %1972 = vmatprep.subr.mxu0 0.0
    %1973 = vmatpush1.msra.mxu0 0.0
    %1974 = vmatprep.subr.mxu0 0.0
    %1975 = vmatpush1.msra.mxu0 0.0
    %1976 = vmatprep.subr.mxu0 0.0
    %1977 = vmatpush1.msra.mxu0 0.0
    %1978 = vmatprep.subr.mxu0 0.0
    %1979 = vmatpush1.msra.mxu0 0.0
    %1980 = vmatprep.mubr.f32.mxu0 0.0
    %1981 = vmatmul.mubr.f32.gmra.mrb[0].mxu0 %v1664
    %v1982 = vpop.f32.mrb[0].mxu0
    %v1983 = vadd.f32 %v1843, %v1982
    %v1984 = vpop.f32.mrb[0].mxu0
    %v1985 = vadd.f32 %v1844, %v1984
    %1986 = vdwg.mxu0
    %v1987 = vxor.u32 %v1912, 2147483648
    %v1988 = vxor.u32 %v1914, 2147483648
    %v1989 = vxor.u32 %v1983, 2147483648
    %v1990 = vmul.f32 %v1987, 1.442695
    %v1991 = vpow.pop %v1990
    %v1992 = vmul.f32 %v1988, 1.442695
    %v1993 = vpow.pop %v1992
    %v1994 = vmul.f32 %v1989, 1.442695
    %v1995 = vpow.pop %v1994
    %v1996 = vadd.f32 %v1991, 1.0
    %v1997 = vadd.f32 %v1993, 1.0
    %v1998 = vadd.f32 %v1995, 1.0
    %v1999 = vrcp.pop %v1996
    %v2000 = vmul.f32 1.0, %v1999
    %v2001 = vrcp.pop %v1997
    %v2002 = vmul.f32 1.0, %v2001
    %v2003 = vrcp.pop %v1998
    %v2004 = vmul.f32 1.0, %v2003
    %v2005 = vtanh.pop %v1985
    %v2006 = vmul.f32 %v2002, %v1662
    %v2007 = vmul.f32 %v2000, %v2005
    %v2008 = vadd.f32 %v2006, %v2007
    %v2009 = vtanh.pop %v2008
    %v2010 = vmul.f32 %v2004, %v2009
    %s2011 = scalar_lea.vmem [#allocation11], 16
    %2012 = vst [vmem:[%s2011] sm:$0xff] %v1839
    %s2013 = scalar_lea.vmem [#allocation12], 40
    %2014 = vst [vmem:[%s2013] sm:$0xff] %v2010
    %s2015 = scalar_lea.vmem [#allocation7], 96
    %v2016 = vld [vmem:[%s2015] sm:$0xff]
    %v2017 = vld [vmem:[%s2015 + $0x8] sm:$0xff]
    %v2018 = vld [vmem:[%s2015 + $0x10] sm:$0xff]
    %v2019 = vld [vmem:[%s2015 + $0x18] sm:$0xff]
    %2020 = vmatprep.subr.mxu0 %v852
    %2021 = vmatpush1.msra.mxu0 %v851
    %2022 = vmatprep.subr.mxu0 %v856
    %2023 = vmatpush1.msra.mxu0 %v855
    %2024 = vmatprep.subr.mxu0 %v860
    %2025 = vmatpush1.msra.mxu0 %v859
    %2026 = vmatprep.subr.mxu0 %v864
    %2027 = vmatpush1.msra.mxu0 %v863
    %2028 = vmatprep.subr.mxu0 %v868
    %2029 = vmatpush1.msra.mxu0 %v867
    %2030 = vmatprep.subr.mxu0 %v872
    %2031 = vmatpush1.msra.mxu0 %v871
    %2032 = vmatprep.subr.mxu0 %v876
    %2033 = vmatpush1.msra.mxu0 %v875
    %2034 = vmatprep.subr.mxu0 %v880
    %2035 = vmatpush1.msra.mxu0 %v879
    %2036 = vmatprep.subr.mxu0 %v884
    %2037 = vmatpush1.msra.mxu0 %v883
    %2038 = vmatprep.subr.mxu0 %v888
    %2039 = vmatpush1.msra.mxu0 %v887
    %2040 = vmatprep.subr.mxu0 %v892
    %2041 = vmatpush1.msra.mxu0 %v891
    %2042 = vmatprep.subr.mxu0 %v896
    %2043 = vmatpush1.msra.mxu0 %v895
    %2044 = vmatprep.subr.mxu0 %v900
    %2045 = vmatpush1.msra.mxu0 %v899
    %2046 = vmatprep.subr.mxu0 %v904
    %2047 = vmatpush1.msra.mxu0 %v903
    %2048 = vmatprep.subr.mxu0 %v908
    %2049 = vmatpush1.msra.mxu0 %v907
    %2050 = vmatprep.subr.mxu0 %v912
    %2051 = vmatpush1.msra.mxu0 %v911
    %2052 = vmatprep.subr.mxu0 0.0
    %2053 = vmatpush1.msra.mxu0 0.0
    %2054 = vmatprep.subr.mxu0 0.0
    %2055 = vmatpush1.msra.mxu0 0.0
    %2056 = vmatprep.subr.mxu0 0.0
    %2057 = vmatpush1.msra.mxu0 0.0
    %2058 = vmatprep.subr.mxu0 0.0
    %2059 = vmatpush1.msra.mxu0 0.0
    %2060 = vmatprep.subr.mxu0 0.0
    %2061 = vmatpush1.msra.mxu0 0.0
    %2062 = vmatprep.subr.mxu0 0.0
    %2063 = vmatpush1.msra.mxu0 0.0
    %2064 = vmatprep.subr.mxu0 0.0
    %2065 = vmatpush1.msra.mxu0 0.0
    %2066 = vmatprep.subr.mxu0 0.0
    %2067 = vmatpush1.msra.mxu0 0.0
    %2068 = vmatprep.subr.mxu0 0.0
    %2069 = vmatpush1.msra.mxu0 0.0
    %2070 = vmatprep.subr.mxu0 0.0
    %2071 = vmatpush1.msra.mxu0 0.0
    %2072 = vmatprep.subr.mxu0 0.0
    %2073 = vmatpush1.msra.mxu0 0.0
    %2074 = vmatprep.subr.mxu0 0.0
    %2075 = vmatpush1.msra.mxu0 0.0
    %2076 = vmatprep.subr.mxu0 0.0
    %2077 = vmatpush1.msra.mxu0 0.0
    %2078 = vmatprep.subr.mxu0 0.0
    %2079 = vmatpush1.msra.mxu0 0.0
    %2080 = vmatprep.subr.mxu0 0.0
    %2081 = vmatpush1.msra.mxu0 0.0
    %2082 = vmatprep.subr.mxu0 0.0
    %2083 = vmatpush1.msra.mxu0 0.0
    %2084 = vmatprep.mubr.f32.mxu0 0.0
    %2085 = vmatmul.mubr.f32.gmra.mrb[0].mxu0 %v1839
    %v2086 = vpop.f32.mrb[0].mxu0
    %v2087 = vadd.f32 %v2016, %v2086
    %v2088 = vpop.f32.mrb[0].mxu0
    %v2089 = vadd.f32 %v2017, %v2088
    %2090 = vdwg.mxu0
    %2091 = vmatprep.subr.mxu0 %v854
    %2092 = vmatpush1.msra.mxu0 %v853
    %2093 = vmatprep.subr.mxu0 %v858
    %2094 = vmatpush1.msra.mxu0 %v857
    %2095 = vmatprep.subr.mxu0 %v862
    %2096 = vmatpush1.msra.mxu0 %v861
    %2097 = vmatprep.subr.mxu0 %v866
    %2098 = vmatpush1.msra.mxu0 %v865
    %2099 = vmatprep.subr.mxu0 %v870
    %2100 = vmatpush1.msra.mxu0 %v869
    %2101 = vmatprep.subr.mxu0 %v874
    %2102 = vmatpush1.msra.mxu0 %v873
    %2103 = vmatprep.subr.mxu0 %v878
    %2104 = vmatpush1.msra.mxu0 %v877
    %2105 = vmatprep.subr.mxu0 %v882
    %2106 = vmatpush1.msra.mxu0 %v881
    %2107 = vmatprep.subr.mxu0 %v886
    %2108 = vmatpush1.msra.mxu0 %v885
    %2109 = vmatprep.subr.mxu0 %v890
    %2110 = vmatpush1.msra.mxu0 %v889
    %2111 = vmatprep.subr.mxu0 %v894
    %2112 = vmatpush1.msra.mxu0 %v893
    %2113 = vmatprep.subr.mxu0 %v898
    %2114 = vmatpush1.msra.mxu0 %v897
    %2115 = vmatprep.subr.mxu0 %v902
    %2116 = vmatpush1.msra.mxu0 %v901
    %2117 = vmatprep.subr.mxu0 %v906
    %2118 = vmatpush1.msra.mxu0 %v905
    %2119 = vmatprep.subr.mxu0 %v910
    %2120 = vmatpush1.msra.mxu0 %v909
    %2121 = vmatprep.subr.mxu0 %v914
    %2122 = vmatpush1.msra.mxu0 %v913
    %2123 = vmatprep.subr.mxu0 0.0
    %2124 = vmatpush1.msra.mxu0 0.0
    %2125 = vmatprep.subr.mxu0 0.0
    %2126 = vmatpush1.msra.mxu0 0.0
    %2127 = vmatprep.subr.mxu0 0.0
    %2128 = vmatpush1.msra.mxu0 0.0
    %2129 = vmatprep.subr.mxu0 0.0
    %2130 = vmatpush1.msra.mxu0 0.0
    %2131 = vmatprep.subr.mxu0 0.0
    %2132 = vmatpush1.msra.mxu0 0.0
    %2133 = vmatprep.subr.mxu0 0.0
    %2134 = vmatpush1.msra.mxu0 0.0
    %2135 = vmatprep.subr.mxu0 0.0
    %2136 = vmatpush1.msra.mxu0 0.0
    %2137 = vmatprep.subr.mxu0 0.0
    %2138 = vmatpush1.msra.mxu0 0.0
    %2139 = vmatprep.subr.mxu0 0.0
    %2140 = vmatpush1.msra.mxu0 0.0
    %2141 = vmatprep.subr.mxu0 0.0
    %2142 = vmatpush1.msra.mxu0 0.0
    %2143 = vmatprep.subr.mxu0 0.0
    %2144 = vmatpush1.msra.mxu0 0.0
    %2145 = vmatprep.subr.mxu0 0.0
    %2146 = vmatpush1.msra.mxu0 0.0
    %2147 = vmatprep.subr.mxu0 0.0
    %2148 = vmatpush1.msra.mxu0 0.0
    %2149 = vmatprep.subr.mxu0 0.0
    %2150 = vmatpush1.msra.mxu0 0.0
    %2151 = vmatprep.subr.mxu0 0.0
    %2152 = vmatpush1.msra.mxu0 0.0
    %2153 = vmatprep.subr.mxu0 0.0
    %2154 = vmatpush1.msra.mxu0 0.0
    %2155 = vmatprep.mubr.f32.mxu0 0.0
    %2156 = vmatmul.mubr.f32.gmra.mrb[0].mxu0 %v1839
    %v2157 = vpop.f32.mrb[0].mxu0
    %v2158 = vadd.f32 %v2018, %v2157
    %v2159 = vpop.f32.mrb[0].mxu0
    %v2160 = vadd.f32 %v2019, %v2159
    %2161 = vdwg.mxu0
    %v2162 = vxor.u32 %v2087, 2147483648
    %v2163 = vxor.u32 %v2089, 2147483648
    %v2164 = vxor.u32 %v2158, 2147483648
    %v2165 = vmul.f32 %v2162, 1.442695
    %v2166 = vpow.pop %v2165
    %v2167 = vmul.f32 %v2163, 1.442695
    %v2168 = vpow.pop %v2167
    %v2169 = vmul.f32 %v2164, 1.442695
    %v2170 = vpow.pop %v2169
    %v2171 = vadd.f32 %v2166, 1.0
    %v2172 = vadd.f32 %v2168, 1.0
    %v2173 = vadd.f32 %v2170, 1.0
    %v2174 = vrcp.pop %v2171
    %v2175 = vmul.f32 1.0, %v2174
    %v2176 = vrcp.pop %v2172
    %v2177 = vmul.f32 1.0, %v2176
    %v2178 = vrcp.pop %v2173
    %v2179 = vmul.f32 1.0, %v2178
    %v2180 = vtanh.pop %v2160
    %v2181 = vmul.f32 %v2177, %v1837
    %v2182 = vmul.f32 %v2175, %v2180
    %v2183 = vadd.f32 %v2181, %v2182
    %v2184 = vtanh.pop %v2183
    %v2185 = vmul.f32 %v2179, %v2184
    %s2186 = scalar_lea.vmem [#allocation8], 128
    %v2187 = vld [vmem:[%s2186] sm:$0xff]
    %v2188 = vld [vmem:[%s2186 + $0x8] sm:$0xff]
    %v2189 = vld [vmem:[%s2186 + $0x10] sm:$0xff]
    %v2190 = vld [vmem:[%s2186 + $0x18] sm:$0xff]
    %2191 = vmatprep.subr.mxu0 %v916
    %2192 = vmatpush1.msra.mxu0 %v915
    %2193 = vmatprep.subr.mxu0 %v920
    %2194 = vmatpush1.msra.mxu0 %v919
    %2195 = vmatprep.subr.mxu0 %v924
    %2196 = vmatpush1.msra.mxu0 %v923
    %2197 = vmatprep.subr.mxu0 %v928
    %2198 = vmatpush1.msra.mxu0 %v927
    %2199 = vmatprep.subr.mxu0 %v932
    %2200 = vmatpush1.msra.mxu0 %v931
    %2201 = vmatprep.subr.mxu0 %v936
    %2202 = vmatpush1.msra.mxu0 %v935
    %2203 = vmatprep.subr.mxu0 %v940
    %2204 = vmatpush1.msra.mxu0 %v939
    %2205 = vmatprep.subr.mxu0 %v944
    %2206 = vmatpush1.msra.mxu0 %v943
    %2207 = vmatprep.subr.mxu0 %v948
    %2208 = vmatpush1.msra.mxu0 %v947
    %2209 = vmatprep.subr.mxu0 %v952
    %2210 = vmatpush1.msra.mxu0 %v951
    %2211 = vmatprep.subr.mxu0 %v956
    %2212 = vmatpush1.msra.mxu0 %v955
    %2213 = vmatprep.subr.mxu0 %v960
    %2214 = vmatpush1.msra.mxu0 %v959
    %2215 = vmatprep.subr.mxu0 %v964
    %2216 = vmatpush1.msra.mxu0 %v963
    %2217 = vmatprep.subr.mxu0 %v968
    %2218 = vmatpush1.msra.mxu0 %v967
    %2219 = vmatprep.subr.mxu0 %v972
    %2220 = vmatpush1.msra.mxu0 %v971
    %2221 = vmatprep.subr.mxu0 %v976
    %2222 = vmatpush1.msra.mxu0 %v975
    %2223 = vmatprep.subr.mxu0 0.0
    %2224 = vmatpush1.msra.mxu0 0.0
    %2225 = vmatprep.subr.mxu0 0.0
    %2226 = vmatpush1.msra.mxu0 0.0
    %2227 = vmatprep.subr.mxu0 0.0
    %2228 = vmatpush1.msra.mxu0 0.0
    %2229 = vmatprep.subr.mxu0 0.0
    %2230 = vmatpush1.msra.mxu0 0.0
    %2231 = vmatprep.subr.mxu0 0.0
    %2232 = vmatpush1.msra.mxu0 0.0
    %2233 = vmatprep.subr.mxu0 0.0
    %2234 = vmatpush1.msra.mxu0 0.0
    %2235 = vmatprep.subr.mxu0 0.0
    %2236 = vmatpush1.msra.mxu0 0.0
    %2237 = vmatprep.subr.mxu0 0.0
    %2238 = vmatpush1.msra.mxu0 0.0
    %2239 = vmatprep.subr.mxu0 0.0
    %2240 = vmatpush1.msra.mxu0 0.0
    %2241 = vmatprep.subr.mxu0 0.0
    %2242 = vmatpush1.msra.mxu0 0.0
    %2243 = vmatprep.subr.mxu0 0.0
    %2244 = vmatpush1.msra.mxu0 0.0
    %2245 = vmatprep.subr.mxu0 0.0
    %2246 = vmatpush1.msra.mxu0 0.0
    %2247 = vmatprep.subr.mxu0 0.0
    %2248 = vmatpush1.msra.mxu0 0.0
    %2249 = vmatprep.subr.mxu0 0.0
    %2250 = vmatpush1.msra.mxu0 0.0
    %2251 = vmatprep.subr.mxu0 0.0
    %2252 = vmatpush1.msra.mxu0 0.0
    %2253 = vmatprep.subr.mxu0 0.0
    %2254 = vmatpush1.msra.mxu0 0.0
    %2255 = vmatprep.mubr.f32.mxu0 0.0
    %2256 = vmatmul.mubr.f32.gmra.mrb[0].mxu0 %v2010
    %v2257 = vpop.f32.mrb[0].mxu0
    %v2258 = vadd.f32 %v2187, %v2257
    %v2259 = vpop.f32.mrb[0].mxu0
    %v2260 = vadd.f32 %v2188, %v2259
    %2261 = vdwg.mxu0
    %2262 = vmatprep.subr.mxu0 %v918
    %2263 = vmatpush1.msra.mxu0 %v917
    %2264 = vmatprep.subr.mxu0 %v922
    %2265 = vmatpush1.msra.mxu0 %v921
    %2266 = vmatprep.subr.mxu0 %v926
    %2267 = vmatpush1.msra.mxu0 %v925
    %2268 = vmatprep.subr.mxu0 %v930
    %2269 = vmatpush1.msra.mxu0 %v929
    %2270 = vmatprep.subr.mxu0 %v934
    %2271 = vmatpush1.msra.mxu0 %v933
    %2272 = vmatprep.subr.mxu0 %v938
    %2273 = vmatpush1.msra.mxu0 %v937
    %2274 = vmatprep.subr.mxu0 %v942
    %2275 = vmatpush1.msra.mxu0 %v941
    %2276 = vmatprep.subr.mxu0 %v946
    %2277 = vmatpush1.msra.mxu0 %v945
    %2278 = vmatprep.subr.mxu0 %v950
    %2279 = vmatpush1.msra.mxu0 %v949
    %2280 = vmatprep.subr.mxu0 %v954
    %2281 = vmatpush1.msra.mxu0 %v953
    %2282 = vmatprep.subr.mxu0 %v958
    %2283 = vmatpush1.msra.mxu0 %v957
    %2284 = vmatprep.subr.mxu0 %v962
    %2285 = vmatpush1.msra.mxu0 %v961
    %2286 = vmatprep.subr.mxu0 %v966
    %2287 = vmatpush1.msra.mxu0 %v965
    %2288 = vmatprep.subr.mxu0 %v970
    %2289 = vmatpush1.msra.mxu0 %v969
    %2290 = vmatprep.subr.mxu0 %v974
    %2291 = vmatpush1.msra.mxu0 %v973
    %2292 = vmatprep.subr.mxu0 %v978
    %2293 = vmatpush1.msra.mxu0 %v977
    %2294 = vmatprep.subr.mxu0 0.0
    %2295 = vmatpush1.msra.mxu0 0.0
    %2296 = vmatprep.subr.mxu0 0.0
    %2297 = vmatpush1.msra.mxu0 0.0
    %2298 = vmatprep.subr.mxu0 0.0
    %2299 = vmatpush1.msra.mxu0 0.0
    %2300 = vmatprep.subr.mxu0 0.0
    %2301 = vmatpush1.msra.mxu0 0.0
    %2302 = vmatprep.subr.mxu0 0.0
    %2303 = vmatpush1.msra.mxu0 0.0
    %2304 = vmatprep.subr.mxu0 0.0
    %2305 = vmatpush1.msra.mxu0 0.0
    %2306 = vmatprep.subr.mxu0 0.0
    %2307 = vmatpush1.msra.mxu0 0.0
    %2308 = vmatprep.subr.mxu0 0.0
    %2309 = vmatpush1.msra.mxu0 0.0
    %2310 = vmatprep.subr.mxu0 0.0
    %2311 = vmatpush1.msra.mxu0 0.0
    %2312 = vmatprep.subr.mxu0 0.0
    %2313 = vmatpush1.msra.mxu0 0.0
    %2314 = vmatprep.subr.mxu0 0.0
    %2315 = vmatpush1.msra.mxu0 0.0
    %2316 = vmatprep.subr.mxu0 0.0
    %2317 = vmatpush1.msra.mxu0 0.0
    %2318 = vmatprep.subr.mxu0 0.0
    %2319 = vmatpush1.msra.mxu0 0.0
    %2320 = vmatprep.subr.mxu0 0.0
    %2321 = vmatpush1.msra.mxu0 0.0
    %2322 = vmatprep.subr.mxu0 0.0
    %2323 = vmatpush1.msra.mxu0 0.0
    %2324 = vmatprep.subr.mxu0 0.0
    %2325 = vmatpush1.msra.mxu0 0.0
    %2326 = vmatprep.mubr.f32.mxu0 0.0
    %2327 = vmatmul.mubr.f32.gmra.mrb[0].mxu0 %v2010
    %v2328 = vpop.f32.mrb[0].mxu0
    %v2329 = vadd.f32 %v2189, %v2328
    %v2330 = vpop.f32.mrb[0].mxu0
    %v2331 = vadd.f32 %v2190, %v2330
    %2332 = vdwg.mxu0
    %v2333 = vxor.u32 %v2258, 2147483648
    %v2334 = vxor.u32 %v2260, 2147483648
    %v2335 = vxor.u32 %v2329, 2147483648
    %v2336 = vmul.f32 %v2333, 1.442695
    %v2337 = vpow.pop %v2336
    %v2338 = vmul.f32 %v2334, 1.442695
    %v2339 = vpow.pop %v2338
    %v2340 = vmul.f32 %v2335, 1.442695
    %v2341 = vpow.pop %v2340
    %v2342 = vadd.f32 %v2337, 1.0
    %v2343 = vadd.f32 %v2339, 1.0
    %v2344 = vadd.f32 %v2341, 1.0
    %v2345 = vrcp.pop %v2342
    %v2346 = vmul.f32 1.0, %v2345
    %v2347 = vrcp.pop %v2343
    %v2348 = vmul.f32 1.0, %v2347
    %v2349 = vrcp.pop %v2344
    %v2350 = vmul.f32 1.0, %v2349
    %v2351 = vtanh.pop %v2331
    %v2352 = vmul.f32 %v2348, %v2008
    %v2353 = vmul.f32 %v2346, %v2351
    %v2354 = vadd.f32 %v2352, %v2353
    %v2355 = vtanh.pop %v2354
    %v2356 = vmul.f32 %v2350, %v2355
    %s2357 = scalar_lea.vmem [#allocation11], 24
    %2358 = vst [vmem:[%s2357] sm:$0xff] %v2185
    %s2359 = scalar_lea.vmem [#allocation12], 32
    %2360 = vst [vmem:[%s2359] sm:$0xff] %v2356
    %s2361 = scalar_lea.vmem [#allocation7], 128
    %v2362 = vld [vmem:[%s2361] sm:$0xff]
    %v2363 = vld [vmem:[%s2361 + $0x8] sm:$0xff]
    %v2364 = vld [vmem:[%s2361 + $0x10] sm:$0xff]
    %v2365 = vld [vmem:[%s2361 + $0x18] sm:$0xff]
    %2366 = vmatprep.subr.mxu0 %v852
    %2367 = vmatpush1.msra.mxu0 %v851
    %2368 = vmatprep.subr.mxu0 %v856
    %2369 = vmatpush1.msra.mxu0 %v855
    %2370 = vmatprep.subr.mxu0 %v860
    %2371 = vmatpush1.msra.mxu0 %v859
    %2372 = vmatprep.subr.mxu0 %v864
    %2373 = vmatpush1.msra.mxu0 %v863
    %2374 = vmatprep.subr.mxu0 %v868
    %2375 = vmatpush1.msra.mxu0 %v867
    %2376 = vmatprep.subr.mxu0 %v872
    %2377 = vmatpush1.msra.mxu0 %v871
    %2378 = vmatprep.subr.mxu0 %v876
    %2379 = vmatpush1.msra.mxu0 %v875
    %2380 = vmatprep.subr.mxu0 %v880
    %2381 = vmatpush1.msra.mxu0 %v879
    %2382 = vmatprep.subr.mxu0 %v884
    %2383 = vmatpush1.msra.mxu0 %v883
    %2384 = vmatprep.subr.mxu0 %v888
    %2385 = vmatpush1.msra.mxu0 %v887
    %2386 = vmatprep.subr.mxu0 %v892
    %2387 = vmatpush1.msra.mxu0 %v891
    %2388 = vmatprep.subr.mxu0 %v896
    %2389 = vmatpush1.msra.mxu0 %v895
    %2390 = vmatprep.subr.mxu0 %v900
    %2391 = vmatpush1.msra.mxu0 %v899
    %2392 = vmatprep.subr.mxu0 %v904
    %2393 = vmatpush1.msra.mxu0 %v903
    %2394 = vmatprep.subr.mxu0 %v908
    %2395 = vmatpush1.msra.mxu0 %v907
    %2396 = vmatprep.subr.mxu0 %v912
    %2397 = vmatpush1.msra.mxu0 %v911
    %2398 = vmatprep.subr.mxu0 0.0
    %2399 = vmatpush1.msra.mxu0 0.0
    %2400 = vmatprep.subr.mxu0 0.0
    %2401 = vmatpush1.msra.mxu0 0.0
    %2402 = vmatprep.subr.mxu0 0.0
    %2403 = vmatpush1.msra.mxu0 0.0
    %2404 = vmatprep.subr.mxu0 0.0
    %2405 = vmatpush1.msra.mxu0 0.0
    %2406 = vmatprep.subr.mxu0 0.0
    %2407 = vmatpush1.msra.mxu0 0.0
    %2408 = vmatprep.subr.mxu0 0.0
    %2409 = vmatpush1.msra.mxu0 0.0
    %2410 = vmatprep.subr.mxu0 0.0
    %2411 = vmatpush1.msra.mxu0 0.0
    %2412 = vmatprep.subr.mxu0 0.0
    %2413 = vmatpush1.msra.mxu0 0.0
    %2414 = vmatprep.subr.mxu0 0.0
    %2415 = vmatpush1.msra.mxu0 0.0
    %2416 = vmatprep.subr.mxu0 0.0
    %2417 = vmatpush1.msra.mxu0 0.0
    %2418 = vmatprep.subr.mxu0 0.0
    %2419 = vmatpush1.msra.mxu0 0.0
    %2420 = vmatprep.subr.mxu0 0.0
    %2421 = vmatpush1.msra.mxu0 0.0
    %2422 = vmatprep.subr.mxu0 0.0
    %2423 = vmatpush1.msra.mxu0 0.0
    %2424 = vmatprep.subr.mxu0 0.0
    %2425 = vmatpush1.msra.mxu0 0.0
    %2426 = vmatprep.subr.mxu0 0.0
    %2427 = vmatpush1.msra.mxu0 0.0
    %2428 = vmatprep.subr.mxu0 0.0
    %2429 = vmatpush1.msra.mxu0 0.0
    %2430 = vmatprep.mubr.f32.mxu0 0.0
    %2431 = vmatmul.mubr.f32.gmra.mrb[0].mxu0 %v2185
    %v2432 = vpop.f32.mrb[0].mxu0
    %v2433 = vadd.f32 %v2362, %v2432
    %v2434 = vpop.f32.mrb[0].mxu0
    %v2435 = vadd.f32 %v2363, %v2434
    %2436 = vdwg.mxu0
    %2437 = vmatprep.subr.mxu0 %v854
    %2438 = vmatpush1.msra.mxu0 %v853
    %2439 = vmatprep.subr.mxu0 %v858
    %2440 = vmatpush1.msra.mxu0 %v857
    %2441 = vmatprep.subr.mxu0 %v862
    %2442 = vmatpush1.msra.mxu0 %v861
    %2443 = vmatprep.subr.mxu0 %v866
    %2444 = vmatpush1.msra.mxu0 %v865
    %2445 = vmatprep.subr.mxu0 %v870
    %2446 = vmatpush1.msra.mxu0 %v869
    %2447 = vmatprep.subr.mxu0 %v874
    %2448 = vmatpush1.msra.mxu0 %v873
    %2449 = vmatprep.subr.mxu0 %v878
    %2450 = vmatpush1.msra.mxu0 %v877
    %2451 = vmatprep.subr.mxu0 %v882
    %2452 = vmatpush1.msra.mxu0 %v881
    %2453 = vmatprep.subr.mxu0 %v886
    %2454 = vmatpush1.msra.mxu0 %v885
    %2455 = vmatprep.subr.mxu0 %v890
    %2456 = vmatpush1.msra.mxu0 %v889
    %2457 = vmatprep.subr.mxu0 %v894
    %2458 = vmatpush1.msra.mxu0 %v893
    %2459 = vmatprep.subr.mxu0 %v898
    %2460 = vmatpush1.msra.mxu0 %v897
    %2461 = vmatprep.subr.mxu0 %v902
    %2462 = vmatpush1.msra.mxu0 %v901
    %2463 = vmatprep.subr.mxu0 %v906
    %2464 = vmatpush1.msra.mxu0 %v905
    %2465 = vmatprep.subr.mxu0 %v910
    %2466 = vmatpush1.msra.mxu0 %v909
    %2467 = vmatprep.subr.mxu0 %v914
    %2468 = vmatpush1.msra.mxu0 %v913
    %2469 = vmatprep.subr.mxu0 0.0
    %2470 = vmatpush1.msra.mxu0 0.0
    %2471 = vmatprep.subr.mxu0 0.0
    %2472 = vmatpush1.msra.mxu0 0.0
    %2473 = vmatprep.subr.mxu0 0.0
    %2474 = vmatpush1.msra.mxu0 0.0
    %2475 = vmatprep.subr.mxu0 0.0
    %2476 = vmatpush1.msra.mxu0 0.0
    %2477 = vmatprep.subr.mxu0 0.0
    %2478 = vmatpush1.msra.mxu0 0.0
    %2479 = vmatprep.subr.mxu0 0.0
    %2480 = vmatpush1.msra.mxu0 0.0
    %2481 = vmatprep.subr.mxu0 0.0
    %2482 = vmatpush1.msra.mxu0 0.0
    %2483 = vmatprep.subr.mxu0 0.0
    %2484 = vmatpush1.msra.mxu0 0.0
    %2485 = vmatprep.subr.mxu0 0.0
    %2486 = vmatpush1.msra.mxu0 0.0
    %2487 = vmatprep.subr.mxu0 0.0
    %2488 = vmatpush1.msra.mxu0 0.0
    %2489 = vmatprep.subr.mxu0 0.0
    %2490 = vmatpush1.msra.mxu0 0.0
    %2491 = vmatprep.subr.mxu0 0.0
    %2492 = vmatpush1.msra.mxu0 0.0
    %2493 = vmatprep.subr.mxu0 0.0
    %2494 = vmatpush1.msra.mxu0 0.0
    %2495 = vmatprep.subr.mxu0 0.0
    %2496 = vmatpush1.msra.mxu0 0.0
    %2497 = vmatprep.subr.mxu0 0.0
    %2498 = vmatpush1.msra.mxu0 0.0
    %2499 = vmatprep.subr.mxu0 0.0
    %2500 = vmatpush1.msra.mxu0 0.0
    %2501 = vmatprep.mubr.f32.mxu0 0.0
    %2502 = vmatmul.mubr.f32.gmra.mrb[0].mxu0 %v2185
    %v2503 = vpop.f32.mrb[0].mxu0
    %v2504 = vadd.f32 %v2364, %v2503
    %v2505 = vpop.f32.mrb[0].mxu0
    %v2506 = vadd.f32 %v2365, %v2505
    %2507 = vdwg.mxu0
    %v2508 = vxor.u32 %v2433, 2147483648
    %v2509 = vxor.u32 %v2435, 2147483648
    %v2510 = vxor.u32 %v2504, 2147483648
    %v2511 = vmul.f32 %v2508, 1.442695
    %v2512 = vpow.pop %v2511
    %v2513 = vmul.f32 %v2509, 1.442695
    %v2514 = vpow.pop %v2513
    %v2515 = vmul.f32 %v2510, 1.442695
    %v2516 = vpow.pop %v2515
    %v2517 = vadd.f32 %v2512, 1.0
    %v2518 = vadd.f32 %v2514, 1.0
    %v2519 = vadd.f32 %v2516, 1.0
    %v2520 = vrcp.pop %v2517
    %v2521 = vmul.f32 1.0, %v2520
    %v2522 = vrcp.pop %v2518
    %v2523 = vmul.f32 1.0, %v2522
    %v2524 = vrcp.pop %v2519
    %v2525 = vmul.f32 1.0, %v2524
    %v2526 = vtanh.pop %v2506
    %v2527 = vmul.f32 %v2523, %v2183
    %v2528 = vmul.f32 %v2521, %v2526
    %v2529 = vadd.f32 %v2527, %v2528
    %v2530 = vtanh.pop %v2529
    %v2531 = vmul.f32 %v2525, %v2530
    %s2532 = scalar_lea.vmem [#allocation8], 96
    %v2533 = vld [vmem:[%s2532] sm:$0xff]
    %v2534 = vld [vmem:[%s2532 + $0x8] sm:$0xff]
    %v2535 = vld [vmem:[%s2532 + $0x10] sm:$0xff]
    %v2536 = vld [vmem:[%s2532 + $0x18] sm:$0xff]
    %2537 = vmatprep.subr.mxu0 %v916
    %2538 = vmatpush1.msra.mxu0 %v915
    %2539 = vmatprep.subr.mxu0 %v920
    %2540 = vmatpush1.msra.mxu0 %v919
    %2541 = vmatprep.subr.mxu0 %v924
    %2542 = vmatpush1.msra.mxu0 %v923
    %2543 = vmatprep.subr.mxu0 %v928
    %2544 = vmatpush1.msra.mxu0 %v927
    %2545 = vmatprep.subr.mxu0 %v932
    %2546 = vmatpush1.msra.mxu0 %v931
    %2547 = vmatprep.subr.mxu0 %v936
    %2548 = vmatpush1.msra.mxu0 %v935
    %2549 = vmatprep.subr.mxu0 %v940
    %2550 = vmatpush1.msra.mxu0 %v939
    %2551 = vmatprep.subr.mxu0 %v944
    %2552 = vmatpush1.msra.mxu0 %v943
    %2553 = vmatprep.subr.mxu0 %v948
    %2554 = vmatpush1.msra.mxu0 %v947
    %2555 = vmatprep.subr.mxu0 %v952
    %2556 = vmatpush1.msra.mxu0 %v951
    %2557 = vmatprep.subr.mxu0 %v956
    %2558 = vmatpush1.msra.mxu0 %v955
    %2559 = vmatprep.subr.mxu0 %v960
    %2560 = vmatpush1.msra.mxu0 %v959
    %2561 = vmatprep.subr.mxu0 %v964
    %2562 = vmatpush1.msra.mxu0 %v963
    %2563 = vmatprep.subr.mxu0 %v968
    %2564 = vmatpush1.msra.mxu0 %v967
    %2565 = vmatprep.subr.mxu0 %v972
    %2566 = vmatpush1.msra.mxu0 %v971
    %2567 = vmatprep.subr.mxu0 %v976
    %2568 = vmatpush1.msra.mxu0 %v975
    %2569 = vmatprep.subr.mxu0 0.0
    %2570 = vmatpush1.msra.mxu0 0.0
    %2571 = vmatprep.subr.mxu0 0.0
    %2572 = vmatpush1.msra.mxu0 0.0
    %2573 = vmatprep.subr.mxu0 0.0
    %2574 = vmatpush1.msra.mxu0 0.0
    %2575 = vmatprep.subr.mxu0 0.0
    %2576 = vmatpush1.msra.mxu0 0.0
    %2577 = vmatprep.subr.mxu0 0.0
    %2578 = vmatpush1.msra.mxu0 0.0
    %2579 = vmatprep.subr.mxu0 0.0
    %2580 = vmatpush1.msra.mxu0 0.0
    %2581 = vmatprep.subr.mxu0 0.0
    %2582 = vmatpush1.msra.mxu0 0.0
    %2583 = vmatprep.subr.mxu0 0.0
    %2584 = vmatpush1.msra.mxu0 0.0
    %2585 = vmatprep.subr.mxu0 0.0
    %2586 = vmatpush1.msra.mxu0 0.0
    %2587 = vmatprep.subr.mxu0 0.0
    %2588 = vmatpush1.msra.mxu0 0.0
    %2589 = vmatprep.subr.mxu0 0.0
    %2590 = vmatpush1.msra.mxu0 0.0
    %2591 = vmatprep.subr.mxu0 0.0
    %2592 = vmatpush1.msra.mxu0 0.0
    %2593 = vmatprep.subr.mxu0 0.0
    %2594 = vmatpush1.msra.mxu0 0.0
    %2595 = vmatprep.subr.mxu0 0.0
    %2596 = vmatpush1.msra.mxu0 0.0
    %2597 = vmatprep.subr.mxu0 0.0
    %2598 = vmatpush1.msra.mxu0 0.0
    %2599 = vmatprep.subr.mxu0 0.0
    %2600 = vmatpush1.msra.mxu0 0.0
    %2601 = vmatprep.mubr.f32.mxu0 0.0
    %2602 = vmatmul.mubr.f32.gmra.mrb[0].mxu0 %v2356
    %v2603 = vpop.f32.mrb[0].mxu0
    %v2604 = vadd.f32 %v2533, %v2603
    %v2605 = vpop.f32.mrb[0].mxu0
    %v2606 = vadd.f32 %v2534, %v2605
    %2607 = vdwg.mxu0
    %2608 = vmatprep.subr.mxu0 %v918
    %2609 = vmatpush1.msra.mxu0 %v917
    %2610 = vmatprep.subr.mxu0 %v922
    %2611 = vmatpush1.msra.mxu0 %v921
    %2612 = vmatprep.subr.mxu0 %v926
    %2613 = vmatpush1.msra.mxu0 %v925
    %2614 = vmatprep.subr.mxu0 %v930
    %2615 = vmatpush1.msra.mxu0 %v929
    %2616 = vmatprep.subr.mxu0 %v934
    %2617 = vmatpush1.msra.mxu0 %v933
    %2618 = vmatprep.subr.mxu0 %v938
    %2619 = vmatpush1.msra.mxu0 %v937
    %2620 = vmatprep.subr.mxu0 %v942
    %2621 = vmatpush1.msra.mxu0 %v941
    %2622 = vmatprep.subr.mxu0 %v946
    %2623 = vmatpush1.msra.mxu0 %v945
    %2624 = vmatprep.subr.mxu0 %v950
    %2625 = vmatpush1.msra.mxu0 %v949
    %2626 = vmatprep.subr.mxu0 %v954
    %2627 = vmatpush1.msra.mxu0 %v953
    %2628 = vmatprep.subr.mxu0 %v958
    %2629 = vmatpush1.msra.mxu0 %v957
    %2630 = vmatprep.subr.mxu0 %v962
    %2631 = vmatpush1.msra.mxu0 %v961
    %2632 = vmatprep.subr.mxu0 %v966
    %2633 = vmatpush1.msra.mxu0 %v965
    %2634 = vmatprep.subr.mxu0 %v970
    %2635 = vmatpush1.msra.mxu0 %v969
    %2636 = vmatprep.subr.mxu0 %v974
    %2637 = vmatpush1.msra.mxu0 %v973
    %2638 = vmatprep.subr.mxu0 %v978
    %2639 = vmatpush1.msra.mxu0 %v977
    %2640 = vmatprep.subr.mxu0 0.0
    %2641 = vmatpush1.msra.mxu0 0.0
    %2642 = vmatprep.subr.mxu0 0.0
    %2643 = vmatpush1.msra.mxu0 0.0
    %2644 = vmatprep.subr.mxu0 0.0
    %2645 = vmatpush1.msra.mxu0 0.0
    %2646 = vmatprep.subr.mxu0 0.0
    %2647 = vmatpush1.msra.mxu0 0.0
    %2648 = vmatprep.subr.mxu0 0.0
    %2649 = vmatpush1.msra.mxu0 0.0
    %2650 = vmatprep.subr.mxu0 0.0
    %2651 = vmatpush1.msra.mxu0 0.0
    %2652 = vmatprep.subr.mxu0 0.0
    %2653 = vmatpush1.msra.mxu0 0.0
    %2654 = vmatprep.subr.mxu0 0.0
    %2655 = vmatpush1.msra.mxu0 0.0
    %2656 = vmatprep.subr.mxu0 0.0
    %2657 = vmatpush1.msra.mxu0 0.0
    %2658 = vmatprep.subr.mxu0 0.0
    %2659 = vmatpush1.msra.mxu0 0.0
    %2660 = vmatprep.subr.mxu0 0.0
    %2661 = vmatpush1.msra.mxu0 0.0
    %2662 = vmatprep.subr.mxu0 0.0
    %2663 = vmatpush1.msra.mxu0 0.0
    %2664 = vmatprep.subr.mxu0 0.0
    %2665 = vmatpush1.msra.mxu0 0.0
    %2666 = vmatprep.subr.mxu0 0.0
    %2667 = vmatpush1.msra.mxu0 0.0
    %2668 = vmatprep.subr.mxu0 0.0
    %2669 = vmatpush1.msra.mxu0 0.0
    %2670 = vmatprep.subr.mxu0 0.0
    %2671 = vmatpush1.msra.mxu0 0.0
    %2672 = vmatprep.mubr.f32.mxu0 0.0
    %2673 = vmatmul.mubr.f32.gmra.mrb[0].mxu0 %v2356
    %v2674 = vpop.f32.mrb[0].mxu0
    %v2675 = vadd.f32 %v2535, %v2674
    %v2676 = vpop.f32.mrb[0].mxu0
    %v2677 = vadd.f32 %v2536, %v2676
    %2678 = vdwg.mxu0
    %v2679 = vxor.u32 %v2604, 2147483648
    %v2680 = vxor.u32 %v2606, 2147483648
    %v2681 = vxor.u32 %v2675, 2147483648
    %v2682 = vmul.f32 %v2679, 1.442695
    %v2683 = vpow.pop %v2682
    %v2684 = vmul.f32 %v2680, 1.442695
    %v2685 = vpow.pop %v2684
    %v2686 = vmul.f32 %v2681, 1.442695
    %v2687 = vpow.pop %v2686
    %v2688 = vadd.f32 %v2683, 1.0
    %v2689 = vadd.f32 %v2685, 1.0
    %v2690 = vadd.f32 %v2687, 1.0
    %v2691 = vrcp.pop %v2688
    %v2692 = vmul.f32 1.0, %v2691
    %v2693 = vrcp.pop %v2689
    %v2694 = vmul.f32 1.0, %v2693
    %v2695 = vrcp.pop %v2690
    %v2696 = vmul.f32 1.0, %v2695
    %v2697 = vtanh.pop %v2677
    %v2698 = vmul.f32 %v2694, %v2354
    %v2699 = vmul.f32 %v2692, %v2697
    %v2700 = vadd.f32 %v2698, %v2699
    %v2701 = vtanh.pop %v2700
    %v2702 = vmul.f32 %v2696, %v2701
    %s2703 = scalar_lea.vmem [#allocation11], 32
    %2704 = vst [vmem:[%s2703] sm:$0xff] %v2531
    %s2705 = scalar_lea.vmem [#allocation12], 24
    %2706 = vst [vmem:[%s2705] sm:$0xff] %v2702
    %s2707 = scalar_lea.vmem [#allocation7], 160
    %v2708 = vld [vmem:[%s2707] sm:$0xff]
    %v2709 = vld [vmem:[%s2707 + $0x8] sm:$0xff]
    %v2710 = vld [vmem:[%s2707 + $0x10] sm:$0xff]
    %v2711 = vld [vmem:[%s2707 + $0x18] sm:$0xff]
    %2712 = vmatprep.subr.mxu0 %v852
    %2713 = vmatpush1.msra.mxu0 %v851
    %2714 = vmatprep.subr.mxu0 %v856
    %2715 = vmatpush1.msra.mxu0 %v855
    %2716 = vmatprep.subr.mxu0 %v860
    %2717 = vmatpush1.msra.mxu0 %v859
    %2718 = vmatprep.subr.mxu0 %v864
    %2719 = vmatpush1.msra.mxu0 %v863
    %2720 = vmatprep.subr.mxu0 %v868
    %2721 = vmatpush1.msra.mxu0 %v867
    %2722 = vmatprep.subr.mxu0 %v872
    %2723 = vmatpush1.msra.mxu0 %v871
    %2724 = vmatprep.subr.mxu0 %v876
    %2725 = vmatpush1.msra.mxu0 %v875
    %2726 = vmatprep.subr.mxu0 %v880
    %2727 = vmatpush1.msra.mxu0 %v879
    %2728 = vmatprep.subr.mxu0 %v884
    %2729 = vmatpush1.msra.mxu0 %v883
    %2730 = vmatprep.subr.mxu0 %v888
    %2731 = vmatpush1.msra.mxu0 %v887
    %2732 = vmatprep.subr.mxu0 %v892
    %2733 = vmatpush1.msra.mxu0 %v891
    %2734 = vmatprep.subr.mxu0 %v896
    %2735 = vmatpush1.msra.mxu0 %v895
    %2736 = vmatprep.subr.mxu0 %v900
    %2737 = vmatpush1.msra.mxu0 %v899
    %2738 = vmatprep.subr.mxu0 %v904
    %2739 = vmatpush1.msra.mxu0 %v903
    %2740 = vmatprep.subr.mxu0 %v908
    %2741 = vmatpush1.msra.mxu0 %v907
    %2742 = vmatprep.subr.mxu0 %v912
    %2743 = vmatpush1.msra.mxu0 %v911
    %2744 = vmatprep.subr.mxu0 0.0
    %2745 = vmatpush1.msra.mxu0 0.0
    %2746 = vmatprep.subr.mxu0 0.0
    %2747 = vmatpush1.msra.mxu0 0.0
    %2748 = vmatprep.subr.mxu0 0.0
    %2749 = vmatpush1.msra.mxu0 0.0
    %2750 = vmatprep.subr.mxu0 0.0
    %2751 = vmatpush1.msra.mxu0 0.0
    %2752 = vmatprep.subr.mxu0 0.0
    %2753 = vmatpush1.msra.mxu0 0.0
    %2754 = vmatprep.subr.mxu0 0.0
    %2755 = vmatpush1.msra.mxu0 0.0
    %2756 = vmatprep.subr.mxu0 0.0
    %2757 = vmatpush1.msra.mxu0 0.0
    %2758 = vmatprep.subr.mxu0 0.0
    %2759 = vmatpush1.msra.mxu0 0.0
    %2760 = vmatprep.subr.mxu0 0.0
    %2761 = vmatpush1.msra.mxu0 0.0
    %2762 = vmatprep.subr.mxu0 0.0
    %2763 = vmatpush1.msra.mxu0 0.0
    %2764 = vmatprep.subr.mxu0 0.0
    %2765 = vmatpush1.msra.mxu0 0.0
    %2766 = vmatprep.subr.mxu0 0.0
    %2767 = vmatpush1.msra.mxu0 0.0
    %2768 = vmatprep.subr.mxu0 0.0
    %2769 = vmatpush1.msra.mxu0 0.0
    %2770 = vmatprep.subr.mxu0 0.0
    %2771 = vmatpush1.msra.mxu0 0.0
    %2772 = vmatprep.subr.mxu0 0.0
    %2773 = vmatpush1.msra.mxu0 0.0
    %2774 = vmatprep.subr.mxu0 0.0
    %2775 = vmatpush1.msra.mxu0 0.0
    %2776 = vmatprep.mubr.f32.mxu0 0.0
    %2777 = vmatmul.mubr.f32.gmra.mrb[0].mxu0 %v2531
    %v2778 = vpop.f32.mrb[0].mxu0
    %v2779 = vadd.f32 %v2708, %v2778
    %v2780 = vpop.f32.mrb[0].mxu0
    %v2781 = vadd.f32 %v2709, %v2780
    %2782 = vdwg.mxu0
    %2783 = vmatprep.subr.mxu0 %v854
    %2784 = vmatpush1.msra.mxu0 %v853
    %2785 = vmatprep.subr.mxu0 %v858
    %2786 = vmatpush1.msra.mxu0 %v857
    %2787 = vmatprep.subr.mxu0 %v862
    %2788 = vmatpush1.msra.mxu0 %v861
    %2789 = vmatprep.subr.mxu0 %v866
    %2790 = vmatpush1.msra.mxu0 %v865
    %2791 = vmatprep.subr.mxu0 %v870
    %2792 = vmatpush1.msra.mxu0 %v869
    %2793 = vmatprep.subr.mxu0 %v874
    %2794 = vmatpush1.msra.mxu0 %v873
    %2795 = vmatprep.subr.mxu0 %v878
    %2796 = vmatpush1.msra.mxu0 %v877
    %2797 = vmatprep.subr.mxu0 %v882
    %2798 = vmatpush1.msra.mxu0 %v881
    %2799 = vmatprep.subr.mxu0 %v886
    %2800 = vmatpush1.msra.mxu0 %v885
    %2801 = vmatprep.subr.mxu0 %v890
    %2802 = vmatpush1.msra.mxu0 %v889
    %2803 = vmatprep.subr.mxu0 %v894
    %2804 = vmatpush1.msra.mxu0 %v893
    %2805 = vmatprep.subr.mxu0 %v898
    %2806 = vmatpush1.msra.mxu0 %v897
    %2807 = vmatprep.subr.mxu0 %v902
    %2808 = vmatpush1.msra.mxu0 %v901
    %2809 = vmatprep.subr.mxu0 %v906
    %2810 = vmatpush1.msra.mxu0 %v905
    %2811 = vmatprep.subr.mxu0 %v910
    %2812 = vmatpush1.msra.mxu0 %v909
    %2813 = vmatprep.subr.mxu0 %v914
    %2814 = vmatpush1.msra.mxu0 %v913
    %2815 = vmatprep.subr.mxu0 0.0
    %2816 = vmatpush1.msra.mxu0 0.0
    %2817 = vmatprep.subr.mxu0 0.0
    %2818 = vmatpush1.msra.mxu0 0.0
    %2819 = vmatprep.subr.mxu0 0.0
    %2820 = vmatpush1.msra.mxu0 0.0
    %2821 = vmatprep.subr.mxu0 0.0
    %2822 = vmatpush1.msra.mxu0 0.0
    %2823 = vmatprep.subr.mxu0 0.0
    %2824 = vmatpush1.msra.mxu0 0.0
    %2825 = vmatprep.subr.mxu0 0.0
    %2826 = vmatpush1.msra.mxu0 0.0
    %2827 = vmatprep.subr.mxu0 0.0
    %2828 = vmatpush1.msra.mxu0 0.0
    %2829 = vmatprep.subr.mxu0 0.0
    %2830 = vmatpush1.msra.mxu0 0.0
    %2831 = vmatprep.subr.mxu0 0.0
    %2832 = vmatpush1.msra.mxu0 0.0
    %2833 = vmatprep.subr.mxu0 0.0
    %2834 = vmatpush1.msra.mxu0 0.0
    %2835 = vmatprep.subr.mxu0 0.0
    %2836 = vmatpush1.msra.mxu0 0.0
    %2837 = vmatprep.subr.mxu0 0.0
    %2838 = vmatpush1.msra.mxu0 0.0
    %2839 = vmatprep.subr.mxu0 0.0
    %2840 = vmatpush1.msra.mxu0 0.0
    %2841 = vmatprep.subr.mxu0 0.0
    %2842 = vmatpush1.msra.mxu0 0.0
    %2843 = vmatprep.subr.mxu0 0.0
    %2844 = vmatpush1.msra.mxu0 0.0
    %2845 = vmatprep.subr.mxu0 0.0
    %2846 = vmatpush1.msra.mxu0 0.0
    %2847 = vmatprep.mubr.f32.mxu0 0.0
    %2848 = vmatmul.mubr.f32.gmra.mrb[0].mxu0 %v2531
    %v2849 = vpop.f32.mrb[0].mxu0
    %v2850 = vadd.f32 %v2710, %v2849
    %v2851 = vpop.f32.mrb[0].mxu0
    %v2852 = vadd.f32 %v2711, %v2851
    %2853 = vdwg.mxu0
    %v2854 = vxor.u32 %v2779, 2147483648
    %v2855 = vxor.u32 %v2781, 2147483648
    %v2856 = vxor.u32 %v2850, 2147483648
    %v2857 = vmul.f32 %v2854, 1.442695
    %v2858 = vpow.pop %v2857
    %v2859 = vmul.f32 %v2855, 1.442695
    %v2860 = vpow.pop %v2859
    %v2861 = vmul.f32 %v2856, 1.442695
    %v2862 = vpow.pop %v2861
    %v2863 = vadd.f32 %v2858, 1.0
    %v2864 = vadd.f32 %v2860, 1.0
    %v2865 = vadd.f32 %v2862, 1.0
    %v2866 = vrcp.pop %v2863
    %v2867 = vmul.f32 1.0, %v2866
    %v2868 = vrcp.pop %v2864
    %v2869 = vmul.f32 1.0, %v2868
    %v2870 = vrcp.pop %v2865
    %v2871 = vmul.f32 1.0, %v2870
    %v2872 = vtanh.pop %v2852
    %v2873 = vmul.f32 %v2869, %v2529
    %v2874 = vmul.f32 %v2867, %v2872
    %v2875 = vadd.f32 %v2873, %v2874
    %v2876 = vtanh.pop %v2875
    %v2877 = vmul.f32 %v2871, %v2876
    %s2878 = scalar_lea.vmem [#allocation8], 64
    %v2879 = vld [vmem:[%s2878] sm:$0xff]
    %v2880 = vld [vmem:[%s2878 + $0x8] sm:$0xff]
    %v2881 = vld [vmem:[%s2878 + $0x10] sm:$0xff]
    %v2882 = vld [vmem:[%s2878 + $0x18] sm:$0xff]
    %2883 = vmatprep.subr.mxu0 %v916
    %2884 = vmatpush1.msra.mxu0 %v915
    %2885 = vmatprep.subr.mxu0 %v920
    %2886 = vmatpush1.msra.mxu0 %v919
    %2887 = vmatprep.subr.mxu0 %v924
    %2888 = vmatpush1.msra.mxu0 %v923
    %2889 = vmatprep.subr.mxu0 %v928
    %2890 = vmatpush1.msra.mxu0 %v927
    %2891 = vmatprep.subr.mxu0 %v932
    %2892 = vmatpush1.msra.mxu0 %v931
    %2893 = vmatprep.subr.mxu0 %v936
    %2894 = vmatpush1.msra.mxu0 %v935
    %2895 = vmatprep.subr.mxu0 %v940
    %2896 = vmatpush1.msra.mxu0 %v939
    %2897 = vmatprep.subr.mxu0 %v944
    %2898 = vmatpush1.msra.mxu0 %v943
    %2899 = vmatprep.subr.mxu0 %v948
    %2900 = vmatpush1.msra.mxu0 %v947
    %2901 = vmatprep.subr.mxu0 %v952
    %2902 = vmatpush1.msra.mxu0 %v951
    %2903 = vmatprep.subr.mxu0 %v956
    %2904 = vmatpush1.msra.mxu0 %v955
    %2905 = vmatprep.subr.mxu0 %v960
    %2906 = vmatpush1.msra.mxu0 %v959
    %2907 = vmatprep.subr.mxu0 %v964
    %2908 = vmatpush1.msra.mxu0 %v963
    %2909 = vmatprep.subr.mxu0 %v968
    %2910 = vmatpush1.msra.mxu0 %v967
    %2911 = vmatprep.subr.mxu0 %v972
    %2912 = vmatpush1.msra.mxu0 %v971
    %2913 = vmatprep.subr.mxu0 %v976
    %2914 = vmatpush1.msra.mxu0 %v975
    %2915 = vmatprep.subr.mxu0 0.0
    %2916 = vmatpush1.msra.mxu0 0.0
    %2917 = vmatprep.subr.mxu0 0.0
    %2918 = vmatpush1.msra.mxu0 0.0
    %2919 = vmatprep.subr.mxu0 0.0
    %2920 = vmatpush1.msra.mxu0 0.0
    %2921 = vmatprep.subr.mxu0 0.0
    %2922 = vmatpush1.msra.mxu0 0.0
    %2923 = vmatprep.subr.mxu0 0.0
    %2924 = vmatpush1.msra.mxu0 0.0
    %2925 = vmatprep.subr.mxu0 0.0
    %2926 = vmatpush1.msra.mxu0 0.0
    %2927 = vmatprep.subr.mxu0 0.0
    %2928 = vmatpush1.msra.mxu0 0.0
    %2929 = vmatprep.subr.mxu0 0.0
    %2930 = vmatpush1.msra.mxu0 0.0
    %2931 = vmatprep.subr.mxu0 0.0
    %2932 = vmatpush1.msra.mxu0 0.0
    %2933 = vmatprep.subr.mxu0 0.0
    %2934 = vmatpush1.msra.mxu0 0.0
    %2935 = vmatprep.subr.mxu0 0.0
    %2936 = vmatpush1.msra.mxu0 0.0
    %2937 = vmatprep.subr.mxu0 0.0
    %2938 = vmatpush1.msra.mxu0 0.0
    %2939 = vmatprep.subr.mxu0 0.0
    %2940 = vmatpush1.msra.mxu0 0.0
    %2941 = vmatprep.subr.mxu0 0.0
    %2942 = vmatpush1.msra.mxu0 0.0
    %2943 = vmatprep.subr.mxu0 0.0
    %2944 = vmatpush1.msra.mxu0 0.0
    %2945 = vmatprep.subr.mxu0 0.0
    %2946 = vmatpush1.msra.mxu0 0.0
    %2947 = vmatprep.mubr.f32.mxu0 0.0
    %2948 = vmatmul.mubr.f32.gmra.mrb[0].mxu0 %v2702
    %v2949 = vpop.f32.mrb[0].mxu0
    %v2950 = vadd.f32 %v2879, %v2949
    %v2951 = vpop.f32.mrb[0].mxu0
    %v2952 = vadd.f32 %v2880, %v2951
    %2953 = vdwg.mxu0
    %2954 = vmatprep.subr.mxu0 %v918
    %2955 = vmatpush1.msra.mxu0 %v917
    %2956 = vmatprep.subr.mxu0 %v922
    %2957 = vmatpush1.msra.mxu0 %v921
    %2958 = vmatprep.subr.mxu0 %v926
    %2959 = vmatpush1.msra.mxu0 %v925
    %2960 = vmatprep.subr.mxu0 %v930
    %2961 = vmatpush1.msra.mxu0 %v929
    %2962 = vmatprep.subr.mxu0 %v934
    %2963 = vmatpush1.msra.mxu0 %v933
    %2964 = vmatprep.subr.mxu0 %v938
    %2965 = vmatpush1.msra.mxu0 %v937
    %2966 = vmatprep.subr.mxu0 %v942
    %2967 = vmatpush1.msra.mxu0 %v941
    %2968 = vmatprep.subr.mxu0 %v946
    %2969 = vmatpush1.msra.mxu0 %v945
    %2970 = vmatprep.subr.mxu0 %v950
    %2971 = vmatpush1.msra.mxu0 %v949
    %2972 = vmatprep.subr.mxu0 %v954
    %2973 = vmatpush1.msra.mxu0 %v953
    %2974 = vmatprep.subr.mxu0 %v958
    %2975 = vmatpush1.msra.mxu0 %v957
    %2976 = vmatprep.subr.mxu0 %v962
    %2977 = vmatpush1.msra.mxu0 %v961
    %2978 = vmatprep.subr.mxu0 %v966
    %2979 = vmatpush1.msra.mxu0 %v965
    %2980 = vmatprep.subr.mxu0 %v970
    %2981 = vmatpush1.msra.mxu0 %v969
    %2982 = vmatprep.subr.mxu0 %v974
    %2983 = vmatpush1.msra.mxu0 %v973
    %2984 = vmatprep.subr.mxu0 %v978
    %2985 = vmatpush1.msra.mxu0 %v977
    %2986 = vmatprep.subr.mxu0 0.0
    %2987 = vmatpush1.msra.mxu0 0.0
    %2988 = vmatprep.subr.mxu0 0.0
    %2989 = vmatpush1.msra.mxu0 0.0
    %2990 = vmatprep.subr.mxu0 0.0
    %2991 = vmatpush1.msra.mxu0 0.0
    %2992 = vmatprep.subr.mxu0 0.0
    %2993 = vmatpush1.msra.mxu0 0.0
    %2994 = vmatprep.subr.mxu0 0.0
    %2995 = vmatpush1.msra.mxu0 0.0
    %2996 = vmatprep.subr.mxu0 0.0
    %2997 = vmatpush1.msra.mxu0 0.0
    %2998 = vmatprep.subr.mxu0 0.0
    %2999 = vmatpush1.msra.mxu0 0.0
    %3000 = vmatprep.subr.mxu0 0.0
    %3001 = vmatpush1.msra.mxu0 0.0
    %3002 = vmatprep.subr.mxu0 0.0
    %3003 = vmatpush1.msra.mxu0 0.0
    %3004 = vmatprep.subr.mxu0 0.0
    %3005 = vmatpush1.msra.mxu0 0.0
    %3006 = vmatprep.subr.mxu0 0.0
    %3007 = vmatpush1.msra.mxu0 0.0
    %3008 = vmatprep.subr.mxu0 0.0
    %3009 = vmatpush1.msra.mxu0 0.0
    %3010 = vmatprep.subr.mxu0 0.0
    %3011 = vmatpush1.msra.mxu0 0.0
    %3012 = vmatprep.subr.mxu0 0.0
    %3013 = vmatpush1.msra.mxu0 0.0
    %3014 = vmatprep.subr.mxu0 0.0
    %3015 = vmatpush1.msra.mxu0 0.0
    %3016 = vmatprep.subr.mxu0 0.0
    %3017 = vmatpush1.msra.mxu0 0.0
    %3018 = vmatprep.mubr.f32.mxu0 0.0
    %3019 = vmatmul.mubr.f32.gmra.mrb[0].mxu0 %v2702
    %v3020 = vpop.f32.mrb[0].mxu0
    %v3021 = vadd.f32 %v2881, %v3020
    %v3022 = vpop.f32.mrb[0].mxu0
    %v3023 = vadd.f32 %v2882, %v3022
    %3024 = vdwg.mxu0
    %v3025 = vxor.u32 %v2950, 2147483648
    %v3026 = vxor.u32 %v2952, 2147483648
    %v3027 = vxor.u32 %v3021, 2147483648
    %v3028 = vmul.f32 %v3025, 1.442695
    %v3029 = vpow.pop %v3028
    %v3030 = vmul.f32 %v3026, 1.442695
    %v3031 = vpow.pop %v3030
    %v3032 = vmul.f32 %v3027, 1.442695
    %v3033 = vpow.pop %v3032
    %v3034 = vadd.f32 %v3029, 1.0
    %v3035 = vadd.f32 %v3031, 1.0
    %v3036 = vadd.f32 %v3033, 1.0
    %v3037 = vrcp.pop %v3034
    %v3038 = vmul.f32 1.0, %v3037
    %v3039 = vrcp.pop %v3035
    %v3040 = vmul.f32 1.0, %v3039
    %v3041 = vrcp.pop %v3036
    %v3042 = vmul.f32 1.0, %v3041
    %v3043 = vtanh.pop %v3023
    %v3044 = vmul.f32 %v3040, %v2700
    %v3045 = vmul.f32 %v3038, %v3043
    %v3046 = vadd.f32 %v3044, %v3045
    %v3047 = vtanh.pop %v3046
    %v3048 = vmul.f32 %v3042, %v3047
    %s3049 = scalar_lea.vmem [#allocation11], 40
    %3050 = vst [vmem:[%s3049] sm:$0xff] %v2877
    %s3051 = scalar_lea.vmem [#allocation12], 16
    %3052 = vst [vmem:[%s3051] sm:$0xff] %v3048
    %s3053 = scalar_lea.vmem [#allocation7], 192
    %v3054 = vld [vmem:[%s3053] sm:$0xff]
    %v3055 = vld [vmem:[%s3053 + $0x8] sm:$0xff]
    %v3056 = vld [vmem:[%s3053 + $0x10] sm:$0xff]
    %v3057 = vld [vmem:[%s3053 + $0x18] sm:$0xff]
    %3058 = vmatprep.subr.mxu0 %v852
    %3059 = vmatpush1.msra.mxu0 %v851
    %3060 = vmatprep.subr.mxu0 %v856
    %3061 = vmatpush1.msra.mxu0 %v855
    %3062 = vmatprep.subr.mxu0 %v860
    %3063 = vmatpush1.msra.mxu0 %v859
    %3064 = vmatprep.subr.mxu0 %v864
    %3065 = vmatpush1.msra.mxu0 %v863
    %3066 = vmatprep.subr.mxu0 %v868
    %3067 = vmatpush1.msra.mxu0 %v867
    %3068 = vmatprep.subr.mxu0 %v872
    %3069 = vmatpush1.msra.mxu0 %v871
    %3070 = vmatprep.subr.mxu0 %v876
    %3071 = vmatpush1.msra.mxu0 %v875
    %3072 = vmatprep.subr.mxu0 %v880
    %3073 = vmatpush1.msra.mxu0 %v879
    %3074 = vmatprep.subr.mxu0 %v884
    %3075 = vmatpush1.msra.mxu0 %v883
    %3076 = vmatprep.subr.mxu0 %v888
    %3077 = vmatpush1.msra.mxu0 %v887
    %3078 = vmatprep.subr.mxu0 %v892
    %3079 = vmatpush1.msra.mxu0 %v891
    %3080 = vmatprep.subr.mxu0 %v896
    %3081 = vmatpush1.msra.mxu0 %v895
    %3082 = vmatprep.subr.mxu0 %v900
    %3083 = vmatpush1.msra.mxu0 %v899
    %3084 = vmatprep.subr.mxu0 %v904
    %3085 = vmatpush1.msra.mxu0 %v903
    %3086 = vmatprep.subr.mxu0 %v908
    %3087 = vmatpush1.msra.mxu0 %v907
    %3088 = vmatprep.subr.mxu0 %v912
    %3089 = vmatpush1.msra.mxu0 %v911
    %3090 = vmatprep.subr.mxu0 0.0
    %3091 = vmatpush1.msra.mxu0 0.0
    %3092 = vmatprep.subr.mxu0 0.0
    %3093 = vmatpush1.msra.mxu0 0.0
    %3094 = vmatprep.subr.mxu0 0.0
    %3095 = vmatpush1.msra.mxu0 0.0
    %3096 = vmatprep.subr.mxu0 0.0
    %3097 = vmatpush1.msra.mxu0 0.0
    %3098 = vmatprep.subr.mxu0 0.0
    %3099 = vmatpush1.msra.mxu0 0.0
    %3100 = vmatprep.subr.mxu0 0.0
    %3101 = vmatpush1.msra.mxu0 0.0
    %3102 = vmatprep.subr.mxu0 0.0
    %3103 = vmatpush1.msra.mxu0 0.0
    %3104 = vmatprep.subr.mxu0 0.0
    %3105 = vmatpush1.msra.mxu0 0.0
    %3106 = vmatprep.subr.mxu0 0.0
    %3107 = vmatpush1.msra.mxu0 0.0
    %3108 = vmatprep.subr.mxu0 0.0
    %3109 = vmatpush1.msra.mxu0 0.0
    %3110 = vmatprep.subr.mxu0 0.0
    %3111 = vmatpush1.msra.mxu0 0.0
    %3112 = vmatprep.subr.mxu0 0.0
    %3113 = vmatpush1.msra.mxu0 0.0
    %3114 = vmatprep.subr.mxu0 0.0
    %3115 = vmatpush1.msra.mxu0 0.0
    %3116 = vmatprep.subr.mxu0 0.0
    %3117 = vmatpush1.msra.mxu0 0.0
    %3118 = vmatprep.subr.mxu0 0.0
    %3119 = vmatpush1.msra.mxu0 0.0
    %3120 = vmatprep.subr.mxu0 0.0
    %3121 = vmatpush1.msra.mxu0 0.0
    %3122 = vmatprep.mubr.f32.mxu0 0.0
    %3123 = vmatmul.mubr.f32.gmra.mrb[0].mxu0 %v2877
    %v3124 = vpop.f32.mrb[0].mxu0
    %v3125 = vadd.f32 %v3054, %v3124
    %v3126 = vpop.f32.mrb[0].mxu0
    %v3127 = vadd.f32 %v3055, %v3126
    %3128 = vdwg.mxu0
    %3129 = vmatprep.subr.mxu0 %v854
    %3130 = vmatpush1.msra.mxu0 %v853
    %3131 = vmatprep.subr.mxu0 %v858
    %3132 = vmatpush1.msra.mxu0 %v857
    %3133 = vmatprep.subr.mxu0 %v862
    %3134 = vmatpush1.msra.mxu0 %v861
    %3135 = vmatprep.subr.mxu0 %v866
    %3136 = vmatpush1.msra.mxu0 %v865
    %3137 = vmatprep.subr.mxu0 %v870
    %3138 = vmatpush1.msra.mxu0 %v869
    %3139 = vmatprep.subr.mxu0 %v874
    %3140 = vmatpush1.msra.mxu0 %v873
    %3141 = vmatprep.subr.mxu0 %v878
    %3142 = vmatpush1.msra.mxu0 %v877
    %3143 = vmatprep.subr.mxu0 %v882
    %3144 = vmatpush1.msra.mxu0 %v881
    %3145 = vmatprep.subr.mxu0 %v886
    %3146 = vmatpush1.msra.mxu0 %v885
    %3147 = vmatprep.subr.mxu0 %v890
    %3148 = vmatpush1.msra.mxu0 %v889
    %3149 = vmatprep.subr.mxu0 %v894
    %3150 = vmatpush1.msra.mxu0 %v893
    %3151 = vmatprep.subr.mxu0 %v898
    %3152 = vmatpush1.msra.mxu0 %v897
    %3153 = vmatprep.subr.mxu0 %v902
    %3154 = vmatpush1.msra.mxu0 %v901
    %3155 = vmatprep.subr.mxu0 %v906
    %3156 = vmatpush1.msra.mxu0 %v905
    %3157 = vmatprep.subr.mxu0 %v910
    %3158 = vmatpush1.msra.mxu0 %v909
    %3159 = vmatprep.subr.mxu0 %v914
    %3160 = vmatpush1.msra.mxu0 %v913
    %3161 = vmatprep.subr.mxu0 0.0
    %3162 = vmatpush1.msra.mxu0 0.0
    %3163 = vmatprep.subr.mxu0 0.0
    %3164 = vmatpush1.msra.mxu0 0.0
    %3165 = vmatprep.subr.mxu0 0.0
    %3166 = vmatpush1.msra.mxu0 0.0
    %3167 = vmatprep.subr.mxu0 0.0
    %3168 = vmatpush1.msra.mxu0 0.0
    %3169 = vmatprep.subr.mxu0 0.0
    %3170 = vmatpush1.msra.mxu0 0.0
    %3171 = vmatprep.subr.mxu0 0.0
    %3172 = vmatpush1.msra.mxu0 0.0
    %3173 = vmatprep.subr.mxu0 0.0
    %3174 = vmatpush1.msra.mxu0 0.0
    %3175 = vmatprep.subr.mxu0 0.0
    %3176 = vmatpush1.msra.mxu0 0.0
    %3177 = vmatprep.subr.mxu0 0.0
    %3178 = vmatpush1.msra.mxu0 0.0
    %3179 = vmatprep.subr.mxu0 0.0
    %3180 = vmatpush1.msra.mxu0 0.0
    %3181 = vmatprep.subr.mxu0 0.0
    %3182 = vmatpush1.msra.mxu0 0.0
    %3183 = vmatprep.subr.mxu0 0.0
    %3184 = vmatpush1.msra.mxu0 0.0
    %3185 = vmatprep.subr.mxu0 0.0
    %3186 = vmatpush1.msra.mxu0 0.0
    %3187 = vmatprep.subr.mxu0 0.0
    %3188 = vmatpush1.msra.mxu0 0.0
    %3189 = vmatprep.subr.mxu0 0.0
    %3190 = vmatpush1.msra.mxu0 0.0
    %3191 = vmatprep.subr.mxu0 0.0
    %3192 = vmatpush1.msra.mxu0 0.0
    %3193 = vmatprep.mubr.f32.mxu0 0.0
    %3194 = vmatmul.mubr.f32.gmra.mrb[0].mxu0 %v2877
    %v3195 = vpop.f32.mrb[0].mxu0
    %v3196 = vadd.f32 %v3056, %v3195
    %v3197 = vpop.f32.mrb[0].mxu0
    %v3198 = vadd.f32 %v3057, %v3197
    %3199 = vdwg.mxu0
    %v3200 = vxor.u32 %v3125, 2147483648
    %v3201 = vxor.u32 %v3127, 2147483648
    %v3202 = vxor.u32 %v3196, 2147483648
    %v3203 = vmul.f32 %v3200, 1.442695
    %v3204 = vpow.pop %v3203
    %v3205 = vmul.f32 %v3201, 1.442695
    %v3206 = vpow.pop %v3205
    %v3207 = vmul.f32 %v3202, 1.442695
    %v3208 = vpow.pop %v3207
    %v3209 = vadd.f32 %v3204, 1.0
    %v3210 = vadd.f32 %v3206, 1.0
    %v3211 = vadd.f32 %v3208, 1.0
    %v3212 = vrcp.pop %v3209
    %v3213 = vmul.f32 1.0, %v3212
    %v3214 = vrcp.pop %v3210
    %v3215 = vmul.f32 1.0, %v3214
    %v3216 = vrcp.pop %v3211
    %v3217 = vmul.f32 1.0, %v3216
    %v3218 = vtanh.pop %v3198
    %v3219 = vmul.f32 %v3215, %v2875
    %v3220 = vmul.f32 %v3213, %v3218
    %v3221 = vadd.f32 %v3219, %v3220
    %v3222 = vtanh.pop %v3221
    %v3223 = vmul.f32 %v3217, %v3222
    %s3224 = scalar_lea.vmem [#allocation8], 32
    %v3225 = vld [vmem:[%s3224] sm:$0xff]
    %v3226 = vld [vmem:[%s3224 + $0x8] sm:$0xff]
    %v3227 = vld [vmem:[%s3224 + $0x10] sm:$0xff]
    %v3228 = vld [vmem:[%s3224 + $0x18] sm:$0xff]
    %3229 = vmatprep.subr.mxu0 %v916
    %3230 = vmatpush1.msra.mxu0 %v915
    %3231 = vmatprep.subr.mxu0 %v920
    %3232 = vmatpush1.msra.mxu0 %v919
    %3233 = vmatprep.subr.mxu0 %v924
    %3234 = vmatpush1.msra.mxu0 %v923
    %3235 = vmatprep.subr.mxu0 %v928
    %3236 = vmatpush1.msra.mxu0 %v927
    %3237 = vmatprep.subr.mxu0 %v932
    %3238 = vmatpush1.msra.mxu0 %v931
    %3239 = vmatprep.subr.mxu0 %v936
    %3240 = vmatpush1.msra.mxu0 %v935
    %3241 = vmatprep.subr.mxu0 %v940
    %3242 = vmatpush1.msra.mxu0 %v939
    %3243 = vmatprep.subr.mxu0 %v944
    %3244 = vmatpush1.msra.mxu0 %v943
    %3245 = vmatprep.subr.mxu0 %v948
    %3246 = vmatpush1.msra.mxu0 %v947
    %3247 = vmatprep.subr.mxu0 %v952
    %3248 = vmatpush1.msra.mxu0 %v951
    %3249 = vmatprep.subr.mxu0 %v956
    %3250 = vmatpush1.msra.mxu0 %v955
    %3251 = vmatprep.subr.mxu0 %v960
    %3252 = vmatpush1.msra.mxu0 %v959
    %3253 = vmatprep.subr.mxu0 %v964
    %3254 = vmatpush1.msra.mxu0 %v963
    %3255 = vmatprep.subr.mxu0 %v968
    %3256 = vmatpush1.msra.mxu0 %v967
    %3257 = vmatprep.subr.mxu0 %v972
    %3258 = vmatpush1.msra.mxu0 %v971
    %3259 = vmatprep.subr.mxu0 %v976
    %3260 = vmatpush1.msra.mxu0 %v975
    %3261 = vmatprep.subr.mxu0 0.0
    %3262 = vmatpush1.msra.mxu0 0.0
    %3263 = vmatprep.subr.mxu0 0.0
    %3264 = vmatpush1.msra.mxu0 0.0
    %3265 = vmatprep.subr.mxu0 0.0
    %3266 = vmatpush1.msra.mxu0 0.0
    %3267 = vmatprep.subr.mxu0 0.0
    %3268 = vmatpush1.msra.mxu0 0.0
    %3269 = vmatprep.subr.mxu0 0.0
    %3270 = vmatpush1.msra.mxu0 0.0
    %3271 = vmatprep.subr.mxu0 0.0
    %3272 = vmatpush1.msra.mxu0 0.0
    %3273 = vmatprep.subr.mxu0 0.0
    %3274 = vmatpush1.msra.mxu0 0.0
    %3275 = vmatprep.subr.mxu0 0.0
    %3276 = vmatpush1.msra.mxu0 0.0
    %3277 = vmatprep.subr.mxu0 0.0
    %3278 = vmatpush1.msra.mxu0 0.0
    %3279 = vmatprep.subr.mxu0 0.0
    %3280 = vmatpush1.msra.mxu0 0.0
    %3281 = vmatprep.subr.mxu0 0.0
    %3282 = vmatpush1.msra.mxu0 0.0
    %3283 = vmatprep.subr.mxu0 0.0
    %3284 = vmatpush1.msra.mxu0 0.0
    %3285 = vmatprep.subr.mxu0 0.0
    %3286 = vmatpush1.msra.mxu0 0.0
    %3287 = vmatprep.subr.mxu0 0.0
    %3288 = vmatpush1.msra.mxu0 0.0
    %3289 = vmatprep.subr.mxu0 0.0
    %3290 = vmatpush1.msra.mxu0 0.0
    %3291 = vmatprep.subr.mxu0 0.0
    %3292 = vmatpush1.msra.mxu0 0.0
    %3293 = vmatprep.mubr.f32.mxu0 0.0
    %3294 = vmatmul.mubr.f32.gmra.mrb[0].mxu0 %v3048
    %v3295 = vpop.f32.mrb[0].mxu0
    %v3296 = vadd.f32 %v3225, %v3295
    %v3297 = vpop.f32.mrb[0].mxu0
    %v3298 = vadd.f32 %v3226, %v3297
    %3299 = vdwg.mxu0
    %3300 = vmatprep.subr.mxu0 %v918
    %3301 = vmatpush1.msra.mxu0 %v917
    %3302 = vmatprep.subr.mxu0 %v922
    %3303 = vmatpush1.msra.mxu0 %v921
    %3304 = vmatprep.subr.mxu0 %v926
    %3305 = vmatpush1.msra.mxu0 %v925
    %3306 = vmatprep.subr.mxu0 %v930
    %3307 = vmatpush1.msra.mxu0 %v929
    %3308 = vmatprep.subr.mxu0 %v934
    %3309 = vmatpush1.msra.mxu0 %v933
    %3310 = vmatprep.subr.mxu0 %v938
    %3311 = vmatpush1.msra.mxu0 %v937
    %3312 = vmatprep.subr.mxu0 %v942
    %3313 = vmatpush1.msra.mxu0 %v941
    %3314 = vmatprep.subr.mxu0 %v946
    %3315 = vmatpush1.msra.mxu0 %v945
    %3316 = vmatprep.subr.mxu0 %v950
    %3317 = vmatpush1.msra.mxu0 %v949
    %3318 = vmatprep.subr.mxu0 %v954
    %3319 = vmatpush1.msra.mxu0 %v953
    %3320 = vmatprep.subr.mxu0 %v958
    %3321 = vmatpush1.msra.mxu0 %v957
    %3322 = vmatprep.subr.mxu0 %v962
    %3323 = vmatpush1.msra.mxu0 %v961
    %3324 = vmatprep.subr.mxu0 %v966
    %3325 = vmatpush1.msra.mxu0 %v965
    %3326 = vmatprep.subr.mxu0 %v970
    %3327 = vmatpush1.msra.mxu0 %v969
    %3328 = vmatprep.subr.mxu0 %v974
    %3329 = vmatpush1.msra.mxu0 %v973
    %3330 = vmatprep.subr.mxu0 %v978
    %3331 = vmatpush1.msra.mxu0 %v977
    %3332 = vmatprep.subr.mxu0 0.0
    %3333 = vmatpush1.msra.mxu0 0.0
    %3334 = vmatprep.subr.mxu0 0.0
    %3335 = vmatpush1.msra.mxu0 0.0
    %3336 = vmatprep.subr.mxu0 0.0
    %3337 = vmatpush1.msra.mxu0 0.0
    %3338 = vmatprep.subr.mxu0 0.0
    %3339 = vmatpush1.msra.mxu0 0.0
    %3340 = vmatprep.subr.mxu0 0.0
    %3341 = vmatpush1.msra.mxu0 0.0
    %3342 = vmatprep.subr.mxu0 0.0
    %3343 = vmatpush1.msra.mxu0 0.0
    %3344 = vmatprep.subr.mxu0 0.0
    %3345 = vmatpush1.msra.mxu0 0.0
    %3346 = vmatprep.subr.mxu0 0.0
    %3347 = vmatpush1.msra.mxu0 0.0
    %3348 = vmatprep.subr.mxu0 0.0
    %3349 = vmatpush1.msra.mxu0 0.0
    %3350 = vmatprep.subr.mxu0 0.0
    %3351 = vmatpush1.msra.mxu0 0.0
    %3352 = vmatprep.subr.mxu0 0.0
    %3353 = vmatpush1.msra.mxu0 0.0
    %3354 = vmatprep.subr.mxu0 0.0
    %3355 = vmatpush1.msra.mxu0 0.0
    %3356 = vmatprep.subr.mxu0 0.0
    %3357 = vmatpush1.msra.mxu0 0.0
    %3358 = vmatprep.subr.mxu0 0.0
    %3359 = vmatpush1.msra.mxu0 0.0
    %3360 = vmatprep.subr.mxu0 0.0
    %3361 = vmatpush1.msra.mxu0 0.0
    %3362 = vmatprep.subr.mxu0 0.0
    %3363 = vmatpush1.msra.mxu0 0.0
    %3364 = vmatprep.mubr.f32.mxu0 0.0
    %3365 = vmatmul.mubr.f32.gmra.mrb[0].mxu0 %v3048
    %v3366 = vpop.f32.mrb[0].mxu0
    %v3367 = vadd.f32 %v3227, %v3366
    %v3368 = vpop.f32.mrb[0].mxu0
    %v3369 = vadd.f32 %v3228, %v3368
    %3370 = vdwg.mxu0
    %v3371 = vxor.u32 %v3296, 2147483648
    %v3372 = vxor.u32 %v3298, 2147483648
    %v3373 = vxor.u32 %v3367, 2147483648
    %v3374 = vmul.f32 %v3371, 1.442695
    %v3375 = vpow.pop %v3374
    %v3376 = vmul.f32 %v3372, 1.442695
    %v3377 = vpow.pop %v3376
    %v3378 = vmul.f32 %v3373, 1.442695
    %v3379 = vpow.pop %v3378
    %v3380 = vadd.f32 %v3375, 1.0
    %v3381 = vadd.f32 %v3377, 1.0
    %v3382 = vadd.f32 %v3379, 1.0
    %v3383 = vrcp.pop %v3380
    %v3384 = vmul.f32 1.0, %v3383
    %v3385 = vrcp.pop %v3381
    %v3386 = vmul.f32 1.0, %v3385
    %v3387 = vrcp.pop %v3382
    %v3388 = vmul.f32 1.0, %v3387
    %v3389 = vtanh.pop %v3369
    %v3390 = vmul.f32 %v3386, %v3046
    %v3391 = vmul.f32 %v3384, %v3389
    %v3392 = vadd.f32 %v3390, %v3391
    %v3393 = vtanh.pop %v3392
    %v3394 = vmul.f32 %v3388, %v3393
    %s3395 = scalar_lea.vmem [#allocation11], 48
    %3396 = vst [vmem:[%s3395] sm:$0xff] %v3223
    %s3397 = scalar_lea.vmem [#allocation12], 8
    %3398 = vst [vmem:[%s3397] sm:$0xff] %v3394
    %s3399 = scalar_lea.vmem [#allocation7], 224
    %v3400 = vld [vmem:[%s3399] sm:$0xff]
    %v3401 = vld [vmem:[%s3399 + $0x8] sm:$0xff]
    %v3402 = vld [vmem:[%s3399 + $0x10] sm:$0xff]
    %v3403 = vld [vmem:[%s3399 + $0x18] sm:$0xff]
    %3404 = vmatprep.subr.mxu0 %v852
    %3405 = vmatpush1.msra.mxu0 %v851
    %3406 = vmatprep.subr.mxu0 %v856
    %3407 = vmatpush1.msra.mxu0 %v855
    %3408 = vmatprep.subr.mxu0 %v860
    %3409 = vmatpush1.msra.mxu0 %v859
    %3410 = vmatprep.subr.mxu0 %v864
    %3411 = vmatpush1.msra.mxu0 %v863
    %3412 = vmatprep.subr.mxu0 %v868
    %3413 = vmatpush1.msra.mxu0 %v867
    %3414 = vmatprep.subr.mxu0 %v872
    %3415 = vmatpush1.msra.mxu0 %v871
    %3416 = vmatprep.subr.mxu0 %v876
    %3417 = vmatpush1.msra.mxu0 %v875
    %3418 = vmatprep.subr.mxu0 %v880
    %3419 = vmatpush1.msra.mxu0 %v879
    %3420 = vmatprep.subr.mxu0 %v884
    %3421 = vmatpush1.msra.mxu0 %v883
    %3422 = vmatprep.subr.mxu0 %v888
    %3423 = vmatpush1.msra.mxu0 %v887
    %3424 = vmatprep.subr.mxu0 %v892
    %3425 = vmatpush1.msra.mxu0 %v891
    %3426 = vmatprep.subr.mxu0 %v896
    %3427 = vmatpush1.msra.mxu0 %v895
    %3428 = vmatprep.subr.mxu0 %v900
    %3429 = vmatpush1.msra.mxu0 %v899
    %3430 = vmatprep.subr.mxu0 %v904
    %3431 = vmatpush1.msra.mxu0 %v903
    %3432 = vmatprep.subr.mxu0 %v908
    %3433 = vmatpush1.msra.mxu0 %v907
    %3434 = vmatprep.subr.mxu0 %v912
    %3435 = vmatpush1.msra.mxu0 %v911
    %3436 = vmatprep.subr.mxu0 0.0
    %3437 = vmatpush1.msra.mxu0 0.0
    %3438 = vmatprep.subr.mxu0 0.0
    %3439 = vmatpush1.msra.mxu0 0.0
    %3440 = vmatprep.subr.mxu0 0.0
    %3441 = vmatpush1.msra.mxu0 0.0
    %3442 = vmatprep.subr.mxu0 0.0
    %3443 = vmatpush1.msra.mxu0 0.0
    %3444 = vmatprep.subr.mxu0 0.0
    %3445 = vmatpush1.msra.mxu0 0.0
    %3446 = vmatprep.subr.mxu0 0.0
    %3447 = vmatpush1.msra.mxu0 0.0
    %3448 = vmatprep.subr.mxu0 0.0
    %3449 = vmatpush1.msra.mxu0 0.0
    %3450 = vmatprep.subr.mxu0 0.0
    %3451 = vmatpush1.msra.mxu0 0.0
    %3452 = vmatprep.subr.mxu0 0.0
    %3453 = vmatpush1.msra.mxu0 0.0
    %3454 = vmatprep.subr.mxu0 0.0
    %3455 = vmatpush1.msra.mxu0 0.0
    %3456 = vmatprep.subr.mxu0 0.0
    %3457 = vmatpush1.msra.mxu0 0.0
    %3458 = vmatprep.subr.mxu0 0.0
    %3459 = vmatpush1.msra.mxu0 0.0
    %3460 = vmatprep.subr.mxu0 0.0
    %3461 = vmatpush1.msra.mxu0 0.0
    %3462 = vmatprep.subr.mxu0 0.0
    %3463 = vmatpush1.msra.mxu0 0.0
    %3464 = vmatprep.subr.mxu0 0.0
    %3465 = vmatpush1.msra.mxu0 0.0
    %3466 = vmatprep.subr.mxu0 0.0
    %3467 = vmatpush1.msra.mxu0 0.0
    %3468 = vmatprep.mubr.f32.mxu0 0.0
    %3469 = vmatmul.mubr.f32.gmra.mrb[0].mxu0 %v3223
    %v3470 = vpop.f32.mrb[0].mxu0
    %v3471 = vadd.f32 %v3400, %v3470
    %v3472 = vpop.f32.mrb[0].mxu0
    %v3473 = vadd.f32 %v3401, %v3472
    %3474 = vdwg.mxu0
    %3475 = vmatprep.subr.mxu0 %v854
    %3476 = vmatpush1.msra.mxu0 %v853
    %3477 = vmatprep.subr.mxu0 %v858
    %3478 = vmatpush1.msra.mxu0 %v857
    %3479 = vmatprep.subr.mxu0 %v862
    %3480 = vmatpush1.msra.mxu0 %v861
    %3481 = vmatprep.subr.mxu0 %v866
    %3482 = vmatpush1.msra.mxu0 %v865
    %3483 = vmatprep.subr.mxu0 %v870
    %3484 = vmatpush1.msra.mxu0 %v869
    %3485 = vmatprep.subr.mxu0 %v874
    %3486 = vmatpush1.msra.mxu0 %v873
    %3487 = vmatprep.subr.mxu0 %v878
    %3488 = vmatpush1.msra.mxu0 %v877
    %3489 = vmatprep.subr.mxu0 %v882
    %3490 = vmatpush1.msra.mxu0 %v881
    %3491 = vmatprep.subr.mxu0 %v886
    %3492 = vmatpush1.msra.mxu0 %v885
    %3493 = vmatprep.subr.mxu0 %v890
    %3494 = vmatpush1.msra.mxu0 %v889
    %3495 = vmatprep.subr.mxu0 %v894
    %3496 = vmatpush1.msra.mxu0 %v893
    %3497 = vmatprep.subr.mxu0 %v898
    %3498 = vmatpush1.msra.mxu0 %v897
    %3499 = vmatprep.subr.mxu0 %v902
    %3500 = vmatpush1.msra.mxu0 %v901
    %3501 = vmatprep.subr.mxu0 %v906
    %3502 = vmatpush1.msra.mxu0 %v905
    %3503 = vmatprep.subr.mxu0 %v910
    %3504 = vmatpush1.msra.mxu0 %v909
    %3505 = vmatprep.subr.mxu0 %v914
    %3506 = vmatpush1.msra.mxu0 %v913
    %3507 = vmatprep.subr.mxu0 0.0
    %3508 = vmatpush1.msra.mxu0 0.0
    %3509 = vmatprep.subr.mxu0 0.0
    %3510 = vmatpush1.msra.mxu0 0.0
    %3511 = vmatprep.subr.mxu0 0.0
    %3512 = vmatpush1.msra.mxu0 0.0
    %3513 = vmatprep.subr.mxu0 0.0
    %3514 = vmatpush1.msra.mxu0 0.0
    %3515 = vmatprep.subr.mxu0 0.0
    %3516 = vmatpush1.msra.mxu0 0.0
    %3517 = vmatprep.subr.mxu0 0.0
    %3518 = vmatpush1.msra.mxu0 0.0
    %3519 = vmatprep.subr.mxu0 0.0
    %3520 = vmatpush1.msra.mxu0 0.0
    %3521 = vmatprep.subr.mxu0 0.0
    %3522 = vmatpush1.msra.mxu0 0.0
    %3523 = vmatprep.subr.mxu0 0.0
    %3524 = vmatpush1.msra.mxu0 0.0
    %3525 = vmatprep.subr.mxu0 0.0
    %3526 = vmatpush1.msra.mxu0 0.0
    %3527 = vmatprep.subr.mxu0 0.0
    %3528 = vmatpush1.msra.mxu0 0.0
    %3529 = vmatprep.subr.mxu0 0.0
    %3530 = vmatpush1.msra.mxu0 0.0
    %3531 = vmatprep.subr.mxu0 0.0
    %3532 = vmatpush1.msra.mxu0 0.0
    %3533 = vmatprep.subr.mxu0 0.0
    %3534 = vmatpush1.msra.mxu0 0.0
    %3535 = vmatprep.subr.mxu0 0.0
    %3536 = vmatpush1.msra.mxu0 0.0
    %3537 = vmatprep.subr.mxu0 0.0
    %3538 = vmatpush1.msra.mxu0 0.0
    %3539 = vmatprep.mubr.f32.mxu0 0.0
    %3540 = vmatmul.mubr.f32.gmra.mrb[0].mxu0 %v3223
    %v3541 = vpop.f32.mrb[0].mxu0
    %v3542 = vadd.f32 %v3402, %v3541
    %v3543 = vpop.f32.mrb[0].mxu0
    %v3544 = vadd.f32 %v3403, %v3543
    %3545 = vdwg.mxu0
    %v3546 = vxor.u32 %v3471, 2147483648
    %v3547 = vxor.u32 %v3473, 2147483648
    %v3548 = vxor.u32 %v3542, 2147483648
    %v3549 = vmul.f32 %v3546, 1.442695
    %v3550 = vpow.pop %v3549
    %v3551 = vmul.f32 %v3547, 1.442695
    %v3552 = vpow.pop %v3551
    %v3553 = vmul.f32 %v3548, 1.442695
    %v3554 = vpow.pop %v3553
    %v3555 = vadd.f32 %v3550, 1.0
    %v3556 = vadd.f32 %v3552, 1.0
    %v3557 = vadd.f32 %v3554, 1.0
    %v3558 = vrcp.pop %v3555
    %v3559 = vmul.f32 1.0, %v3558
    %v3560 = vrcp.pop %v3556
    %v3561 = vmul.f32 1.0, %v3560
    %v3562 = vrcp.pop %v3557
    %v3563 = vmul.f32 1.0, %v3562
    %v3564 = vtanh.pop %v3544
    %v3565 = vmul.f32 %v3561, %v3221
    %v3566 = vmul.f32 %v3559, %v3564
    %v3567 = vadd.f32 %v3565, %v3566
    %v3568 = vtanh.pop %v3567
    %v3569 = vmul.f32 %v3563, %v3568
    %v3570 = vld [vmem:[#allocation8] sm:$0xff]
    %v3571 = vld [vmem:[#allocation8 + $0x8] sm:$0xff]
    %v3572 = vld [vmem:[#allocation8 + $0x10] sm:$0xff]
    %v3573 = vld [vmem:[#allocation8 + $0x18] sm:$0xff]
    %3574 = vmatprep.subr.mxu0 %v916
    %3575 = vmatpush1.msra.mxu0 %v915
    %3576 = vmatprep.subr.mxu0 %v920
    %3577 = vmatpush1.msra.mxu0 %v919
    %3578 = vmatprep.subr.mxu0 %v924
    %3579 = vmatpush1.msra.mxu0 %v923
    %3580 = vmatprep.subr.mxu0 %v928
    %3581 = vmatpush1.msra.mxu0 %v927
    %3582 = vmatprep.subr.mxu0 %v932
    %3583 = vmatpush1.msra.mxu0 %v931
    %3584 = vmatprep.subr.mxu0 %v936
    %3585 = vmatpush1.msra.mxu0 %v935
    %3586 = vmatprep.subr.mxu0 %v940
    %3587 = vmatpush1.msra.mxu0 %v939
    %3588 = vmatprep.subr.mxu0 %v944
    %3589 = vmatpush1.msra.mxu0 %v943
    %3590 = vmatprep.subr.mxu0 %v948
    %3591 = vmatpush1.msra.mxu0 %v947
    %3592 = vmatprep.subr.mxu0 %v952
    %3593 = vmatpush1.msra.mxu0 %v951
    %3594 = vmatprep.subr.mxu0 %v956
    %3595 = vmatpush1.msra.mxu0 %v955
    %3596 = vmatprep.subr.mxu0 %v960
    %3597 = vmatpush1.msra.mxu0 %v959
    %3598 = vmatprep.subr.mxu0 %v964
    %3599 = vmatpush1.msra.mxu0 %v963
    %3600 = vmatprep.subr.mxu0 %v968
    %3601 = vmatpush1.msra.mxu0 %v967
    %3602 = vmatprep.subr.mxu0 %v972
    %3603 = vmatpush1.msra.mxu0 %v971
    %3604 = vmatprep.subr.mxu0 %v976
    %3605 = vmatpush1.msra.mxu0 %v975
    %3606 = vmatprep.subr.mxu0 0.0
    %3607 = vmatpush1.msra.mxu0 0.0
    %3608 = vmatprep.subr.mxu0 0.0
    %3609 = vmatpush1.msra.mxu0 0.0
    %3610 = vmatprep.subr.mxu0 0.0
    %3611 = vmatpush1.msra.mxu0 0.0
    %3612 = vmatprep.subr.mxu0 0.0
    %3613 = vmatpush1.msra.mxu0 0.0
    %3614 = vmatprep.subr.mxu0 0.0
    %3615 = vmatpush1.msra.mxu0 0.0
    %3616 = vmatprep.subr.mxu0 0.0
    %3617 = vmatpush1.msra.mxu0 0.0
    %3618 = vmatprep.subr.mxu0 0.0
    %3619 = vmatpush1.msra.mxu0 0.0
    %3620 = vmatprep.subr.mxu0 0.0
    %3621 = vmatpush1.msra.mxu0 0.0
    %3622 = vmatprep.subr.mxu0 0.0
    %3623 = vmatpush1.msra.mxu0 0.0
    %3624 = vmatprep.subr.mxu0 0.0
    %3625 = vmatpush1.msra.mxu0 0.0
    %3626 = vmatprep.subr.mxu0 0.0
    %3627 = vmatpush1.msra.mxu0 0.0
    %3628 = vmatprep.subr.mxu0 0.0
    %3629 = vmatpush1.msra.mxu0 0.0
    %3630 = vmatprep.subr.mxu0 0.0
    %3631 = vmatpush1.msra.mxu0 0.0
    %3632 = vmatprep.subr.mxu0 0.0
    %3633 = vmatpush1.msra.mxu0 0.0
    %3634 = vmatprep.subr.mxu0 0.0
    %3635 = vmatpush1.msra.mxu0 0.0
    %3636 = vmatprep.subr.mxu0 0.0
    %3637 = vmatpush1.msra.mxu0 0.0
    %3638 = vmatprep.mubr.f32.mxu0 0.0
    %3639 = vmatmul.mubr.f32.gmra.mrb[0].mxu0 %v3394
    %v3640 = vpop.f32.mrb[0].mxu0
    %v3641 = vadd.f32 %v3570, %v3640
    %v3642 = vpop.f32.mrb[0].mxu0
    %v3643 = vadd.f32 %v3571, %v3642
    %3644 = vdwg.mxu0
    %3645 = vmatprep.subr.mxu0 %v918
    %3646 = vmatpush1.msra.mxu0 %v917
    %3647 = vmatprep.subr.mxu0 %v922
    %3648 = vmatpush1.msra.mxu0 %v921
    %3649 = vmatprep.subr.mxu0 %v926
    %3650 = vmatpush1.msra.mxu0 %v925
    %3651 = vmatprep.subr.mxu0 %v930
    %3652 = vmatpush1.msra.mxu0 %v929
    %3653 = vmatprep.subr.mxu0 %v934
    %3654 = vmatpush1.msra.mxu0 %v933
    %3655 = vmatprep.subr.mxu0 %v938
    %3656 = vmatpush1.msra.mxu0 %v937
    %3657 = vmatprep.subr.mxu0 %v942
    %3658 = vmatpush1.msra.mxu0 %v941
    %3659 = vmatprep.subr.mxu0 %v946
    %3660 = vmatpush1.msra.mxu0 %v945
    %3661 = vmatprep.subr.mxu0 %v950
    %3662 = vmatpush1.msra.mxu0 %v949
    %3663 = vmatprep.subr.mxu0 %v954
    %3664 = vmatpush1.msra.mxu0 %v953
    %3665 = vmatprep.subr.mxu0 %v958
    %3666 = vmatpush1.msra.mxu0 %v957
    %3667 = vmatprep.subr.mxu0 %v962
    %3668 = vmatpush1.msra.mxu0 %v961
    %3669 = vmatprep.subr.mxu0 %v966
    %3670 = vmatpush1.msra.mxu0 %v965
    %3671 = vmatprep.subr.mxu0 %v970
    %3672 = vmatpush1.msra.mxu0 %v969
    %3673 = vmatprep.subr.mxu0 %v974
    %3674 = vmatpush1.msra.mxu0 %v973
    %3675 = vmatprep.subr.mxu0 %v978
    %3676 = vmatpush1.msra.mxu0 %v977
    %3677 = vmatprep.subr.mxu0 0.0
    %3678 = vmatpush1.msra.mxu0 0.0
    %3679 = vmatprep.subr.mxu0 0.0
    %3680 = vmatpush1.msra.mxu0 0.0
    %3681 = vmatprep.subr.mxu0 0.0
    %3682 = vmatpush1.msra.mxu0 0.0
    %3683 = vmatprep.subr.mxu0 0.0
    %3684 = vmatpush1.msra.mxu0 0.0
    %3685 = vmatprep.subr.mxu0 0.0
    %3686 = vmatpush1.msra.mxu0 0.0
    %3687 = vmatprep.subr.mxu0 0.0
    %3688 = vmatpush1.msra.mxu0 0.0
    %3689 = vmatprep.subr.mxu0 0.0
    %3690 = vmatpush1.msra.mxu0 0.0
    %3691 = vmatprep.subr.mxu0 0.0
    %3692 = vmatpush1.msra.mxu0 0.0
    %3693 = vmatprep.subr.mxu0 0.0
    %3694 = vmatpush1.msra.mxu0 0.0
    %3695 = vmatprep.subr.mxu0 0.0
    %3696 = vmatpush1.msra.mxu0 0.0
    %3697 = vmatprep.subr.mxu0 0.0
    %3698 = vmatpush1.msra.mxu0 0.0
    %3699 = vmatprep.subr.mxu0 0.0
    %3700 = vmatpush1.msra.mxu0 0.0
    %3701 = vmatprep.subr.mxu0 0.0
    %3702 = vmatpush1.msra.mxu0 0.0
    %3703 = vmatprep.subr.mxu0 0.0
    %3704 = vmatpush1.msra.mxu0 0.0
    %3705 = vmatprep.subr.mxu0 0.0
    %3706 = vmatpush1.msra.mxu0 0.0
    %3707 = vmatprep.subr.mxu0 0.0
    %3708 = vmatpush1.msra.mxu0 0.0
    %3709 = vmatprep.mubr.f32.mxu0 0.0
    %3710 = vmatmul.mubr.f32.gmra.mrb[0].mxu0 %v3394
    %v3711 = vpop.f32.mrb[0].mxu0
    %v3712 = vadd.f32 %v3572, %v3711
    %v3713 = vpop.f32.mrb[0].mxu0
    %v3714 = vadd.f32 %v3573, %v3713
    %3715 = vdwg.mxu0
    %v3716 = vxor.u32 %v3641, 2147483648
    %v3717 = vxor.u32 %v3643, 2147483648
    %v3718 = vxor.u32 %v3712, 2147483648
    %v3719 = vmul.f32 %v3716, 1.442695
    %v3720 = vpow.pop %v3719
    %v3721 = vmul.f32 %v3717, 1.442695
    %v3722 = vpow.pop %v3721
    %v3723 = vmul.f32 %v3718, 1.442695
    %v3724 = vpow.pop %v3723
    %v3725 = vadd.f32 %v3720, 1.0
    %v3726 = vadd.f32 %v3722, 1.0
    %v3727 = vadd.f32 %v3724, 1.0
    %v3728 = vrcp.pop %v3725
    %v3729 = vmul.f32 1.0, %v3728
    %v3730 = vrcp.pop %v3726
    %v3731 = vmul.f32 1.0, %v3730
    %v3732 = vrcp.pop %v3727
    %v3733 = vmul.f32 1.0, %v3732
    %v3734 = vtanh.pop %v3714
    %v3735 = vmul.f32 %v3731, %v3392
    %v3736 = vmul.f32 %v3729, %v3734
    %v3737 = vadd.f32 %v3735, %v3736
    %v3738 = vtanh.pop %v3737
    %v3739 = vmul.f32 %v3733, %v3738
    %s3740 = scalar_lea.vmem [#allocation11], 56
    %3741 = vst [vmem:[%s3740] sm:$0xff] %v3569
    %3742 = vst [vmem:[#allocation12] sm:$0xff] %v3739
    %s3743 = smul.u32 8, 16
    %s3744 = smul.u32 %s3743, 8
    %s3745 = sshll.u32 %s3744, 4
    %3746 = dma.done [#allocation13], %s3745
    %s3747 = sshll.u32 %s3744, 4
    %3748 = dma.done %s109, %s3747
    %v3749 = vld [vmem:[#allocation11] sm:$0xff]
    %v3750 = vld [vmem:[#allocation11 + $0x8] sm:$0xff]
    %v3751 = vld [vmem:[#allocation11 + $0x10] sm:$0xff]
    %v3752 = vld [vmem:[#allocation11 + $0x18] sm:$0xff]
    %v3753 = vld [vmem:[#allocation11 + $0x20] sm:$0xff]
    %v3754 = vld [vmem:[#allocation11 + $0x28] sm:$0xff]
    %v3755 = vld [vmem:[#allocation11 + $0x30] sm:$0xff]
    %v3756 = vld [vmem:[#allocation11 + $0x38] sm:$0xff]
    %v3757 = vld [vmem:[#allocation12] sm:$0xff]
    %v3758 = vld [vmem:[#allocation12 + $0x8] sm:$0xff]
    %v3759 = vld [vmem:[#allocation12 + $0x10] sm:$0xff]
    %v3760 = vld [vmem:[#allocation12 + $0x18] sm:$0xff]
    %v3761 = vld [vmem:[#allocation12 + $0x20] sm:$0xff]
    %v3762 = vld [vmem:[#allocation12 + $0x28] sm:$0xff]
    %v3763 = vld [vmem:[#allocation12 + $0x30] sm:$0xff]
    %v3764 = vld [vmem:[#allocation12 + $0x38] sm:$0xff]
    %v3765 = vld [vmem:[#allocation2] sm:$0xff]
    %v3766 = vld [vmem:[#allocation2 + $0x8] sm:$0xff]
    %v3767 = vld [vmem:[#allocation2 + $0x10] sm:$0xff]
    %v3768 = vld [vmem:[#allocation2 + $0x18] sm:$0xff]
    %v3769 = vld [vmem:[#allocation2 + $0x20] sm:$0xff]
    %v3770 = vld [vmem:[#allocation2 + $0x28] sm:$0xff]
    %v3771 = vld [vmem:[#allocation2 + $0x30] sm:$0xff]
    %v3772 = vld [vmem:[#allocation2 + $0x38] sm:$0xff]
    %v3773 = vld [vmem:[#allocation2 + $0x40] sm:$0xff]
    %v3774 = vld [vmem:[#allocation2 + $0x48] sm:$0xff]
    %v3775 = vld [vmem:[#allocation2 + $0x50] sm:$0xff]
    %v3776 = vld [vmem:[#allocation2 + $0x58] sm:$0xff]
    %v3777 = vld [vmem:[#allocation2 + $0x60] sm:$0xff]
    %v3778 = vld [vmem:[#allocation2 + $0x68] sm:$0xff]
    %v3779 = vld [vmem:[#allocation2 + $0x70] sm:$0xff]
    %v3780 = vld [vmem:[#allocation2 + $0x78] sm:$0xff]
    %v3781 = vld [vmem:[#allocation2 + $0x80] sm:$0xff]
    %v3782 = vld [vmem:[#allocation2 + $0x88] sm:$0xff]
    %v3783 = vld [vmem:[#allocation2 + $0x90] sm:$0xff]
    %v3784 = vld [vmem:[#allocation2 + $0x98] sm:$0xff]
    %v3785 = vld [vmem:[#allocation2 + $0xa0] sm:$0xff]
    %v3786 = vld [vmem:[#allocation2 + $0xa8] sm:$0xff]
    %v3787 = vld [vmem:[#allocation2 + $0xb0] sm:$0xff]
    %v3788 = vld [vmem:[#allocation2 + $0xb8] sm:$0xff]
    %v3789 = vld [vmem:[#allocation2 + $0xc0] sm:$0xff]
    %v3790 = vld [vmem:[#allocation2 + $0xc8] sm:$0xff]
    %v3791 = vld [vmem:[#allocation2 + $0xd0] sm:$0xff]
    %v3792 = vld [vmem:[#allocation2 + $0xd8] sm:$0xff]
    %v3793 = vld [vmem:[#allocation2 + $0xe0] sm:$0xff]
    %v3794 = vld [vmem:[#allocation2 + $0xe8] sm:$0xff]
    %v3795 = vld [vmem:[#allocation2 + $0xf0] sm:$0xff]
    %v3796 = vld [vmem:[#allocation2 + $0xf8] sm:$0xff]
    %v3797 = vld [vmem:[#allocation2 + $0x100] sm:$0xff]
    %v3798 = vld [vmem:[#allocation2 + $0x108] sm:$0xff]
    %v3799 = vld [vmem:[#allocation2 + $0x110] sm:$0xff]
    %v3800 = vld [vmem:[#allocation2 + $0x118] sm:$0xff]
    %v3801 = vld [vmem:[#allocation2 + $0x120] sm:$0xff]
    %v3802 = vld [vmem:[#allocation2 + $0x128] sm:$0xff]
    %v3803 = vld [vmem:[#allocation2 + $0x130] sm:$0xff]
    %v3804 = vld [vmem:[#allocation2 + $0x138] sm:$0xff]
    %v3805 = vld [vmem:[#allocation2 + $0x140] sm:$0xff]
    %v3806 = vld [vmem:[#allocation2 + $0x148] sm:$0xff]
    %v3807 = vld [vmem:[#allocation2 + $0x150] sm:$0xff]
    %v3808 = vld [vmem:[#allocation2 + $0x158] sm:$0xff]
    %v3809 = vld [vmem:[#allocation2 + $0x160] sm:$0xff]
    %v3810 = vld [vmem:[#allocation2 + $0x168] sm:$0xff]
    %v3811 = vld [vmem:[#allocation2 + $0x170] sm:$0xff]
    %v3812 = vld [vmem:[#allocation2 + $0x178] sm:$0xff]
    %v3813 = vld [vmem:[#allocation2 + $0x180] sm:$0xff]
    %v3814 = vld [vmem:[#allocation2 + $0x188] sm:$0xff]
    %v3815 = vld [vmem:[#allocation2 + $0x190] sm:$0xff]
    %v3816 = vld [vmem:[#allocation2 + $0x198] sm:$0xff]
    %v3817 = vld [vmem:[#allocation2 + $0x1a0] sm:$0xff]
    %v3818 = vld [vmem:[#allocation2 + $0x1a8] sm:$0xff]
    %v3819 = vld [vmem:[#allocation2 + $0x1b0] sm:$0xff]
    %v3820 = vld [vmem:[#allocation2 + $0x1b8] sm:$0xff]
    %v3821 = vld [vmem:[#allocation2 + $0x1c0] sm:$0xff]
    %v3822 = vld [vmem:[#allocation2 + $0x1c8] sm:$0xff]
    %v3823 = vld [vmem:[#allocation2 + $0x1d0] sm:$0xff]
    %v3824 = vld [vmem:[#allocation2 + $0x1d8] sm:$0xff]
    %v3825 = vld [vmem:[#allocation2 + $0x1e0] sm:$0xff]
    %v3826 = vld [vmem:[#allocation2 + $0x1e8] sm:$0xff]
    %v3827 = vld [vmem:[#allocation2 + $0x1f0] sm:$0xff]
    %v3828 = vld [vmem:[#allocation2 + $0x1f8] sm:$0xff]
    %v3829 = vld [vmem:[#allocation2 + $0x200] sm:$0xff]
    %v3830 = vld [vmem:[#allocation2 + $0x208] sm:$0xff]
    %v3831 = vld [vmem:[#allocation2 + $0x210] sm:$0xff]
    %v3832 = vld [vmem:[#allocation2 + $0x218] sm:$0xff]
    %v3833 = vld [vmem:[#allocation2 + $0x220] sm:$0xff]
    %v3834 = vld [vmem:[#allocation2 + $0x228] sm:$0xff]
    %v3835 = vld [vmem:[#allocation2 + $0x230] sm:$0xff]
    %v3836 = vld [vmem:[#allocation2 + $0x238] sm:$0xff]
    %v3837 = vld [vmem:[#allocation2 + $0x240] sm:$0xff]
    %v3838 = vld [vmem:[#allocation2 + $0x248] sm:$0xff]
    %v3839 = vld [vmem:[#allocation2 + $0x250] sm:$0xff]
    %v3840 = vld [vmem:[#allocation2 + $0x258] sm:$0xff]
    %v3841 = vld [vmem:[#allocation2 + $0x260] sm:$0xff]
    %v3842 = vld [vmem:[#allocation2 + $0x268] sm:$0xff]
    %v3843 = vld [vmem:[#allocation2 + $0x270] sm:$0xff]
    %v3844 = vld [vmem:[#allocation2 + $0x278] sm:$0xff]
    %v3845 = vld [vmem:[#allocation2 + $0x280] sm:$0xff]
    %v3846 = vld [vmem:[#allocation2 + $0x288] sm:$0xff]
    %v3847 = vld [vmem:[#allocation2 + $0x290] sm:$0xff]
    %v3848 = vld [vmem:[#allocation2 + $0x298] sm:$0xff]
    %v3849 = vld [vmem:[#allocation2 + $0x2a0] sm:$0xff]
    %v3850 = vld [vmem:[#allocation2 + $0x2a8] sm:$0xff]
    %v3851 = vld [vmem:[#allocation2 + $0x2b0] sm:$0xff]
    %v3852 = vld [vmem:[#allocation2 + $0x2b8] sm:$0xff]
    %v3853 = vld [vmem:[#allocation2 + $0x2c0] sm:$0xff]
    %v3854 = vld [vmem:[#allocation2 + $0x2c8] sm:$0xff]
    %v3855 = vld [vmem:[#allocation2 + $0x2d0] sm:$0xff]
    %v3856 = vld [vmem:[#allocation2 + $0x2d8] sm:$0xff]
    %v3857 = vld [vmem:[#allocation2 + $0x2e0] sm:$0xff]
    %v3858 = vld [vmem:[#allocation2 + $0x2e8] sm:$0xff]
    %v3859 = vld [vmem:[#allocation2 + $0x2f0] sm:$0xff]
    %v3860 = vld [vmem:[#allocation2 + $0x2f8] sm:$0xff]
    %v3861 = vld [vmem:[#allocation2 + $0x300] sm:$0xff]
    %v3862 = vld [vmem:[#allocation2 + $0x308] sm:$0xff]
    %v3863 = vld [vmem:[#allocation2 + $0x310] sm:$0xff]
    %v3864 = vld [vmem:[#allocation2 + $0x318] sm:$0xff]
    %v3865 = vld [vmem:[#allocation2 + $0x320] sm:$0xff]
    %v3866 = vld [vmem:[#allocation2 + $0x328] sm:$0xff]
    %v3867 = vld [vmem:[#allocation2 + $0x330] sm:$0xff]
    %v3868 = vld [vmem:[#allocation2 + $0x338] sm:$0xff]
    %v3869 = vld [vmem:[#allocation2 + $0x340] sm:$0xff]
    %v3870 = vld [vmem:[#allocation2 + $0x348] sm:$0xff]
    %v3871 = vld [vmem:[#allocation2 + $0x350] sm:$0xff]
    %v3872 = vld [vmem:[#allocation2 + $0x358] sm:$0xff]
    %v3873 = vld [vmem:[#allocation2 + $0x360] sm:$0xff]
    %v3874 = vld [vmem:[#allocation2 + $0x368] sm:$0xff]
    %v3875 = vld [vmem:[#allocation2 + $0x370] sm:$0xff]
    %v3876 = vld [vmem:[#allocation2 + $0x378] sm:$0xff]
    %v3877 = vld [vmem:[#allocation2 + $0x380] sm:$0xff]
    %v3878 = vld [vmem:[#allocation2 + $0x388] sm:$0xff]
    %v3879 = vld [vmem:[#allocation2 + $0x390] sm:$0xff]
    %v3880 = vld [vmem:[#allocation2 + $0x398] sm:$0xff]
    %v3881 = vld [vmem:[#allocation2 + $0x3a0] sm:$0xff]
    %v3882 = vld [vmem:[#allocation2 + $0x3a8] sm:$0xff]
    %v3883 = vld [vmem:[#allocation2 + $0x3b0] sm:$0xff]
    %v3884 = vld [vmem:[#allocation2 + $0x3b8] sm:$0xff]
    %v3885 = vld [vmem:[#allocation2 + $0x3c0] sm:$0xff]
    %v3886 = vld [vmem:[#allocation2 + $0x3c8] sm:$0xff]
    %v3887 = vld [vmem:[#allocation2 + $0x3d0] sm:$0xff]
    %v3888 = vld [vmem:[#allocation2 + $0x3d8] sm:$0xff]
    %v3889 = vld [vmem:[#allocation2 + $0x3e0] sm:$0xff]
    %v3890 = vld [vmem:[#allocation2 + $0x3e8] sm:$0xff]
    %v3891 = vld [vmem:[#allocation2 + $0x3f0] sm:$0xff]
    %v3892 = vld [vmem:[#allocation2 + $0x3f8] sm:$0xff]
    %v3893 = vld [vmem:[#allocation3] sm:$0xff]
    %v3894 = vld [vmem:[#allocation3 + $0x8] sm:$0xff]
    %v3895 = vld [vmem:[#allocation3 + $0x10] sm:$0xff]
    %v3896 = vld [vmem:[#allocation3 + $0x18] sm:$0xff]
    %v3897 = vld [vmem:[#allocation3 + $0x20] sm:$0xff]
    %v3898 = vld [vmem:[#allocation3 + $0x28] sm:$0xff]
    %v3899 = vld [vmem:[#allocation3 + $0x30] sm:$0xff]
    %v3900 = vld [vmem:[#allocation3 + $0x38] sm:$0xff]
    %v3901 = vld [vmem:[#allocation3 + $0x40] sm:$0xff]
    %v3902 = vld [vmem:[#allocation3 + $0x48] sm:$0xff]
    %v3903 = vld [vmem:[#allocation3 + $0x50] sm:$0xff]
    %v3904 = vld [vmem:[#allocation3 + $0x58] sm:$0xff]
    %v3905 = vld [vmem:[#allocation3 + $0x60] sm:$0xff]
    %v3906 = vld [vmem:[#allocation3 + $0x68] sm:$0xff]
    %v3907 = vld [vmem:[#allocation3 + $0x70] sm:$0xff]
    %v3908 = vld [vmem:[#allocation3 + $0x78] sm:$0xff]
    %v3909 = vld [vmem:[#allocation3 + $0x80] sm:$0xff]
    %v3910 = vld [vmem:[#allocation3 + $0x88] sm:$0xff]
    %v3911 = vld [vmem:[#allocation3 + $0x90] sm:$0xff]
    %v3912 = vld [vmem:[#allocation3 + $0x98] sm:$0xff]
    %v3913 = vld [vmem:[#allocation3 + $0xa0] sm:$0xff]
    %v3914 = vld [vmem:[#allocation3 + $0xa8] sm:$0xff]
    %v3915 = vld [vmem:[#allocation3 + $0xb0] sm:$0xff]
    %v3916 = vld [vmem:[#allocation3 + $0xb8] sm:$0xff]
    %v3917 = vld [vmem:[#allocation3 + $0xc0] sm:$0xff]
    %v3918 = vld [vmem:[#allocation3 + $0xc8] sm:$0xff]
    %v3919 = vld [vmem:[#allocation3 + $0xd0] sm:$0xff]
    %v3920 = vld [vmem:[#allocation3 + $0xd8] sm:$0xff]
    %v3921 = vld [vmem:[#allocation3 + $0xe0] sm:$0xff]
    %v3922 = vld [vmem:[#allocation3 + $0xe8] sm:$0xff]
    %v3923 = vld [vmem:[#allocation3 + $0xf0] sm:$0xff]
    %v3924 = vld [vmem:[#allocation3 + $0xf8] sm:$0xff]
    %v3925 = vld [vmem:[#allocation3 + $0x100] sm:$0xff]
    %v3926 = vld [vmem:[#allocation3 + $0x108] sm:$0xff]
    %v3927 = vld [vmem:[#allocation3 + $0x110] sm:$0xff]
    %v3928 = vld [vmem:[#allocation3 + $0x118] sm:$0xff]
    %v3929 = vld [vmem:[#allocation3 + $0x120] sm:$0xff]
    %v3930 = vld [vmem:[#allocation3 + $0x128] sm:$0xff]
    %v3931 = vld [vmem:[#allocation3 + $0x130] sm:$0xff]
    %v3932 = vld [vmem:[#allocation3 + $0x138] sm:$0xff]
    %v3933 = vld [vmem:[#allocation3 + $0x140] sm:$0xff]
    %v3934 = vld [vmem:[#allocation3 + $0x148] sm:$0xff]
    %v3935 = vld [vmem:[#allocation3 + $0x150] sm:$0xff]
    %v3936 = vld [vmem:[#allocation3 + $0x158] sm:$0xff]
    %v3937 = vld [vmem:[#allocation3 + $0x160] sm:$0xff]
    %v3938 = vld [vmem:[#allocation3 + $0x168] sm:$0xff]
    %v3939 = vld [vmem:[#allocation3 + $0x170] sm:$0xff]
    %v3940 = vld [vmem:[#allocation3 + $0x178] sm:$0xff]
    %v3941 = vld [vmem:[#allocation3 + $0x180] sm:$0xff]
    %v3942 = vld [vmem:[#allocation3 + $0x188] sm:$0xff]
    %v3943 = vld [vmem:[#allocation3 + $0x190] sm:$0xff]
    %v3944 = vld [vmem:[#allocation3 + $0x198] sm:$0xff]
    %v3945 = vld [vmem:[#allocation3 + $0x1a0] sm:$0xff]
    %v3946 = vld [vmem:[#allocation3 + $0x1a8] sm:$0xff]
    %v3947 = vld [vmem:[#allocation3 + $0x1b0] sm:$0xff]
    %v3948 = vld [vmem:[#allocation3 + $0x1b8] sm:$0xff]
    %v3949 = vld [vmem:[#allocation3 + $0x1c0] sm:$0xff]
    %v3950 = vld [vmem:[#allocation3 + $0x1c8] sm:$0xff]
    %v3951 = vld [vmem:[#allocation3 + $0x1d0] sm:$0xff]
    %v3952 = vld [vmem:[#allocation3 + $0x1d8] sm:$0xff]
    %v3953 = vld [vmem:[#allocation3 + $0x1e0] sm:$0xff]
    %v3954 = vld [vmem:[#allocation3 + $0x1e8] sm:$0xff]
    %v3955 = vld [vmem:[#allocation3 + $0x1f0] sm:$0xff]
    %v3956 = vld [vmem:[#allocation3 + $0x1f8] sm:$0xff]
    %v3957 = vld [vmem:[#allocation3 + $0x200] sm:$0xff]
    %v3958 = vld [vmem:[#allocation3 + $0x208] sm:$0xff]
    %v3959 = vld [vmem:[#allocation3 + $0x210] sm:$0xff]
    %v3960 = vld [vmem:[#allocation3 + $0x218] sm:$0xff]
    %v3961 = vld [vmem:[#allocation3 + $0x220] sm:$0xff]
    %v3962 = vld [vmem:[#allocation3 + $0x228] sm:$0xff]
    %v3963 = vld [vmem:[#allocation3 + $0x230] sm:$0xff]
    %v3964 = vld [vmem:[#allocation3 + $0x238] sm:$0xff]
    %v3965 = vld [vmem:[#allocation3 + $0x240] sm:$0xff]
    %v3966 = vld [vmem:[#allocation3 + $0x248] sm:$0xff]
    %v3967 = vld [vmem:[#allocation3 + $0x250] sm:$0xff]
    %v3968 = vld [vmem:[#allocation3 + $0x258] sm:$0xff]
    %v3969 = vld [vmem:[#allocation3 + $0x260] sm:$0xff]
    %v3970 = vld [vmem:[#allocation3 + $0x268] sm:$0xff]
    %v3971 = vld [vmem:[#allocation3 + $0x270] sm:$0xff]
    %v3972 = vld [vmem:[#allocation3 + $0x278] sm:$0xff]
    %v3973 = vld [vmem:[#allocation3 + $0x280] sm:$0xff]
    %v3974 = vld [vmem:[#allocation3 + $0x288] sm:$0xff]
    %v3975 = vld [vmem:[#allocation3 + $0x290] sm:$0xff]
    %v3976 = vld [vmem:[#allocation3 + $0x298] sm:$0xff]
    %v3977 = vld [vmem:[#allocation3 + $0x2a0] sm:$0xff]
    %v3978 = vld [vmem:[#allocation3 + $0x2a8] sm:$0xff]
    %v3979 = vld [vmem:[#allocation3 + $0x2b0] sm:$0xff]
    %v3980 = vld [vmem:[#allocation3 + $0x2b8] sm:$0xff]
    %v3981 = vld [vmem:[#allocation3 + $0x2c0] sm:$0xff]
    %v3982 = vld [vmem:[#allocation3 + $0x2c8] sm:$0xff]
    %v3983 = vld [vmem:[#allocation3 + $0x2d0] sm:$0xff]
    %v3984 = vld [vmem:[#allocation3 + $0x2d8] sm:$0xff]
    %v3985 = vld [vmem:[#allocation3 + $0x2e0] sm:$0xff]
    %v3986 = vld [vmem:[#allocation3 + $0x2e8] sm:$0xff]
    %v3987 = vld [vmem:[#allocation3 + $0x2f0] sm:$0xff]
    %v3988 = vld [vmem:[#allocation3 + $0x2f8] sm:$0xff]
    %v3989 = vld [vmem:[#allocation3 + $0x300] sm:$0xff]
    %v3990 = vld [vmem:[#allocation3 + $0x308] sm:$0xff]
    %v3991 = vld [vmem:[#allocation3 + $0x310] sm:$0xff]
    %v3992 = vld [vmem:[#allocation3 + $0x318] sm:$0xff]
    %v3993 = vld [vmem:[#allocation3 + $0x320] sm:$0xff]
    %v3994 = vld [vmem:[#allocation3 + $0x328] sm:$0xff]
    %v3995 = vld [vmem:[#allocation3 + $0x330] sm:$0xff]
    %v3996 = vld [vmem:[#allocation3 + $0x338] sm:$0xff]
    %v3997 = vld [vmem:[#allocation3 + $0x340] sm:$0xff]
    %v3998 = vld [vmem:[#allocation3 + $0x348] sm:$0xff]
    %v3999 = vld [vmem:[#allocation3 + $0x350] sm:$0xff]
    %v4000 = vld [vmem:[#allocation3 + $0x358] sm:$0xff]
    %v4001 = vld [vmem:[#allocation3 + $0x360] sm:$0xff]
    %v4002 = vld [vmem:[#allocation3 + $0x368] sm:$0xff]
    %v4003 = vld [vmem:[#allocation3 + $0x370] sm:$0xff]
    %v4004 = vld [vmem:[#allocation3 + $0x378] sm:$0xff]
    %v4005 = vld [vmem:[#allocation3 + $0x380] sm:$0xff]
    %v4006 = vld [vmem:[#allocation3 + $0x388] sm:$0xff]
    %v4007 = vld [vmem:[#allocation3 + $0x390] sm:$0xff]
    %v4008 = vld [vmem:[#allocation3 + $0x398] sm:$0xff]
    %v4009 = vld [vmem:[#allocation3 + $0x3a0] sm:$0xff]
    %v4010 = vld [vmem:[#allocation3 + $0x3a8] sm:$0xff]
    %v4011 = vld [vmem:[#allocation3 + $0x3b0] sm:$0xff]
    %v4012 = vld [vmem:[#allocation3 + $0x3b8] sm:$0xff]
    %v4013 = vld [vmem:[#allocation3 + $0x3c0] sm:$0xff]
    %v4014 = vld [vmem:[#allocation3 + $0x3c8] sm:$0xff]
    %v4015 = vld [vmem:[#allocation3 + $0x3d0] sm:$0xff]
    %v4016 = vld [vmem:[#allocation3 + $0x3d8] sm:$0xff]
    %v4017 = vld [vmem:[#allocation3 + $0x3e0] sm:$0xff]
    %v4018 = vld [vmem:[#allocation3 + $0x3e8] sm:$0xff]
    %v4019 = vld [vmem:[#allocation3 + $0x3f0] sm:$0xff]
    %v4020 = vld [vmem:[#allocation3 + $0x3f8] sm:$0xff]
    %4021 = vmatprep.subr.mxu0 %v3894
    %4022 = vmatpush1.msra.mxu0 %v3893
    %4023 = vmatprep.subr.mxu0 %v3902
    %4024 = vmatpush1.msra.mxu0 %v3901
    %4025 = vmatprep.subr.mxu0 %v3910
    %4026 = vmatpush1.msra.mxu0 %v3909
    %4027 = vmatprep.subr.mxu0 %v3918
    %4028 = vmatpush1.msra.mxu0 %v3917
    %4029 = vmatprep.subr.mxu0 %v3926
    %4030 = vmatpush1.msra.mxu0 %v3925
    %4031 = vmatprep.subr.mxu0 %v3934
    %4032 = vmatpush1.msra.mxu0 %v3933
    %4033 = vmatprep.subr.mxu0 %v3942
    %4034 = vmatpush1.msra.mxu0 %v3941
    %4035 = vmatprep.subr.mxu0 %v3950
    %4036 = vmatpush1.msra.mxu0 %v3949
    %4037 = vmatprep.subr.mxu0 %v3958
    %4038 = vmatpush1.msra.mxu0 %v3957
    %4039 = vmatprep.subr.mxu0 %v3966
    %4040 = vmatpush1.msra.mxu0 %v3965
    %4041 = vmatprep.subr.mxu0 %v3974
    %4042 = vmatpush1.msra.mxu0 %v3973
    %4043 = vmatprep.subr.mxu0 %v3982
    %4044 = vmatpush1.msra.mxu0 %v3981
    %4045 = vmatprep.subr.mxu0 %v3990
    %4046 = vmatpush1.msra.mxu0 %v3989
    %4047 = vmatprep.subr.mxu0 %v3998
    %4048 = vmatpush1.msra.mxu0 %v3997
    %4049 = vmatprep.subr.mxu0 %v4006
    %4050 = vmatpush1.msra.mxu0 %v4005
    %4051 = vmatprep.subr.mxu0 %v4014
    %4052 = vmatpush1.msra.mxu0 %v4013
    %4053 = vmatprep.subr.mxu0 0.0
    %4054 = vmatpush1.msra.mxu0 0.0
    %4055 = vmatprep.subr.mxu0 0.0
    %4056 = vmatpush1.msra.mxu0 0.0
    %4057 = vmatprep.subr.mxu0 0.0
    %4058 = vmatpush1.msra.mxu0 0.0
    %4059 = vmatprep.subr.mxu0 0.0
    %4060 = vmatpush1.msra.mxu0 0.0
    %4061 = vmatprep.subr.mxu0 0.0
    %4062 = vmatpush1.msra.mxu0 0.0
    %4063 = vmatprep.subr.mxu0 0.0
    %4064 = vmatpush1.msra.mxu0 0.0
    %4065 = vmatprep.subr.mxu0 0.0
    %4066 = vmatpush1.msra.mxu0 0.0
    %4067 = vmatprep.subr.mxu0 0.0
    %4068 = vmatpush1.msra.mxu0 0.0
    %4069 = vmatprep.subr.mxu0 0.0
    %4070 = vmatpush1.msra.mxu0 0.0
    %4071 = vmatprep.subr.mxu0 0.0
    %4072 = vmatpush1.msra.mxu0 0.0
    %4073 = vmatprep.subr.mxu0 0.0
    %4074 = vmatpush1.msra.mxu0 0.0
    %4075 = vmatprep.subr.mxu0 0.0
    %4076 = vmatpush1.msra.mxu0 0.0
    %4077 = vmatprep.subr.mxu0 0.0
    %4078 = vmatpush1.msra.mxu0 0.0
    %4079 = vmatprep.subr.mxu0 0.0
    %4080 = vmatpush1.msra.mxu0 0.0
    %4081 = vmatprep.subr.mxu0 0.0
    %4082 = vmatpush1.msra.mxu0 0.0
    %4083 = vmatprep.subr.mxu0 0.0
    %4084 = vmatpush1.msra.mxu0 0.0
    %4085 = vmatprep.mubr.f32.mxu0 0.0
    %4086 = vmatmul.mubr.f32.gmra.mrb[0].mxu0 %v3757
    %v4087 = vpop.f32.mrb[0].mxu0
    %v4088 = vadd.f32 0.0, %v4087
    %v4089 = vpop.f32.mrb[0].mxu0
    %v4090 = vadd.f32 0.0, %v4089
    %4091 = vmatprep.mubr.f32.mxu0 0.0
    %4092 = vmatmul.mubr.f32.gmra.mrb[0].mxu0 %v3758
    %v4093 = vpop.f32.mrb[0].mxu0
    %v4094 = vadd.f32 0.0, %v4093
    %v4095 = vpop.f32.mrb[0].mxu0
    %v4096 = vadd.f32 0.0, %v4095
    %4097 = vmatprep.mubr.f32.mxu0 0.0
    %4098 = vmatmul.mubr.f32.gmra.mrb[0].mxu0 %v3759
    %v4099 = vpop.f32.mrb[0].mxu0
    %v4100 = vadd.f32 0.0, %v4099
    %v4101 = vpop.f32.mrb[0].mxu0
    %v4102 = vadd.f32 0.0, %v4101
    %4103 = vmatprep.mubr.f32.mxu0 0.0
    %4104 = vmatmul.mubr.f32.gmra.mrb[0].mxu0 %v3760
    %v4105 = vpop.f32.mrb[0].mxu0
    %v4106 = vadd.f32 0.0, %v4105
    %v4107 = vpop.f32.mrb[0].mxu0
    %v4108 = vadd.f32 0.0, %v4107
    %4109 = vmatprep.mubr.f32.mxu0 0.0
    %4110 = vmatmul.mubr.f32.gmra.mrb[0].mxu0 %v3761
    %v4111 = vpop.f32.mrb[0].mxu0
    %v4112 = vadd.f32 0.0, %v4111
    %v4113 = vpop.f32.mrb[0].mxu0
    %v4114 = vadd.f32 0.0, %v4113
    %4115 = vmatprep.mubr.f32.mxu0 0.0
    %4116 = vmatmul.mubr.f32.gmra.mrb[0].mxu0 %v3762
    %v4117 = vpop.f32.mrb[0].mxu0
    %v4118 = vadd.f32 0.0, %v4117
    %v4119 = vpop.f32.mrb[0].mxu0
    %v4120 = vadd.f32 0.0, %v4119
    %4121 = vmatprep.mubr.f32.mxu0 0.0
    %4122 = vmatmul.mubr.f32.gmra.mrb[0].mxu0 %v3763
    %v4123 = vpop.f32.mrb[0].mxu0
    %v4124 = vadd.f32 0.0, %v4123
    %v4125 = vpop.f32.mrb[0].mxu0
    %v4126 = vadd.f32 0.0, %v4125
    %4127 = vmatprep.mubr.f32.mxu0 0.0
    %4128 = vmatmul.mubr.f32.gmra.mrb[0].mxu0 %v3764
    %v4129 = vpop.f32.mrb[0].mxu0
    %v4130 = vadd.f32 0.0, %v4129
    %v4131 = vpop.f32.mrb[0].mxu0
    %v4132 = vadd.f32 0.0, %v4131
    %4133 = vdwg.mxu0
    %4134 = vmatprep.subr.mxu0 %v3896
    %4135 = vmatpush1.msra.mxu0 %v3895
    %4136 = vmatprep.subr.mxu0 %v3904
    %4137 = vmatpush1.msra.mxu0 %v3903
    %4138 = vmatprep.subr.mxu0 %v3912
    %4139 = vmatpush1.msra.mxu0 %v3911
    %4140 = vmatprep.subr.mxu0 %v3920
    %4141 = vmatpush1.msra.mxu0 %v3919
    %4142 = vmatprep.subr.mxu0 %v3928
    %4143 = vmatpush1.msra.mxu0 %v3927
    %4144 = vmatprep.subr.mxu0 %v3936
    %4145 = vmatpush1.msra.mxu0 %v3935
    %4146 = vmatprep.subr.mxu0 %v3944
    %4147 = vmatpush1.msra.mxu0 %v3943
    %4148 = vmatprep.subr.mxu0 %v3952
    %4149 = vmatpush1.msra.mxu0 %v3951
    %4150 = vmatprep.subr.mxu0 %v3960
    %4151 = vmatpush1.msra.mxu0 %v3959
    %4152 = vmatprep.subr.mxu0 %v3968
    %4153 = vmatpush1.msra.mxu0 %v3967
    %4154 = vmatprep.subr.mxu0 %v3976
    %4155 = vmatpush1.msra.mxu0 %v3975
    %4156 = vmatprep.subr.mxu0 %v3984
    %4157 = vmatpush1.msra.mxu0 %v3983
    %4158 = vmatprep.subr.mxu0 %v3992
    %4159 = vmatpush1.msra.mxu0 %v3991
    %4160 = vmatprep.subr.mxu0 %v4000
    %4161 = vmatpush1.msra.mxu0 %v3999
    %4162 = vmatprep.subr.mxu0 %v4008
    %4163 = vmatpush1.msra.mxu0 %v4007
    %4164 = vmatprep.subr.mxu0 %v4016
    %4165 = vmatpush1.msra.mxu0 %v4015
    %4166 = vmatprep.subr.mxu0 0.0
    %4167 = vmatpush1.msra.mxu0 0.0
    %4168 = vmatprep.subr.mxu0 0.0
    %4169 = vmatpush1.msra.mxu0 0.0
    %4170 = vmatprep.subr.mxu0 0.0
    %4171 = vmatpush1.msra.mxu0 0.0
    %4172 = vmatprep.subr.mxu0 0.0
    %4173 = vmatpush1.msra.mxu0 0.0
    %4174 = vmatprep.subr.mxu0 0.0
    %4175 = vmatpush1.msra.mxu0 0.0
    %4176 = vmatprep.subr.mxu0 0.0
    %4177 = vmatpush1.msra.mxu0 0.0
    %4178 = vmatprep.subr.mxu0 0.0
    %4179 = vmatpush1.msra.mxu0 0.0
    %4180 = vmatprep.subr.mxu0 0.0
    %4181 = vmatpush1.msra.mxu0 0.0
    %4182 = vmatprep.subr.mxu0 0.0
    %4183 = vmatpush1.msra.mxu0 0.0
    %4184 = vmatprep.subr.mxu0 0.0
    %4185 = vmatpush1.msra.mxu0 0.0
    %4186 = vmatprep.subr.mxu0 0.0
    %4187 = vmatpush1.msra.mxu0 0.0
    %4188 = vmatprep.subr.mxu0 0.0
    %4189 = vmatpush1.msra.mxu0 0.0
    %4190 = vmatprep.subr.mxu0 0.0
    %4191 = vmatpush1.msra.mxu0 0.0
    %4192 = vmatprep.subr.mxu0 0.0
    %4193 = vmatpush1.msra.mxu0 0.0
    %4194 = vmatprep.subr.mxu0 0.0
    %4195 = vmatpush1.msra.mxu0 0.0
    %4196 = vmatprep.subr.mxu0 0.0
    %4197 = vmatpush1.msra.mxu0 0.0
    %4198 = vmatprep.mubr.f32.mxu0 0.0
    %4199 = vmatmul.mubr.f32.gmra.mrb[0].mxu0 %v3757
    %v4200 = vpop.f32.mrb[0].mxu0
    %v4201 = vadd.f32 0.0, %v4200
    %v4202 = vpop.f32.mrb[0].mxu0
    %v4203 = vadd.f32 0.0, %v4202
    %4204 = vmatprep.mubr.f32.mxu0 0.0
    %4205 = vmatmul.mubr.f32.gmra.mrb[0].mxu0 %v3758
    %v4206 = vpop.f32.mrb[0].mxu0
    %v4207 = vadd.f32 0.0, %v4206
    %v4208 = vpop.f32.mrb[0].mxu0
    %v4209 = vadd.f32 0.0, %v4208
    %4210 = vmatprep.mubr.f32.mxu0 0.0
    %4211 = vmatmul.mubr.f32.gmra.mrb[0].mxu0 %v3759
    %v4212 = vpop.f32.mrb[0].mxu0
    %v4213 = vadd.f32 0.0, %v4212
    %v4214 = vpop.f32.mrb[0].mxu0
    %v4215 = vadd.f32 0.0, %v4214
    %4216 = vmatprep.mubr.f32.mxu0 0.0
    %4217 = vmatmul.mubr.f32.gmra.mrb[0].mxu0 %v3760
    %v4218 = vpop.f32.mrb[0].mxu0
    %v4219 = vadd.f32 0.0, %v4218
    %v4220 = vpop.f32.mrb[0].mxu0
    %v4221 = vadd.f32 0.0, %v4220
    %4222 = vmatprep.mubr.f32.mxu0 0.0
    %4223 = vmatmul.mubr.f32.gmra.mrb[0].mxu0 %v3761
    %v4224 = vpop.f32.mrb[0].mxu0
    %v4225 = vadd.f32 0.0, %v4224
    %v4226 = vpop.f32.mrb[0].mxu0
    %v4227 = vadd.f32 0.0, %v4226
    %4228 = vmatprep.mubr.f32.mxu0 0.0
    %4229 = vmatmul.mubr.f32.gmra.mrb[0].mxu0 %v3762
    %v4230 = vpop.f32.mrb[0].mxu0
    %v4231 = vadd.f32 0.0, %v4230
    %v4232 = vpop.f32.mrb[0].mxu0
    %v4233 = vadd.f32 0.0, %v4232
    %4234 = vmatprep.mubr.f32.mxu0 0.0
    %4235 = vmatmul.mubr.f32.gmra.mrb[0].mxu0 %v3763
    %v4236 = vpop.f32.mrb[0].mxu0
    %v4237 = vadd.f32 0.0, %v4236
    %v4238 = vpop.f32.mrb[0].mxu0
    %v4239 = vadd.f32 0.0, %v4238
    %4240 = vmatprep.mubr.f32.mxu0 0.0
    %4241 = vmatmul.mubr.f32.gmra.mrb[0].mxu0 %v3764
    %v4242 = vpop.f32.mrb[0].mxu0
    %v4243 = vadd.f32 0.0, %v4242
    %v4244 = vpop.f32.mrb[0].mxu0
    %v4245 = vadd.f32 0.0, %v4244
    %4246 = vdwg.mxu0
    %4247 = vmatprep.subr.mxu0 %v3898
    %4248 = vmatpush1.msra.mxu0 %v3897
    %4249 = vmatprep.subr.mxu0 %v3906
    %4250 = vmatpush1.msra.mxu0 %v3905
    %4251 = vmatprep.subr.mxu0 %v3914
    %4252 = vmatpush1.msra.mxu0 %v3913
    %4253 = vmatprep.subr.mxu0 %v3922
    %4254 = vmatpush1.msra.mxu0 %v3921
    %4255 = vmatprep.subr.mxu0 %v3930
    %4256 = vmatpush1.msra.mxu0 %v3929
    %4257 = vmatprep.subr.mxu0 %v3938
    %4258 = vmatpush1.msra.mxu0 %v3937
    %4259 = vmatprep.subr.mxu0 %v3946
    %4260 = vmatpush1.msra.mxu0 %v3945
    %4261 = vmatprep.subr.mxu0 %v3954
    %4262 = vmatpush1.msra.mxu0 %v3953
    %4263 = vmatprep.subr.mxu0 %v3962
    %4264 = vmatpush1.msra.mxu0 %v3961
    %4265 = vmatprep.subr.mxu0 %v3970
    %4266 = vmatpush1.msra.mxu0 %v3969
    %4267 = vmatprep.subr.mxu0 %v3978
    %4268 = vmatpush1.msra.mxu0 %v3977
    %4269 = vmatprep.subr.mxu0 %v3986
    %4270 = vmatpush1.msra.mxu0 %v3985
    %4271 = vmatprep.subr.mxu0 %v3994
    %4272 = vmatpush1.msra.mxu0 %v3993
    %4273 = vmatprep.subr.mxu0 %v4002
    %4274 = vmatpush1.msra.mxu0 %v4001
    %4275 = vmatprep.subr.mxu0 %v4010
    %4276 = vmatpush1.msra.mxu0 %v4009
    %4277 = vmatprep.subr.mxu0 %v4018
    %4278 = vmatpush1.msra.mxu0 %v4017
    %4279 = vmatprep.subr.mxu0 0.0
    %4280 = vmatpush1.msra.mxu0 0.0
    %4281 = vmatprep.subr.mxu0 0.0
    %4282 = vmatpush1.msra.mxu0 0.0
    %4283 = vmatprep.subr.mxu0 0.0
    %4284 = vmatpush1.msra.mxu0 0.0
    %4285 = vmatprep.subr.mxu0 0.0
    %4286 = vmatpush1.msra.mxu0 0.0
    %4287 = vmatprep.subr.mxu0 0.0
    %4288 = vmatpush1.msra.mxu0 0.0
    %4289 = vmatprep.subr.mxu0 0.0
    %4290 = vmatpush1.msra.mxu0 0.0
    %4291 = vmatprep.subr.mxu0 0.0
    %4292 = vmatpush1.msra.mxu0 0.0
    %4293 = vmatprep.subr.mxu0 0.0
    %4294 = vmatpush1.msra.mxu0 0.0
    %4295 = vmatprep.subr.mxu0 0.0
    %4296 = vmatpush1.msra.mxu0 0.0
    %4297 = vmatprep.subr.mxu0 0.0
    %4298 = vmatpush1.msra.mxu0 0.0
    %4299 = vmatprep.subr.mxu0 0.0
    %4300 = vmatpush1.msra.mxu0 0.0
    %4301 = vmatprep.subr.mxu0 0.0
    %4302 = vmatpush1.msra.mxu0 0.0
    %4303 = vmatprep.subr.mxu0 0.0
    %4304 = vmatpush1.msra.mxu0 0.0
    %4305 = vmatprep.subr.mxu0 0.0
    %4306 = vmatpush1.msra.mxu0 0.0
    %4307 = vmatprep.subr.mxu0 0.0
    %4308 = vmatpush1.msra.mxu0 0.0
    %4309 = vmatprep.subr.mxu0 0.0
    %4310 = vmatpush1.msra.mxu0 0.0
    %4311 = vmatprep.mubr.f32.mxu0 0.0
    %4312 = vmatmul.mubr.f32.gmra.mrb[0].mxu0 %v3757
    %v4313 = vpop.f32.mrb[0].mxu0
    %v4314 = vadd.f32 0.0, %v4313
    %v4315 = vpop.f32.mrb[0].mxu0
    %v4316 = vadd.f32 0.0, %v4315
    %4317 = vmatprep.mubr.f32.mxu0 0.0
    %4318 = vmatmul.mubr.f32.gmra.mrb[0].mxu0 %v3758
    %v4319 = vpop.f32.mrb[0].mxu0
    %v4320 = vadd.f32 0.0, %v4319
    %v4321 = vpop.f32.mrb[0].mxu0
    %v4322 = vadd.f32 0.0, %v4321
    %4323 = vmatprep.mubr.f32.mxu0 0.0
    %4324 = vmatmul.mubr.f32.gmra.mrb[0].mxu0 %v3759
    %v4325 = vpop.f32.mrb[0].mxu0
    %v4326 = vadd.f32 0.0, %v4325
    %v4327 = vpop.f32.mrb[0].mxu0
    %v4328 = vadd.f32 0.0, %v4327
    %4329 = vmatprep.mubr.f32.mxu0 0.0
    %4330 = vmatmul.mubr.f32.gmra.mrb[0].mxu0 %v3760
    %v4331 = vpop.f32.mrb[0].mxu0
    %v4332 = vadd.f32 0.0, %v4331
    %v4333 = vpop.f32.mrb[0].mxu0
    %v4334 = vadd.f32 0.0, %v4333
    %4335 = vmatprep.mubr.f32.mxu0 0.0
    %4336 = vmatmul.mubr.f32.gmra.mrb[0].mxu0 %v3761
    %v4337 = vpop.f32.mrb[0].mxu0
    %v4338 = vadd.f32 0.0, %v4337
    %v4339 = vpop.f32.mrb[0].mxu0
    %v4340 = vadd.f32 0.0, %v4339
    %4341 = vmatprep.mubr.f32.mxu0 0.0
    %4342 = vmatmul.mubr.f32.gmra.mrb[0].mxu0 %v3762
    %v4343 = vpop.f32.mrb[0].mxu0
    %v4344 = vadd.f32 0.0, %v4343
    %v4345 = vpop.f32.mrb[0].mxu0
    %v4346 = vadd.f32 0.0, %v4345
    %4347 = vmatprep.mubr.f32.mxu0 0.0
    %4348 = vmatmul.mubr.f32.gmra.mrb[0].mxu0 %v3763
    %v4349 = vpop.f32.mrb[0].mxu0
    %v4350 = vadd.f32 0.0, %v4349
    %v4351 = vpop.f32.mrb[0].mxu0
    %v4352 = vadd.f32 0.0, %v4351
    %4353 = vmatprep.mubr.f32.mxu0 0.0
    %4354 = vmatmul.mubr.f32.gmra.mrb[0].mxu0 %v3764
    %v4355 = vpop.f32.mrb[0].mxu0
    %v4356 = vadd.f32 0.0, %v4355
    %v4357 = vpop.f32.mrb[0].mxu0
    %v4358 = vadd.f32 0.0, %v4357
    %4359 = vdwg.mxu0
    %4360 = vmatprep.subr.mxu0 %v3900
    %4361 = vmatpush1.msra.mxu0 %v3899
    %4362 = vmatprep.subr.mxu0 %v3908
    %4363 = vmatpush1.msra.mxu0 %v3907
    %4364 = vmatprep.subr.mxu0 %v3916
    %4365 = vmatpush1.msra.mxu0 %v3915
    %4366 = vmatprep.subr.mxu0 %v3924
    %4367 = vmatpush1.msra.mxu0 %v3923
    %4368 = vmatprep.subr.mxu0 %v3932
    %4369 = vmatpush1.msra.mxu0 %v3931
    %4370 = vmatprep.subr.mxu0 %v3940
    %4371 = vmatpush1.msra.mxu0 %v3939
    %4372 = vmatprep.subr.mxu0 %v3948
    %4373 = vmatpush1.msra.mxu0 %v3947
    %4374 = vmatprep.subr.mxu0 %v3956
    %4375 = vmatpush1.msra.mxu0 %v3955
    %4376 = vmatprep.subr.mxu0 %v3964
    %4377 = vmatpush1.msra.mxu0 %v3963
    %4378 = vmatprep.subr.mxu0 %v3972
    %4379 = vmatpush1.msra.mxu0 %v3971
    %4380 = vmatprep.subr.mxu0 %v3980
    %4381 = vmatpush1.msra.mxu0 %v3979
    %4382 = vmatprep.subr.mxu0 %v3988
    %4383 = vmatpush1.msra.mxu0 %v3987
    %4384 = vmatprep.subr.mxu0 %v3996
    %4385 = vmatpush1.msra.mxu0 %v3995
    %4386 = vmatprep.subr.mxu0 %v4004
    %4387 = vmatpush1.msra.mxu0 %v4003
    %4388 = vmatprep.subr.mxu0 %v4012
    %4389 = vmatpush1.msra.mxu0 %v4011
    %4390 = vmatprep.subr.mxu0 %v4020
    %4391 = vmatpush1.msra.mxu0 %v4019
    %4392 = vmatprep.subr.mxu0 0.0
    %4393 = vmatpush1.msra.mxu0 0.0
    %4394 = vmatprep.subr.mxu0 0.0
    %4395 = vmatpush1.msra.mxu0 0.0
    %4396 = vmatprep.subr.mxu0 0.0
    %4397 = vmatpush1.msra.mxu0 0.0
    %4398 = vmatprep.subr.mxu0 0.0
    %4399 = vmatpush1.msra.mxu0 0.0
    %4400 = vmatprep.subr.mxu0 0.0
    %4401 = vmatpush1.msra.mxu0 0.0
    %4402 = vmatprep.subr.mxu0 0.0
    %4403 = vmatpush1.msra.mxu0 0.0
    %4404 = vmatprep.subr.mxu0 0.0
    %4405 = vmatpush1.msra.mxu0 0.0
    %4406 = vmatprep.subr.mxu0 0.0
    %4407 = vmatpush1.msra.mxu0 0.0
    %4408 = vmatprep.subr.mxu0 0.0
    %4409 = vmatpush1.msra.mxu0 0.0
    %4410 = vmatprep.subr.mxu0 0.0
    %4411 = vmatpush1.msra.mxu0 0.0
    %4412 = vmatprep.subr.mxu0 0.0
    %4413 = vmatpush1.msra.mxu0 0.0
    %4414 = vmatprep.subr.mxu0 0.0
    %4415 = vmatpush1.msra.mxu0 0.0
    %4416 = vmatprep.subr.mxu0 0.0
    %4417 = vmatpush1.msra.mxu0 0.0
    %4418 = vmatprep.subr.mxu0 0.0
    %4419 = vmatpush1.msra.mxu0 0.0
    %4420 = vmatprep.subr.mxu0 0.0
    %4421 = vmatpush1.msra.mxu0 0.0
    %4422 = vmatprep.subr.mxu0 0.0
    %4423 = vmatpush1.msra.mxu0 0.0
    %4424 = vmatprep.mubr.f32.mxu0 0.0
    %4425 = vmatmul.mubr.f32.gmra.mrb[0].mxu0 %v3757
    %v4426 = vpop.f32.mrb[0].mxu0
    %v4427 = vadd.f32 0.0, %v4426
    %v4428 = vpop.f32.mrb[0].mxu0
    %v4429 = vadd.f32 0.0, %v4428
    %4430 = vmatprep.mubr.f32.mxu0 0.0
    %4431 = vmatmul.mubr.f32.gmra.mrb[0].mxu0 %v3758
    %v4432 = vpop.f32.mrb[0].mxu0
    %v4433 = vadd.f32 0.0, %v4432
    %v4434 = vpop.f32.mrb[0].mxu0
    %v4435 = vadd.f32 0.0, %v4434
    %4436 = vmatprep.mubr.f32.mxu0 0.0
    %4437 = vmatmul.mubr.f32.gmra.mrb[0].mxu0 %v3759
    %v4438 = vpop.f32.mrb[0].mxu0
    %v4439 = vadd.f32 0.0, %v4438
    %v4440 = vpop.f32.mrb[0].mxu0
    %v4441 = vadd.f32 0.0, %v4440
    %4442 = vmatprep.mubr.f32.mxu0 0.0
    %4443 = vmatmul.mubr.f32.gmra.mrb[0].mxu0 %v3760
    %v4444 = vpop.f32.mrb[0].mxu0
    %v4445 = vadd.f32 0.0, %v4444
    %v4446 = vpop.f32.mrb[0].mxu0
    %v4447 = vadd.f32 0.0, %v4446
    %4448 = vmatprep.mubr.f32.mxu0 0.0
    %4449 = vmatmul.mubr.f32.gmra.mrb[0].mxu0 %v3761
    %v4450 = vpop.f32.mrb[0].mxu0
    %v4451 = vadd.f32 0.0, %v4450
    %v4452 = vpop.f32.mrb[0].mxu0
    %v4453 = vadd.f32 0.0, %v4452
    %4454 = vmatprep.mubr.f32.mxu0 0.0
    %4455 = vmatmul.mubr.f32.gmra.mrb[0].mxu0 %v3762
    %v4456 = vpop.f32.mrb[0].mxu0
    %v4457 = vadd.f32 0.0, %v4456
    %v4458 = vpop.f32.mrb[0].mxu0
    %v4459 = vadd.f32 0.0, %v4458
    %4460 = vmatprep.mubr.f32.mxu0 0.0
    %4461 = vmatmul.mubr.f32.gmra.mrb[0].mxu0 %v3763
    %v4462 = vpop.f32.mrb[0].mxu0
    %v4463 = vadd.f32 0.0, %v4462
    %v4464 = vpop.f32.mrb[0].mxu0
    %v4465 = vadd.f32 0.0, %v4464
    %4466 = vmatprep.mubr.f32.mxu0 0.0
    %4467 = vmatmul.mubr.f32.gmra.mrb[0].mxu0 %v3764
    %v4468 = vpop.f32.mrb[0].mxu0
    %v4469 = vadd.f32 0.0, %v4468
    %v4470 = vpop.f32.mrb[0].mxu0
    %v4471 = vadd.f32 0.0, %v4470
    %4472 = vdwg.mxu0
    %4473 = vmatprep.subr.mxu0 %v3766
    %4474 = vmatpush1.msra.mxu0 %v3765
    %4475 = vmatprep.subr.mxu0 %v3774
    %4476 = vmatpush1.msra.mxu0 %v3773
    %4477 = vmatprep.subr.mxu0 %v3782
    %4478 = vmatpush1.msra.mxu0 %v3781
    %4479 = vmatprep.subr.mxu0 %v3790
    %4480 = vmatpush1.msra.mxu0 %v3789
    %4481 = vmatprep.subr.mxu0 %v3798
    %4482 = vmatpush1.msra.mxu0 %v3797
    %4483 = vmatprep.subr.mxu0 %v3806
    %4484 = vmatpush1.msra.mxu0 %v3805
    %4485 = vmatprep.subr.mxu0 %v3814
    %4486 = vmatpush1.msra.mxu0 %v3813
    %4487 = vmatprep.subr.mxu0 %v3822
    %4488 = vmatpush1.msra.mxu0 %v3821
    %4489 = vmatprep.subr.mxu0 %v3830
    %4490 = vmatpush1.msra.mxu0 %v3829
    %4491 = vmatprep.subr.mxu0 %v3838
    %4492 = vmatpush1.msra.mxu0 %v3837
    %4493 = vmatprep.subr.mxu0 %v3846
    %4494 = vmatpush1.msra.mxu0 %v3845
    %4495 = vmatprep.subr.mxu0 %v3854
    %4496 = vmatpush1.msra.mxu0 %v3853
    %4497 = vmatprep.subr.mxu0 %v3862
    %4498 = vmatpush1.msra.mxu0 %v3861
    %4499 = vmatprep.subr.mxu0 %v3870
    %4500 = vmatpush1.msra.mxu0 %v3869
    %4501 = vmatprep.subr.mxu0 %v3878
    %4502 = vmatpush1.msra.mxu0 %v3877
    %4503 = vmatprep.subr.mxu0 %v3886
    %4504 = vmatpush1.msra.mxu0 %v3885
    %4505 = vmatprep.subr.mxu0 0.0
    %4506 = vmatpush1.msra.mxu0 0.0
    %4507 = vmatprep.subr.mxu0 0.0
    %4508 = vmatpush1.msra.mxu0 0.0
    %4509 = vmatprep.subr.mxu0 0.0
    %4510 = vmatpush1.msra.mxu0 0.0
    %4511 = vmatprep.subr.mxu0 0.0
    %4512 = vmatpush1.msra.mxu0 0.0
    %4513 = vmatprep.subr.mxu0 0.0
    %4514 = vmatpush1.msra.mxu0 0.0
    %4515 = vmatprep.subr.mxu0 0.0
    %4516 = vmatpush1.msra.mxu0 0.0
    %4517 = vmatprep.subr.mxu0 0.0
    %4518 = vmatpush1.msra.mxu0 0.0
    %4519 = vmatprep.subr.mxu0 0.0
    %4520 = vmatpush1.msra.mxu0 0.0
    %4521 = vmatprep.subr.mxu0 0.0
    %4522 = vmatpush1.msra.mxu0 0.0
    %4523 = vmatprep.subr.mxu0 0.0
    %4524 = vmatpush1.msra.mxu0 0.0
    %4525 = vmatprep.subr.mxu0 0.0
    %4526 = vmatpush1.msra.mxu0 0.0
    %4527 = vmatprep.subr.mxu0 0.0
    %4528 = vmatpush1.msra.mxu0 0.0
    %4529 = vmatprep.subr.mxu0 0.0
    %4530 = vmatpush1.msra.mxu0 0.0
    %4531 = vmatprep.subr.mxu0 0.0
    %4532 = vmatpush1.msra.mxu0 0.0
    %4533 = vmatprep.subr.mxu0 0.0
    %4534 = vmatpush1.msra.mxu0 0.0
    %4535 = vmatprep.subr.mxu0 0.0
    %4536 = vmatpush1.msra.mxu0 0.0
    %4537 = vmatprep.mubr.f32.mxu0 0.0
    %4538 = vmatmul.mubr.f32.gmra.mrb[0].mxu0 %v3749
    %v4539 = vpop.f32.mrb[0].mxu0
    %v4540 = vadd.f32 %v4088, %v4539
    %v4541 = vpop.f32.mrb[0].mxu0
    %v4542 = vadd.f32 %v4090, %v4541
    %4543 = vmatprep.mubr.f32.mxu0 0.0
    %4544 = vmatmul.mubr.f32.gmra.mrb[0].mxu0 %v3750
    %v4545 = vpop.f32.mrb[0].mxu0
    %v4546 = vadd.f32 %v4094, %v4545
    %v4547 = vpop.f32.mrb[0].mxu0
    %v4548 = vadd.f32 %v4096, %v4547
    %4549 = vmatprep.mubr.f32.mxu0 0.0
    %4550 = vmatmul.mubr.f32.gmra.mrb[0].mxu0 %v3751
    %v4551 = vpop.f32.mrb[0].mxu0
    %v4552 = vadd.f32 %v4100, %v4551
    %v4553 = vpop.f32.mrb[0].mxu0
    %v4554 = vadd.f32 %v4102, %v4553
    %4555 = vmatprep.mubr.f32.mxu0 0.0
    %4556 = vmatmul.mubr.f32.gmra.mrb[0].mxu0 %v3752
    %v4557 = vpop.f32.mrb[0].mxu0
    %v4558 = vadd.f32 %v4106, %v4557
    %v4559 = vpop.f32.mrb[0].mxu0
    %v4560 = vadd.f32 %v4108, %v4559
    %4561 = vmatprep.mubr.f32.mxu0 0.0
    %4562 = vmatmul.mubr.f32.gmra.mrb[0].mxu0 %v3753
    %v4563 = vpop.f32.mrb[0].mxu0
    %v4564 = vadd.f32 %v4112, %v4563
    %v4565 = vpop.f32.mrb[0].mxu0
    %v4566 = vadd.f32 %v4114, %v4565
    %4567 = vmatprep.mubr.f32.mxu0 0.0
    %4568 = vmatmul.mubr.f32.gmra.mrb[0].mxu0 %v3754
    %v4569 = vpop.f32.mrb[0].mxu0
    %v4570 = vadd.f32 %v4118, %v4569
    %v4571 = vpop.f32.mrb[0].mxu0
    %v4572 = vadd.f32 %v4120, %v4571
    %4573 = vmatprep.mubr.f32.mxu0 0.0
    %4574 = vmatmul.mubr.f32.gmra.mrb[0].mxu0 %v3755
    %v4575 = vpop.f32.mrb[0].mxu0
    %v4576 = vadd.f32 %v4124, %v4575
    %v4577 = vpop.f32.mrb[0].mxu0
    %v4578 = vadd.f32 %v4126, %v4577
    %4579 = vmatprep.mubr.f32.mxu0 0.0
    %4580 = vmatmul.mubr.f32.gmra.mrb[0].mxu0 %v3756
    %v4581 = vpop.f32.mrb[0].mxu0
    %v4582 = vadd.f32 %v4130, %v4581
    %v4583 = vpop.f32.mrb[0].mxu0
    %v4584 = vadd.f32 %v4132, %v4583
    %4585 = vdwg.mxu0
    %4586 = vmatprep.subr.mxu0 %v3768
    %4587 = vmatpush1.msra.mxu0 %v3767
    %4588 = vmatprep.subr.mxu0 %v3776
    %4589 = vmatpush1.msra.mxu0 %v3775
    %4590 = vmatprep.subr.mxu0 %v3784
    %4591 = vmatpush1.msra.mxu0 %v3783
    %4592 = vmatprep.subr.mxu0 %v3792
    %4593 = vmatpush1.msra.mxu0 %v3791
    %4594 = vmatprep.subr.mxu0 %v3800
    %4595 = vmatpush1.msra.mxu0 %v3799
    %4596 = vmatprep.subr.mxu0 %v3808
    %4597 = vmatpush1.msra.mxu0 %v3807
    %4598 = vmatprep.subr.mxu0 %v3816
    %4599 = vmatpush1.msra.mxu0 %v3815
    %4600 = vmatprep.subr.mxu0 %v3824
    %4601 = vmatpush1.msra.mxu0 %v3823
    %4602 = vmatprep.subr.mxu0 %v3832
    %4603 = vmatpush1.msra.mxu0 %v3831
    %4604 = vmatprep.subr.mxu0 %v3840
    %4605 = vmatpush1.msra.mxu0 %v3839
    %4606 = vmatprep.subr.mxu0 %v3848
    %4607 = vmatpush1.msra.mxu0 %v3847
    %4608 = vmatprep.subr.mxu0 %v3856
    %4609 = vmatpush1.msra.mxu0 %v3855
    %4610 = vmatprep.subr.mxu0 %v3864
    %4611 = vmatpush1.msra.mxu0 %v3863
    %4612 = vmatprep.subr.mxu0 %v3872
    %4613 = vmatpush1.msra.mxu0 %v3871
    %4614 = vmatprep.subr.mxu0 %v3880
    %4615 = vmatpush1.msra.mxu0 %v3879
    %4616 = vmatprep.subr.mxu0 %v3888
    %4617 = vmatpush1.msra.mxu0 %v3887
    %4618 = vmatprep.subr.mxu0 0.0
    %4619 = vmatpush1.msra.mxu0 0.0
    %4620 = vmatprep.subr.mxu0 0.0
    %4621 = vmatpush1.msra.mxu0 0.0
    %4622 = vmatprep.subr.mxu0 0.0
    %4623 = vmatpush1.msra.mxu0 0.0
    %4624 = vmatprep.subr.mxu0 0.0
    %4625 = vmatpush1.msra.mxu0 0.0
    %4626 = vmatprep.subr.mxu0 0.0
    %4627 = vmatpush1.msra.mxu0 0.0
    %4628 = vmatprep.subr.mxu0 0.0
    %4629 = vmatpush1.msra.mxu0 0.0
    %4630 = vmatprep.subr.mxu0 0.0
    %4631 = vmatpush1.msra.mxu0 0.0
    %4632 = vmatprep.subr.mxu0 0.0
    %4633 = vmatpush1.msra.mxu0 0.0
    %4634 = vmatprep.subr.mxu0 0.0
    %4635 = vmatpush1.msra.mxu0 0.0
    %4636 = vmatprep.subr.mxu0 0.0
    %4637 = vmatpush1.msra.mxu0 0.0
    %4638 = vmatprep.subr.mxu0 0.0
    %4639 = vmatpush1.msra.mxu0 0.0
    %4640 = vmatprep.subr.mxu0 0.0
    %4641 = vmatpush1.msra.mxu0 0.0
    %4642 = vmatprep.subr.mxu0 0.0
    %4643 = vmatpush1.msra.mxu0 0.0
    %4644 = vmatprep.subr.mxu0 0.0
    %4645 = vmatpush1.msra.mxu0 0.0
    %4646 = vmatprep.subr.mxu0 0.0
    %4647 = vmatpush1.msra.mxu0 0.0
    %4648 = vmatprep.subr.mxu0 0.0
    %4649 = vmatpush1.msra.mxu0 0.0
    %4650 = vmatprep.mubr.f32.mxu0 0.0
    %4651 = vmatmul.mubr.f32.gmra.mrb[0].mxu0 %v3749
    %v4652 = vpop.f32.mrb[0].mxu0
    %v4653 = vadd.f32 %v4201, %v4652
    %v4654 = vpop.f32.mrb[0].mxu0
    %v4655 = vadd.f32 %v4203, %v4654
    %4656 = vmatprep.mubr.f32.mxu0 0.0
    %4657 = vmatmul.mubr.f32.gmra.mrb[0].mxu0 %v3750
    %v4658 = vpop.f32.mrb[0].mxu0
    %v4659 = vadd.f32 %v4207, %v4658
    %v4660 = vpop.f32.mrb[0].mxu0
    %v4661 = vadd.f32 %v4209, %v4660
    %4662 = vmatprep.mubr.f32.mxu0 0.0
    %4663 = vmatmul.mubr.f32.gmra.mrb[0].mxu0 %v3751
    %v4664 = vpop.f32.mrb[0].mxu0
    %v4665 = vadd.f32 %v4213, %v4664
    %v4666 = vpop.f32.mrb[0].mxu0
    %v4667 = vadd.f32 %v4215, %v4666
    %4668 = vmatprep.mubr.f32.mxu0 0.0
    %4669 = vmatmul.mubr.f32.gmra.mrb[0].mxu0 %v3752
    %v4670 = vpop.f32.mrb[0].mxu0
    %v4671 = vadd.f32 %v4219, %v4670
    %v4672 = vpop.f32.mrb[0].mxu0
    %v4673 = vadd.f32 %v4221, %v4672
    %4674 = vmatprep.mubr.f32.mxu0 0.0
    %4675 = vmatmul.mubr.f32.gmra.mrb[0].mxu0 %v3753
    %v4676 = vpop.f32.mrb[0].mxu0
    %v4677 = vadd.f32 %v4225, %v4676
    %v4678 = vpop.f32.mrb[0].mxu0
    %v4679 = vadd.f32 %v4227, %v4678
    %4680 = vmatprep.mubr.f32.mxu0 0.0
    %4681 = vmatmul.mubr.f32.gmra.mrb[0].mxu0 %v3754
    %v4682 = vpop.f32.mrb[0].mxu0
    %v4683 = vadd.f32 %v4231, %v4682
    %v4684 = vpop.f32.mrb[0].mxu0
    %v4685 = vadd.f32 %v4233, %v4684
    %4686 = vmatprep.mubr.f32.mxu0 0.0
    %4687 = vmatmul.mubr.f32.gmra.mrb[0].mxu0 %v3755
    %v4688 = vpop.f32.mrb[0].mxu0
    %v4689 = vadd.f32 %v4237, %v4688
    %v4690 = vpop.f32.mrb[0].mxu0
    %v4691 = vadd.f32 %v4239, %v4690
    %4692 = vmatprep.mubr.f32.mxu0 0.0
    %4693 = vmatmul.mubr.f32.gmra.mrb[0].mxu0 %v3756
    %v4694 = vpop.f32.mrb[0].mxu0
    %v4695 = vadd.f32 %v4243, %v4694
    %v4696 = vpop.f32.mrb[0].mxu0
    %v4697 = vadd.f32 %v4245, %v4696
    %4698 = vdwg.mxu0
    %4699 = vmatprep.subr.mxu0 %v3770
    %4700 = vmatpush1.msra.mxu0 %v3769
    %4701 = vmatprep.subr.mxu0 %v3778
    %4702 = vmatpush1.msra.mxu0 %v3777
    %4703 = vmatprep.subr.mxu0 %v3786
    %4704 = vmatpush1.msra.mxu0 %v3785
    %4705 = vmatprep.subr.mxu0 %v3794
    %4706 = vmatpush1.msra.mxu0 %v3793
    %4707 = vmatprep.subr.mxu0 %v3802
    %4708 = vmatpush1.msra.mxu0 %v3801
    %4709 = vmatprep.subr.mxu0 %v3810
    %4710 = vmatpush1.msra.mxu0 %v3809
    %4711 = vmatprep.subr.mxu0 %v3818
    %4712 = vmatpush1.msra.mxu0 %v3817
    %4713 = vmatprep.subr.mxu0 %v3826
    %4714 = vmatpush1.msra.mxu0 %v3825
    %4715 = vmatprep.subr.mxu0 %v3834
    %4716 = vmatpush1.msra.mxu0 %v3833
    %4717 = vmatprep.subr.mxu0 %v3842
    %4718 = vmatpush1.msra.mxu0 %v3841
    %4719 = vmatprep.subr.mxu0 %v3850
    %4720 = vmatpush1.msra.mxu0 %v3849
    %4721 = vmatprep.subr.mxu0 %v3858
    %4722 = vmatpush1.msra.mxu0 %v3857
    %4723 = vmatprep.subr.mxu0 %v3866
    %4724 = vmatpush1.msra.mxu0 %v3865
    %4725 = vmatprep.subr.mxu0 %v3874
    %4726 = vmatpush1.msra.mxu0 %v3873
    %4727 = vmatprep.subr.mxu0 %v3882
    %4728 = vmatpush1.msra.mxu0 %v3881
    %4729 = vmatprep.subr.mxu0 %v3890
    %4730 = vmatpush1.msra.mxu0 %v3889
    %4731 = vmatprep.subr.mxu0 0.0
    %4732 = vmatpush1.msra.mxu0 0.0
    %4733 = vmatprep.subr.mxu0 0.0
    %4734 = vmatpush1.msra.mxu0 0.0
    %4735 = vmatprep.subr.mxu0 0.0
    %4736 = vmatpush1.msra.mxu0 0.0
    %4737 = vmatprep.subr.mxu0 0.0
    %4738 = vmatpush1.msra.mxu0 0.0
    %4739 = vmatprep.subr.mxu0 0.0
    %4740 = vmatpush1.msra.mxu0 0.0
    %4741 = vmatprep.subr.mxu0 0.0
    %4742 = vmatpush1.msra.mxu0 0.0
    %4743 = vmatprep.subr.mxu0 0.0
    %4744 = vmatpush1.msra.mxu0 0.0
    %4745 = vmatprep.subr.mxu0 0.0
    %4746 = vmatpush1.msra.mxu0 0.0
    %4747 = vmatprep.subr.mxu0 0.0
    %4748 = vmatpush1.msra.mxu0 0.0
    %4749 = vmatprep.subr.mxu0 0.0
    %4750 = vmatpush1.msra.mxu0 0.0
    %4751 = vmatprep.subr.mxu0 0.0
    %4752 = vmatpush1.msra.mxu0 0.0
    %4753 = vmatprep.subr.mxu0 0.0
    %4754 = vmatpush1.msra.mxu0 0.0
    %4755 = vmatprep.subr.mxu0 0.0
    %4756 = vmatpush1.msra.mxu0 0.0
    %4757 = vmatprep.subr.mxu0 0.0
    %4758 = vmatpush1.msra.mxu0 0.0
    %4759 = vmatprep.subr.mxu0 0.0
    %4760 = vmatpush1.msra.mxu0 0.0
    %4761 = vmatprep.subr.mxu0 0.0
    %4762 = vmatpush1.msra.mxu0 0.0
    %4763 = vmatprep.mubr.f32.mxu0 0.0
    %4764 = vmatmul.mubr.f32.gmra.mrb[0].mxu0 %v3749
    %v4765 = vpop.f32.mrb[0].mxu0
    %v4766 = vadd.f32 %v4314, %v4765
    %v4767 = vpop.f32.mrb[0].mxu0
    %v4768 = vadd.f32 %v4316, %v4767
    %4769 = vmatprep.mubr.f32.mxu0 0.0
    %4770 = vmatmul.mubr.f32.gmra.mrb[0].mxu0 %v3750
    %v4771 = vpop.f32.mrb[0].mxu0
    %v4772 = vadd.f32 %v4320, %v4771
    %v4773 = vpop.f32.mrb[0].mxu0
    %v4774 = vadd.f32 %v4322, %v4773
    %4775 = vmatprep.mubr.f32.mxu0 0.0
    %4776 = vmatmul.mubr.f32.gmra.mrb[0].mxu0 %v3751
    %v4777 = vpop.f32.mrb[0].mxu0
    %v4778 = vadd.f32 %v4326, %v4777
    %v4779 = vpop.f32.mrb[0].mxu0
    %v4780 = vadd.f32 %v4328, %v4779
    %4781 = vmatprep.mubr.f32.mxu0 0.0
    %4782 = vmatmul.mubr.f32.gmra.mrb[0].mxu0 %v3752
    %v4783 = vpop.f32.mrb[0].mxu0
    %v4784 = vadd.f32 %v4332, %v4783
    %v4785 = vpop.f32.mrb[0].mxu0
    %v4786 = vadd.f32 %v4334, %v4785
    %4787 = vmatprep.mubr.f32.mxu0 0.0
    %4788 = vmatmul.mubr.f32.gmra.mrb[0].mxu0 %v3753
    %v4789 = vpop.f32.mrb[0].mxu0
    %v4790 = vadd.f32 %v4338, %v4789
    %v4791 = vpop.f32.mrb[0].mxu0
    %v4792 = vadd.f32 %v4340, %v4791
    %4793 = vmatprep.mubr.f32.mxu0 0.0
    %4794 = vmatmul.mubr.f32.gmra.mrb[0].mxu0 %v3754
    %v4795 = vpop.f32.mrb[0].mxu0
    %v4796 = vadd.f32 %v4344, %v4795
    %v4797 = vpop.f32.mrb[0].mxu0
    %v4798 = vadd.f32 %v4346, %v4797
    %4799 = vmatprep.mubr.f32.mxu0 0.0
    %4800 = vmatmul.mubr.f32.gmra.mrb[0].mxu0 %v3755
    %v4801 = vpop.f32.mrb[0].mxu0
    %v4802 = vadd.f32 %v4350, %v4801
    %v4803 = vpop.f32.mrb[0].mxu0
    %v4804 = vadd.f32 %v4352, %v4803
    %4805 = vmatprep.mubr.f32.mxu0 0.0
    %4806 = vmatmul.mubr.f32.gmra.mrb[0].mxu0 %v3756
    %v4807 = vpop.f32.mrb[0].mxu0
    %v4808 = vadd.f32 %v4356, %v4807
    %v4809 = vpop.f32.mrb[0].mxu0
    %v4810 = vadd.f32 %v4358, %v4809
    %4811 = vdwg.mxu0
    %4812 = vmatprep.subr.mxu0 %v3772
    %4813 = vmatpush1.msra.mxu0 %v3771
    %4814 = vmatprep.subr.mxu0 %v3780
    %4815 = vmatpush1.msra.mxu0 %v3779
    %4816 = vmatprep.subr.mxu0 %v3788
    %4817 = vmatpush1.msra.mxu0 %v3787
    %4818 = vmatprep.subr.mxu0 %v3796
    %4819 = vmatpush1.msra.mxu0 %v3795
    %4820 = vmatprep.subr.mxu0 %v3804
    %4821 = vmatpush1.msra.mxu0 %v3803
    %4822 = vmatprep.subr.mxu0 %v3812
    %4823 = vmatpush1.msra.mxu0 %v3811
    %4824 = vmatprep.subr.mxu0 %v3820
    %4825 = vmatpush1.msra.mxu0 %v3819
    %4826 = vmatprep.subr.mxu0 %v3828
    %4827 = vmatpush1.msra.mxu0 %v3827
    %4828 = vmatprep.subr.mxu0 %v3836
    %4829 = vmatpush1.msra.mxu0 %v3835
    %4830 = vmatprep.subr.mxu0 %v3844
    %4831 = vmatpush1.msra.mxu0 %v3843
    %4832 = vmatprep.subr.mxu0 %v3852
    %4833 = vmatpush1.msra.mxu0 %v3851
    %4834 = vmatprep.subr.mxu0 %v3860
    %4835 = vmatpush1.msra.mxu0 %v3859
    %4836 = vmatprep.subr.mxu0 %v3868
    %4837 = vmatpush1.msra.mxu0 %v3867
    %4838 = vmatprep.subr.mxu0 %v3876
    %4839 = vmatpush1.msra.mxu0 %v3875
    %4840 = vmatprep.subr.mxu0 %v3884
    %4841 = vmatpush1.msra.mxu0 %v3883
    %4842 = vmatprep.subr.mxu0 %v3892
    %4843 = vmatpush1.msra.mxu0 %v3891
    %4844 = vmatprep.subr.mxu0 0.0
    %4845 = vmatpush1.msra.mxu0 0.0
    %4846 = vmatprep.subr.mxu0 0.0
    %4847 = vmatpush1.msra.mxu0 0.0
    %4848 = vmatprep.subr.mxu0 0.0
    %4849 = vmatpush1.msra.mxu0 0.0
    %4850 = vmatprep.subr.mxu0 0.0
    %4851 = vmatpush1.msra.mxu0 0.0
    %4852 = vmatprep.subr.mxu0 0.0
    %4853 = vmatpush1.msra.mxu0 0.0
    %4854 = vmatprep.subr.mxu0 0.0
    %4855 = vmatpush1.msra.mxu0 0.0
    %4856 = vmatprep.subr.mxu0 0.0
    %4857 = vmatpush1.msra.mxu0 0.0
    %4858 = vmatprep.subr.mxu0 0.0
    %4859 = vmatpush1.msra.mxu0 0.0
    %4860 = vmatprep.subr.mxu0 0.0
    %4861 = vmatpush1.msra.mxu0 0.0
    %4862 = vmatprep.subr.mxu0 0.0
    %4863 = vmatpush1.msra.mxu0 0.0
    %4864 = vmatprep.subr.mxu0 0.0
    %4865 = vmatpush1.msra.mxu0 0.0
    %4866 = vmatprep.subr.mxu0 0.0
    %4867 = vmatpush1.msra.mxu0 0.0
    %4868 = vmatprep.subr.mxu0 0.0
    %4869 = vmatpush1.msra.mxu0 0.0
    %4870 = vmatprep.subr.mxu0 0.0
    %4871 = vmatpush1.msra.mxu0 0.0
    %4872 = vmatprep.subr.mxu0 0.0
    %4873 = vmatpush1.msra.mxu0 0.0
    %4874 = vmatprep.subr.mxu0 0.0
    %4875 = vmatpush1.msra.mxu0 0.0
    %4876 = vmatprep.mubr.f32.mxu0 0.0
    %4877 = vmatmul.mubr.f32.gmra.mrb[0].mxu0 %v3749
    %v4878 = vpop.f32.mrb[0].mxu0
    %v4879 = vadd.f32 %v4427, %v4878
    %v4880 = vpop.f32.mrb[0].mxu0
    %v4881 = vadd.f32 %v4429, %v4880
    %4882 = vmatprep.mubr.f32.mxu0 0.0
    %4883 = vmatmul.mubr.f32.gmra.mrb[0].mxu0 %v3750
    %v4884 = vpop.f32.mrb[0].mxu0
    %v4885 = vadd.f32 %v4433, %v4884
    %v4886 = vpop.f32.mrb[0].mxu0
    %v4887 = vadd.f32 %v4435, %v4886
    %4888 = vmatprep.mubr.f32.mxu0 0.0
    %4889 = vmatmul.mubr.f32.gmra.mrb[0].mxu0 %v3751
    %v4890 = vpop.f32.mrb[0].mxu0
    %v4891 = vadd.f32 %v4439, %v4890
    %v4892 = vpop.f32.mrb[0].mxu0
    %v4893 = vadd.f32 %v4441, %v4892
    %4894 = vmatprep.mubr.f32.mxu0 0.0
    %4895 = vmatmul.mubr.f32.gmra.mrb[0].mxu0 %v3752
    %v4896 = vpop.f32.mrb[0].mxu0
    %v4897 = vadd.f32 %v4445, %v4896
    %v4898 = vpop.f32.mrb[0].mxu0
    %v4899 = vadd.f32 %v4447, %v4898
    %4900 = vmatprep.mubr.f32.mxu0 0.0
    %4901 = vmatmul.mubr.f32.gmra.mrb[0].mxu0 %v3753
    %v4902 = vpop.f32.mrb[0].mxu0
    %v4903 = vadd.f32 %v4451, %v4902
    %v4904 = vpop.f32.mrb[0].mxu0
    %v4905 = vadd.f32 %v4453, %v4904
    %4906 = vmatprep.mubr.f32.mxu0 0.0
    %4907 = vmatmul.mubr.f32.gmra.mrb[0].mxu0 %v3754
    %v4908 = vpop.f32.mrb[0].mxu0
    %v4909 = vadd.f32 %v4457, %v4908
    %v4910 = vpop.f32.mrb[0].mxu0
    %v4911 = vadd.f32 %v4459, %v4910
    %4912 = vmatprep.mubr.f32.mxu0 0.0
    %4913 = vmatmul.mubr.f32.gmra.mrb[0].mxu0 %v3755
    %v4914 = vpop.f32.mrb[0].mxu0
    %v4915 = vadd.f32 %v4463, %v4914
    %v4916 = vpop.f32.mrb[0].mxu0
    %v4917 = vadd.f32 %v4465, %v4916
    %4918 = vmatprep.mubr.f32.mxu0 0.0
    %4919 = vmatmul.mubr.f32.gmra.mrb[0].mxu0 %v3756
    %v4920 = vpop.f32.mrb[0].mxu0
    %v4921 = vadd.f32 %v4469, %v4920
    %v4922 = vpop.f32.mrb[0].mxu0
    %v4923 = vadd.f32 %v4471, %v4922
    %4924 = vdwg.mxu0
    %v4925 = vld [vmem:[%s5] sm:$0xff]
    %v4927 = vlaneseq
    %v4928 = vshrl.u32 %v4927, 7
    %v4929 = vsub.s32 0, %v4928
    %v4930 = vrot.slane %v4925, %v4929
    %v4931 = vlaneseq
    %v4932 = vshrl.u32 %v4931, 7
    %v4933 = vsub.s32 1, %v4932
    %v4934 = vrot.slane %v4925, %v4933
    %v4935 = vlaneseq
    %v4936 = vshrl.u32 %v4935, 7
    %v4937 = vsub.s32 2, %v4936
    %v4938 = vrot.slane %v4925, %v4937
    %v4939 = vlaneseq
    %v4940 = vshrl.u32 %v4939, 7
    %v4941 = vsub.s32 3, %v4940
    %v4942 = vrot.slane %v4925, %v4941
    %v4943 = vlaneseq
    %v4944 = vshrl.u32 %v4943, 7
    %v4945 = vsub.s32 4, %v4944
    %v4946 = vrot.slane %v4925, %v4945
    %v4947 = vlaneseq
    %v4948 = vshrl.u32 %v4947, 7
    %v4949 = vsub.s32 5, %v4948
    %v4950 = vrot.slane %v4925, %v4949
    %v4951 = vlaneseq
    %v4952 = vshrl.u32 %v4951, 7
    %v4953 = vsub.s32 6, %v4952
    %v4954 = vrot.slane %v4925, %v4953
    %v4955 = vlaneseq
    %v4956 = vshrl.u32 %v4955, 7
    %v4957 = vsub.s32 7, %v4956
    %v4958 = vrot.slane %v4925, %v4957
    %v4967 = vadd.f32 %v4540, %v4930
    %v4968 = vadd.f32 %v4542, %v4934
    %v4969 = vadd.f32 %v4653, %v4938
    %v4970 = vadd.f32 %v4655, %v4942
    %v4971 = vadd.f32 %v4766, %v4946
    %v4972 = vadd.f32 %v4768, %v4950
    %v4973 = vadd.f32 %v4879, %v4954
    %v4974 = vadd.f32 %v4881, %v4958
    %v4975 = vadd.f32 %v4546, %v4930
    %v4976 = vadd.f32 %v4548, %v4934
    %v4977 = vadd.f32 %v4659, %v4938
    %v4978 = vadd.f32 %v4661, %v4942
    %v4979 = vadd.f32 %v4772, %v4946
    %v4980 = vadd.f32 %v4774, %v4950
    %v4981 = vadd.f32 %v4885, %v4954
    %v4982 = vadd.f32 %v4887, %v4958
    %v4983 = vadd.f32 %v4552, %v4930
    %v4984 = vadd.f32 %v4554, %v4934
    %v4985 = vadd.f32 %v4665, %v4938
    %v4986 = vadd.f32 %v4667, %v4942
    %v4987 = vadd.f32 %v4778, %v4946
    %v4988 = vadd.f32 %v4780, %v4950
    %v4989 = vadd.f32 %v4891, %v4954
    %v4990 = vadd.f32 %v4893, %v4958
    %v4991 = vadd.f32 %v4558, %v4930
    %v4992 = vadd.f32 %v4560, %v4934
    %v4993 = vadd.f32 %v4671, %v4938
    %v4994 = vadd.f32 %v4673, %v4942
    %v4995 = vadd.f32 %v4784, %v4946
    %v4996 = vadd.f32 %v4786, %v4950
    %v4997 = vadd.f32 %v4897, %v4954
    %v4998 = vadd.f32 %v4899, %v4958
    %v4999 = vadd.f32 %v4564, %v4930
    %v5000 = vadd.f32 %v4566, %v4934
    %v5001 = vadd.f32 %v4677, %v4938
    %v5002 = vadd.f32 %v4679, %v4942
    %v5003 = vadd.f32 %v4790, %v4946
    %v5004 = vadd.f32 %v4792, %v4950
    %v5005 = vadd.f32 %v4903, %v4954
    %v5006 = vadd.f32 %v4905, %v4958
    %v5007 = vadd.f32 %v4570, %v4930
    %v5008 = vadd.f32 %v4572, %v4934
    %v5009 = vadd.f32 %v4683, %v4938
    %v5010 = vadd.f32 %v4685, %v4942
    %v5011 = vadd.f32 %v4796, %v4946
    %v5012 = vadd.f32 %v4798, %v4950
    %v5013 = vadd.f32 %v4909, %v4954
    %v5014 = vadd.f32 %v4911, %v4958
    %v5015 = vadd.f32 %v4576, %v4930
    %v5016 = vadd.f32 %v4578, %v4934
    %v5017 = vadd.f32 %v4689, %v4938
    %v5018 = vadd.f32 %v4691, %v4942
    %v5019 = vadd.f32 %v4802, %v4946
    %v5020 = vadd.f32 %v4804, %v4950
    %v5021 = vadd.f32 %v4915, %v4954
    %v5022 = vadd.f32 %v4917, %v4958
    %v5023 = vadd.f32 %v4582, %v4930
    %v5024 = vadd.f32 %v4584, %v4934
    %v5025 = vadd.f32 %v4695, %v4938
    %v5026 = vadd.f32 %v4697, %v4942
    %v5027 = vadd.f32 %v4808, %v4946
    %v5028 = vadd.f32 %v4810, %v4950
    %v5029 = vadd.f32 %v4921, %v4954
    %v5030 = vadd.f32 %v4923, %v4958
    %5031 = vst [vmem:[#allocation9] sm:$0xff] %v4967
    %5032 = vst [vmem:[#allocation9 + $0x8] sm:$0xff] %v4968
    %5033 = vst [vmem:[#allocation9 + $0x10] sm:$0xff] %v4969
    %5034 = vst [vmem:[#allocation9 + $0x18] sm:$0xff] %v4970
    %5035 = vst [vmem:[#allocation9 + $0x20] sm:$0xff] %v4975
    %5036 = vst [vmem:[#allocation9 + $0x28] sm:$0xff] %v4976
    %5037 = vst [vmem:[#allocation9 + $0x30] sm:$0xff] %v4977
    %5038 = vst [vmem:[#allocation9 + $0x38] sm:$0xff] %v4978
    %5039 = vst [vmem:[#allocation9 + $0x40] sm:$0xff] %v4983
    %5040 = vst [vmem:[#allocation9 + $0x48] sm:$0xff] %v4984
    %5041 = vst [vmem:[#allocation9 + $0x50] sm:$0xff] %v4985
    %5042 = vst [vmem:[#allocation9 + $0x58] sm:$0xff] %v4986
    %5043 = vst [vmem:[#allocation9 + $0x60] sm:$0xff] %v4991
    %5044 = vst [vmem:[#allocation9 + $0x68] sm:$0xff] %v4992
    %5045 = vst [vmem:[#allocation9 + $0x70] sm:$0xff] %v4993
    %5046 = vst [vmem:[#allocation9 + $0x78] sm:$0xff] %v4994
    %5047 = vst [vmem:[#allocation9 + $0x80] sm:$0xff] %v4999
    %5048 = vst [vmem:[#allocation9 + $0x88] sm:$0xff] %v5000
    %5049 = vst [vmem:[#allocation9 + $0x90] sm:$0xff] %v5001
    %5050 = vst [vmem:[#allocation9 + $0x98] sm:$0xff] %v5002
    %5051 = vst [vmem:[#allocation9 + $0xa0] sm:$0xff] %v5007
    %5052 = vst [vmem:[#allocation9 + $0xa8] sm:$0xff] %v5008
    %5053 = vst [vmem:[#allocation9 + $0xb0] sm:$0xff] %v5009
    %5054 = vst [vmem:[#allocation9 + $0xb8] sm:$0xff] %v5010
    %5055 = vst [vmem:[#allocation9 + $0xc0] sm:$0xff] %v5015
    %5056 = vst [vmem:[#allocation9 + $0xc8] sm:$0xff] %v5016
    %5057 = vst [vmem:[#allocation9 + $0xd0] sm:$0xff] %v5017
    %5058 = vst [vmem:[#allocation9 + $0xd8] sm:$0xff] %v5018
    %5059 = vst [vmem:[#allocation9 + $0xe0] sm:$0xff] %v5023
    %5060 = vst [vmem:[#allocation9 + $0xe8] sm:$0xff] %v5024
    %5061 = vst [vmem:[#allocation9 + $0xf0] sm:$0xff] %v5025
    %5062 = vst [vmem:[#allocation9 + $0xf8] sm:$0xff] %v5026
    %5063 = vst [vmem:[#allocation10] sm:$0xff] %v4971
    %5064 = vst [vmem:[#allocation10 + $0x8] sm:$0xff] %v4972
    %5065 = vst [vmem:[#allocation10 + $0x10] sm:$0xff] %v4973
    %5066 = vst [vmem:[#allocation10 + $0x18] sm:$0xff] %v4974
    %5067 = vst [vmem:[#allocation10 + $0x20] sm:$0xff] %v4979
    %5068 = vst [vmem:[#allocation10 + $0x28] sm:$0xff] %v4980
    %5069 = vst [vmem:[#allocation10 + $0x30] sm:$0xff] %v4981
    %5070 = vst [vmem:[#allocation10 + $0x38] sm:$0xff] %v4982
    %5071 = vst [vmem:[#allocation10 + $0x40] sm:$0xff] %v4987
    %5072 = vst [vmem:[#allocation10 + $0x48] sm:$0xff] %v4988
    %5073 = vst [vmem:[#allocation10 + $0x50] sm:$0xff] %v4989
    %5074 = vst [vmem:[#allocation10 + $0x58] sm:$0xff] %v4990
    %5075 = vst [vmem:[#allocation10 + $0x60] sm:$0xff] %v4995
    %5076 = vst [vmem:[#allocation10 + $0x68] sm:$0xff] %v4996
    %5077 = vst [vmem:[#allocation10 + $0x70] sm:$0xff] %v4997
    %5078 = vst [vmem:[#allocation10 + $0x78] sm:$0xff] %v4998
    %5079 = vst [vmem:[#allocation10 + $0x80] sm:$0xff] %v5003
    %5080 = vst [vmem:[#allocation10 + $0x88] sm:$0xff] %v5004
    %5081 = vst [vmem:[#allocation10 + $0x90] sm:$0xff] %v5005
    %5082 = vst [vmem:[#allocation10 + $0x98] sm:$0xff] %v5006
    %5083 = vst [vmem:[#allocation10 + $0xa0] sm:$0xff] %v5011
    %5084 = vst [vmem:[#allocation10 + $0xa8] sm:$0xff] %v5012
    %5085 = vst [vmem:[#allocation10 + $0xb0] sm:$0xff] %v5013
    %5086 = vst [vmem:[#allocation10 + $0xb8] sm:$0xff] %v5014
    %5087 = vst [vmem:[#allocation10 + $0xc0] sm:$0xff] %v5019
    %5088 = vst [vmem:[#allocation10 + $0xc8] sm:$0xff] %v5020
    %5089 = vst [vmem:[#allocation10 + $0xd0] sm:$0xff] %v5021
    %5090 = vst [vmem:[#allocation10 + $0xd8] sm:$0xff] %v5022
    %5091 = vst [vmem:[#allocation10 + $0xe0] sm:$0xff] %v5027
    %5092 = vst [vmem:[#allocation10 + $0xe8] sm:$0xff] %v5028
    %5093 = vst [vmem:[#allocation10 + $0xf0] sm:$0xff] %v5029
    %5094 = vst [vmem:[#allocation10 + $0xf8] sm:$0xff] %v5030
    %s5095 = smul.u32 %s3743, 4
    %s5096 = sshll.u32 %s5095, 4
    %5097 = dma.done %s121, %s5096
    %s5098 = sshll.u32 %s5095, 4
    %5099 = dma.done %s133, %s5098
    %v5100 = vld [vmem:[#allocation4] sm:$0xff]
    %v5101 = vld [vmem:[#allocation4 + $0x8] sm:$0xff]
    %v5102 = vld [vmem:[#allocation4 + $0x10] sm:$0xff]
    %v5103 = vld [vmem:[#allocation4 + $0x18] sm:$0xff]
    %v5104 = vld [vmem:[#allocation4 + $0x20] sm:$0xff]
    %v5105 = vld [vmem:[#allocation4 + $0x28] sm:$0xff]
    %v5106 = vld [vmem:[#allocation4 + $0x30] sm:$0xff]
    %v5107 = vld [vmem:[#allocation4 + $0x38] sm:$0xff]
    %v5108 = vld [vmem:[#allocation4 + $0x40] sm:$0xff]
    %v5109 = vld [vmem:[#allocation4 + $0x48] sm:$0xff]
    %v5110 = vld [vmem:[#allocation4 + $0x50] sm:$0xff]
    %v5111 = vld [vmem:[#allocation4 + $0x58] sm:$0xff]
    %v5112 = vld [vmem:[#allocation4 + $0x60] sm:$0xff]
    %v5113 = vld [vmem:[#allocation4 + $0x68] sm:$0xff]
    %v5114 = vld [vmem:[#allocation4 + $0x70] sm:$0xff]
    %v5115 = vld [vmem:[#allocation4 + $0x78] sm:$0xff]
    %v5116 = vld [vmem:[#allocation4 + $0x80] sm:$0xff]
    %v5117 = vld [vmem:[#allocation4 + $0x88] sm:$0xff]
    %v5118 = vld [vmem:[#allocation4 + $0x90] sm:$0xff]
    %v5119 = vld [vmem:[#allocation4 + $0x98] sm:$0xff]
    %v5120 = vld [vmem:[#allocation4 + $0xa0] sm:$0xff]
    %v5121 = vld [vmem:[#allocation4 + $0xa8] sm:$0xff]
    %v5122 = vld [vmem:[#allocation4 + $0xb0] sm:$0xff]
    %v5123 = vld [vmem:[#allocation4 + $0xb8] sm:$0xff]
    %v5124 = vld [vmem:[#allocation4 + $0xc0] sm:$0xff]
    %v5125 = vld [vmem:[#allocation4 + $0xc8] sm:$0xff]
    %v5126 = vld [vmem:[#allocation4 + $0xd0] sm:$0xff]
    %v5127 = vld [vmem:[#allocation4 + $0xd8] sm:$0xff]
    %v5128 = vld [vmem:[#allocation4 + $0xe0] sm:$0xff]
    %v5129 = vld [vmem:[#allocation4 + $0xe8] sm:$0xff]
    %v5130 = vld [vmem:[#allocation4 + $0xf0] sm:$0xff]
    %v5131 = vld [vmem:[#allocation4 + $0xf8] sm:$0xff]
    %v5132 = vld [vmem:[#allocation4 + $0x100] sm:$0xff]
    %v5133 = vld [vmem:[#allocation4 + $0x108] sm:$0xff]
    %v5134 = vld [vmem:[#allocation4 + $0x110] sm:$0xff]
    %v5135 = vld [vmem:[#allocation4 + $0x118] sm:$0xff]
    %v5136 = vld [vmem:[#allocation4 + $0x120] sm:$0xff]
    %v5137 = vld [vmem:[#allocation4 + $0x128] sm:$0xff]
    %v5138 = vld [vmem:[#allocation4 + $0x130] sm:$0xff]
    %v5139 = vld [vmem:[#allocation4 + $0x138] sm:$0xff]
    %v5140 = vld [vmem:[#allocation4 + $0x140] sm:$0xff]
    %v5141 = vld [vmem:[#allocation4 + $0x148] sm:$0xff]
    %v5142 = vld [vmem:[#allocation4 + $0x150] sm:$0xff]
    %v5143 = vld [vmem:[#allocation4 + $0x158] sm:$0xff]
    %v5144 = vld [vmem:[#allocation4 + $0x160] sm:$0xff]
    %v5145 = vld [vmem:[#allocation4 + $0x168] sm:$0xff]
    %v5146 = vld [vmem:[#allocation4 + $0x170] sm:$0xff]
    %v5147 = vld [vmem:[#allocation4 + $0x178] sm:$0xff]
    %v5148 = vld [vmem:[#allocation4 + $0x180] sm:$0xff]
    %v5149 = vld [vmem:[#allocation4 + $0x188] sm:$0xff]
    %v5150 = vld [vmem:[#allocation4 + $0x190] sm:$0xff]
    %v5151 = vld [vmem:[#allocation4 + $0x198] sm:$0xff]
    %v5152 = vld [vmem:[#allocation4 + $0x1a0] sm:$0xff]
    %v5153 = vld [vmem:[#allocation4 + $0x1a8] sm:$0xff]
    %v5154 = vld [vmem:[#allocation4 + $0x1b0] sm:$0xff]
    %v5155 = vld [vmem:[#allocation4 + $0x1b8] sm:$0xff]
    %v5156 = vld [vmem:[#allocation4 + $0x1c0] sm:$0xff]
    %v5157 = vld [vmem:[#allocation4 + $0x1c8] sm:$0xff]
    %v5158 = vld [vmem:[#allocation4 + $0x1d0] sm:$0xff]
    %v5159 = vld [vmem:[#allocation4 + $0x1d8] sm:$0xff]
    %v5160 = vld [vmem:[#allocation4 + $0x1e0] sm:$0xff]
    %v5161 = vld [vmem:[#allocation4 + $0x1e8] sm:$0xff]
    %v5162 = vld [vmem:[#allocation4 + $0x1f0] sm:$0xff]
    %v5163 = vld [vmem:[#allocation4 + $0x1f8] sm:$0xff]
    %v5164 = vld [vmem:[#allocation5] sm:$0xff]
    %v5165 = vld [vmem:[#allocation5 + $0x8] sm:$0xff]
    %v5166 = vld [vmem:[#allocation5 + $0x10] sm:$0xff]
    %v5167 = vld [vmem:[#allocation5 + $0x18] sm:$0xff]
    %v5168 = vld [vmem:[#allocation5 + $0x20] sm:$0xff]
    %v5169 = vld [vmem:[#allocation5 + $0x28] sm:$0xff]
    %v5170 = vld [vmem:[#allocation5 + $0x30] sm:$0xff]
    %v5171 = vld [vmem:[#allocation5 + $0x38] sm:$0xff]
    %v5172 = vld [vmem:[#allocation5 + $0x40] sm:$0xff]
    %v5173 = vld [vmem:[#allocation5 + $0x48] sm:$0xff]
    %v5174 = vld [vmem:[#allocation5 + $0x50] sm:$0xff]
    %v5175 = vld [vmem:[#allocation5 + $0x58] sm:$0xff]
    %v5176 = vld [vmem:[#allocation5 + $0x60] sm:$0xff]
    %v5177 = vld [vmem:[#allocation5 + $0x68] sm:$0xff]
    %v5178 = vld [vmem:[#allocation5 + $0x70] sm:$0xff]
    %v5179 = vld [vmem:[#allocation5 + $0x78] sm:$0xff]
    %v5180 = vld [vmem:[#allocation5 + $0x80] sm:$0xff]
    %v5181 = vld [vmem:[#allocation5 + $0x88] sm:$0xff]
    %v5182 = vld [vmem:[#allocation5 + $0x90] sm:$0xff]
    %v5183 = vld [vmem:[#allocation5 + $0x98] sm:$0xff]
    %v5184 = vld [vmem:[#allocation5 + $0xa0] sm:$0xff]
    %v5185 = vld [vmem:[#allocation5 + $0xa8] sm:$0xff]
    %v5186 = vld [vmem:[#allocation5 + $0xb0] sm:$0xff]
    %v5187 = vld [vmem:[#allocation5 + $0xb8] sm:$0xff]
    %v5188 = vld [vmem:[#allocation5 + $0xc0] sm:$0xff]
    %v5189 = vld [vmem:[#allocation5 + $0xc8] sm:$0xff]
    %v5190 = vld [vmem:[#allocation5 + $0xd0] sm:$0xff]
    %v5191 = vld [vmem:[#allocation5 + $0xd8] sm:$0xff]
    %v5192 = vld [vmem:[#allocation5 + $0xe0] sm:$0xff]
    %v5193 = vld [vmem:[#allocation5 + $0xe8] sm:$0xff]
    %v5194 = vld [vmem:[#allocation5 + $0xf0] sm:$0xff]
    %v5195 = vld [vmem:[#allocation5 + $0xf8] sm:$0xff]
    %v5196 = vld [vmem:[#allocation5 + $0x100] sm:$0xff]
    %v5197 = vld [vmem:[#allocation5 + $0x108] sm:$0xff]
    %v5198 = vld [vmem:[#allocation5 + $0x110] sm:$0xff]
    %v5199 = vld [vmem:[#allocation5 + $0x118] sm:$0xff]
    %v5200 = vld [vmem:[#allocation5 + $0x120] sm:$0xff]
    %v5201 = vld [vmem:[#allocation5 + $0x128] sm:$0xff]
    %v5202 = vld [vmem:[#allocation5 + $0x130] sm:$0xff]
    %v5203 = vld [vmem:[#allocation5 + $0x138] sm:$0xff]
    %v5204 = vld [vmem:[#allocation5 + $0x140] sm:$0xff]
    %v5205 = vld [vmem:[#allocation5 + $0x148] sm:$0xff]
    %v5206 = vld [vmem:[#allocation5 + $0x150] sm:$0xff]
    %v5207 = vld [vmem:[#allocation5 + $0x158] sm:$0xff]
    %v5208 = vld [vmem:[#allocation5 + $0x160] sm:$0xff]
    %v5209 = vld [vmem:[#allocation5 + $0x168] sm:$0xff]
    %v5210 = vld [vmem:[#allocation5 + $0x170] sm:$0xff]
    %v5211 = vld [vmem:[#allocation5 + $0x178] sm:$0xff]
    %v5212 = vld [vmem:[#allocation5 + $0x180] sm:$0xff]
    %v5213 = vld [vmem:[#allocation5 + $0x188] sm:$0xff]
    %v5214 = vld [vmem:[#allocation5 + $0x190] sm:$0xff]
    %v5215 = vld [vmem:[#allocation5 + $0x198] sm:$0xff]
    %v5216 = vld [vmem:[#allocation5 + $0x1a0] sm:$0xff]
    %v5217 = vld [vmem:[#allocation5 + $0x1a8] sm:$0xff]
    %v5218 = vld [vmem:[#allocation5 + $0x1b0] sm:$0xff]
    %v5219 = vld [vmem:[#allocation5 + $0x1b8] sm:$0xff]
    %v5220 = vld [vmem:[#allocation5 + $0x1c0] sm:$0xff]
    %v5221 = vld [vmem:[#allocation5 + $0x1c8] sm:$0xff]
    %v5222 = vld [vmem:[#allocation5 + $0x1d0] sm:$0xff]
    %v5223 = vld [vmem:[#allocation5 + $0x1d8] sm:$0xff]
    %v5224 = vld [vmem:[#allocation5 + $0x1e0] sm:$0xff]
    %v5225 = vld [vmem:[#allocation5 + $0x1e8] sm:$0xff]
    %v5226 = vld [vmem:[#allocation5 + $0x1f0] sm:$0xff]
    %v5227 = vld [vmem:[#allocation5 + $0x1f8] sm:$0xff]
    %v5228 = vld [vmem:[#allocation9] sm:$0xff]
    %v5229 = vld [vmem:[#allocation9 + $0x8] sm:$0xff]
    %v5230 = vld [vmem:[#allocation9 + $0x10] sm:$0xff]
    %v5231 = vld [vmem:[#allocation9 + $0x18] sm:$0xff]
    %5232 = vmatprep.subr.mxu0 %v5101
    %5233 = vmatpush1.msra.mxu0 %v5100
    %5234 = vmatprep.subr.mxu0 %v5105
    %5235 = vmatpush1.msra.mxu0 %v5104
    %5236 = vmatprep.subr.mxu0 %v5109
    %5237 = vmatpush1.msra.mxu0 %v5108
    %5238 = vmatprep.subr.mxu0 %v5113
    %5239 = vmatpush1.msra.mxu0 %v5112
    %5240 = vmatprep.subr.mxu0 %v5117
    %5241 = vmatpush1.msra.mxu0 %v5116
    %5242 = vmatprep.subr.mxu0 %v5121
    %5243 = vmatpush1.msra.mxu0 %v5120
    %5244 = vmatprep.subr.mxu0 %v5125
    %5245 = vmatpush1.msra.mxu0 %v5124
    %5246 = vmatprep.subr.mxu0 %v5129
    %5247 = vmatpush1.msra.mxu0 %v5128
    %5248 = vmatprep.subr.mxu0 %v5133
    %5249 = vmatpush1.msra.mxu0 %v5132
    %5250 = vmatprep.subr.mxu0 %v5137
    %5251 = vmatpush1.msra.mxu0 %v5136
    %5252 = vmatprep.subr.mxu0 %v5141
    %5253 = vmatpush1.msra.mxu0 %v5140
    %5254 = vmatprep.subr.mxu0 %v5145
    %5255 = vmatpush1.msra.mxu0 %v5144
    %5256 = vmatprep.subr.mxu0 %v5149
    %5257 = vmatpush1.msra.mxu0 %v5148
    %5258 = vmatprep.subr.mxu0 %v5153
    %5259 = vmatpush1.msra.mxu0 %v5152
    %5260 = vmatprep.subr.mxu0 %v5157
    %5261 = vmatpush1.msra.mxu0 %v5156
    %5262 = vmatprep.subr.mxu0 %v5161
    %5263 = vmatpush1.msra.mxu0 %v5160
    %5264 = vmatprep.subr.mxu0 0.0
    %5265 = vmatpush1.msra.mxu0 0.0
    %5266 = vmatprep.subr.mxu0 0.0
    %5267 = vmatpush1.msra.mxu0 0.0
    %5268 = vmatprep.subr.mxu0 0.0
    %5269 = vmatpush1.msra.mxu0 0.0
    %5270 = vmatprep.subr.mxu0 0.0
    %5271 = vmatpush1.msra.mxu0 0.0
    %5272 = vmatprep.subr.mxu0 0.0
    %5273 = vmatpush1.msra.mxu0 0.0
    %5274 = vmatprep.subr.mxu0 0.0
    %5275 = vmatpush1.msra.mxu0 0.0
    %5276 = vmatprep.subr.mxu0 0.0
    %5277 = vmatpush1.msra.mxu0 0.0
    %5278 = vmatprep.subr.mxu0 0.0
    %5279 = vmatpush1.msra.mxu0 0.0
    %5280 = vmatprep.subr.mxu0 0.0
    %5281 = vmatpush1.msra.mxu0 0.0
    %5282 = vmatprep.subr.mxu0 0.0
    %5283 = vmatpush1.msra.mxu0 0.0
    %5284 = vmatprep.subr.mxu0 0.0
    %5285 = vmatpush1.msra.mxu0 0.0
    %5286 = vmatprep.subr.mxu0 0.0
    %5287 = vmatpush1.msra.mxu0 0.0
    %5288 = vmatprep.subr.mxu0 0.0
    %5289 = vmatpush1.msra.mxu0 0.0
    %5290 = vmatprep.subr.mxu0 0.0
    %5291 = vmatpush1.msra.mxu0 0.0
    %5292 = vmatprep.subr.mxu0 0.0
    %5293 = vmatpush1.msra.mxu0 0.0
    %5294 = vmatprep.subr.mxu0 0.0
    %5295 = vmatpush1.msra.mxu0 0.0
    %5296 = vmatprep.mubr.f32.mxu0 0.0
    %5297 = vmatmul.mubr.f32.gmra.mrb[0].mxu0 0.0
    %v5298 = vpop.f32.mrb[0].mxu0
    %v5299 = vadd.f32 %v5228, %v5298
    %v5300 = vpop.f32.mrb[0].mxu0
    %v5301 = vadd.f32 %v5229, %v5300
    %5302 = vdwg.mxu0
    %5303 = vmatprep.subr.mxu0 %v5103
    %5304 = vmatpush1.msra.mxu0 %v5102
    %5305 = vmatprep.subr.mxu0 %v5107
    %5306 = vmatpush1.msra.mxu0 %v5106
    %5307 = vmatprep.subr.mxu0 %v5111
    %5308 = vmatpush1.msra.mxu0 %v5110
    %5309 = vmatprep.subr.mxu0 %v5115
    %5310 = vmatpush1.msra.mxu0 %v5114
    %5311 = vmatprep.subr.mxu0 %v5119
    %5312 = vmatpush1.msra.mxu0 %v5118
    %5313 = vmatprep.subr.mxu0 %v5123
    %5314 = vmatpush1.msra.mxu0 %v5122
    %5315 = vmatprep.subr.mxu0 %v5127
    %5316 = vmatpush1.msra.mxu0 %v5126
    %5317 = vmatprep.subr.mxu0 %v5131
    %5318 = vmatpush1.msra.mxu0 %v5130
    %5319 = vmatprep.subr.mxu0 %v5135
    %5320 = vmatpush1.msra.mxu0 %v5134
    %5321 = vmatprep.subr.mxu0 %v5139
    %5322 = vmatpush1.msra.mxu0 %v5138
    %5323 = vmatprep.subr.mxu0 %v5143
    %5324 = vmatpush1.msra.mxu0 %v5142
    %5325 = vmatprep.subr.mxu0 %v5147
    %5326 = vmatpush1.msra.mxu0 %v5146
    %5327 = vmatprep.subr.mxu0 %v5151
    %5328 = vmatpush1.msra.mxu0 %v5150
    %5329 = vmatprep.subr.mxu0 %v5155
    %5330 = vmatpush1.msra.mxu0 %v5154
    %5331 = vmatprep.subr.mxu0 %v5159
    %5332 = vmatpush1.msra.mxu0 %v5158
    %5333 = vmatprep.subr.mxu0 %v5163
    %5334 = vmatpush1.msra.mxu0 %v5162
    %5335 = vmatprep.subr.mxu0 0.0
    %5336 = vmatpush1.msra.mxu0 0.0
    %5337 = vmatprep.subr.mxu0 0.0
    %5338 = vmatpush1.msra.mxu0 0.0
    %5339 = vmatprep.subr.mxu0 0.0
    %5340 = vmatpush1.msra.mxu0 0.0
    %5341 = vmatprep.subr.mxu0 0.0
    %5342 = vmatpush1.msra.mxu0 0.0
    %5343 = vmatprep.subr.mxu0 0.0
    %5344 = vmatpush1.msra.mxu0 0.0
    %5345 = vmatprep.subr.mxu0 0.0
    %5346 = vmatpush1.msra.mxu0 0.0
    %5347 = vmatprep.subr.mxu0 0.0
    %5348 = vmatpush1.msra.mxu0 0.0
    %5349 = vmatprep.subr.mxu0 0.0
    %5350 = vmatpush1.msra.mxu0 0.0
    %5351 = vmatprep.subr.mxu0 0.0
    %5352 = vmatpush1.msra.mxu0 0.0
    %5353 = vmatprep.subr.mxu0 0.0
    %5354 = vmatpush1.msra.mxu0 0.0
    %5355 = vmatprep.subr.mxu0 0.0
    %5356 = vmatpush1.msra.mxu0 0.0
    %5357 = vmatprep.subr.mxu0 0.0
    %5358 = vmatpush1.msra.mxu0 0.0
    %5359 = vmatprep.subr.mxu0 0.0
    %5360 = vmatpush1.msra.mxu0 0.0
    %5361 = vmatprep.subr.mxu0 0.0
    %5362 = vmatpush1.msra.mxu0 0.0
    %5363 = vmatprep.subr.mxu0 0.0
    %5364 = vmatpush1.msra.mxu0 0.0
    %5365 = vmatprep.subr.mxu0 0.0
    %5366 = vmatpush1.msra.mxu0 0.0
    %5367 = vmatprep.mubr.f32.mxu0 0.0
    %5368 = vmatmul.mubr.f32.gmra.mrb[0].mxu0 0.0
    %v5369 = vpop.f32.mrb[0].mxu0
    %v5370 = vadd.f32 %v5230, %v5369
    %v5371 = vpop.f32.mrb[0].mxu0
    %v5372 = vadd.f32 %v5231, %v5371
    %5373 = vdwg.mxu0
    %v5374 = vxor.u32 %v5299, 2147483648
    %v5375 = vxor.u32 %v5301, 2147483648
    %v5376 = vxor.u32 %v5370, 2147483648
    %v5377 = vmul.f32 %v5374, 1.442695
    %v5378 = vpow.pop %v5377
    %v5379 = vmul.f32 %v5375, 1.442695
    %v5380 = vpow.pop %v5379
    %v5381 = vmul.f32 %v5376, 1.442695
    %v5382 = vpow.pop %v5381
    %v5383 = vadd.f32 %v5378, 1.0
    %v5384 = vadd.f32 %v5380, 1.0
    %v5385 = vadd.f32 %v5382, 1.0
    %v5386 = vrcp.pop %v5383
    %v5387 = vmul.f32 1.0, %v5386
    %v5388 = vrcp.pop %v5384
    %v5389 = vmul.f32 1.0, %v5388
    %v5390 = vrcp.pop %v5385
    %v5391 = vmul.f32 1.0, %v5390
    %v5392 = vtanh.pop %v5372
    %v5393 = vmul.f32 %v5389, 0.0
    %v5394 = vmul.f32 %v5387, %v5392
    %v5395 = vadd.f32 %v5393, %v5394
    %v5396 = vtanh.pop %v5395
    %v5397 = vmul.f32 %v5391, %v5396
    %s5398 = scalar_lea.vmem [#allocation10], 224
    %v5399 = vld [vmem:[%s5398] sm:$0xff]
    %v5400 = vld [vmem:[%s5398 + $0x8] sm:$0xff]
    %v5401 = vld [vmem:[%s5398 + $0x10] sm:$0xff]
    %v5402 = vld [vmem:[%s5398 + $0x18] sm:$0xff]
    %5403 = vmatprep.subr.mxu0 %v5165
    %5404 = vmatpush1.msra.mxu0 %v5164
    %5405 = vmatprep.subr.mxu0 %v5169
    %5406 = vmatpush1.msra.mxu0 %v5168
    %5407 = vmatprep.subr.mxu0 %v5173
    %5408 = vmatpush1.msra.mxu0 %v5172
    %5409 = vmatprep.subr.mxu0 %v5177
    %5410 = vmatpush1.msra.mxu0 %v5176
    %5411 = vmatprep.subr.mxu0 %v5181
    %5412 = vmatpush1.msra.mxu0 %v5180
    %5413 = vmatprep.subr.mxu0 %v5185
    %5414 = vmatpush1.msra.mxu0 %v5184
    %5415 = vmatprep.subr.mxu0 %v5189
    %5416 = vmatpush1.msra.mxu0 %v5188
    %5417 = vmatprep.subr.mxu0 %v5193
    %5418 = vmatpush1.msra.mxu0 %v5192
    %5419 = vmatprep.subr.mxu0 %v5197
    %5420 = vmatpush1.msra.mxu0 %v5196
    %5421 = vmatprep.subr.mxu0 %v5201
    %5422 = vmatpush1.msra.mxu0 %v5200
    %5423 = vmatprep.subr.mxu0 %v5205
    %5424 = vmatpush1.msra.mxu0 %v5204
    %5425 = vmatprep.subr.mxu0 %v5209
    %5426 = vmatpush1.msra.mxu0 %v5208
    %5427 = vmatprep.subr.mxu0 %v5213
    %5428 = vmatpush1.msra.mxu0 %v5212
    %5429 = vmatprep.subr.mxu0 %v5217
    %5430 = vmatpush1.msra.mxu0 %v5216
    %5431 = vmatprep.subr.mxu0 %v5221
    %5432 = vmatpush1.msra.mxu0 %v5220
    %5433 = vmatprep.subr.mxu0 %v5225
    %5434 = vmatpush1.msra.mxu0 %v5224
    %5435 = vmatprep.subr.mxu0 0.0
    %5436 = vmatpush1.msra.mxu0 0.0
    %5437 = vmatprep.subr.mxu0 0.0
    %5438 = vmatpush1.msra.mxu0 0.0
    %5439 = vmatprep.subr.mxu0 0.0
    %5440 = vmatpush1.msra.mxu0 0.0
    %5441 = vmatprep.subr.mxu0 0.0
    %5442 = vmatpush1.msra.mxu0 0.0
    %5443 = vmatprep.subr.mxu0 0.0
    %5444 = vmatpush1.msra.mxu0 0.0
    %5445 = vmatprep.subr.mxu0 0.0
    %5446 = vmatpush1.msra.mxu0 0.0
    %5447 = vmatprep.subr.mxu0 0.0
    %5448 = vmatpush1.msra.mxu0 0.0
    %5449 = vmatprep.subr.mxu0 0.0
    %5450 = vmatpush1.msra.mxu0 0.0
    %5451 = vmatprep.subr.mxu0 0.0
    %5452 = vmatpush1.msra.mxu0 0.0
    %5453 = vmatprep.subr.mxu0 0.0
    %5454 = vmatpush1.msra.mxu0 0.0
    %5455 = vmatprep.subr.mxu0 0.0
    %5456 = vmatpush1.msra.mxu0 0.0
    %5457 = vmatprep.subr.mxu0 0.0
    %5458 = vmatpush1.msra.mxu0 0.0
    %5459 = vmatprep.subr.mxu0 0.0
    %5460 = vmatpush1.msra.mxu0 0.0
    %5461 = vmatprep.subr.mxu0 0.0
    %5462 = vmatpush1.msra.mxu0 0.0
    %5463 = vmatprep.subr.mxu0 0.0
    %5464 = vmatpush1.msra.mxu0 0.0
    %5465 = vmatprep.subr.mxu0 0.0
    %5466 = vmatpush1.msra.mxu0 0.0
    %5467 = vmatprep.mubr.f32.mxu0 0.0
    %5468 = vmatmul.mubr.f32.gmra.mrb[0].mxu0 0.0
    %v5469 = vpop.f32.mrb[0].mxu0
    %v5470 = vadd.f32 %v5399, %v5469
    %v5471 = vpop.f32.mrb[0].mxu0
    %v5472 = vadd.f32 %v5400, %v5471
    %5473 = vdwg.mxu0
    %5474 = vmatprep.subr.mxu0 %v5167
    %5475 = vmatpush1.msra.mxu0 %v5166
    %5476 = vmatprep.subr.mxu0 %v5171
    %5477 = vmatpush1.msra.mxu0 %v5170
    %5478 = vmatprep.subr.mxu0 %v5175
    %5479 = vmatpush1.msra.mxu0 %v5174
    %5480 = vmatprep.subr.mxu0 %v5179
    %5481 = vmatpush1.msra.mxu0 %v5178
    %5482 = vmatprep.subr.mxu0 %v5183
    %5483 = vmatpush1.msra.mxu0 %v5182
    %5484 = vmatprep.subr.mxu0 %v5187
    %5485 = vmatpush1.msra.mxu0 %v5186
    %5486 = vmatprep.subr.mxu0 %v5191
    %5487 = vmatpush1.msra.mxu0 %v5190
    %5488 = vmatprep.subr.mxu0 %v5195
    %5489 = vmatpush1.msra.mxu0 %v5194
    %5490 = vmatprep.subr.mxu0 %v5199
    %5491 = vmatpush1.msra.mxu0 %v5198
    %5492 = vmatprep.subr.mxu0 %v5203
    %5493 = vmatpush1.msra.mxu0 %v5202
    %5494 = vmatprep.subr.mxu0 %v5207
    %5495 = vmatpush1.msra.mxu0 %v5206
    %5496 = vmatprep.subr.mxu0 %v5211
    %5497 = vmatpush1.msra.mxu0 %v5210
    %5498 = vmatprep.subr.mxu0 %v5215
    %5499 = vmatpush1.msra.mxu0 %v5214
    %5500 = vmatprep.subr.mxu0 %v5219
    %5501 = vmatpush1.msra.mxu0 %v5218
    %5502 = vmatprep.subr.mxu0 %v5223
    %5503 = vmatpush1.msra.mxu0 %v5222
    %5504 = vmatprep.subr.mxu0 %v5227
    %5505 = vmatpush1.msra.mxu0 %v5226
    %5506 = vmatprep.subr.mxu0 0.0
    %5507 = vmatpush1.msra.mxu0 0.0
    %5508 = vmatprep.subr.mxu0 0.0
    %5509 = vmatpush1.msra.mxu0 0.0
    %5510 = vmatprep.subr.mxu0 0.0
    %5511 = vmatpush1.msra.mxu0 0.0
    %5512 = vmatprep.subr.mxu0 0.0
    %5513 = vmatpush1.msra.mxu0 0.0
    %5514 = vmatprep.subr.mxu0 0.0
    %5515 = vmatpush1.msra.mxu0 0.0
    %5516 = vmatprep.subr.mxu0 0.0
    %5517 = vmatpush1.msra.mxu0 0.0
    %5518 = vmatprep.subr.mxu0 0.0
    %5519 = vmatpush1.msra.mxu0 0.0
    %5520 = vmatprep.subr.mxu0 0.0
    %5521 = vmatpush1.msra.mxu0 0.0
    %5522 = vmatprep.subr.mxu0 0.0
    %5523 = vmatpush1.msra.mxu0 0.0
    %5524 = vmatprep.subr.mxu0 0.0
    %5525 = vmatpush1.msra.mxu0 0.0
    %5526 = vmatprep.subr.mxu0 0.0
    %5527 = vmatpush1.msra.mxu0 0.0
    %5528 = vmatprep.subr.mxu0 0.0
    %5529 = vmatpush1.msra.mxu0 0.0
    %5530 = vmatprep.subr.mxu0 0.0
    %5531 = vmatpush1.msra.mxu0 0.0
    %5532 = vmatprep.subr.mxu0 0.0
    %5533 = vmatpush1.msra.mxu0 0.0
    %5534 = vmatprep.subr.mxu0 0.0
    %5535 = vmatpush1.msra.mxu0 0.0
    %5536 = vmatprep.subr.mxu0 0.0
    %5537 = vmatpush1.msra.mxu0 0.0
    %5538 = vmatprep.mubr.f32.mxu0 0.0
    %5539 = vmatmul.mubr.f32.gmra.mrb[0].mxu0 0.0
    %v5540 = vpop.f32.mrb[0].mxu0
    %v5541 = vadd.f32 %v5401, %v5540
    %v5542 = vpop.f32.mrb[0].mxu0
    %v5543 = vadd.f32 %v5402, %v5542
    %5544 = vdwg.mxu0
    %v5545 = vxor.u32 %v5470, 2147483648
    %v5546 = vxor.u32 %v5472, 2147483648
    %v5547 = vxor.u32 %v5541, 2147483648
    %v5548 = vmul.f32 %v5545, 1.442695
    %v5549 = vpow.pop %v5548
    %v5550 = vmul.f32 %v5546, 1.442695
    %v5551 = vpow.pop %v5550
    %v5552 = vmul.f32 %v5547, 1.442695
    %v5553 = vpow.pop %v5552
    %v5554 = vadd.f32 %v5549, 1.0
    %v5555 = vadd.f32 %v5551, 1.0
    %v5556 = vadd.f32 %v5553, 1.0
    %v5557 = vrcp.pop %v5554
    %v5558 = vmul.f32 1.0, %v5557
    %v5559 = vrcp.pop %v5555
    %v5560 = vmul.f32 1.0, %v5559
    %v5561 = vrcp.pop %v5556
    %v5562 = vmul.f32 1.0, %v5561
    %v5563 = vtanh.pop %v5543
    %v5564 = vmul.f32 %v5560, 0.0
    %v5565 = vmul.f32 %v5558, %v5563
    %v5566 = vadd.f32 %v5564, %v5565
    %v5567 = vtanh.pop %v5566
    %v5568 = vmul.f32 %v5562, %v5567
    %s5569 = scalar_lea.vmem [#allocation9], 32
    %v5570 = vld [vmem:[%s5569] sm:$0xff]
    %v5571 = vld [vmem:[%s5569 + $0x8] sm:$0xff]
    %v5572 = vld [vmem:[%s5569 + $0x10] sm:$0xff]
    %v5573 = vld [vmem:[%s5569 + $0x18] sm:$0xff]
    %5574 = vmatprep.subr.mxu0 %v5101
    %5575 = vmatpush1.msra.mxu0 %v5100
    %5576 = vmatprep.subr.mxu0 %v5105
    %5577 = vmatpush1.msra.mxu0 %v5104
    %5578 = vmatprep.subr.mxu0 %v5109
    %5579 = vmatpush1.msra.mxu0 %v5108
    %5580 = vmatprep.subr.mxu0 %v5113
    %5581 = vmatpush1.msra.mxu0 %v5112
    %5582 = vmatprep.subr.mxu0 %v5117
    %5583 = vmatpush1.msra.mxu0 %v5116
    %5584 = vmatprep.subr.mxu0 %v5121
    %5585 = vmatpush1.msra.mxu0 %v5120
    %5586 = vmatprep.subr.mxu0 %v5125
    %5587 = vmatpush1.msra.mxu0 %v5124
    %5588 = vmatprep.subr.mxu0 %v5129
    %5589 = vmatpush1.msra.mxu0 %v5128
    %5590 = vmatprep.subr.mxu0 %v5133
    %5591 = vmatpush1.msra.mxu0 %v5132
    %5592 = vmatprep.subr.mxu0 %v5137
    %5593 = vmatpush1.msra.mxu0 %v5136
    %5594 = vmatprep.subr.mxu0 %v5141
    %5595 = vmatpush1.msra.mxu0 %v5140
    %5596 = vmatprep.subr.mxu0 %v5145
    %5597 = vmatpush1.msra.mxu0 %v5144
    %5598 = vmatprep.subr.mxu0 %v5149
    %5599 = vmatpush1.msra.mxu0 %v5148
    %5600 = vmatprep.subr.mxu0 %v5153
    %5601 = vmatpush1.msra.mxu0 %v5152
    %5602 = vmatprep.subr.mxu0 %v5157
    %5603 = vmatpush1.msra.mxu0 %v5156
    %5604 = vmatprep.subr.mxu0 %v5161
    %5605 = vmatpush1.msra.mxu0 %v5160
    %5606 = vmatprep.subr.mxu0 0.0
    %5607 = vmatpush1.msra.mxu0 0.0
    %5608 = vmatprep.subr.mxu0 0.0
    %5609 = vmatpush1.msra.mxu0 0.0
    %5610 = vmatprep.subr.mxu0 0.0
    %5611 = vmatpush1.msra.mxu0 0.0
    %5612 = vmatprep.subr.mxu0 0.0
    %5613 = vmatpush1.msra.mxu0 0.0
    %5614 = vmatprep.subr.mxu0 0.0
    %5615 = vmatpush1.msra.mxu0 0.0
    %5616 = vmatprep.subr.mxu0 0.0
    %5617 = vmatpush1.msra.mxu0 0.0
    %5618 = vmatprep.subr.mxu0 0.0
    %5619 = vmatpush1.msra.mxu0 0.0
    %5620 = vmatprep.subr.mxu0 0.0
    %5621 = vmatpush1.msra.mxu0 0.0
    %5622 = vmatprep.subr.mxu0 0.0
    %5623 = vmatpush1.msra.mxu0 0.0
    %5624 = vmatprep.subr.mxu0 0.0
    %5625 = vmatpush1.msra.mxu0 0.0
    %5626 = vmatprep.subr.mxu0 0.0
    %5627 = vmatpush1.msra.mxu0 0.0
    %5628 = vmatprep.subr.mxu0 0.0
    %5629 = vmatpush1.msra.mxu0 0.0
    %5630 = vmatprep.subr.mxu0 0.0
    %5631 = vmatpush1.msra.mxu0 0.0
    %5632 = vmatprep.subr.mxu0 0.0
    %5633 = vmatpush1.msra.mxu0 0.0
    %5634 = vmatprep.subr.mxu0 0.0
    %5635 = vmatpush1.msra.mxu0 0.0
    %5636 = vmatprep.subr.mxu0 0.0
    %5637 = vmatpush1.msra.mxu0 0.0
    %5638 = vmatprep.mubr.f32.mxu0 0.0
    %5639 = vmatmul.mubr.f32.gmra.mrb[0].mxu0 %v5397
    %v5640 = vpop.f32.mrb[0].mxu0
    %v5641 = vadd.f32 %v5570, %v5640
    %v5642 = vpop.f32.mrb[0].mxu0
    %v5643 = vadd.f32 %v5571, %v5642
    %5644 = vdwg.mxu0
    %5645 = vmatprep.subr.mxu0 %v5103
    %5646 = vmatpush1.msra.mxu0 %v5102
    %5647 = vmatprep.subr.mxu0 %v5107
    %5648 = vmatpush1.msra.mxu0 %v5106
    %5649 = vmatprep.subr.mxu0 %v5111
    %5650 = vmatpush1.msra.mxu0 %v5110
    %5651 = vmatprep.subr.mxu0 %v5115
    %5652 = vmatpush1.msra.mxu0 %v5114
    %5653 = vmatprep.subr.mxu0 %v5119
    %5654 = vmatpush1.msra.mxu0 %v5118
    %5655 = vmatprep.subr.mxu0 %v5123
    %5656 = vmatpush1.msra.mxu0 %v5122
    %5657 = vmatprep.subr.mxu0 %v5127
    %5658 = vmatpush1.msra.mxu0 %v5126
    %5659 = vmatprep.subr.mxu0 %v5131
    %5660 = vmatpush1.msra.mxu0 %v5130
    %5661 = vmatprep.subr.mxu0 %v5135
    %5662 = vmatpush1.msra.mxu0 %v5134
    %5663 = vmatprep.subr.mxu0 %v5139
    %5664 = vmatpush1.msra.mxu0 %v5138
    %5665 = vmatprep.subr.mxu0 %v5143
    %5666 = vmatpush1.msra.mxu0 %v5142
    %5667 = vmatprep.subr.mxu0 %v5147
    %5668 = vmatpush1.msra.mxu0 %v5146
    %5669 = vmatprep.subr.mxu0 %v5151
    %5670 = vmatpush1.msra.mxu0 %v5150
    %5671 = vmatprep.subr.mxu0 %v5155
    %5672 = vmatpush1.msra.mxu0 %v5154
    %5673 = vmatprep.subr.mxu0 %v5159
    %5674 = vmatpush1.msra.mxu0 %v5158
    %5675 = vmatprep.subr.mxu0 %v5163
    %5676 = vmatpush1.msra.mxu0 %v5162
    %5677 = vmatprep.subr.mxu0 0.0
    %5678 = vmatpush1.msra.mxu0 0.0
    %5679 = vmatprep.subr.mxu0 0.0
    %5680 = vmatpush1.msra.mxu0 0.0
    %5681 = vmatprep.subr.mxu0 0.0
    %5682 = vmatpush1.msra.mxu0 0.0
    %5683 = vmatprep.subr.mxu0 0.0
    %5684 = vmatpush1.msra.mxu0 0.0
    %5685 = vmatprep.subr.mxu0 0.0
    %5686 = vmatpush1.msra.mxu0 0.0
    %5687 = vmatprep.subr.mxu0 0.0
    %5688 = vmatpush1.msra.mxu0 0.0
    %5689 = vmatprep.subr.mxu0 0.0
    %5690 = vmatpush1.msra.mxu0 0.0
    %5691 = vmatprep.subr.mxu0 0.0
    %5692 = vmatpush1.msra.mxu0 0.0
    %5693 = vmatprep.subr.mxu0 0.0
    %5694 = vmatpush1.msra.mxu0 0.0
    %5695 = vmatprep.subr.mxu0 0.0
    %5696 = vmatpush1.msra.mxu0 0.0
    %5697 = vmatprep.subr.mxu0 0.0
    %5698 = vmatpush1.msra.mxu0 0.0
    %5699 = vmatprep.subr.mxu0 0.0
    %5700 = vmatpush1.msra.mxu0 0.0
    %5701 = vmatprep.subr.mxu0 0.0
    %5702 = vmatpush1.msra.mxu0 0.0
    %5703 = vmatprep.subr.mxu0 0.0
    %5704 = vmatpush1.msra.mxu0 0.0
    %5705 = vmatprep.subr.mxu0 0.0
    %5706 = vmatpush1.msra.mxu0 0.0
    %5707 = vmatprep.subr.mxu0 0.0
    %5708 = vmatpush1.msra.mxu0 0.0
    %5709 = vmatprep.mubr.f32.mxu0 0.0
    %5710 = vmatmul.mubr.f32.gmra.mrb[0].mxu0 %v5397
    %v5711 = vpop.f32.mrb[0].mxu0
    %v5712 = vadd.f32 %v5572, %v5711
    %v5713 = vpop.f32.mrb[0].mxu0
    %v5714 = vadd.f32 %v5573, %v5713
    %5715 = vdwg.mxu0
    %v5716 = vxor.u32 %v5641, 2147483648
    %v5717 = vxor.u32 %v5643, 2147483648
    %v5718 = vxor.u32 %v5712, 2147483648
    %v5719 = vmul.f32 %v5716, 1.442695
    %v5720 = vpow.pop %v5719
    %v5721 = vmul.f32 %v5717, 1.442695
    %v5722 = vpow.pop %v5721
    %v5723 = vmul.f32 %v5718, 1.442695
    %v5724 = vpow.pop %v5723
    %v5725 = vadd.f32 %v5720, 1.0
    %v5726 = vadd.f32 %v5722, 1.0
    %v5727 = vadd.f32 %v5724, 1.0
    %v5728 = vrcp.pop %v5725
    %v5729 = vmul.f32 1.0, %v5728
    %v5730 = vrcp.pop %v5726
    %v5731 = vmul.f32 1.0, %v5730
    %v5732 = vrcp.pop %v5727
    %v5733 = vmul.f32 1.0, %v5732
    %v5734 = vtanh.pop %v5714
    %v5735 = vmul.f32 %v5731, %v5395
    %v5736 = vmul.f32 %v5729, %v5734
    %v5737 = vadd.f32 %v5735, %v5736
    %v5738 = vtanh.pop %v5737
    %v5739 = vmul.f32 %v5733, %v5738
    %s5740 = scalar_lea.vmem [#allocation10], 192
    %v5741 = vld [vmem:[%s5740] sm:$0xff]
    %v5742 = vld [vmem:[%s5740 + $0x8] sm:$0xff]
    %v5743 = vld [vmem:[%s5740 + $0x10] sm:$0xff]
    %v5744 = vld [vmem:[%s5740 + $0x18] sm:$0xff]
    %5745 = vmatprep.subr.mxu0 %v5165
    %5746 = vmatpush1.msra.mxu0 %v5164
    %5747 = vmatprep.subr.mxu0 %v5169
    %5748 = vmatpush1.msra.mxu0 %v5168
    %5749 = vmatprep.subr.mxu0 %v5173
    %5750 = vmatpush1.msra.mxu0 %v5172
    %5751 = vmatprep.subr.mxu0 %v5177
    %5752 = vmatpush1.msra.mxu0 %v5176
    %5753 = vmatprep.subr.mxu0 %v5181
    %5754 = vmatpush1.msra.mxu0 %v5180
    %5755 = vmatprep.subr.mxu0 %v5185
    %5756 = vmatpush1.msra.mxu0 %v5184
    %5757 = vmatprep.subr.mxu0 %v5189
    %5758 = vmatpush1.msra.mxu0 %v5188
    %5759 = vmatprep.subr.mxu0 %v5193
    %5760 = vmatpush1.msra.mxu0 %v5192
    %5761 = vmatprep.subr.mxu0 %v5197
    %5762 = vmatpush1.msra.mxu0 %v5196
    %5763 = vmatprep.subr.mxu0 %v5201
    %5764 = vmatpush1.msra.mxu0 %v5200
    %5765 = vmatprep.subr.mxu0 %v5205
    %5766 = vmatpush1.msra.mxu0 %v5204
    %5767 = vmatprep.subr.mxu0 %v5209
    %5768 = vmatpush1.msra.mxu0 %v5208
    %5769 = vmatprep.subr.mxu0 %v5213
    %5770 = vmatpush1.msra.mxu0 %v5212
    %5771 = vmatprep.subr.mxu0 %v5217
    %5772 = vmatpush1.msra.mxu0 %v5216
    %5773 = vmatprep.subr.mxu0 %v5221
    %5774 = vmatpush1.msra.mxu0 %v5220
    %5775 = vmatprep.subr.mxu0 %v5225
    %5776 = vmatpush1.msra.mxu0 %v5224
    %5777 = vmatprep.subr.mxu0 0.0
    %5778 = vmatpush1.msra.mxu0 0.0
    %5779 = vmatprep.subr.mxu0 0.0
    %5780 = vmatpush1.msra.mxu0 0.0
    %5781 = vmatprep.subr.mxu0 0.0
    %5782 = vmatpush1.msra.mxu0 0.0
    %5783 = vmatprep.subr.mxu0 0.0
    %5784 = vmatpush1.msra.mxu0 0.0
    %5785 = vmatprep.subr.mxu0 0.0
    %5786 = vmatpush1.msra.mxu0 0.0
    %5787 = vmatprep.subr.mxu0 0.0
    %5788 = vmatpush1.msra.mxu0 0.0
    %5789 = vmatprep.subr.mxu0 0.0
    %5790 = vmatpush1.msra.mxu0 0.0
    %5791 = vmatprep.subr.mxu0 0.0
    %5792 = vmatpush1.msra.mxu0 0.0
    %5793 = vmatprep.subr.mxu0 0.0
    %5794 = vmatpush1.msra.mxu0 0.0
    %5795 = vmatprep.subr.mxu0 0.0
    %5796 = vmatpush1.msra.mxu0 0.0
    %5797 = vmatprep.subr.mxu0 0.0
    %5798 = vmatpush1.msra.mxu0 0.0
    %5799 = vmatprep.subr.mxu0 0.0
    %5800 = vmatpush1.msra.mxu0 0.0
    %5801 = vmatprep.subr.mxu0 0.0
    %5802 = vmatpush1.msra.mxu0 0.0
    %5803 = vmatprep.subr.mxu0 0.0
    %5804 = vmatpush1.msra.mxu0 0.0
    %5805 = vmatprep.subr.mxu0 0.0
    %5806 = vmatpush1.msra.mxu0 0.0
    %5807 = vmatprep.subr.mxu0 0.0
    %5808 = vmatpush1.msra.mxu0 0.0
    %5809 = vmatprep.mubr.f32.mxu0 0.0
    %5810 = vmatmul.mubr.f32.gmra.mrb[0].mxu0 %v5568
    %v5811 = vpop.f32.mrb[0].mxu0
    %v5812 = vadd.f32 %v5741, %v5811
    %v5813 = vpop.f32.mrb[0].mxu0
    %v5814 = vadd.f32 %v5742, %v5813
    %5815 = vdwg.mxu0
    %5816 = vmatprep.subr.mxu0 %v5167
    %5817 = vmatpush1.msra.mxu0 %v5166
    %5818 = vmatprep.subr.mxu0 %v5171
    %5819 = vmatpush1.msra.mxu0 %v5170
    %5820 = vmatprep.subr.mxu0 %v5175
    %5821 = vmatpush1.msra.mxu0 %v5174
    %5822 = vmatprep.subr.mxu0 %v5179
    %5823 = vmatpush1.msra.mxu0 %v5178
    %5824 = vmatprep.subr.mxu0 %v5183
    %5825 = vmatpush1.msra.mxu0 %v5182
    %5826 = vmatprep.subr.mxu0 %v5187
    %5827 = vmatpush1.msra.mxu0 %v5186
    %5828 = vmatprep.subr.mxu0 %v5191
    %5829 = vmatpush1.msra.mxu0 %v5190
    %5830 = vmatprep.subr.mxu0 %v5195
    %5831 = vmatpush1.msra.mxu0 %v5194
    %5832 = vmatprep.subr.mxu0 %v5199
    %5833 = vmatpush1.msra.mxu0 %v5198
    %5834 = vmatprep.subr.mxu0 %v5203
    %5835 = vmatpush1.msra.mxu0 %v5202
    %5836 = vmatprep.subr.mxu0 %v5207
    %5837 = vmatpush1.msra.mxu0 %v5206
    %5838 = vmatprep.subr.mxu0 %v5211
    %5839 = vmatpush1.msra.mxu0 %v5210
    %5840 = vmatprep.subr.mxu0 %v5215
    %5841 = vmatpush1.msra.mxu0 %v5214
    %5842 = vmatprep.subr.mxu0 %v5219
    %5843 = vmatpush1.msra.mxu0 %v5218
    %5844 = vmatprep.subr.mxu0 %v5223
    %5845 = vmatpush1.msra.mxu0 %v5222
    %5846 = vmatprep.subr.mxu0 %v5227
    %5847 = vmatpush1.msra.mxu0 %v5226
    %5848 = vmatprep.subr.mxu0 0.0
    %5849 = vmatpush1.msra.mxu0 0.0
    %5850 = vmatprep.subr.mxu0 0.0
    %5851 = vmatpush1.msra.mxu0 0.0
    %5852 = vmatprep.subr.mxu0 0.0
    %5853 = vmatpush1.msra.mxu0 0.0
    %5854 = vmatprep.subr.mxu0 0.0
    %5855 = vmatpush1.msra.mxu0 0.0
    %5856 = vmatprep.subr.mxu0 0.0
    %5857 = vmatpush1.msra.mxu0 0.0
    %5858 = vmatprep.subr.mxu0 0.0
    %5859 = vmatpush1.msra.mxu0 0.0
    %5860 = vmatprep.subr.mxu0 0.0
    %5861 = vmatpush1.msra.mxu0 0.0
    %5862 = vmatprep.subr.mxu0 0.0
    %5863 = vmatpush1.msra.mxu0 0.0
    %5864 = vmatprep.subr.mxu0 0.0
    %5865 = vmatpush1.msra.mxu0 0.0
    %5866 = vmatprep.subr.mxu0 0.0
    %5867 = vmatpush1.msra.mxu0 0.0
    %5868 = vmatprep.subr.mxu0 0.0
    %5869 = vmatpush1.msra.mxu0 0.0
    %5870 = vmatprep.subr.mxu0 0.0
    %5871 = vmatpush1.msra.mxu0 0.0
    %5872 = vmatprep.subr.mxu0 0.0
    %5873 = vmatpush1.msra.mxu0 0.0
    %5874 = vmatprep.subr.mxu0 0.0
    %5875 = vmatpush1.msra.mxu0 0.0
    %5876 = vmatprep.subr.mxu0 0.0
    %5877 = vmatpush1.msra.mxu0 0.0
    %5878 = vmatprep.subr.mxu0 0.0
    %5879 = vmatpush1.msra.mxu0 0.0
    %5880 = vmatprep.mubr.f32.mxu0 0.0
    %5881 = vmatmul.mubr.f32.gmra.mrb[0].mxu0 %v5568
    %v5882 = vpop.f32.mrb[0].mxu0
    %v5883 = vadd.f32 %v5743, %v5882
    %v5884 = vpop.f32.mrb[0].mxu0
    %v5885 = vadd.f32 %v5744, %v5884
    %5886 = vdwg.mxu0
    %v5887 = vxor.u32 %v5812, 2147483648
    %v5888 = vxor.u32 %v5814, 2147483648
    %v5889 = vxor.u32 %v5883, 2147483648
    %v5890 = vmul.f32 %v5887, 1.442695
    %v5891 = vpow.pop %v5890
    %v5892 = vmul.f32 %v5888, 1.442695
    %v5893 = vpow.pop %v5892
    %v5894 = vmul.f32 %v5889, 1.442695
    %v5895 = vpow.pop %v5894
    %v5896 = vadd.f32 %v5891, 1.0
    %v5897 = vadd.f32 %v5893, 1.0
    %v5898 = vadd.f32 %v5895, 1.0
    %v5899 = vrcp.pop %v5896
    %v5900 = vmul.f32 1.0, %v5899
    %v5901 = vrcp.pop %v5897
    %v5902 = vmul.f32 1.0, %v5901
    %v5903 = vrcp.pop %v5898
    %v5904 = vmul.f32 1.0, %v5903
    %v5905 = vtanh.pop %v5885
    %v5906 = vmul.f32 %v5902, %v5566
    %v5907 = vmul.f32 %v5900, %v5905
    %v5908 = vadd.f32 %v5906, %v5907
    %v5909 = vtanh.pop %v5908
    %v5910 = vmul.f32 %v5904, %v5909
    %s5911 = scalar_lea.vmem [#allocation9], 64
    %v5912 = vld [vmem:[%s5911] sm:$0xff]
    %v5913 = vld [vmem:[%s5911 + $0x8] sm:$0xff]
    %v5914 = vld [vmem:[%s5911 + $0x10] sm:$0xff]
    %v5915 = vld [vmem:[%s5911 + $0x18] sm:$0xff]
    %5916 = vmatprep.subr.mxu0 %v5101
    %5917 = vmatpush1.msra.mxu0 %v5100
    %5918 = vmatprep.subr.mxu0 %v5105
    %5919 = vmatpush1.msra.mxu0 %v5104
    %5920 = vmatprep.subr.mxu0 %v5109
    %5921 = vmatpush1.msra.mxu0 %v5108
    %5922 = vmatprep.subr.mxu0 %v5113
    %5923 = vmatpush1.msra.mxu0 %v5112
    %5924 = vmatprep.subr.mxu0 %v5117
    %5925 = vmatpush1.msra.mxu0 %v5116
    %5926 = vmatprep.subr.mxu0 %v5121
    %5927 = vmatpush1.msra.mxu0 %v5120
    %5928 = vmatprep.subr.mxu0 %v5125
    %5929 = vmatpush1.msra.mxu0 %v5124
    %5930 = vmatprep.subr.mxu0 %v5129
    %5931 = vmatpush1.msra.mxu0 %v5128
    %5932 = vmatprep.subr.mxu0 %v5133
    %5933 = vmatpush1.msra.mxu0 %v5132
    %5934 = vmatprep.subr.mxu0 %v5137
    %5935 = vmatpush1.msra.mxu0 %v5136
    %5936 = vmatprep.subr.mxu0 %v5141
    %5937 = vmatpush1.msra.mxu0 %v5140
    %5938 = vmatprep.subr.mxu0 %v5145
    %5939 = vmatpush1.msra.mxu0 %v5144
    %5940 = vmatprep.subr.mxu0 %v5149
    %5941 = vmatpush1.msra.mxu0 %v5148
    %5942 = vmatprep.subr.mxu0 %v5153
    %5943 = vmatpush1.msra.mxu0 %v5152
    %5944 = vmatprep.subr.mxu0 %v5157
    %5945 = vmatpush1.msra.mxu0 %v5156
    %5946 = vmatprep.subr.mxu0 %v5161
    %5947 = vmatpush1.msra.mxu0 %v5160
    %5948 = vmatprep.subr.mxu0 0.0
    %5949 = vmatpush1.msra.mxu0 0.0
    %5950 = vmatprep.subr.mxu0 0.0
    %5951 = vmatpush1.msra.mxu0 0.0
    %5952 = vmatprep.subr.mxu0 0.0
    %5953 = vmatpush1.msra.mxu0 0.0
    %5954 = vmatprep.subr.mxu0 0.0
    %5955 = vmatpush1.msra.mxu0 0.0
    %5956 = vmatprep.subr.mxu0 0.0
    %5957 = vmatpush1.msra.mxu0 0.0
    %5958 = vmatprep.subr.mxu0 0.0
    %5959 = vmatpush1.msra.mxu0 0.0
    %5960 = vmatprep.subr.mxu0 0.0
    %5961 = vmatpush1.msra.mxu0 0.0
    %5962 = vmatprep.subr.mxu0 0.0
    %5963 = vmatpush1.msra.mxu0 0.0
    %5964 = vmatprep.subr.mxu0 0.0
    %5965 = vmatpush1.msra.mxu0 0.0
    %5966 = vmatprep.subr.mxu0 0.0
    %5967 = vmatpush1.msra.mxu0 0.0
    %5968 = vmatprep.subr.mxu0 0.0
    %5969 = vmatpush1.msra.mxu0 0.0
    %5970 = vmatprep.subr.mxu0 0.0
    %5971 = vmatpush1.msra.mxu0 0.0
    %5972 = vmatprep.subr.mxu0 0.0
    %5973 = vmatpush1.msra.mxu0 0.0
    %5974 = vmatprep.subr.mxu0 0.0
    %5975 = vmatpush1.msra.mxu0 0.0
    %5976 = vmatprep.subr.mxu0 0.0
    %5977 = vmatpush1.msra.mxu0 0.0
    %5978 = vmatprep.subr.mxu0 0.0
    %5979 = vmatpush1.msra.mxu0 0.0
    %5980 = vmatprep.mubr.f32.mxu0 0.0
    %5981 = vmatmul.mubr.f32.gmra.mrb[0].mxu0 %v5739
    %v5982 = vpop.f32.mrb[0].mxu0
    %v5983 = vadd.f32 %v5912, %v5982
    %v5984 = vpop.f32.mrb[0].mxu0
    %v5985 = vadd.f32 %v5913, %v5984
    %5986 = vdwg.mxu0
    %5987 = vmatprep.subr.mxu0 %v5103
    %5988 = vmatpush1.msra.mxu0 %v5102
    %5989 = vmatprep.subr.mxu0 %v5107
    %5990 = vmatpush1.msra.mxu0 %v5106
    %5991 = vmatprep.subr.mxu0 %v5111
    %5992 = vmatpush1.msra.mxu0 %v5110
    %5993 = vmatprep.subr.mxu0 %v5115
    %5994 = vmatpush1.msra.mxu0 %v5114
    %5995 = vmatprep.subr.mxu0 %v5119
    %5996 = vmatpush1.msra.mxu0 %v5118
    %5997 = vmatprep.subr.mxu0 %v5123
    %5998 = vmatpush1.msra.mxu0 %v5122
    %5999 = vmatprep.subr.mxu0 %v5127
    %6000 = vmatpush1.msra.mxu0 %v5126
    %6001 = vmatprep.subr.mxu0 %v5131
    %6002 = vmatpush1.msra.mxu0 %v5130
    %6003 = vmatprep.subr.mxu0 %v5135
    %6004 = vmatpush1.msra.mxu0 %v5134
    %6005 = vmatprep.subr.mxu0 %v5139
    %6006 = vmatpush1.msra.mxu0 %v5138
    %6007 = vmatprep.subr.mxu0 %v5143
    %6008 = vmatpush1.msra.mxu0 %v5142
    %6009 = vmatprep.subr.mxu0 %v5147
    %6010 = vmatpush1.msra.mxu0 %v5146
    %6011 = vmatprep.subr.mxu0 %v5151
    %6012 = vmatpush1.msra.mxu0 %v5150
    %6013 = vmatprep.subr.mxu0 %v5155
    %6014 = vmatpush1.msra.mxu0 %v5154
    %6015 = vmatprep.subr.mxu0 %v5159
    %6016 = vmatpush1.msra.mxu0 %v5158
    %6017 = vmatprep.subr.mxu0 %v5163
    %6018 = vmatpush1.msra.mxu0 %v5162
    %6019 = vmatprep.subr.mxu0 0.0
    %6020 = vmatpush1.msra.mxu0 0.0
    %6021 = vmatprep.subr.mxu0 0.0
    %6022 = vmatpush1.msra.mxu0 0.0
    %6023 = vmatprep.subr.mxu0 0.0
    %6024 = vmatpush1.msra.mxu0 0.0
    %6025 = vmatprep.subr.mxu0 0.0
    %6026 = vmatpush1.msra.mxu0 0.0
    %6027 = vmatprep.subr.mxu0 0.0
    %6028 = vmatpush1.msra.mxu0 0.0
    %6029 = vmatprep.subr.mxu0 0.0
    %6030 = vmatpush1.msra.mxu0 0.0
    %6031 = vmatprep.subr.mxu0 0.0
    %6032 = vmatpush1.msra.mxu0 0.0
    %6033 = vmatprep.subr.mxu0 0.0
    %6034 = vmatpush1.msra.mxu0 0.0
    %6035 = vmatprep.subr.mxu0 0.0
    %6036 = vmatpush1.msra.mxu0 0.0
    %6037 = vmatprep.subr.mxu0 0.0
    %6038 = vmatpush1.msra.mxu0 0.0
    %6039 = vmatprep.subr.mxu0 0.0
    %6040 = vmatpush1.msra.mxu0 0.0
    %6041 = vmatprep.subr.mxu0 0.0
    %6042 = vmatpush1.msra.mxu0 0.0
    %6043 = vmatprep.subr.mxu0 0.0
    %6044 = vmatpush1.msra.mxu0 0.0
    %6045 = vmatprep.subr.mxu0 0.0
    %6046 = vmatpush1.msra.mxu0 0.0
    %6047 = vmatprep.subr.mxu0 0.0
    %6048 = vmatpush1.msra.mxu0 0.0
    %6049 = vmatprep.subr.mxu0 0.0
    %6050 = vmatpush1.msra.mxu0 0.0
    %6051 = vmatprep.mubr.f32.mxu0 0.0
    %6052 = vmatmul.mubr.f32.gmra.mrb[0].mxu0 %v5739
    %v6053 = vpop.f32.mrb[0].mxu0
    %v6054 = vadd.f32 %v5914, %v6053
    %v6055 = vpop.f32.mrb[0].mxu0
    %v6056 = vadd.f32 %v5915, %v6055
    %6057 = vdwg.mxu0
    %v6058 = vxor.u32 %v5983, 2147483648
    %v6059 = vxor.u32 %v5985, 2147483648
    %v6060 = vxor.u32 %v6054, 2147483648
    %v6061 = vmul.f32 %v6058, 1.442695
    %v6062 = vpow.pop %v6061
    %v6063 = vmul.f32 %v6059, 1.442695
    %v6064 = vpow.pop %v6063
    %v6065 = vmul.f32 %v6060, 1.442695
    %v6066 = vpow.pop %v6065
    %v6067 = vadd.f32 %v6062, 1.0
    %v6068 = vadd.f32 %v6064, 1.0
    %v6069 = vadd.f32 %v6066, 1.0
    %v6070 = vrcp.pop %v6067
    %v6071 = vmul.f32 1.0, %v6070
    %v6072 = vrcp.pop %v6068
    %v6073 = vmul.f32 1.0, %v6072
    %v6074 = vrcp.pop %v6069
    %v6075 = vmul.f32 1.0, %v6074
    %v6076 = vtanh.pop %v6056
    %v6077 = vmul.f32 %v6073, %v5737
    %v6078 = vmul.f32 %v6071, %v6076
    %v6079 = vadd.f32 %v6077, %v6078
    %v6080 = vtanh.pop %v6079
    %v6081 = vmul.f32 %v6075, %v6080
    %s6082 = scalar_lea.vmem [#allocation10], 160
    %v6083 = vld [vmem:[%s6082] sm:$0xff]
    %v6084 = vld [vmem:[%s6082 + $0x8] sm:$0xff]
    %v6085 = vld [vmem:[%s6082 + $0x10] sm:$0xff]
    %v6086 = vld [vmem:[%s6082 + $0x18] sm:$0xff]
    %6087 = vmatprep.subr.mxu0 %v5165
    %6088 = vmatpush1.msra.mxu0 %v5164
    %6089 = vmatprep.subr.mxu0 %v5169
    %6090 = vmatpush1.msra.mxu0 %v5168
    %6091 = vmatprep.subr.mxu0 %v5173
    %6092 = vmatpush1.msra.mxu0 %v5172
    %6093 = vmatprep.subr.mxu0 %v5177
    %6094 = vmatpush1.msra.mxu0 %v5176
    %6095 = vmatprep.subr.mxu0 %v5181
    %6096 = vmatpush1.msra.mxu0 %v5180
    %6097 = vmatprep.subr.mxu0 %v5185
    %6098 = vmatpush1.msra.mxu0 %v5184
    %6099 = vmatprep.subr.mxu0 %v5189
    %6100 = vmatpush1.msra.mxu0 %v5188
    %6101 = vmatprep.subr.mxu0 %v5193
    %6102 = vmatpush1.msra.mxu0 %v5192
    %6103 = vmatprep.subr.mxu0 %v5197
    %6104 = vmatpush1.msra.mxu0 %v5196
    %6105 = vmatprep.subr.mxu0 %v5201
    %6106 = vmatpush1.msra.mxu0 %v5200
    %6107 = vmatprep.subr.mxu0 %v5205
    %6108 = vmatpush1.msra.mxu0 %v5204
    %6109 = vmatprep.subr.mxu0 %v5209
    %6110 = vmatpush1.msra.mxu0 %v5208
    %6111 = vmatprep.subr.mxu0 %v5213
    %6112 = vmatpush1.msra.mxu0 %v5212
    %6113 = vmatprep.subr.mxu0 %v5217
    %6114 = vmatpush1.msra.mxu0 %v5216
    %6115 = vmatprep.subr.mxu0 %v5221
    %6116 = vmatpush1.msra.mxu0 %v5220
    %6117 = vmatprep.subr.mxu0 %v5225
    %6118 = vmatpush1.msra.mxu0 %v5224
    %6119 = vmatprep.subr.mxu0 0.0
    %6120 = vmatpush1.msra.mxu0 0.0
    %6121 = vmatprep.subr.mxu0 0.0
    %6122 = vmatpush1.msra.mxu0 0.0
    %6123 = vmatprep.subr.mxu0 0.0
    %6124 = vmatpush1.msra.mxu0 0.0
    %6125 = vmatprep.subr.mxu0 0.0
    %6126 = vmatpush1.msra.mxu0 0.0
    %6127 = vmatprep.subr.mxu0 0.0
    %6128 = vmatpush1.msra.mxu0 0.0
    %6129 = vmatprep.subr.mxu0 0.0
    %6130 = vmatpush1.msra.mxu0 0.0
    %6131 = vmatprep.subr.mxu0 0.0
    %6132 = vmatpush1.msra.mxu0 0.0
    %6133 = vmatprep.subr.mxu0 0.0
    %6134 = vmatpush1.msra.mxu0 0.0
    %6135 = vmatprep.subr.mxu0 0.0
    %6136 = vmatpush1.msra.mxu0 0.0
    %6137 = vmatprep.subr.mxu0 0.0
    %6138 = vmatpush1.msra.mxu0 0.0
    %6139 = vmatprep.subr.mxu0 0.0
    %6140 = vmatpush1.msra.mxu0 0.0
    %6141 = vmatprep.subr.mxu0 0.0
    %6142 = vmatpush1.msra.mxu0 0.0
    %6143 = vmatprep.subr.mxu0 0.0
    %6144 = vmatpush1.msra.mxu0 0.0
    %6145 = vmatprep.subr.mxu0 0.0
    %6146 = vmatpush1.msra.mxu0 0.0
    %6147 = vmatprep.subr.mxu0 0.0
    %6148 = vmatpush1.msra.mxu0 0.0
    %6149 = vmatprep.subr.mxu0 0.0
    %6150 = vmatpush1.msra.mxu0 0.0
    %6151 = vmatprep.mubr.f32.mxu0 0.0
    %6152 = vmatmul.mubr.f32.gmra.mrb[0].mxu0 %v5910
    %v6153 = vpop.f32.mrb[0].mxu0
    %v6154 = vadd.f32 %v6083, %v6153
    %v6155 = vpop.f32.mrb[0].mxu0
    %v6156 = vadd.f32 %v6084, %v6155
    %6157 = vdwg.mxu0
    %6158 = vmatprep.subr.mxu0 %v5167
    %6159 = vmatpush1.msra.mxu0 %v5166
    %6160 = vmatprep.subr.mxu0 %v5171
    %6161 = vmatpush1.msra.mxu0 %v5170
    %6162 = vmatprep.subr.mxu0 %v5175
    %6163 = vmatpush1.msra.mxu0 %v5174
    %6164 = vmatprep.subr.mxu0 %v5179
    %6165 = vmatpush1.msra.mxu0 %v5178
    %6166 = vmatprep.subr.mxu0 %v5183
    %6167 = vmatpush1.msra.mxu0 %v5182
    %6168 = vmatprep.subr.mxu0 %v5187
    %6169 = vmatpush1.msra.mxu0 %v5186
    %6170 = vmatprep.subr.mxu0 %v5191
    %6171 = vmatpush1.msra.mxu0 %v5190
    %6172 = vmatprep.subr.mxu0 %v5195
    %6173 = vmatpush1.msra.mxu0 %v5194
    %6174 = vmatprep.subr.mxu0 %v5199
    %6175 = vmatpush1.msra.mxu0 %v5198
    %6176 = vmatprep.subr.mxu0 %v5203
    %6177 = vmatpush1.msra.mxu0 %v5202
    %6178 = vmatprep.subr.mxu0 %v5207
    %6179 = vmatpush1.msra.mxu0 %v5206
    %6180 = vmatprep.subr.mxu0 %v5211
    %6181 = vmatpush1.msra.mxu0 %v5210
    %6182 = vmatprep.subr.mxu0 %v5215
    %6183 = vmatpush1.msra.mxu0 %v5214
    %6184 = vmatprep.subr.mxu0 %v5219
    %6185 = vmatpush1.msra.mxu0 %v5218
    %6186 = vmatprep.subr.mxu0 %v5223
    %6187 = vmatpush1.msra.mxu0 %v5222
    %6188 = vmatprep.subr.mxu0 %v5227
    %6189 = vmatpush1.msra.mxu0 %v5226
    %6190 = vmatprep.subr.mxu0 0.0
    %6191 = vmatpush1.msra.mxu0 0.0
    %6192 = vmatprep.subr.mxu0 0.0
    %6193 = vmatpush1.msra.mxu0 0.0
    %6194 = vmatprep.subr.mxu0 0.0
    %6195 = vmatpush1.msra.mxu0 0.0
    %6196 = vmatprep.subr.mxu0 0.0
    %6197 = vmatpush1.msra.mxu0 0.0
    %6198 = vmatprep.subr.mxu0 0.0
    %6199 = vmatpush1.msra.mxu0 0.0
    %6200 = vmatprep.subr.mxu0 0.0
    %6201 = vmatpush1.msra.mxu0 0.0
    %6202 = vmatprep.subr.mxu0 0.0
    %6203 = vmatpush1.msra.mxu0 0.0
    %6204 = vmatprep.subr.mxu0 0.0
    %6205 = vmatpush1.msra.mxu0 0.0
    %6206 = vmatprep.subr.mxu0 0.0
    %6207 = vmatpush1.msra.mxu0 0.0
    %6208 = vmatprep.subr.mxu0 0.0
    %6209 = vmatpush1.msra.mxu0 0.0
    %6210 = vmatprep.subr.mxu0 0.0
    %6211 = vmatpush1.msra.mxu0 0.0
    %6212 = vmatprep.subr.mxu0 0.0
    %6213 = vmatpush1.msra.mxu0 0.0
    %6214 = vmatprep.subr.mxu0 0.0
    %6215 = vmatpush1.msra.mxu0 0.0
    %6216 = vmatprep.subr.mxu0 0.0
    %6217 = vmatpush1.msra.mxu0 0.0
    %6218 = vmatprep.subr.mxu0 0.0
    %6219 = vmatpush1.msra.mxu0 0.0
    %6220 = vmatprep.subr.mxu0 0.0
    %6221 = vmatpush1.msra.mxu0 0.0
    %6222 = vmatprep.mubr.f32.mxu0 0.0
    %6223 = vmatmul.mubr.f32.gmra.mrb[0].mxu0 %v5910
    %v6224 = vpop.f32.mrb[0].mxu0
    %v6225 = vadd.f32 %v6085, %v6224
    %v6226 = vpop.f32.mrb[0].mxu0
    %v6227 = vadd.f32 %v6086, %v6226
    %6228 = vdwg.mxu0
    %v6229 = vxor.u32 %v6154, 2147483648
    %v6230 = vxor.u32 %v6156, 2147483648
    %v6231 = vxor.u32 %v6225, 2147483648
    %v6232 = vmul.f32 %v6229, 1.442695
    %v6233 = vpow.pop %v6232
    %v6234 = vmul.f32 %v6230, 1.442695
    %v6235 = vpow.pop %v6234
    %v6236 = vmul.f32 %v6231, 1.442695
    %v6237 = vpow.pop %v6236
    %v6238 = vadd.f32 %v6233, 1.0
    %v6239 = vadd.f32 %v6235, 1.0
    %v6240 = vadd.f32 %v6237, 1.0
    %v6241 = vrcp.pop %v6238
    %v6242 = vmul.f32 1.0, %v6241
    %v6243 = vrcp.pop %v6239
    %v6244 = vmul.f32 1.0, %v6243
    %v6245 = vrcp.pop %v6240
    %v6246 = vmul.f32 1.0, %v6245
    %v6247 = vtanh.pop %v6227
    %v6248 = vmul.f32 %v6244, %v5908
    %v6249 = vmul.f32 %v6242, %v6247
    %v6250 = vadd.f32 %v6248, %v6249
    %v6251 = vtanh.pop %v6250
    %v6252 = vmul.f32 %v6246, %v6251
    %s6253 = scalar_lea.vmem [#allocation9], 96
    %v6254 = vld [vmem:[%s6253] sm:$0xff]
    %v6255 = vld [vmem:[%s6253 + $0x8] sm:$0xff]
    %v6256 = vld [vmem:[%s6253 + $0x10] sm:$0xff]
    %v6257 = vld [vmem:[%s6253 + $0x18] sm:$0xff]
    %6258 = vmatprep.subr.mxu0 %v5101
    %6259 = vmatpush1.msra.mxu0 %v5100
    %6260 = vmatprep.subr.mxu0 %v5105
    %6261 = vmatpush1.msra.mxu0 %v5104
    %6262 = vmatprep.subr.mxu0 %v5109
    %6263 = vmatpush1.msra.mxu0 %v5108
    %6264 = vmatprep.subr.mxu0 %v5113
    %6265 = vmatpush1.msra.mxu0 %v5112
    %6266 = vmatprep.subr.mxu0 %v5117
    %6267 = vmatpush1.msra.mxu0 %v5116
    %6268 = vmatprep.subr.mxu0 %v5121
    %6269 = vmatpush1.msra.mxu0 %v5120
    %6270 = vmatprep.subr.mxu0 %v5125
    %6271 = vmatpush1.msra.mxu0 %v5124
    %6272 = vmatprep.subr.mxu0 %v5129
    %6273 = vmatpush1.msra.mxu0 %v5128
    %6274 = vmatprep.subr.mxu0 %v5133
    %6275 = vmatpush1.msra.mxu0 %v5132
    %6276 = vmatprep.subr.mxu0 %v5137
    %6277 = vmatpush1.msra.mxu0 %v5136
    %6278 = vmatprep.subr.mxu0 %v5141
    %6279 = vmatpush1.msra.mxu0 %v5140
    %6280 = vmatprep.subr.mxu0 %v5145
    %6281 = vmatpush1.msra.mxu0 %v5144
    %6282 = vmatprep.subr.mxu0 %v5149
    %6283 = vmatpush1.msra.mxu0 %v5148
    %6284 = vmatprep.subr.mxu0 %v5153
    %6285 = vmatpush1.msra.mxu0 %v5152
    %6286 = vmatprep.subr.mxu0 %v5157
    %6287 = vmatpush1.msra.mxu0 %v5156
    %6288 = vmatprep.subr.mxu0 %v5161
    %6289 = vmatpush1.msra.mxu0 %v5160
    %6290 = vmatprep.subr.mxu0 0.0
    %6291 = vmatpush1.msra.mxu0 0.0
    %6292 = vmatprep.subr.mxu0 0.0
    %6293 = vmatpush1.msra.mxu0 0.0
    %6294 = vmatprep.subr.mxu0 0.0
    %6295 = vmatpush1.msra.mxu0 0.0
    %6296 = vmatprep.subr.mxu0 0.0
    %6297 = vmatpush1.msra.mxu0 0.0
    %6298 = vmatprep.subr.mxu0 0.0
    %6299 = vmatpush1.msra.mxu0 0.0
    %6300 = vmatprep.subr.mxu0 0.0
    %6301 = vmatpush1.msra.mxu0 0.0
    %6302 = vmatprep.subr.mxu0 0.0
    %6303 = vmatpush1.msra.mxu0 0.0
    %6304 = vmatprep.subr.mxu0 0.0
    %6305 = vmatpush1.msra.mxu0 0.0
    %6306 = vmatprep.subr.mxu0 0.0
    %6307 = vmatpush1.msra.mxu0 0.0
    %6308 = vmatprep.subr.mxu0 0.0
    %6309 = vmatpush1.msra.mxu0 0.0
    %6310 = vmatprep.subr.mxu0 0.0
    %6311 = vmatpush1.msra.mxu0 0.0
    %6312 = vmatprep.subr.mxu0 0.0
    %6313 = vmatpush1.msra.mxu0 0.0
    %6314 = vmatprep.subr.mxu0 0.0
    %6315 = vmatpush1.msra.mxu0 0.0
    %6316 = vmatprep.subr.mxu0 0.0
    %6317 = vmatpush1.msra.mxu0 0.0
    %6318 = vmatprep.subr.mxu0 0.0
    %6319 = vmatpush1.msra.mxu0 0.0
    %6320 = vmatprep.subr.mxu0 0.0
    %6321 = vmatpush1.msra.mxu0 0.0
    %6322 = vmatprep.mubr.f32.mxu0 0.0
    %6323 = vmatmul.mubr.f32.gmra.mrb[0].mxu0 %v6081
    %v6324 = vpop.f32.mrb[0].mxu0
    %v6325 = vadd.f32 %v6254, %v6324
    %v6326 = vpop.f32.mrb[0].mxu0
    %v6327 = vadd.f32 %v6255, %v6326
    %6328 = vdwg.mxu0
    %6329 = vmatprep.subr.mxu0 %v5103
    %6330 = vmatpush1.msra.mxu0 %v5102
    %6331 = vmatprep.subr.mxu0 %v5107
    %6332 = vmatpush1.msra.mxu0 %v5106
    %6333 = vmatprep.subr.mxu0 %v5111
    %6334 = vmatpush1.msra.mxu0 %v5110
    %6335 = vmatprep.subr.mxu0 %v5115
    %6336 = vmatpush1.msra.mxu0 %v5114
    %6337 = vmatprep.subr.mxu0 %v5119
    %6338 = vmatpush1.msra.mxu0 %v5118
    %6339 = vmatprep.subr.mxu0 %v5123
    %6340 = vmatpush1.msra.mxu0 %v5122
    %6341 = vmatprep.subr.mxu0 %v5127
    %6342 = vmatpush1.msra.mxu0 %v5126
    %6343 = vmatprep.subr.mxu0 %v5131
    %6344 = vmatpush1.msra.mxu0 %v5130
    %6345 = vmatprep.subr.mxu0 %v5135
    %6346 = vmatpush1.msra.mxu0 %v5134
    %6347 = vmatprep.subr.mxu0 %v5139
    %6348 = vmatpush1.msra.mxu0 %v5138
    %6349 = vmatprep.subr.mxu0 %v5143
    %6350 = vmatpush1.msra.mxu0 %v5142
    %6351 = vmatprep.subr.mxu0 %v5147
    %6352 = vmatpush1.msra.mxu0 %v5146
    %6353 = vmatprep.subr.mxu0 %v5151
    %6354 = vmatpush1.msra.mxu0 %v5150
    %6355 = vmatprep.subr.mxu0 %v5155
    %6356 = vmatpush1.msra.mxu0 %v5154
    %6357 = vmatprep.subr.mxu0 %v5159
    %6358 = vmatpush1.msra.mxu0 %v5158
    %6359 = vmatprep.subr.mxu0 %v5163
    %6360 = vmatpush1.msra.mxu0 %v5162
    %6361 = vmatprep.subr.mxu0 0.0
    %6362 = vmatpush1.msra.mxu0 0.0
    %6363 = vmatprep.subr.mxu0 0.0
    %6364 = vmatpush1.msra.mxu0 0.0
    %6365 = vmatprep.subr.mxu0 0.0
    %6366 = vmatpush1.msra.mxu0 0.0
    %6367 = vmatprep.subr.mxu0 0.0
    %6368 = vmatpush1.msra.mxu0 0.0
    %6369 = vmatprep.subr.mxu0 0.0
    %6370 = vmatpush1.msra.mxu0 0.0
    %6371 = vmatprep.subr.mxu0 0.0
    %6372 = vmatpush1.msra.mxu0 0.0
    %6373 = vmatprep.subr.mxu0 0.0
    %6374 = vmatpush1.msra.mxu0 0.0
    %6375 = vmatprep.subr.mxu0 0.0
    %6376 = vmatpush1.msra.mxu0 0.0
    %6377 = vmatprep.subr.mxu0 0.0
    %6378 = vmatpush1.msra.mxu0 0.0
    %6379 = vmatprep.subr.mxu0 0.0
    %6380 = vmatpush1.msra.mxu0 0.0
    %6381 = vmatprep.subr.mxu0 0.0
    %6382 = vmatpush1.msra.mxu0 0.0
    %6383 = vmatprep.subr.mxu0 0.0
    %6384 = vmatpush1.msra.mxu0 0.0
    %6385 = vmatprep.subr.mxu0 0.0
    %6386 = vmatpush1.msra.mxu0 0.0
    %6387 = vmatprep.subr.mxu0 0.0
    %6388 = vmatpush1.msra.mxu0 0.0
    %6389 = vmatprep.subr.mxu0 0.0
    %6390 = vmatpush1.msra.mxu0 0.0
    %6391 = vmatprep.subr.mxu0 0.0
    %6392 = vmatpush1.msra.mxu0 0.0
    %6393 = vmatprep.mubr.f32.mxu0 0.0
    %6394 = vmatmul.mubr.f32.gmra.mrb[0].mxu0 %v6081
    %v6395 = vpop.f32.mrb[0].mxu0
    %v6396 = vadd.f32 %v6256, %v6395
    %v6397 = vpop.f32.mrb[0].mxu0
    %v6398 = vadd.f32 %v6257, %v6397
    %6399 = vdwg.mxu0
    %v6400 = vxor.u32 %v6325, 2147483648
    %v6401 = vxor.u32 %v6327, 2147483648
    %v6402 = vxor.u32 %v6396, 2147483648
    %v6403 = vmul.f32 %v6400, 1.442695
    %v6404 = vpow.pop %v6403
    %v6405 = vmul.f32 %v6401, 1.442695
    %v6406 = vpow.pop %v6405
    %v6407 = vmul.f32 %v6402, 1.442695
    %v6408 = vpow.pop %v6407
    %v6409 = vadd.f32 %v6404, 1.0
    %v6410 = vadd.f32 %v6406, 1.0
    %v6411 = vadd.f32 %v6408, 1.0
    %v6412 = vrcp.pop %v6409
    %v6413 = vmul.f32 1.0, %v6412
    %v6414 = vrcp.pop %v6410
    %v6415 = vmul.f32 1.0, %v6414
    %v6416 = vrcp.pop %v6411
    %v6417 = vmul.f32 1.0, %v6416
    %v6418 = vtanh.pop %v6398
    %v6419 = vmul.f32 %v6415, %v6079
    %v6420 = vmul.f32 %v6413, %v6418
    %v6421 = vadd.f32 %v6419, %v6420
    %v6422 = vtanh.pop %v6421
    %v6423 = vmul.f32 %v6417, %v6422
    %s6424 = scalar_lea.vmem [#allocation10], 128
    %v6425 = vld [vmem:[%s6424] sm:$0xff]
    %v6426 = vld [vmem:[%s6424 + $0x8] sm:$0xff]
    %v6427 = vld [vmem:[%s6424 + $0x10] sm:$0xff]
    %v6428 = vld [vmem:[%s6424 + $0x18] sm:$0xff]
    %6429 = vmatprep.subr.mxu0 %v5165
    %6430 = vmatpush1.msra.mxu0 %v5164
    %6431 = vmatprep.subr.mxu0 %v5169
    %6432 = vmatpush1.msra.mxu0 %v5168
    %6433 = vmatprep.subr.mxu0 %v5173
    %6434 = vmatpush1.msra.mxu0 %v5172
    %6435 = vmatprep.subr.mxu0 %v5177
    %6436 = vmatpush1.msra.mxu0 %v5176
    %6437 = vmatprep.subr.mxu0 %v5181
    %6438 = vmatpush1.msra.mxu0 %v5180
    %6439 = vmatprep.subr.mxu0 %v5185
    %6440 = vmatpush1.msra.mxu0 %v5184
    %6441 = vmatprep.subr.mxu0 %v5189
    %6442 = vmatpush1.msra.mxu0 %v5188
    %6443 = vmatprep.subr.mxu0 %v5193
    %6444 = vmatpush1.msra.mxu0 %v5192
    %6445 = vmatprep.subr.mxu0 %v5197
    %6446 = vmatpush1.msra.mxu0 %v5196
    %6447 = vmatprep.subr.mxu0 %v5201
    %6448 = vmatpush1.msra.mxu0 %v5200
    %6449 = vmatprep.subr.mxu0 %v5205
    %6450 = vmatpush1.msra.mxu0 %v5204
    %6451 = vmatprep.subr.mxu0 %v5209
    %6452 = vmatpush1.msra.mxu0 %v5208
    %6453 = vmatprep.subr.mxu0 %v5213
    %6454 = vmatpush1.msra.mxu0 %v5212
    %6455 = vmatprep.subr.mxu0 %v5217
    %6456 = vmatpush1.msra.mxu0 %v5216
    %6457 = vmatprep.subr.mxu0 %v5221
    %6458 = vmatpush1.msra.mxu0 %v5220
    %6459 = vmatprep.subr.mxu0 %v5225
    %6460 = vmatpush1.msra.mxu0 %v5224
    %6461 = vmatprep.subr.mxu0 0.0
    %6462 = vmatpush1.msra.mxu0 0.0
    %6463 = vmatprep.subr.mxu0 0.0
    %6464 = vmatpush1.msra.mxu0 0.0
    %6465 = vmatprep.subr.mxu0 0.0
    %6466 = vmatpush1.msra.mxu0 0.0
    %6467 = vmatprep.subr.mxu0 0.0
    %6468 = vmatpush1.msra.mxu0 0.0
    %6469 = vmatprep.subr.mxu0 0.0
    %6470 = vmatpush1.msra.mxu0 0.0
    %6471 = vmatprep.subr.mxu0 0.0
    %6472 = vmatpush1.msra.mxu0 0.0
    %6473 = vmatprep.subr.mxu0 0.0
    %6474 = vmatpush1.msra.mxu0 0.0
    %6475 = vmatprep.subr.mxu0 0.0
    %6476 = vmatpush1.msra.mxu0 0.0
    %6477 = vmatprep.subr.mxu0 0.0
    %6478 = vmatpush1.msra.mxu0 0.0
    %6479 = vmatprep.subr.mxu0 0.0
    %6480 = vmatpush1.msra.mxu0 0.0
    %6481 = vmatprep.subr.mxu0 0.0
    %6482 = vmatpush1.msra.mxu0 0.0
    %6483 = vmatprep.subr.mxu0 0.0
    %6484 = vmatpush1.msra.mxu0 0.0
    %6485 = vmatprep.subr.mxu0 0.0
    %6486 = vmatpush1.msra.mxu0 0.0
    %6487 = vmatprep.subr.mxu0 0.0
    %6488 = vmatpush1.msra.mxu0 0.0
    %6489 = vmatprep.subr.mxu0 0.0
    %6490 = vmatpush1.msra.mxu0 0.0
    %6491 = vmatprep.subr.mxu0 0.0
    %6492 = vmatpush1.msra.mxu0 0.0
    %6493 = vmatprep.mubr.f32.mxu0 0.0
    %6494 = vmatmul.mubr.f32.gmra.mrb[0].mxu0 %v6252
    %v6495 = vpop.f32.mrb[0].mxu0
    %v6496 = vadd.f32 %v6425, %v6495
    %v6497 = vpop.f32.mrb[0].mxu0
    %v6498 = vadd.f32 %v6426, %v6497
    %6499 = vdwg.mxu0
    %6500 = vmatprep.subr.mxu0 %v5167
    %6501 = vmatpush1.msra.mxu0 %v5166
    %6502 = vmatprep.subr.mxu0 %v5171
    %6503 = vmatpush1.msra.mxu0 %v5170
    %6504 = vmatprep.subr.mxu0 %v5175
    %6505 = vmatpush1.msra.mxu0 %v5174
    %6506 = vmatprep.subr.mxu0 %v5179
    %6507 = vmatpush1.msra.mxu0 %v5178
    %6508 = vmatprep.subr.mxu0 %v5183
    %6509 = vmatpush1.msra.mxu0 %v5182
    %6510 = vmatprep.subr.mxu0 %v5187
    %6511 = vmatpush1.msra.mxu0 %v5186
    %6512 = vmatprep.subr.mxu0 %v5191
    %6513 = vmatpush1.msra.mxu0 %v5190
    %6514 = vmatprep.subr.mxu0 %v5195
    %6515 = vmatpush1.msra.mxu0 %v5194
    %6516 = vmatprep.subr.mxu0 %v5199
    %6517 = vmatpush1.msra.mxu0 %v5198
    %6518 = vmatprep.subr.mxu0 %v5203
    %6519 = vmatpush1.msra.mxu0 %v5202
    %6520 = vmatprep.subr.mxu0 %v5207
    %6521 = vmatpush1.msra.mxu0 %v5206
    %6522 = vmatprep.subr.mxu0 %v5211
    %6523 = vmatpush1.msra.mxu0 %v5210
    %6524 = vmatprep.subr.mxu0 %v5215
    %6525 = vmatpush1.msra.mxu0 %v5214
    %6526 = vmatprep.subr.mxu0 %v5219
    %6527 = vmatpush1.msra.mxu0 %v5218
    %6528 = vmatprep.subr.mxu0 %v5223
    %6529 = vmatpush1.msra.mxu0 %v5222
    %6530 = vmatprep.subr.mxu0 %v5227
    %6531 = vmatpush1.msra.mxu0 %v5226
    %6532 = vmatprep.subr.mxu0 0.0
    %6533 = vmatpush1.msra.mxu0 0.0
    %6534 = vmatprep.subr.mxu0 0.0
    %6535 = vmatpush1.msra.mxu0 0.0
    %6536 = vmatprep.subr.mxu0 0.0
    %6537 = vmatpush1.msra.mxu0 0.0
    %6538 = vmatprep.subr.mxu0 0.0
    %6539 = vmatpush1.msra.mxu0 0.0
    %6540 = vmatprep.subr.mxu0 0.0
    %6541 = vmatpush1.msra.mxu0 0.0
    %6542 = vmatprep.subr.mxu0 0.0
    %6543 = vmatpush1.msra.mxu0 0.0
    %6544 = vmatprep.subr.mxu0 0.0
    %6545 = vmatpush1.msra.mxu0 0.0
    %6546 = vmatprep.subr.mxu0 0.0
    %6547 = vmatpush1.msra.mxu0 0.0
    %6548 = vmatprep.subr.mxu0 0.0
    %6549 = vmatpush1.msra.mxu0 0.0
    %6550 = vmatprep.subr.mxu0 0.0
    %6551 = vmatpush1.msra.mxu0 0.0
    %6552 = vmatprep.subr.mxu0 0.0
    %6553 = vmatpush1.msra.mxu0 0.0
    %6554 = vmatprep.subr.mxu0 0.0
    %6555 = vmatpush1.msra.mxu0 0.0
    %6556 = vmatprep.subr.mxu0 0.0
    %6557 = vmatpush1.msra.mxu0 0.0
    %6558 = vmatprep.subr.mxu0 0.0
    %6559 = vmatpush1.msra.mxu0 0.0
    %6560 = vmatprep.subr.mxu0 0.0
    %6561 = vmatpush1.msra.mxu0 0.0
    %6562 = vmatprep.subr.mxu0 0.0
    %6563 = vmatpush1.msra.mxu0 0.0
    %6564 = vmatprep.mubr.f32.mxu0 0.0
    %6565 = vmatmul.mubr.f32.gmra.mrb[0].mxu0 %v6252
    %v6566 = vpop.f32.mrb[0].mxu0
    %v6567 = vadd.f32 %v6427, %v6566
    %v6568 = vpop.f32.mrb[0].mxu0
    %v6569 = vadd.f32 %v6428, %v6568
    %6570 = vdwg.mxu0
    %v6571 = vxor.u32 %v6496, 2147483648
    %v6572 = vxor.u32 %v6498, 2147483648
    %v6573 = vxor.u32 %v6567, 2147483648
    %v6574 = vmul.f32 %v6571, 1.442695
    %v6575 = vpow.pop %v6574
    %v6576 = vmul.f32 %v6572, 1.442695
    %v6577 = vpow.pop %v6576
    %v6578 = vmul.f32 %v6573, 1.442695
    %v6579 = vpow.pop %v6578
    %v6580 = vadd.f32 %v6575, 1.0
    %v6581 = vadd.f32 %v6577, 1.0
    %v6582 = vadd.f32 %v6579, 1.0
    %v6583 = vrcp.pop %v6580
    %v6584 = vmul.f32 1.0, %v6583
    %v6585 = vrcp.pop %v6581
    %v6586 = vmul.f32 1.0, %v6585
    %v6587 = vrcp.pop %v6582
    %v6588 = vmul.f32 1.0, %v6587
    %v6589 = vtanh.pop %v6569
    %v6590 = vmul.f32 %v6586, %v6250
    %v6591 = vmul.f32 %v6584, %v6589
    %v6592 = vadd.f32 %v6590, %v6591
    %v6593 = vtanh.pop %v6592
    %v6594 = vmul.f32 %v6588, %v6593
    %s6595 = scalar_lea.vmem [#allocation9], 128
    %v6596 = vld [vmem:[%s6595] sm:$0xff]
    %v6597 = vld [vmem:[%s6595 + $0x8] sm:$0xff]
    %v6598 = vld [vmem:[%s6595 + $0x10] sm:$0xff]
    %v6599 = vld [vmem:[%s6595 + $0x18] sm:$0xff]
    %6600 = vmatprep.subr.mxu0 %v5101
    %6601 = vmatpush1.msra.mxu0 %v5100
    %6602 = vmatprep.subr.mxu0 %v5105
    %6603 = vmatpush1.msra.mxu0 %v5104
    %6604 = vmatprep.subr.mxu0 %v5109
    %6605 = vmatpush1.msra.mxu0 %v5108
    %6606 = vmatprep.subr.mxu0 %v5113
    %6607 = vmatpush1.msra.mxu0 %v5112
    %6608 = vmatprep.subr.mxu0 %v5117
    %6609 = vmatpush1.msra.mxu0 %v5116
    %6610 = vmatprep.subr.mxu0 %v5121
    %6611 = vmatpush1.msra.mxu0 %v5120
    %6612 = vmatprep.subr.mxu0 %v5125
    %6613 = vmatpush1.msra.mxu0 %v5124
    %6614 = vmatprep.subr.mxu0 %v5129
    %6615 = vmatpush1.msra.mxu0 %v5128
    %6616 = vmatprep.subr.mxu0 %v5133
    %6617 = vmatpush1.msra.mxu0 %v5132
    %6618 = vmatprep.subr.mxu0 %v5137
    %6619 = vmatpush1.msra.mxu0 %v5136
    %6620 = vmatprep.subr.mxu0 %v5141
    %6621 = vmatpush1.msra.mxu0 %v5140
    %6622 = vmatprep.subr.mxu0 %v5145
    %6623 = vmatpush1.msra.mxu0 %v5144
    %6624 = vmatprep.subr.mxu0 %v5149
    %6625 = vmatpush1.msra.mxu0 %v5148
    %6626 = vmatprep.subr.mxu0 %v5153
    %6627 = vmatpush1.msra.mxu0 %v5152
    %6628 = vmatprep.subr.mxu0 %v5157
    %6629 = vmatpush1.msra.mxu0 %v5156
    %6630 = vmatprep.subr.mxu0 %v5161
    %6631 = vmatpush1.msra.mxu0 %v5160
    %6632 = vmatprep.subr.mxu0 0.0
    %6633 = vmatpush1.msra.mxu0 0.0
    %6634 = vmatprep.subr.mxu0 0.0
    %6635 = vmatpush1.msra.mxu0 0.0
    %6636 = vmatprep.subr.mxu0 0.0
    %6637 = vmatpush1.msra.mxu0 0.0
    %6638 = vmatprep.subr.mxu0 0.0
    %6639 = vmatpush1.msra.mxu0 0.0
    %6640 = vmatprep.subr.mxu0 0.0
    %6641 = vmatpush1.msra.mxu0 0.0
    %6642 = vmatprep.subr.mxu0 0.0
    %6643 = vmatpush1.msra.mxu0 0.0
    %6644 = vmatprep.subr.mxu0 0.0
    %6645 = vmatpush1.msra.mxu0 0.0
    %6646 = vmatprep.subr.mxu0 0.0
    %6647 = vmatpush1.msra.mxu0 0.0
    %6648 = vmatprep.subr.mxu0 0.0
    %6649 = vmatpush1.msra.mxu0 0.0
    %6650 = vmatprep.subr.mxu0 0.0
    %6651 = vmatpush1.msra.mxu0 0.0
    %6652 = vmatprep.subr.mxu0 0.0
    %6653 = vmatpush1.msra.mxu0 0.0
    %6654 = vmatprep.subr.mxu0 0.0
    %6655 = vmatpush1.msra.mxu0 0.0
    %6656 = vmatprep.subr.mxu0 0.0
    %6657 = vmatpush1.msra.mxu0 0.0
    %6658 = vmatprep.subr.mxu0 0.0
    %6659 = vmatpush1.msra.mxu0 0.0
    %6660 = vmatprep.subr.mxu0 0.0
    %6661 = vmatpush1.msra.mxu0 0.0
    %6662 = vmatprep.subr.mxu0 0.0
    %6663 = vmatpush1.msra.mxu0 0.0
    %6664 = vmatprep.mubr.f32.mxu0 0.0
    %6665 = vmatmul.mubr.f32.gmra.mrb[0].mxu0 %v6423
    %v6666 = vpop.f32.mrb[0].mxu0
    %v6667 = vadd.f32 %v6596, %v6666
    %v6668 = vpop.f32.mrb[0].mxu0
    %v6669 = vadd.f32 %v6597, %v6668
    %6670 = vdwg.mxu0
    %6671 = vmatprep.subr.mxu0 %v5103
    %6672 = vmatpush1.msra.mxu0 %v5102
    %6673 = vmatprep.subr.mxu0 %v5107
    %6674 = vmatpush1.msra.mxu0 %v5106
    %6675 = vmatprep.subr.mxu0 %v5111
    %6676 = vmatpush1.msra.mxu0 %v5110
    %6677 = vmatprep.subr.mxu0 %v5115
    %6678 = vmatpush1.msra.mxu0 %v5114
    %6679 = vmatprep.subr.mxu0 %v5119
    %6680 = vmatpush1.msra.mxu0 %v5118
    %6681 = vmatprep.subr.mxu0 %v5123
    %6682 = vmatpush1.msra.mxu0 %v5122
    %6683 = vmatprep.subr.mxu0 %v5127
    %6684 = vmatpush1.msra.mxu0 %v5126
    %6685 = vmatprep.subr.mxu0 %v5131
    %6686 = vmatpush1.msra.mxu0 %v5130
    %6687 = vmatprep.subr.mxu0 %v5135
    %6688 = vmatpush1.msra.mxu0 %v5134
    %6689 = vmatprep.subr.mxu0 %v5139
    %6690 = vmatpush1.msra.mxu0 %v5138
    %6691 = vmatprep.subr.mxu0 %v5143
    %6692 = vmatpush1.msra.mxu0 %v5142
    %6693 = vmatprep.subr.mxu0 %v5147
    %6694 = vmatpush1.msra.mxu0 %v5146
    %6695 = vmatprep.subr.mxu0 %v5151
    %6696 = vmatpush1.msra.mxu0 %v5150
    %6697 = vmatprep.subr.mxu0 %v5155
    %6698 = vmatpush1.msra.mxu0 %v5154
    %6699 = vmatprep.subr.mxu0 %v5159
    %6700 = vmatpush1.msra.mxu0 %v5158
    %6701 = vmatprep.subr.mxu0 %v5163
    %6702 = vmatpush1.msra.mxu0 %v5162
    %6703 = vmatprep.subr.mxu0 0.0
    %6704 = vmatpush1.msra.mxu0 0.0
    %6705 = vmatprep.subr.mxu0 0.0
    %6706 = vmatpush1.msra.mxu0 0.0
    %6707 = vmatprep.subr.mxu0 0.0
    %6708 = vmatpush1.msra.mxu0 0.0
    %6709 = vmatprep.subr.mxu0 0.0
    %6710 = vmatpush1.msra.mxu0 0.0
    %6711 = vmatprep.subr.mxu0 0.0
    %6712 = vmatpush1.msra.mxu0 0.0
    %6713 = vmatprep.subr.mxu0 0.0
    %6714 = vmatpush1.msra.mxu0 0.0
    %6715 = vmatprep.subr.mxu0 0.0
    %6716 = vmatpush1.msra.mxu0 0.0
    %6717 = vmatprep.subr.mxu0 0.0
    %6718 = vmatpush1.msra.mxu0 0.0
    %6719 = vmatprep.subr.mxu0 0.0
    %6720 = vmatpush1.msra.mxu0 0.0
    %6721 = vmatprep.subr.mxu0 0.0
    %6722 = vmatpush1.msra.mxu0 0.0
    %6723 = vmatprep.subr.mxu0 0.0
    %6724 = vmatpush1.msra.mxu0 0.0
    %6725 = vmatprep.subr.mxu0 0.0
    %6726 = vmatpush1.msra.mxu0 0.0
    %6727 = vmatprep.subr.mxu0 0.0
    %6728 = vmatpush1.msra.mxu0 0.0
    %6729 = vmatprep.subr.mxu0 0.0
    %6730 = vmatpush1.msra.mxu0 0.0
    %6731 = vmatprep.subr.mxu0 0.0
    %6732 = vmatpush1.msra.mxu0 0.0
    %6733 = vmatprep.subr.mxu0 0.0
    %6734 = vmatpush1.msra.mxu0 0.0
    %6735 = vmatprep.mubr.f32.mxu0 0.0
    %6736 = vmatmul.mubr.f32.gmra.mrb[0].mxu0 %v6423
    %v6737 = vpop.f32.mrb[0].mxu0
    %v6738 = vadd.f32 %v6598, %v6737
    %v6739 = vpop.f32.mrb[0].mxu0
    %v6740 = vadd.f32 %v6599, %v6739
    %6741 = vdwg.mxu0
    %v6742 = vxor.u32 %v6667, 2147483648
    %v6743 = vxor.u32 %v6669, 2147483648
    %v6744 = vxor.u32 %v6738, 2147483648
    %v6745 = vmul.f32 %v6742, 1.442695
    %v6746 = vpow.pop %v6745
    %v6747 = vmul.f32 %v6743, 1.442695
    %v6748 = vpow.pop %v6747
    %v6749 = vmul.f32 %v6744, 1.442695
    %v6750 = vpow.pop %v6749
    %v6751 = vadd.f32 %v6746, 1.0
    %v6752 = vadd.f32 %v6748, 1.0
    %v6753 = vadd.f32 %v6750, 1.0
    %v6754 = vrcp.pop %v6751
    %v6755 = vmul.f32 1.0, %v6754
    %v6756 = vrcp.pop %v6752
    %v6757 = vmul.f32 1.0, %v6756
    %v6758 = vrcp.pop %v6753
    %v6759 = vmul.f32 1.0, %v6758
    %v6760 = vtanh.pop %v6740
    %v6761 = vmul.f32 %v6757, %v6421
    %v6762 = vmul.f32 %v6755, %v6760
    %v6763 = vadd.f32 %v6761, %v6762
    %v6764 = vtanh.pop %v6763
    %v6765 = vmul.f32 %v6759, %v6764
    %s6766 = scalar_lea.vmem [#allocation10], 96
    %v6767 = vld [vmem:[%s6766] sm:$0xff]
    %v6768 = vld [vmem:[%s6766 + $0x8] sm:$0xff]
    %v6769 = vld [vmem:[%s6766 + $0x10] sm:$0xff]
    %v6770 = vld [vmem:[%s6766 + $0x18] sm:$0xff]
    %6771 = vmatprep.subr.mxu0 %v5165
    %6772 = vmatpush1.msra.mxu0 %v5164
    %6773 = vmatprep.subr.mxu0 %v5169
    %6774 = vmatpush1.msra.mxu0 %v5168
    %6775 = vmatprep.subr.mxu0 %v5173
    %6776 = vmatpush1.msra.mxu0 %v5172
    %6777 = vmatprep.subr.mxu0 %v5177
    %6778 = vmatpush1.msra.mxu0 %v5176
    %6779 = vmatprep.subr.mxu0 %v5181
    %6780 = vmatpush1.msra.mxu0 %v5180
    %6781 = vmatprep.subr.mxu0 %v5185
    %6782 = vmatpush1.msra.mxu0 %v5184
    %6783 = vmatprep.subr.mxu0 %v5189
    %6784 = vmatpush1.msra.mxu0 %v5188
    %6785 = vmatprep.subr.mxu0 %v5193
    %6786 = vmatpush1.msra.mxu0 %v5192
    %6787 = vmatprep.subr.mxu0 %v5197
    %6788 = vmatpush1.msra.mxu0 %v5196
    %6789 = vmatprep.subr.mxu0 %v5201
    %6790 = vmatpush1.msra.mxu0 %v5200
    %6791 = vmatprep.subr.mxu0 %v5205
    %6792 = vmatpush1.msra.mxu0 %v5204
    %6793 = vmatprep.subr.mxu0 %v5209
    %6794 = vmatpush1.msra.mxu0 %v5208
    %6795 = vmatprep.subr.mxu0 %v5213
    %6796 = vmatpush1.msra.mxu0 %v5212
    %6797 = vmatprep.subr.mxu0 %v5217
    %6798 = vmatpush1.msra.mxu0 %v5216
    %6799 = vmatprep.subr.mxu0 %v5221
    %6800 = vmatpush1.msra.mxu0 %v5220
    %6801 = vmatprep.subr.mxu0 %v5225
    %6802 = vmatpush1.msra.mxu0 %v5224
    %6803 = vmatprep.subr.mxu0 0.0
    %6804 = vmatpush1.msra.mxu0 0.0
    %6805 = vmatprep.subr.mxu0 0.0
    %6806 = vmatpush1.msra.mxu0 0.0
    %6807 = vmatprep.subr.mxu0 0.0
    %6808 = vmatpush1.msra.mxu0 0.0
    %6809 = vmatprep.subr.mxu0 0.0
    %6810 = vmatpush1.msra.mxu0 0.0
    %6811 = vmatprep.subr.mxu0 0.0
    %6812 = vmatpush1.msra.mxu0 0.0
    %6813 = vmatprep.subr.mxu0 0.0
    %6814 = vmatpush1.msra.mxu0 0.0
    %6815 = vmatprep.subr.mxu0 0.0
    %6816 = vmatpush1.msra.mxu0 0.0
    %6817 = vmatprep.subr.mxu0 0.0
    %6818 = vmatpush1.msra.mxu0 0.0
    %6819 = vmatprep.subr.mxu0 0.0
    %6820 = vmatpush1.msra.mxu0 0.0
    %6821 = vmatprep.subr.mxu0 0.0
    %6822 = vmatpush1.msra.mxu0 0.0
    %6823 = vmatprep.subr.mxu0 0.0
    %6824 = vmatpush1.msra.mxu0 0.0
    %6825 = vmatprep.subr.mxu0 0.0
    %6826 = vmatpush1.msra.mxu0 0.0
    %6827 = vmatprep.subr.mxu0 0.0
    %6828 = vmatpush1.msra.mxu0 0.0
    %6829 = vmatprep.subr.mxu0 0.0
    %6830 = vmatpush1.msra.mxu0 0.0
    %6831 = vmatprep.subr.mxu0 0.0
    %6832 = vmatpush1.msra.mxu0 0.0
    %6833 = vmatprep.subr.mxu0 0.0
    %6834 = vmatpush1.msra.mxu0 0.0
    %6835 = vmatprep.mubr.f32.mxu0 0.0
    %6836 = vmatmul.mubr.f32.gmra.mrb[0].mxu0 %v6594
    %v6837 = vpop.f32.mrb[0].mxu0
    %v6838 = vadd.f32 %v6767, %v6837
    %v6839 = vpop.f32.mrb[0].mxu0
    %v6840 = vadd.f32 %v6768, %v6839
    %6841 = vdwg.mxu0
    %6842 = vmatprep.subr.mxu0 %v5167
    %6843 = vmatpush1.msra.mxu0 %v5166
    %6844 = vmatprep.subr.mxu0 %v5171
    %6845 = vmatpush1.msra.mxu0 %v5170
    %6846 = vmatprep.subr.mxu0 %v5175
    %6847 = vmatpush1.msra.mxu0 %v5174
    %6848 = vmatprep.subr.mxu0 %v5179
    %6849 = vmatpush1.msra.mxu0 %v5178
    %6850 = vmatprep.subr.mxu0 %v5183
    %6851 = vmatpush1.msra.mxu0 %v5182
    %6852 = vmatprep.subr.mxu0 %v5187
    %6853 = vmatpush1.msra.mxu0 %v5186
    %6854 = vmatprep.subr.mxu0 %v5191
    %6855 = vmatpush1.msra.mxu0 %v5190
    %6856 = vmatprep.subr.mxu0 %v5195
    %6857 = vmatpush1.msra.mxu0 %v5194
    %6858 = vmatprep.subr.mxu0 %v5199
    %6859 = vmatpush1.msra.mxu0 %v5198
    %6860 = vmatprep.subr.mxu0 %v5203
    %6861 = vmatpush1.msra.mxu0 %v5202
    %6862 = vmatprep.subr.mxu0 %v5207
    %6863 = vmatpush1.msra.mxu0 %v5206
    %6864 = vmatprep.subr.mxu0 %v5211
    %6865 = vmatpush1.msra.mxu0 %v5210
    %6866 = vmatprep.subr.mxu0 %v5215
    %6867 = vmatpush1.msra.mxu0 %v5214
    %6868 = vmatprep.subr.mxu0 %v5219
    %6869 = vmatpush1.msra.mxu0 %v5218
    %6870 = vmatprep.subr.mxu0 %v5223
    %6871 = vmatpush1.msra.mxu0 %v5222
    %6872 = vmatprep.subr.mxu0 %v5227
    %6873 = vmatpush1.msra.mxu0 %v5226
    %6874 = vmatprep.subr.mxu0 0.0
    %6875 = vmatpush1.msra.mxu0 0.0
    %6876 = vmatprep.subr.mxu0 0.0
    %6877 = vmatpush1.msra.mxu0 0.0
    %6878 = vmatprep.subr.mxu0 0.0
    %6879 = vmatpush1.msra.mxu0 0.0
    %6880 = vmatprep.subr.mxu0 0.0
    %6881 = vmatpush1.msra.mxu0 0.0
    %6882 = vmatprep.subr.mxu0 0.0
    %6883 = vmatpush1.msra.mxu0 0.0
    %6884 = vmatprep.subr.mxu0 0.0
    %6885 = vmatpush1.msra.mxu0 0.0
    %6886 = vmatprep.subr.mxu0 0.0
    %6887 = vmatpush1.msra.mxu0 0.0
    %6888 = vmatprep.subr.mxu0 0.0
    %6889 = vmatpush1.msra.mxu0 0.0
    %6890 = vmatprep.subr.mxu0 0.0
    %6891 = vmatpush1.msra.mxu0 0.0
    %6892 = vmatprep.subr.mxu0 0.0
    %6893 = vmatpush1.msra.mxu0 0.0
    %6894 = vmatprep.subr.mxu0 0.0
    %6895 = vmatpush1.msra.mxu0 0.0
    %6896 = vmatprep.subr.mxu0 0.0
    %6897 = vmatpush1.msra.mxu0 0.0
    %6898 = vmatprep.subr.mxu0 0.0
    %6899 = vmatpush1.msra.mxu0 0.0
    %6900 = vmatprep.subr.mxu0 0.0
    %6901 = vmatpush1.msra.mxu0 0.0
    %6902 = vmatprep.subr.mxu0 0.0
    %6903 = vmatpush1.msra.mxu0 0.0
    %6904 = vmatprep.subr.mxu0 0.0
    %6905 = vmatpush1.msra.mxu0 0.0
    %6906 = vmatprep.mubr.f32.mxu0 0.0
    %6907 = vmatmul.mubr.f32.gmra.mrb[0].mxu0 %v6594
    %v6908 = vpop.f32.mrb[0].mxu0
    %v6909 = vadd.f32 %v6769, %v6908
    %v6910 = vpop.f32.mrb[0].mxu0
    %v6911 = vadd.f32 %v6770, %v6910
    %6912 = vdwg.mxu0
    %v6913 = vxor.u32 %v6838, 2147483648
    %v6914 = vxor.u32 %v6840, 2147483648
    %v6915 = vxor.u32 %v6909, 2147483648
    %v6916 = vmul.f32 %v6913, 1.442695
    %v6917 = vpow.pop %v6916
    %v6918 = vmul.f32 %v6914, 1.442695
    %v6919 = vpow.pop %v6918
    %v6920 = vmul.f32 %v6915, 1.442695
    %v6921 = vpow.pop %v6920
    %v6922 = vadd.f32 %v6917, 1.0
    %v6923 = vadd.f32 %v6919, 1.0
    %v6924 = vadd.f32 %v6921, 1.0
    %v6925 = vrcp.pop %v6922
    %v6926 = vmul.f32 1.0, %v6925
    %v6927 = vrcp.pop %v6923
    %v6928 = vmul.f32 1.0, %v6927
    %v6929 = vrcp.pop %v6924
    %v6930 = vmul.f32 1.0, %v6929
    %v6931 = vtanh.pop %v6911
    %v6932 = vmul.f32 %v6928, %v6592
    %v6933 = vmul.f32 %v6926, %v6931
    %v6934 = vadd.f32 %v6932, %v6933
    %v6935 = vtanh.pop %v6934
    %v6936 = vmul.f32 %v6930, %v6935
    %s6937 = scalar_lea.vmem [#allocation9], 160
    %v6938 = vld [vmem:[%s6937] sm:$0xff]
    %v6939 = vld [vmem:[%s6937 + $0x8] sm:$0xff]
    %v6940 = vld [vmem:[%s6937 + $0x10] sm:$0xff]
    %v6941 = vld [vmem:[%s6937 + $0x18] sm:$0xff]
    %6942 = vmatprep.subr.mxu0 %v5101
    %6943 = vmatpush1.msra.mxu0 %v5100
    %6944 = vmatprep.subr.mxu0 %v5105
    %6945 = vmatpush1.msra.mxu0 %v5104
    %6946 = vmatprep.subr.mxu0 %v5109
    %6947 = vmatpush1.msra.mxu0 %v5108
    %6948 = vmatprep.subr.mxu0 %v5113
    %6949 = vmatpush1.msra.mxu0 %v5112
    %6950 = vmatprep.subr.mxu0 %v5117
    %6951 = vmatpush1.msra.mxu0 %v5116
    %6952 = vmatprep.subr.mxu0 %v5121
    %6953 = vmatpush1.msra.mxu0 %v5120
    %6954 = vmatprep.subr.mxu0 %v5125
    %6955 = vmatpush1.msra.mxu0 %v5124
    %6956 = vmatprep.subr.mxu0 %v5129
    %6957 = vmatpush1.msra.mxu0 %v5128
    %6958 = vmatprep.subr.mxu0 %v5133
    %6959 = vmatpush1.msra.mxu0 %v5132
    %6960 = vmatprep.subr.mxu0 %v5137
    %6961 = vmatpush1.msra.mxu0 %v5136
    %6962 = vmatprep.subr.mxu0 %v5141
    %6963 = vmatpush1.msra.mxu0 %v5140
    %6964 = vmatprep.subr.mxu0 %v5145
    %6965 = vmatpush1.msra.mxu0 %v5144
    %6966 = vmatprep.subr.mxu0 %v5149
    %6967 = vmatpush1.msra.mxu0 %v5148
    %6968 = vmatprep.subr.mxu0 %v5153
    %6969 = vmatpush1.msra.mxu0 %v5152
    %6970 = vmatprep.subr.mxu0 %v5157
    %6971 = vmatpush1.msra.mxu0 %v5156
    %6972 = vmatprep.subr.mxu0 %v5161
    %6973 = vmatpush1.msra.mxu0 %v5160
    %6974 = vmatprep.subr.mxu0 0.0
    %6975 = vmatpush1.msra.mxu0 0.0
    %6976 = vmatprep.subr.mxu0 0.0
    %6977 = vmatpush1.msra.mxu0 0.0
    %6978 = vmatprep.subr.mxu0 0.0
    %6979 = vmatpush1.msra.mxu0 0.0
    %6980 = vmatprep.subr.mxu0 0.0
    %6981 = vmatpush1.msra.mxu0 0.0
    %6982 = vmatprep.subr.mxu0 0.0
    %6983 = vmatpush1.msra.mxu0 0.0
    %6984 = vmatprep.subr.mxu0 0.0
    %6985 = vmatpush1.msra.mxu0 0.0
    %6986 = vmatprep.subr.mxu0 0.0
    %6987 = vmatpush1.msra.mxu0 0.0
    %6988 = vmatprep.subr.mxu0 0.0
    %6989 = vmatpush1.msra.mxu0 0.0
    %6990 = vmatprep.subr.mxu0 0.0
    %6991 = vmatpush1.msra.mxu0 0.0
    %6992 = vmatprep.subr.mxu0 0.0
    %6993 = vmatpush1.msra.mxu0 0.0
    %6994 = vmatprep.subr.mxu0 0.0
    %6995 = vmatpush1.msra.mxu0 0.0
    %6996 = vmatprep.subr.mxu0 0.0
    %6997 = vmatpush1.msra.mxu0 0.0
    %6998 = vmatprep.subr.mxu0 0.0
    %6999 = vmatpush1.msra.mxu0 0.0
    %7000 = vmatprep.subr.mxu0 0.0
    %7001 = vmatpush1.msra.mxu0 0.0
    %7002 = vmatprep.subr.mxu0 0.0
    %7003 = vmatpush1.msra.mxu0 0.0
    %7004 = vmatprep.subr.mxu0 0.0
    %7005 = vmatpush1.msra.mxu0 0.0
    %7006 = vmatprep.mubr.f32.mxu0 0.0
    %7007 = vmatmul.mubr.f32.gmra.mrb[0].mxu0 %v6765
    %v7008 = vpop.f32.mrb[0].mxu0
    %v7009 = vadd.f32 %v6938, %v7008
    %v7010 = vpop.f32.mrb[0].mxu0
    %v7011 = vadd.f32 %v6939, %v7010
    %7012 = vdwg.mxu0
    %7013 = vmatprep.subr.mxu0 %v5103
    %7014 = vmatpush1.msra.mxu0 %v5102
    %7015 = vmatprep.subr.mxu0 %v5107
    %7016 = vmatpush1.msra.mxu0 %v5106
    %7017 = vmatprep.subr.mxu0 %v5111
    %7018 = vmatpush1.msra.mxu0 %v5110
    %7019 = vmatprep.subr.mxu0 %v5115
    %7020 = vmatpush1.msra.mxu0 %v5114
    %7021 = vmatprep.subr.mxu0 %v5119
    %7022 = vmatpush1.msra.mxu0 %v5118
    %7023 = vmatprep.subr.mxu0 %v5123
    %7024 = vmatpush1.msra.mxu0 %v5122
    %7025 = vmatprep.subr.mxu0 %v5127
    %7026 = vmatpush1.msra.mxu0 %v5126
    %7027 = vmatprep.subr.mxu0 %v5131
    %7028 = vmatpush1.msra.mxu0 %v5130
    %7029 = vmatprep.subr.mxu0 %v5135
    %7030 = vmatpush1.msra.mxu0 %v5134
    %7031 = vmatprep.subr.mxu0 %v5139
    %7032 = vmatpush1.msra.mxu0 %v5138
    %7033 = vmatprep.subr.mxu0 %v5143
    %7034 = vmatpush1.msra.mxu0 %v5142
    %7035 = vmatprep.subr.mxu0 %v5147
    %7036 = vmatpush1.msra.mxu0 %v5146
    %7037 = vmatprep.subr.mxu0 %v5151
    %7038 = vmatpush1.msra.mxu0 %v5150
    %7039 = vmatprep.subr.mxu0 %v5155
    %7040 = vmatpush1.msra.mxu0 %v5154
    %7041 = vmatprep.subr.mxu0 %v5159
    %7042 = vmatpush1.msra.mxu0 %v5158
    %7043 = vmatprep.subr.mxu0 %v5163
    %7044 = vmatpush1.msra.mxu0 %v5162
    %7045 = vmatprep.subr.mxu0 0.0
    %7046 = vmatpush1.msra.mxu0 0.0
    %7047 = vmatprep.subr.mxu0 0.0
    %7048 = vmatpush1.msra.mxu0 0.0
    %7049 = vmatprep.subr.mxu0 0.0
    %7050 = vmatpush1.msra.mxu0 0.0
    %7051 = vmatprep.subr.mxu0 0.0
    %7052 = vmatpush1.msra.mxu0 0.0
    %7053 = vmatprep.subr.mxu0 0.0
    %7054 = vmatpush1.msra.mxu0 0.0
    %7055 = vmatprep.subr.mxu0 0.0
    %7056 = vmatpush1.msra.mxu0 0.0
    %7057 = vmatprep.subr.mxu0 0.0
    %7058 = vmatpush1.msra.mxu0 0.0
    %7059 = vmatprep.subr.mxu0 0.0
    %7060 = vmatpush1.msra.mxu0 0.0
    %7061 = vmatprep.subr.mxu0 0.0
    %7062 = vmatpush1.msra.mxu0 0.0
    %7063 = vmatprep.subr.mxu0 0.0
    %7064 = vmatpush1.msra.mxu0 0.0
    %7065 = vmatprep.subr.mxu0 0.0
    %7066 = vmatpush1.msra.mxu0 0.0
    %7067 = vmatprep.subr.mxu0 0.0
    %7068 = vmatpush1.msra.mxu0 0.0
    %7069 = vmatprep.subr.mxu0 0.0
    %7070 = vmatpush1.msra.mxu0 0.0
    %7071 = vmatprep.subr.mxu0 0.0
    %7072 = vmatpush1.msra.mxu0 0.0
    %7073 = vmatprep.subr.mxu0 0.0
    %7074 = vmatpush1.msra.mxu0 0.0
    %7075 = vmatprep.subr.mxu0 0.0
    %7076 = vmatpush1.msra.mxu0 0.0
    %7077 = vmatprep.mubr.f32.mxu0 0.0
    %7078 = vmatmul.mubr.f32.gmra.mrb[0].mxu0 %v6765
    %v7079 = vpop.f32.mrb[0].mxu0
    %v7080 = vadd.f32 %v6940, %v7079
    %v7081 = vpop.f32.mrb[0].mxu0
    %v7082 = vadd.f32 %v6941, %v7081
    %7083 = vdwg.mxu0
    %v7084 = vxor.u32 %v7009, 2147483648
    %v7085 = vxor.u32 %v7011, 2147483648
    %v7086 = vxor.u32 %v7080, 2147483648
    %v7087 = vmul.f32 %v7084, 1.442695
    %v7088 = vpow.pop %v7087
    %v7089 = vmul.f32 %v7085, 1.442695
    %v7090 = vpow.pop %v7089
    %v7091 = vmul.f32 %v7086, 1.442695
    %v7092 = vpow.pop %v7091
    %v7093 = vadd.f32 %v7088, 1.0
    %v7094 = vadd.f32 %v7090, 1.0
    %v7095 = vadd.f32 %v7092, 1.0
    %v7096 = vrcp.pop %v7093
    %v7097 = vmul.f32 1.0, %v7096
    %v7098 = vrcp.pop %v7094
    %v7099 = vmul.f32 1.0, %v7098
    %v7100 = vrcp.pop %v7095
    %v7101 = vmul.f32 1.0, %v7100
    %v7102 = vtanh.pop %v7082
    %v7103 = vmul.f32 %v7099, %v6763
    %v7104 = vmul.f32 %v7097, %v7102
    %v7105 = vadd.f32 %v7103, %v7104
    %v7106 = vtanh.pop %v7105
    %v7107 = vmul.f32 %v7101, %v7106
    %s7108 = scalar_lea.vmem [#allocation10], 64
    %v7109 = vld [vmem:[%s7108] sm:$0xff]
    %v7110 = vld [vmem:[%s7108 + $0x8] sm:$0xff]
    %v7111 = vld [vmem:[%s7108 + $0x10] sm:$0xff]
    %v7112 = vld [vmem:[%s7108 + $0x18] sm:$0xff]
    %7113 = vmatprep.subr.mxu0 %v5165
    %7114 = vmatpush1.msra.mxu0 %v5164
    %7115 = vmatprep.subr.mxu0 %v5169
    %7116 = vmatpush1.msra.mxu0 %v5168
    %7117 = vmatprep.subr.mxu0 %v5173
    %7118 = vmatpush1.msra.mxu0 %v5172
    %7119 = vmatprep.subr.mxu0 %v5177
    %7120 = vmatpush1.msra.mxu0 %v5176
    %7121 = vmatprep.subr.mxu0 %v5181
    %7122 = vmatpush1.msra.mxu0 %v5180
    %7123 = vmatprep.subr.mxu0 %v5185
    %7124 = vmatpush1.msra.mxu0 %v5184
    %7125 = vmatprep.subr.mxu0 %v5189
    %7126 = vmatpush1.msra.mxu0 %v5188
    %7127 = vmatprep.subr.mxu0 %v5193
    %7128 = vmatpush1.msra.mxu0 %v5192
    %7129 = vmatprep.subr.mxu0 %v5197
    %7130 = vmatpush1.msra.mxu0 %v5196
    %7131 = vmatprep.subr.mxu0 %v5201
    %7132 = vmatpush1.msra.mxu0 %v5200
    %7133 = vmatprep.subr.mxu0 %v5205
    %7134 = vmatpush1.msra.mxu0 %v5204
    %7135 = vmatprep.subr.mxu0 %v5209
    %7136 = vmatpush1.msra.mxu0 %v5208
    %7137 = vmatprep.subr.mxu0 %v5213
    %7138 = vmatpush1.msra.mxu0 %v5212
    %7139 = vmatprep.subr.mxu0 %v5217
    %7140 = vmatpush1.msra.mxu0 %v5216
    %7141 = vmatprep.subr.mxu0 %v5221
    %7142 = vmatpush1.msra.mxu0 %v5220
    %7143 = vmatprep.subr.mxu0 %v5225
    %7144 = vmatpush1.msra.mxu0 %v5224
    %7145 = vmatprep.subr.mxu0 0.0
    %7146 = vmatpush1.msra.mxu0 0.0
    %7147 = vmatprep.subr.mxu0 0.0
    %7148 = vmatpush1.msra.mxu0 0.0
    %7149 = vmatprep.subr.mxu0 0.0
    %7150 = vmatpush1.msra.mxu0 0.0
    %7151 = vmatprep.subr.mxu0 0.0
    %7152 = vmatpush1.msra.mxu0 0.0
    %7153 = vmatprep.subr.mxu0 0.0
    %7154 = vmatpush1.msra.mxu0 0.0
    %7155 = vmatprep.subr.mxu0 0.0
    %7156 = vmatpush1.msra.mxu0 0.0
    %7157 = vmatprep.subr.mxu0 0.0
    %7158 = vmatpush1.msra.mxu0 0.0
    %7159 = vmatprep.subr.mxu0 0.0
    %7160 = vmatpush1.msra.mxu0 0.0
    %7161 = vmatprep.subr.mxu0 0.0
    %7162 = vmatpush1.msra.mxu0 0.0
    %7163 = vmatprep.subr.mxu0 0.0
    %7164 = vmatpush1.msra.mxu0 0.0
    %7165 = vmatprep.subr.mxu0 0.0
    %7166 = vmatpush1.msra.mxu0 0.0
    %7167 = vmatprep.subr.mxu0 0.0
    %7168 = vmatpush1.msra.mxu0 0.0
    %7169 = vmatprep.subr.mxu0 0.0
    %7170 = vmatpush1.msra.mxu0 0.0
    %7171 = vmatprep.subr.mxu0 0.0
    %7172 = vmatpush1.msra.mxu0 0.0
    %7173 = vmatprep.subr.mxu0 0.0
    %7174 = vmatpush1.msra.mxu0 0.0
    %7175 = vmatprep.subr.mxu0 0.0
    %7176 = vmatpush1.msra.mxu0 0.0
    %7177 = vmatprep.mubr.f32.mxu0 0.0
    %7178 = vmatmul.mubr.f32.gmra.mrb[0].mxu0 %v6936
    %v7179 = vpop.f32.mrb[0].mxu0
    %v7180 = vadd.f32 %v7109, %v7179
    %v7181 = vpop.f32.mrb[0].mxu0
    %v7182 = vadd.f32 %v7110, %v7181
    %7183 = vdwg.mxu0
    %7184 = vmatprep.subr.mxu0 %v5167
    %7185 = vmatpush1.msra.mxu0 %v5166
    %7186 = vmatprep.subr.mxu0 %v5171
    %7187 = vmatpush1.msra.mxu0 %v5170
    %7188 = vmatprep.subr.mxu0 %v5175
    %7189 = vmatpush1.msra.mxu0 %v5174
    %7190 = vmatprep.subr.mxu0 %v5179
    %7191 = vmatpush1.msra.mxu0 %v5178
    %7192 = vmatprep.subr.mxu0 %v5183
    %7193 = vmatpush1.msra.mxu0 %v5182
    %7194 = vmatprep.subr.mxu0 %v5187
    %7195 = vmatpush1.msra.mxu0 %v5186
    %7196 = vmatprep.subr.mxu0 %v5191
    %7197 = vmatpush1.msra.mxu0 %v5190
    %7198 = vmatprep.subr.mxu0 %v5195
    %7199 = vmatpush1.msra.mxu0 %v5194
    %7200 = vmatprep.subr.mxu0 %v5199
    %7201 = vmatpush1.msra.mxu0 %v5198
    %7202 = vmatprep.subr.mxu0 %v5203
    %7203 = vmatpush1.msra.mxu0 %v5202
    %7204 = vmatprep.subr.mxu0 %v5207
    %7205 = vmatpush1.msra.mxu0 %v5206
    %7206 = vmatprep.subr.mxu0 %v5211
    %7207 = vmatpush1.msra.mxu0 %v5210
    %7208 = vmatprep.subr.mxu0 %v5215
    %7209 = vmatpush1.msra.mxu0 %v5214
    %7210 = vmatprep.subr.mxu0 %v5219
    %7211 = vmatpush1.msra.mxu0 %v5218
    %7212 = vmatprep.subr.mxu0 %v5223
    %7213 = vmatpush1.msra.mxu0 %v5222
    %7214 = vmatprep.subr.mxu0 %v5227
    %7215 = vmatpush1.msra.mxu0 %v5226
    %7216 = vmatprep.subr.mxu0 0.0
    %7217 = vmatpush1.msra.mxu0 0.0
    %7218 = vmatprep.subr.mxu0 0.0
    %7219 = vmatpush1.msra.mxu0 0.0
    %7220 = vmatprep.subr.mxu0 0.0
    %7221 = vmatpush1.msra.mxu0 0.0
    %7222 = vmatprep.subr.mxu0 0.0
    %7223 = vmatpush1.msra.mxu0 0.0
    %7224 = vmatprep.subr.mxu0 0.0
    %7225 = vmatpush1.msra.mxu0 0.0
    %7226 = vmatprep.subr.mxu0 0.0
    %7227 = vmatpush1.msra.mxu0 0.0
    %7228 = vmatprep.subr.mxu0 0.0
    %7229 = vmatpush1.msra.mxu0 0.0
    %7230 = vmatprep.subr.mxu0 0.0
    %7231 = vmatpush1.msra.mxu0 0.0
    %7232 = vmatprep.subr.mxu0 0.0
    %7233 = vmatpush1.msra.mxu0 0.0
    %7234 = vmatprep.subr.mxu0 0.0
    %7235 = vmatpush1.msra.mxu0 0.0
    %7236 = vmatprep.subr.mxu0 0.0
    %7237 = vmatpush1.msra.mxu0 0.0
    %7238 = vmatprep.subr.mxu0 0.0
    %7239 = vmatpush1.msra.mxu0 0.0
    %7240 = vmatprep.subr.mxu0 0.0
    %7241 = vmatpush1.msra.mxu0 0.0
    %7242 = vmatprep.subr.mxu0 0.0
    %7243 = vmatpush1.msra.mxu0 0.0
    %7244 = vmatprep.subr.mxu0 0.0
    %7245 = vmatpush1.msra.mxu0 0.0
    %7246 = vmatprep.subr.mxu0 0.0
    %7247 = vmatpush1.msra.mxu0 0.0
    %7248 = vmatprep.mubr.f32.mxu0 0.0
    %7249 = vmatmul.mubr.f32.gmra.mrb[0].mxu0 %v6936
    %v7250 = vpop.f32.mrb[0].mxu0
    %v7251 = vadd.f32 %v7111, %v7250
    %v7252 = vpop.f32.mrb[0].mxu0
    %v7253 = vadd.f32 %v7112, %v7252
    %7254 = vdwg.mxu0
    %v7255 = vxor.u32 %v7180, 2147483648
    %v7256 = vxor.u32 %v7182, 2147483648
    %v7257 = vxor.u32 %v7251, 2147483648
    %v7258 = vmul.f32 %v7255, 1.442695
    %v7259 = vpow.pop %v7258
    %v7260 = vmul.f32 %v7256, 1.442695
    %v7261 = vpow.pop %v7260
    %v7262 = vmul.f32 %v7257, 1.442695
    %v7263 = vpow.pop %v7262
    %v7264 = vadd.f32 %v7259, 1.0
    %v7265 = vadd.f32 %v7261, 1.0
    %v7266 = vadd.f32 %v7263, 1.0
    %v7267 = vrcp.pop %v7264
    %v7268 = vmul.f32 1.0, %v7267
    %v7269 = vrcp.pop %v7265
    %v7270 = vmul.f32 1.0, %v7269
    %v7271 = vrcp.pop %v7266
    %v7272 = vmul.f32 1.0, %v7271
    %v7273 = vtanh.pop %v7253
    %v7274 = vmul.f32 %v7270, %v6934
    %v7275 = vmul.f32 %v7268, %v7273
    %v7276 = vadd.f32 %v7274, %v7275
    %v7277 = vtanh.pop %v7276
    %v7278 = vmul.f32 %v7272, %v7277
    %s7279 = scalar_lea.vmem [#allocation9], 192
    %v7280 = vld [vmem:[%s7279] sm:$0xff]
    %v7281 = vld [vmem:[%s7279 + $0x8] sm:$0xff]
    %v7282 = vld [vmem:[%s7279 + $0x10] sm:$0xff]
    %v7283 = vld [vmem:[%s7279 + $0x18] sm:$0xff]
    %7284 = vmatprep.subr.mxu0 %v5101
    %7285 = vmatpush1.msra.mxu0 %v5100
    %7286 = vmatprep.subr.mxu0 %v5105
    %7287 = vmatpush1.msra.mxu0 %v5104
    %7288 = vmatprep.subr.mxu0 %v5109
    %7289 = vmatpush1.msra.mxu0 %v5108
    %7290 = vmatprep.subr.mxu0 %v5113
    %7291 = vmatpush1.msra.mxu0 %v5112
    %7292 = vmatprep.subr.mxu0 %v5117
    %7293 = vmatpush1.msra.mxu0 %v5116
    %7294 = vmatprep.subr.mxu0 %v5121
    %7295 = vmatpush1.msra.mxu0 %v5120
    %7296 = vmatprep.subr.mxu0 %v5125
    %7297 = vmatpush1.msra.mxu0 %v5124
    %7298 = vmatprep.subr.mxu0 %v5129
    %7299 = vmatpush1.msra.mxu0 %v5128
    %7300 = vmatprep.subr.mxu0 %v5133
    %7301 = vmatpush1.msra.mxu0 %v5132
    %7302 = vmatprep.subr.mxu0 %v5137
    %7303 = vmatpush1.msra.mxu0 %v5136
    %7304 = vmatprep.subr.mxu0 %v5141
    %7305 = vmatpush1.msra.mxu0 %v5140
    %7306 = vmatprep.subr.mxu0 %v5145
    %7307 = vmatpush1.msra.mxu0 %v5144
    %7308 = vmatprep.subr.mxu0 %v5149
    %7309 = vmatpush1.msra.mxu0 %v5148
    %7310 = vmatprep.subr.mxu0 %v5153
    %7311 = vmatpush1.msra.mxu0 %v5152
    %7312 = vmatprep.subr.mxu0 %v5157
    %7313 = vmatpush1.msra.mxu0 %v5156
    %7314 = vmatprep.subr.mxu0 %v5161
    %7315 = vmatpush1.msra.mxu0 %v5160
    %7316 = vmatprep.subr.mxu0 0.0
    %7317 = vmatpush1.msra.mxu0 0.0
    %7318 = vmatprep.subr.mxu0 0.0
    %7319 = vmatpush1.msra.mxu0 0.0
    %7320 = vmatprep.subr.mxu0 0.0
    %7321 = vmatpush1.msra.mxu0 0.0
    %7322 = vmatprep.subr.mxu0 0.0
    %7323 = vmatpush1.msra.mxu0 0.0
    %7324 = vmatprep.subr.mxu0 0.0
    %7325 = vmatpush1.msra.mxu0 0.0
    %7326 = vmatprep.subr.mxu0 0.0
    %7327 = vmatpush1.msra.mxu0 0.0
    %7328 = vmatprep.subr.mxu0 0.0
    %7329 = vmatpush1.msra.mxu0 0.0
    %7330 = vmatprep.subr.mxu0 0.0
    %7331 = vmatpush1.msra.mxu0 0.0
    %7332 = vmatprep.subr.mxu0 0.0
    %7333 = vmatpush1.msra.mxu0 0.0
    %7334 = vmatprep.subr.mxu0 0.0
    %7335 = vmatpush1.msra.mxu0 0.0
    %7336 = vmatprep.subr.mxu0 0.0
    %7337 = vmatpush1.msra.mxu0 0.0
    %7338 = vmatprep.subr.mxu0 0.0
    %7339 = vmatpush1.msra.mxu0 0.0
    %7340 = vmatprep.subr.mxu0 0.0
    %7341 = vmatpush1.msra.mxu0 0.0
    %7342 = vmatprep.subr.mxu0 0.0
    %7343 = vmatpush1.msra.mxu0 0.0
    %7344 = vmatprep.subr.mxu0 0.0
    %7345 = vmatpush1.msra.mxu0 0.0
    %7346 = vmatprep.subr.mxu0 0.0
    %7347 = vmatpush1.msra.mxu0 0.0
    %7348 = vmatprep.mubr.f32.mxu0 0.0
    %7349 = vmatmul.mubr.f32.gmra.mrb[0].mxu0 %v7107
    %v7350 = vpop.f32.mrb[0].mxu0
    %v7351 = vadd.f32 %v7280, %v7350
    %v7352 = vpop.f32.mrb[0].mxu0
    %v7353 = vadd.f32 %v7281, %v7352
    %7354 = vdwg.mxu0
    %7355 = vmatprep.subr.mxu0 %v5103
    %7356 = vmatpush1.msra.mxu0 %v5102
    %7357 = vmatprep.subr.mxu0 %v5107
    %7358 = vmatpush1.msra.mxu0 %v5106
    %7359 = vmatprep.subr.mxu0 %v5111
    %7360 = vmatpush1.msra.mxu0 %v5110
    %7361 = vmatprep.subr.mxu0 %v5115
    %7362 = vmatpush1.msra.mxu0 %v5114
    %7363 = vmatprep.subr.mxu0 %v5119
    %7364 = vmatpush1.msra.mxu0 %v5118
    %7365 = vmatprep.subr.mxu0 %v5123
    %7366 = vmatpush1.msra.mxu0 %v5122
    %7367 = vmatprep.subr.mxu0 %v5127
    %7368 = vmatpush1.msra.mxu0 %v5126
    %7369 = vmatprep.subr.mxu0 %v5131
    %7370 = vmatpush1.msra.mxu0 %v5130
    %7371 = vmatprep.subr.mxu0 %v5135
    %7372 = vmatpush1.msra.mxu0 %v5134
    %7373 = vmatprep.subr.mxu0 %v5139
    %7374 = vmatpush1.msra.mxu0 %v5138
    %7375 = vmatprep.subr.mxu0 %v5143
    %7376 = vmatpush1.msra.mxu0 %v5142
    %7377 = vmatprep.subr.mxu0 %v5147
    %7378 = vmatpush1.msra.mxu0 %v5146
    %7379 = vmatprep.subr.mxu0 %v5151
    %7380 = vmatpush1.msra.mxu0 %v5150
    %7381 = vmatprep.subr.mxu0 %v5155
    %7382 = vmatpush1.msra.mxu0 %v5154
    %7383 = vmatprep.subr.mxu0 %v5159
    %7384 = vmatpush1.msra.mxu0 %v5158
    %7385 = vmatprep.subr.mxu0 %v5163
    %7386 = vmatpush1.msra.mxu0 %v5162
    %7387 = vmatprep.subr.mxu0 0.0
    %7388 = vmatpush1.msra.mxu0 0.0
    %7389 = vmatprep.subr.mxu0 0.0
    %7390 = vmatpush1.msra.mxu0 0.0
    %7391 = vmatprep.subr.mxu0 0.0
    %7392 = vmatpush1.msra.mxu0 0.0
    %7393 = vmatprep.subr.mxu0 0.0
    %7394 = vmatpush1.msra.mxu0 0.0
    %7395 = vmatprep.subr.mxu0 0.0
    %7396 = vmatpush1.msra.mxu0 0.0
    %7397 = vmatprep.subr.mxu0 0.0
    %7398 = vmatpush1.msra.mxu0 0.0
    %7399 = vmatprep.subr.mxu0 0.0
    %7400 = vmatpush1.msra.mxu0 0.0
    %7401 = vmatprep.subr.mxu0 0.0
    %7402 = vmatpush1.msra.mxu0 0.0
    %7403 = vmatprep.subr.mxu0 0.0
    %7404 = vmatpush1.msra.mxu0 0.0
    %7405 = vmatprep.subr.mxu0 0.0
    %7406 = vmatpush1.msra.mxu0 0.0
    %7407 = vmatprep.subr.mxu0 0.0
    %7408 = vmatpush1.msra.mxu0 0.0
    %7409 = vmatprep.subr.mxu0 0.0
    %7410 = vmatpush1.msra.mxu0 0.0
    %7411 = vmatprep.subr.mxu0 0.0
    %7412 = vmatpush1.msra.mxu0 0.0
    %7413 = vmatprep.subr.mxu0 0.0
    %7414 = vmatpush1.msra.mxu0 0.0
    %7415 = vmatprep.subr.mxu0 0.0
    %7416 = vmatpush1.msra.mxu0 0.0
    %7417 = vmatprep.subr.mxu0 0.0
    %7418 = vmatpush1.msra.mxu0 0.0
    %7419 = vmatprep.mubr.f32.mxu0 0.0
    %7420 = vmatmul.mubr.f32.gmra.mrb[0].mxu0 %v7107
    %v7421 = vpop.f32.mrb[0].mxu0
    %v7422 = vadd.f32 %v7282, %v7421
    %v7423 = vpop.f32.mrb[0].mxu0
    %v7424 = vadd.f32 %v7283, %v7423
    %7425 = vdwg.mxu0
    %v7426 = vxor.u32 %v7351, 2147483648
    %v7427 = vxor.u32 %v7353, 2147483648
    %v7428 = vxor.u32 %v7422, 2147483648
    %v7429 = vmul.f32 %v7426, 1.442695
    %v7430 = vpow.pop %v7429
    %v7431 = vmul.f32 %v7427, 1.442695
    %v7432 = vpow.pop %v7431
    %v7433 = vmul.f32 %v7428, 1.442695
    %v7434 = vpow.pop %v7433
    %v7435 = vadd.f32 %v7430, 1.0
    %v7436 = vadd.f32 %v7432, 1.0
    %v7437 = vadd.f32 %v7434, 1.0
    %v7438 = vrcp.pop %v7435
    %v7439 = vmul.f32 1.0, %v7438
    %v7440 = vrcp.pop %v7436
    %v7441 = vmul.f32 1.0, %v7440
    %v7442 = vrcp.pop %v7437
    %v7443 = vmul.f32 1.0, %v7442
    %v7444 = vtanh.pop %v7424
    %v7445 = vmul.f32 %v7441, %v7105
    %v7446 = vmul.f32 %v7439, %v7444
    %v7447 = vadd.f32 %v7445, %v7446
    %v7448 = vtanh.pop %v7447
    %v7449 = vmul.f32 %v7443, %v7448
    %s7450 = scalar_lea.vmem [#allocation10], 32
    %v7451 = vld [vmem:[%s7450] sm:$0xff]
    %v7452 = vld [vmem:[%s7450 + $0x8] sm:$0xff]
    %v7453 = vld [vmem:[%s7450 + $0x10] sm:$0xff]
    %v7454 = vld [vmem:[%s7450 + $0x18] sm:$0xff]
    %7455 = vmatprep.subr.mxu0 %v5165
    %7456 = vmatpush1.msra.mxu0 %v5164
    %7457 = vmatprep.subr.mxu0 %v5169
    %7458 = vmatpush1.msra.mxu0 %v5168
    %7459 = vmatprep.subr.mxu0 %v5173
    %7460 = vmatpush1.msra.mxu0 %v5172
    %7461 = vmatprep.subr.mxu0 %v5177
    %7462 = vmatpush1.msra.mxu0 %v5176
    %7463 = vmatprep.subr.mxu0 %v5181
    %7464 = vmatpush1.msra.mxu0 %v5180
    %7465 = vmatprep.subr.mxu0 %v5185
    %7466 = vmatpush1.msra.mxu0 %v5184
    %7467 = vmatprep.subr.mxu0 %v5189
    %7468 = vmatpush1.msra.mxu0 %v5188
    %7469 = vmatprep.subr.mxu0 %v5193
    %7470 = vmatpush1.msra.mxu0 %v5192
    %7471 = vmatprep.subr.mxu0 %v5197
    %7472 = vmatpush1.msra.mxu0 %v5196
    %7473 = vmatprep.subr.mxu0 %v5201
    %7474 = vmatpush1.msra.mxu0 %v5200
    %7475 = vmatprep.subr.mxu0 %v5205
    %7476 = vmatpush1.msra.mxu0 %v5204
    %7477 = vmatprep.subr.mxu0 %v5209
    %7478 = vmatpush1.msra.mxu0 %v5208
    %7479 = vmatprep.subr.mxu0 %v5213
    %7480 = vmatpush1.msra.mxu0 %v5212
    %7481 = vmatprep.subr.mxu0 %v5217
    %7482 = vmatpush1.msra.mxu0 %v5216
    %7483 = vmatprep.subr.mxu0 %v5221
    %7484 = vmatpush1.msra.mxu0 %v5220
    %7485 = vmatprep.subr.mxu0 %v5225
    %7486 = vmatpush1.msra.mxu0 %v5224
    %7487 = vmatprep.subr.mxu0 0.0
    %7488 = vmatpush1.msra.mxu0 0.0
    %7489 = vmatprep.subr.mxu0 0.0
    %7490 = vmatpush1.msra.mxu0 0.0
    %7491 = vmatprep.subr.mxu0 0.0
    %7492 = vmatpush1.msra.mxu0 0.0
    %7493 = vmatprep.subr.mxu0 0.0
    %7494 = vmatpush1.msra.mxu0 0.0
    %7495 = vmatprep.subr.mxu0 0.0
    %7496 = vmatpush1.msra.mxu0 0.0
    %7497 = vmatprep.subr.mxu0 0.0
    %7498 = vmatpush1.msra.mxu0 0.0
    %7499 = vmatprep.subr.mxu0 0.0
    %7500 = vmatpush1.msra.mxu0 0.0
    %7501 = vmatprep.subr.mxu0 0.0
    %7502 = vmatpush1.msra.mxu0 0.0
    %7503 = vmatprep.subr.mxu0 0.0
    %7504 = vmatpush1.msra.mxu0 0.0
    %7505 = vmatprep.subr.mxu0 0.0
    %7506 = vmatpush1.msra.mxu0 0.0
    %7507 = vmatprep.subr.mxu0 0.0
    %7508 = vmatpush1.msra.mxu0 0.0
    %7509 = vmatprep.subr.mxu0 0.0
    %7510 = vmatpush1.msra.mxu0 0.0
    %7511 = vmatprep.subr.mxu0 0.0
    %7512 = vmatpush1.msra.mxu0 0.0
    %7513 = vmatprep.subr.mxu0 0.0
    %7514 = vmatpush1.msra.mxu0 0.0
    %7515 = vmatprep.subr.mxu0 0.0
    %7516 = vmatpush1.msra.mxu0 0.0
    %7517 = vmatprep.subr.mxu0 0.0
    %7518 = vmatpush1.msra.mxu0 0.0
    %7519 = vmatprep.mubr.f32.mxu0 0.0
    %7520 = vmatmul.mubr.f32.gmra.mrb[0].mxu0 %v7278
    %v7521 = vpop.f32.mrb[0].mxu0
    %v7522 = vadd.f32 %v7451, %v7521
    %v7523 = vpop.f32.mrb[0].mxu0
    %v7524 = vadd.f32 %v7452, %v7523
    %7525 = vdwg.mxu0
    %7526 = vmatprep.subr.mxu0 %v5167
    %7527 = vmatpush1.msra.mxu0 %v5166
    %7528 = vmatprep.subr.mxu0 %v5171
    %7529 = vmatpush1.msra.mxu0 %v5170
    %7530 = vmatprep.subr.mxu0 %v5175
    %7531 = vmatpush1.msra.mxu0 %v5174
    %7532 = vmatprep.subr.mxu0 %v5179
    %7533 = vmatpush1.msra.mxu0 %v5178
    %7534 = vmatprep.subr.mxu0 %v5183
    %7535 = vmatpush1.msra.mxu0 %v5182
    %7536 = vmatprep.subr.mxu0 %v5187
    %7537 = vmatpush1.msra.mxu0 %v5186
    %7538 = vmatprep.subr.mxu0 %v5191
    %7539 = vmatpush1.msra.mxu0 %v5190
    %7540 = vmatprep.subr.mxu0 %v5195
    %7541 = vmatpush1.msra.mxu0 %v5194
    %7542 = vmatprep.subr.mxu0 %v5199
    %7543 = vmatpush1.msra.mxu0 %v5198
    %7544 = vmatprep.subr.mxu0 %v5203
    %7545 = vmatpush1.msra.mxu0 %v5202
    %7546 = vmatprep.subr.mxu0 %v5207
    %7547 = vmatpush1.msra.mxu0 %v5206
    %7548 = vmatprep.subr.mxu0 %v5211
    %7549 = vmatpush1.msra.mxu0 %v5210
    %7550 = vmatprep.subr.mxu0 %v5215
    %7551 = vmatpush1.msra.mxu0 %v5214
    %7552 = vmatprep.subr.mxu0 %v5219
    %7553 = vmatpush1.msra.mxu0 %v5218
    %7554 = vmatprep.subr.mxu0 %v5223
    %7555 = vmatpush1.msra.mxu0 %v5222
    %7556 = vmatprep.subr.mxu0 %v5227
    %7557 = vmatpush1.msra.mxu0 %v5226
    %7558 = vmatprep.subr.mxu0 0.0
    %7559 = vmatpush1.msra.mxu0 0.0
    %7560 = vmatprep.subr.mxu0 0.0
    %7561 = vmatpush1.msra.mxu0 0.0
    %7562 = vmatprep.subr.mxu0 0.0
    %7563 = vmatpush1.msra.mxu0 0.0
    %7564 = vmatprep.subr.mxu0 0.0
    %7565 = vmatpush1.msra.mxu0 0.0
    %7566 = vmatprep.subr.mxu0 0.0
    %7567 = vmatpush1.msra.mxu0 0.0
    %7568 = vmatprep.subr.mxu0 0.0
    %7569 = vmatpush1.msra.mxu0 0.0
    %7570 = vmatprep.subr.mxu0 0.0
    %7571 = vmatpush1.msra.mxu0 0.0
    %7572 = vmatprep.subr.mxu0 0.0
    %7573 = vmatpush1.msra.mxu0 0.0
    %7574 = vmatprep.subr.mxu0 0.0
    %7575 = vmatpush1.msra.mxu0 0.0
    %7576 = vmatprep.subr.mxu0 0.0
    %7577 = vmatpush1.msra.mxu0 0.0
    %7578 = vmatprep.subr.mxu0 0.0
    %7579 = vmatpush1.msra.mxu0 0.0
    %7580 = vmatprep.subr.mxu0 0.0
    %7581 = vmatpush1.msra.mxu0 0.0
    %7582 = vmatprep.subr.mxu0 0.0
    %7583 = vmatpush1.msra.mxu0 0.0
    %7584 = vmatprep.subr.mxu0 0.0
    %7585 = vmatpush1.msra.mxu0 0.0
    %7586 = vmatprep.subr.mxu0 0.0
    %7587 = vmatpush1.msra.mxu0 0.0
    %7588 = vmatprep.subr.mxu0 0.0
    %7589 = vmatpush1.msra.mxu0 0.0
    %7590 = vmatprep.mubr.f32.mxu0 0.0
    %7591 = vmatmul.mubr.f32.gmra.mrb[0].mxu0 %v7278
    %v7592 = vpop.f32.mrb[0].mxu0
    %v7593 = vadd.f32 %v7453, %v7592
    %v7594 = vpop.f32.mrb[0].mxu0
    %v7595 = vadd.f32 %v7454, %v7594
    %7596 = vdwg.mxu0
    %v7597 = vxor.u32 %v7522, 2147483648
    %v7598 = vxor.u32 %v7524, 2147483648
    %v7599 = vxor.u32 %v7593, 2147483648
    %v7600 = vmul.f32 %v7597, 1.442695
    %v7601 = vpow.pop %v7600
    %v7602 = vmul.f32 %v7598, 1.442695
    %v7603 = vpow.pop %v7602
    %v7604 = vmul.f32 %v7599, 1.442695
    %v7605 = vpow.pop %v7604
    %v7606 = vadd.f32 %v7601, 1.0
    %v7607 = vadd.f32 %v7603, 1.0
    %v7608 = vadd.f32 %v7605, 1.0
    %v7609 = vrcp.pop %v7606
    %v7610 = vmul.f32 1.0, %v7609
    %v7611 = vrcp.pop %v7607
    %v7612 = vmul.f32 1.0, %v7611
    %v7613 = vrcp.pop %v7608
    %v7614 = vmul.f32 1.0, %v7613
    %v7615 = vtanh.pop %v7595
    %v7616 = vmul.f32 %v7612, %v7276
    %v7617 = vmul.f32 %v7610, %v7615
    %v7618 = vadd.f32 %v7616, %v7617
    %v7619 = vtanh.pop %v7618
    %v7620 = vmul.f32 %v7614, %v7619
    %s7621 = scalar_lea.vmem [#allocation9], 224
    %v7622 = vld [vmem:[%s7621] sm:$0xff]
    %v7623 = vld [vmem:[%s7621 + $0x8] sm:$0xff]
    %v7624 = vld [vmem:[%s7621 + $0x10] sm:$0xff]
    %v7625 = vld [vmem:[%s7621 + $0x18] sm:$0xff]
    %7626 = vmatprep.subr.mxu0 %v5101
    %7627 = vmatpush1.msra.mxu0 %v5100
    %7628 = vmatprep.subr.mxu0 %v5105
    %7629 = vmatpush1.msra.mxu0 %v5104
    %7630 = vmatprep.subr.mxu0 %v5109
    %7631 = vmatpush1.msra.mxu0 %v5108
    %7632 = vmatprep.subr.mxu0 %v5113
    %7633 = vmatpush1.msra.mxu0 %v5112
    %7634 = vmatprep.subr.mxu0 %v5117
    %7635 = vmatpush1.msra.mxu0 %v5116
    %7636 = vmatprep.subr.mxu0 %v5121
    %7637 = vmatpush1.msra.mxu0 %v5120
    %7638 = vmatprep.subr.mxu0 %v5125
    %7639 = vmatpush1.msra.mxu0 %v5124
    %7640 = vmatprep.subr.mxu0 %v5129
    %7641 = vmatpush1.msra.mxu0 %v5128
    %7642 = vmatprep.subr.mxu0 %v5133
    %7643 = vmatpush1.msra.mxu0 %v5132
    %7644 = vmatprep.subr.mxu0 %v5137
    %7645 = vmatpush1.msra.mxu0 %v5136
    %7646 = vmatprep.subr.mxu0 %v5141
    %7647 = vmatpush1.msra.mxu0 %v5140
    %7648 = vmatprep.subr.mxu0 %v5145
    %7649 = vmatpush1.msra.mxu0 %v5144
    %7650 = vmatprep.subr.mxu0 %v5149
    %7651 = vmatpush1.msra.mxu0 %v5148
    %7652 = vmatprep.subr.mxu0 %v5153
    %7653 = vmatpush1.msra.mxu0 %v5152
    %7654 = vmatprep.subr.mxu0 %v5157
    %7655 = vmatpush1.msra.mxu0 %v5156
    %7656 = vmatprep.subr.mxu0 %v5161
    %7657 = vmatpush1.msra.mxu0 %v5160
    %7658 = vmatprep.subr.mxu0 0.0
    %7659 = vmatpush1.msra.mxu0 0.0
    %7660 = vmatprep.subr.mxu0 0.0
    %7661 = vmatpush1.msra.mxu0 0.0
    %7662 = vmatprep.subr.mxu0 0.0
    %7663 = vmatpush1.msra.mxu0 0.0
    %7664 = vmatprep.subr.mxu0 0.0
    %7665 = vmatpush1.msra.mxu0 0.0
    %7666 = vmatprep.subr.mxu0 0.0
    %7667 = vmatpush1.msra.mxu0 0.0
    %7668 = vmatprep.subr.mxu0 0.0
    %7669 = vmatpush1.msra.mxu0 0.0
    %7670 = vmatprep.subr.mxu0 0.0
    %7671 = vmatpush1.msra.mxu0 0.0
    %7672 = vmatprep.subr.mxu0 0.0
    %7673 = vmatpush1.msra.mxu0 0.0
    %7674 = vmatprep.subr.mxu0 0.0
    %7675 = vmatpush1.msra.mxu0 0.0
    %7676 = vmatprep.subr.mxu0 0.0
    %7677 = vmatpush1.msra.mxu0 0.0
    %7678 = vmatprep.subr.mxu0 0.0
    %7679 = vmatpush1.msra.mxu0 0.0
    %7680 = vmatprep.subr.mxu0 0.0
    %7681 = vmatpush1.msra.mxu0 0.0
    %7682 = vmatprep.subr.mxu0 0.0
    %7683 = vmatpush1.msra.mxu0 0.0
    %7684 = vmatprep.subr.mxu0 0.0
    %7685 = vmatpush1.msra.mxu0 0.0
    %7686 = vmatprep.subr.mxu0 0.0
    %7687 = vmatpush1.msra.mxu0 0.0
    %7688 = vmatprep.subr.mxu0 0.0
    %7689 = vmatpush1.msra.mxu0 0.0
    %7690 = vmatprep.mubr.f32.mxu0 0.0
    %7691 = vmatmul.mubr.f32.gmra.mrb[0].mxu0 %v7449
    %v7692 = vpop.f32.mrb[0].mxu0
    %v7693 = vadd.f32 %v7622, %v7692
    %v7694 = vpop.f32.mrb[0].mxu0
    %v7695 = vadd.f32 %v7623, %v7694
    %7696 = vdwg.mxu0
    %7697 = vmatprep.subr.mxu0 %v5103
    %7698 = vmatpush1.msra.mxu0 %v5102
    %7699 = vmatprep.subr.mxu0 %v5107
    %7700 = vmatpush1.msra.mxu0 %v5106
    %7701 = vmatprep.subr.mxu0 %v5111
    %7702 = vmatpush1.msra.mxu0 %v5110
    %7703 = vmatprep.subr.mxu0 %v5115
    %7704 = vmatpush1.msra.mxu0 %v5114
    %7705 = vmatprep.subr.mxu0 %v5119
    %7706 = vmatpush1.msra.mxu0 %v5118
    %7707 = vmatprep.subr.mxu0 %v5123
    %7708 = vmatpush1.msra.mxu0 %v5122
    %7709 = vmatprep.subr.mxu0 %v5127
    %7710 = vmatpush1.msra.mxu0 %v5126
    %7711 = vmatprep.subr.mxu0 %v5131
    %7712 = vmatpush1.msra.mxu0 %v5130
    %7713 = vmatprep.subr.mxu0 %v5135
    %7714 = vmatpush1.msra.mxu0 %v5134
    %7715 = vmatprep.subr.mxu0 %v5139
    %7716 = vmatpush1.msra.mxu0 %v5138
    %7717 = vmatprep.subr.mxu0 %v5143
    %7718 = vmatpush1.msra.mxu0 %v5142
    %7719 = vmatprep.subr.mxu0 %v5147
    %7720 = vmatpush1.msra.mxu0 %v5146
    %7721 = vmatprep.subr.mxu0 %v5151
    %7722 = vmatpush1.msra.mxu0 %v5150
    %7723 = vmatprep.subr.mxu0 %v5155
    %7724 = vmatpush1.msra.mxu0 %v5154
    %7725 = vmatprep.subr.mxu0 %v5159
    %7726 = vmatpush1.msra.mxu0 %v5158
    %7727 = vmatprep.subr.mxu0 %v5163
    %7728 = vmatpush1.msra.mxu0 %v5162
    %7729 = vmatprep.subr.mxu0 0.0
    %7730 = vmatpush1.msra.mxu0 0.0
    %7731 = vmatprep.subr.mxu0 0.0
    %7732 = vmatpush1.msra.mxu0 0.0
    %7733 = vmatprep.subr.mxu0 0.0
    %7734 = vmatpush1.msra.mxu0 0.0
    %7735 = vmatprep.subr.mxu0 0.0
    %7736 = vmatpush1.msra.mxu0 0.0
    %7737 = vmatprep.subr.mxu0 0.0
    %7738 = vmatpush1.msra.mxu0 0.0
    %7739 = vmatprep.subr.mxu0 0.0
    %7740 = vmatpush1.msra.mxu0 0.0
    %7741 = vmatprep.subr.mxu0 0.0
    %7742 = vmatpush1.msra.mxu0 0.0
    %7743 = vmatprep.subr.mxu0 0.0
    %7744 = vmatpush1.msra.mxu0 0.0
    %7745 = vmatprep.subr.mxu0 0.0
    %7746 = vmatpush1.msra.mxu0 0.0
    %7747 = vmatprep.subr.mxu0 0.0
    %7748 = vmatpush1.msra.mxu0 0.0
    %7749 = vmatprep.subr.mxu0 0.0
    %7750 = vmatpush1.msra.mxu0 0.0
    %7751 = vmatprep.subr.mxu0 0.0
    %7752 = vmatpush1.msra.mxu0 0.0
    %7753 = vmatprep.subr.mxu0 0.0
    %7754 = vmatpush1.msra.mxu0 0.0
    %7755 = vmatprep.subr.mxu0 0.0
    %7756 = vmatpush1.msra.mxu0 0.0
    %7757 = vmatprep.subr.mxu0 0.0
    %7758 = vmatpush1.msra.mxu0 0.0
    %7759 = vmatprep.subr.mxu0 0.0
    %7760 = vmatpush1.msra.mxu0 0.0
    %7761 = vmatprep.mubr.f32.mxu0 0.0
    %7762 = vmatmul.mubr.f32.gmra.mrb[0].mxu0 %v7449
    %v7763 = vpop.f32.mrb[0].mxu0
    %v7764 = vadd.f32 %v7624, %v7763
    %v7765 = vpop.f32.mrb[0].mxu0
    %v7766 = vadd.f32 %v7625, %v7765
    %7767 = vdwg.mxu0
    %v7768 = vxor.u32 %v7693, 2147483648
    %v7769 = vxor.u32 %v7695, 2147483648
    %v7770 = vxor.u32 %v7764, 2147483648
    %v7771 = vmul.f32 %v7768, 1.442695
    %v7772 = vpow.pop %v7771
    %v7773 = vmul.f32 %v7769, 1.442695
    %v7774 = vpow.pop %v7773
    %v7775 = vmul.f32 %v7770, 1.442695
    %v7776 = vpow.pop %v7775
    %v7777 = vadd.f32 %v7772, 1.0
    %v7778 = vadd.f32 %v7774, 1.0
    %v7779 = vadd.f32 %v7776, 1.0
    %v7780 = vrcp.pop %v7777
    %v7781 = vmul.f32 1.0, %v7780
    %v7782 = vrcp.pop %v7778
    %v7783 = vmul.f32 1.0, %v7782
    %v7784 = vrcp.pop %v7779
    %v7785 = vmul.f32 1.0, %v7784
    %v7786 = vtanh.pop %v7766
    %v7787 = vmul.f32 %v7783, %v7447
    %v7788 = vmul.f32 %v7781, %v7786
    %v7789 = vadd.f32 %v7787, %v7788
    %v7790 = vtanh.pop %v7789
    %v7791 = vmul.f32 %v7785, %v7790
    %v7792 = vld [vmem:[#allocation10] sm:$0xff]
    %v7793 = vld [vmem:[#allocation10 + $0x8] sm:$0xff]
    %v7794 = vld [vmem:[#allocation10 + $0x10] sm:$0xff]
    %v7795 = vld [vmem:[#allocation10 + $0x18] sm:$0xff]
    %7796 = vmatprep.subr.mxu0 %v5165
    %7797 = vmatpush1.msra.mxu0 %v5164
    %7798 = vmatprep.subr.mxu0 %v5169
    %7799 = vmatpush1.msra.mxu0 %v5168
    %7800 = vmatprep.subr.mxu0 %v5173
    %7801 = vmatpush1.msra.mxu0 %v5172
    %7802 = vmatprep.subr.mxu0 %v5177
    %7803 = vmatpush1.msra.mxu0 %v5176
    %7804 = vmatprep.subr.mxu0 %v5181
    %7805 = vmatpush1.msra.mxu0 %v5180
    %7806 = vmatprep.subr.mxu0 %v5185
    %7807 = vmatpush1.msra.mxu0 %v5184
    %7808 = vmatprep.subr.mxu0 %v5189
    %7809 = vmatpush1.msra.mxu0 %v5188
    %7810 = vmatprep.subr.mxu0 %v5193
    %7811 = vmatpush1.msra.mxu0 %v5192
    %7812 = vmatprep.subr.mxu0 %v5197
    %7813 = vmatpush1.msra.mxu0 %v5196
    %7814 = vmatprep.subr.mxu0 %v5201
    %7815 = vmatpush1.msra.mxu0 %v5200
    %7816 = vmatprep.subr.mxu0 %v5205
    %7817 = vmatpush1.msra.mxu0 %v5204
    %7818 = vmatprep.subr.mxu0 %v5209
    %7819 = vmatpush1.msra.mxu0 %v5208
    %7820 = vmatprep.subr.mxu0 %v5213
    %7821 = vmatpush1.msra.mxu0 %v5212
    %7822 = vmatprep.subr.mxu0 %v5217
    %7823 = vmatpush1.msra.mxu0 %v5216
    %7824 = vmatprep.subr.mxu0 %v5221
    %7825 = vmatpush1.msra.mxu0 %v5220
    %7826 = vmatprep.subr.mxu0 %v5225
    %7827 = vmatpush1.msra.mxu0 %v5224
    %7828 = vmatprep.subr.mxu0 0.0
    %7829 = vmatpush1.msra.mxu0 0.0
    %7830 = vmatprep.subr.mxu0 0.0
    %7831 = vmatpush1.msra.mxu0 0.0
    %7832 = vmatprep.subr.mxu0 0.0
    %7833 = vmatpush1.msra.mxu0 0.0
    %7834 = vmatprep.subr.mxu0 0.0
    %7835 = vmatpush1.msra.mxu0 0.0
    %7836 = vmatprep.subr.mxu0 0.0
    %7837 = vmatpush1.msra.mxu0 0.0
    %7838 = vmatprep.subr.mxu0 0.0
    %7839 = vmatpush1.msra.mxu0 0.0
    %7840 = vmatprep.subr.mxu0 0.0
    %7841 = vmatpush1.msra.mxu0 0.0
    %7842 = vmatprep.subr.mxu0 0.0
    %7843 = vmatpush1.msra.mxu0 0.0
    %7844 = vmatprep.subr.mxu0 0.0
    %7845 = vmatpush1.msra.mxu0 0.0
    %7846 = vmatprep.subr.mxu0 0.0
    %7847 = vmatpush1.msra.mxu0 0.0
    %7848 = vmatprep.subr.mxu0 0.0
    %7849 = vmatpush1.msra.mxu0 0.0
    %7850 = vmatprep.subr.mxu0 0.0
    %7851 = vmatpush1.msra.mxu0 0.0
    %7852 = vmatprep.subr.mxu0 0.0
    %7853 = vmatpush1.msra.mxu0 0.0
    %7854 = vmatprep.subr.mxu0 0.0
    %7855 = vmatpush1.msra.mxu0 0.0
    %7856 = vmatprep.subr.mxu0 0.0
    %7857 = vmatpush1.msra.mxu0 0.0
    %7858 = vmatprep.subr.mxu0 0.0
    %7859 = vmatpush1.msra.mxu0 0.0
    %7860 = vmatprep.mubr.f32.mxu0 0.0
    %7861 = vmatmul.mubr.f32.gmra.mrb[0].mxu0 %v7620
    %v7862 = vpop.f32.mrb[0].mxu0
    %v7863 = vadd.f32 %v7792, %v7862
    %v7864 = vpop.f32.mrb[0].mxu0
    %v7865 = vadd.f32 %v7793, %v7864
    %7866 = vdwg.mxu0
    %7867 = vmatprep.subr.mxu0 %v5167
    %7868 = vmatpush1.msra.mxu0 %v5166
    %7869 = vmatprep.subr.mxu0 %v5171
    %7870 = vmatpush1.msra.mxu0 %v5170
    %7871 = vmatprep.subr.mxu0 %v5175
    %7872 = vmatpush1.msra.mxu0 %v5174
    %7873 = vmatprep.subr.mxu0 %v5179
    %7874 = vmatpush1.msra.mxu0 %v5178
    %7875 = vmatprep.subr.mxu0 %v5183
    %7876 = vmatpush1.msra.mxu0 %v5182
    %7877 = vmatprep.subr.mxu0 %v5187
    %7878 = vmatpush1.msra.mxu0 %v5186
    %7879 = vmatprep.subr.mxu0 %v5191
    %7880 = vmatpush1.msra.mxu0 %v5190
    %7881 = vmatprep.subr.mxu0 %v5195
    %7882 = vmatpush1.msra.mxu0 %v5194
    %7883 = vmatprep.subr.mxu0 %v5199
    %7884 = vmatpush1.msra.mxu0 %v5198
    %7885 = vmatprep.subr.mxu0 %v5203
    %7886 = vmatpush1.msra.mxu0 %v5202
    %7887 = vmatprep.subr.mxu0 %v5207
    %7888 = vmatpush1.msra.mxu0 %v5206
    %7889 = vmatprep.subr.mxu0 %v5211
    %7890 = vmatpush1.msra.mxu0 %v5210
    %7891 = vmatprep.subr.mxu0 %v5215
    %7892 = vmatpush1.msra.mxu0 %v5214
    %7893 = vmatprep.subr.mxu0 %v5219
    %7894 = vmatpush1.msra.mxu0 %v5218
    %7895 = vmatprep.subr.mxu0 %v5223
    %7896 = vmatpush1.msra.mxu0 %v5222
    %7897 = vmatprep.subr.mxu0 %v5227
    %7898 = vmatpush1.msra.mxu0 %v5226
    %7899 = vmatprep.subr.mxu0 0.0
    %7900 = vmatpush1.msra.mxu0 0.0
    %7901 = vmatprep.subr.mxu0 0.0
    %7902 = vmatpush1.msra.mxu0 0.0
    %7903 = vmatprep.subr.mxu0 0.0
    %7904 = vmatpush1.msra.mxu0 0.0
    %7905 = vmatprep.subr.mxu0 0.0
    %7906 = vmatpush1.msra.mxu0 0.0
    %7907 = vmatprep.subr.mxu0 0.0
    %7908 = vmatpush1.msra.mxu0 0.0
    %7909 = vmatprep.subr.mxu0 0.0
    %7910 = vmatpush1.msra.mxu0 0.0
    %7911 = vmatprep.subr.mxu0 0.0
    %7912 = vmatpush1.msra.mxu0 0.0
    %7913 = vmatprep.subr.mxu0 0.0
    %7914 = vmatpush1.msra.mxu0 0.0
    %7915 = vmatprep.subr.mxu0 0.0
    %7916 = vmatpush1.msra.mxu0 0.0
    %7917 = vmatprep.subr.mxu0 0.0
    %7918 = vmatpush1.msra.mxu0 0.0
    %7919 = vmatprep.subr.mxu0 0.0
    %7920 = vmatpush1.msra.mxu0 0.0
    %7921 = vmatprep.subr.mxu0 0.0
    %7922 = vmatpush1.msra.mxu0 0.0
    %7923 = vmatprep.subr.mxu0 0.0
    %7924 = vmatpush1.msra.mxu0 0.0
    %7925 = vmatprep.subr.mxu0 0.0
    %7926 = vmatpush1.msra.mxu0 0.0
    %7927 = vmatprep.subr.mxu0 0.0
    %7928 = vmatpush1.msra.mxu0 0.0
    %7929 = vmatprep.subr.mxu0 0.0
    %7930 = vmatpush1.msra.mxu0 0.0
    %7931 = vmatprep.mubr.f32.mxu0 0.0
    %7932 = vmatmul.mubr.f32.gmra.mrb[0].mxu0 %v7620
    %v7933 = vpop.f32.mrb[0].mxu0
    %v7934 = vadd.f32 %v7794, %v7933
    %v7935 = vpop.f32.mrb[0].mxu0
    %v7936 = vadd.f32 %v7795, %v7935
    %7937 = vdwg.mxu0
    %v7938 = vxor.u32 %v7863, 2147483648
    %v7939 = vxor.u32 %v7865, 2147483648
    %v7940 = vxor.u32 %v7934, 2147483648
    %v7941 = vmul.f32 %v7938, 1.442695
    %v7942 = vpow.pop %v7941
    %v7943 = vmul.f32 %v7939, 1.442695
    %v7944 = vpow.pop %v7943
    %v7945 = vmul.f32 %v7940, 1.442695
    %v7946 = vpow.pop %v7945
    %v7947 = vadd.f32 %v7942, 1.0
    %v7948 = vadd.f32 %v7944, 1.0
    %v7949 = vadd.f32 %v7946, 1.0
    %v7950 = vrcp.pop %v7947
    %v7951 = vmul.f32 1.0, %v7950
    %v7952 = vrcp.pop %v7948
    %v7953 = vmul.f32 1.0, %v7952
    %v7954 = vrcp.pop %v7949
    %v7955 = vmul.f32 1.0, %v7954
    %v7956 = vtanh.pop %v7936
    %v7957 = vmul.f32 %v7953, %v7618
    %v7958 = vmul.f32 %v7951, %v7956
    %v7959 = vadd.f32 %v7957, %v7958
    %v7960 = vtanh.pop %v7959
    %v7961 = vmul.f32 %v7955, %v7960
    %s7962 = smul.u32 256, 1
    %s7963 = sshll.u32 %s7962, 4
    %7964 = dma.done %s145, %s7963
    %v7965 = vld [vmem:[#allocation6] sm:$0xff]
    %v7966 = vld [vmem:[#allocation6 + $0x8] sm:$0xff]
    %v7967 = vld [vmem:[#allocation6 + $0x10] sm:$0xff]
    %v7968 = vld [vmem:[#allocation6 + $0x18] sm:$0xff]
    %v7969 = vld [vmem:[#allocation6 + $0x20] sm:$0xff]
    %v7970 = vld [vmem:[#allocation6 + $0x28] sm:$0xff]
    %v7971 = vld [vmem:[#allocation6 + $0x30] sm:$0xff]
    %v7972 = vld [vmem:[#allocation6 + $0x38] sm:$0xff]
    %v7973 = vld [vmem:[#allocation6 + $0x40] sm:$0xff]
    %v7974 = vld [vmem:[#allocation6 + $0x48] sm:$0xff]
    %v7975 = vld [vmem:[#allocation6 + $0x50] sm:$0xff]
    %v7976 = vld [vmem:[#allocation6 + $0x58] sm:$0xff]
    %v7977 = vld [vmem:[#allocation6 + $0x60] sm:$0xff]
    %v7978 = vld [vmem:[#allocation6 + $0x68] sm:$0xff]
    %v7979 = vld [vmem:[#allocation6 + $0x70] sm:$0xff]
    %v7980 = vld [vmem:[#allocation6 + $0x78] sm:$0xff]
    %v7981 = vld [vmem:[#allocation6 + $0x80] sm:$0xff]
    %v7982 = vld [vmem:[#allocation6 + $0x88] sm:$0xff]
    %v7983 = vld [vmem:[#allocation6 + $0x90] sm:$0xff]
    %v7984 = vld [vmem:[#allocation6 + $0x98] sm:$0xff]
    %v7985 = vld [vmem:[#allocation6 + $0xa0] sm:$0xff]
    %v7986 = vld [vmem:[#allocation6 + $0xa8] sm:$0xff]
    %v7987 = vld [vmem:[#allocation6 + $0xb0] sm:$0xff]
    %v7988 = vld [vmem:[#allocation6 + $0xb8] sm:$0xff]
    %v7989 = vld [vmem:[#allocation6 + $0xc0] sm:$0xff]
    %v7990 = vld [vmem:[#allocation6 + $0xc8] sm:$0xff]
    %v7991 = vld [vmem:[#allocation6 + $0xd0] sm:$0xff]
    %v7992 = vld [vmem:[#allocation6 + $0xd8] sm:$0xff]
    %v7993 = vld [vmem:[#allocation6 + $0xe0] sm:$0xff]
    %v7994 = vld [vmem:[#allocation6 + $0xe8] sm:$0xff]
    %v7995 = vld [vmem:[#allocation6 + $0xf0] sm:$0xff]
    %v7996 = vld [vmem:[#allocation6 + $0xf8] sm:$0xff]
    %v7997 = vld [vmem:[%s11] sm:$0x1]
    %v7999 = vlaneseq
    %v8000 = vshrl.u32 %v7999, 7
    %v8001 = vsub.s32 0, %v8000
    %v8002 = vrot.slane %v7997, %v8001
    %8004 = vmatprep.subr.mxu0 0.0
    %8005 = vmatpush1.msra.mxu0 %v7965
    %8006 = vmatprep.subr.mxu0 0.0
    %8007 = vmatpush1.msra.mxu0 %v7966
    %8008 = vmatprep.subr.mxu0 0.0
    %8009 = vmatpush1.msra.mxu0 %v7967
    %8010 = vmatprep.subr.mxu0 0.0
    %8011 = vmatpush1.msra.mxu0 %v7968
    %8012 = vmatprep.subr.mxu0 0.0
    %8013 = vmatpush1.msra.mxu0 %v7969
    %8014 = vmatprep.subr.mxu0 0.0
    %8015 = vmatpush1.msra.mxu0 %v7970
    %8016 = vmatprep.subr.mxu0 0.0
    %8017 = vmatpush1.msra.mxu0 %v7971
    %8018 = vmatprep.subr.mxu0 0.0
    %8019 = vmatpush1.msra.mxu0 %v7972
    %8020 = vmatprep.subr.mxu0 0.0
    %8021 = vmatpush1.msra.mxu0 %v7973
    %8022 = vmatprep.subr.mxu0 0.0
    %8023 = vmatpush1.msra.mxu0 %v7974
    %8024 = vmatprep.subr.mxu0 0.0
    %8025 = vmatpush1.msra.mxu0 %v7975
    %8026 = vmatprep.subr.mxu0 0.0
    %8027 = vmatpush1.msra.mxu0 %v7976
    %8028 = vmatprep.subr.mxu0 0.0
    %8029 = vmatpush1.msra.mxu0 %v7977
    %8030 = vmatprep.subr.mxu0 0.0
    %8031 = vmatpush1.msra.mxu0 %v7978
    %8032 = vmatprep.subr.mxu0 0.0
    %8033 = vmatpush1.msra.mxu0 %v7979
    %8034 = vmatprep.subr.mxu0 0.0
    %8035 = vmatpush1.msra.mxu0 %v7980
    %8036 = vmatprep.subr.mxu0 0.0
    %8037 = vmatpush1.msra.mxu0 %v7981
    %8038 = vmatprep.subr.mxu0 0.0
    %8039 = vmatpush1.msra.mxu0 %v7982
    %8040 = vmatprep.subr.mxu0 0.0
    %8041 = vmatpush1.msra.mxu0 %v7983
    %8042 = vmatprep.subr.mxu0 0.0
    %8043 = vmatpush1.msra.mxu0 %v7984
    %8044 = vmatprep.subr.mxu0 0.0
    %8045 = vmatpush1.msra.mxu0 %v7985
    %8046 = vmatprep.subr.mxu0 0.0
    %8047 = vmatpush1.msra.mxu0 %v7986
    %8048 = vmatprep.subr.mxu0 0.0
    %8049 = vmatpush1.msra.mxu0 %v7987
    %8050 = vmatprep.subr.mxu0 0.0
    %8051 = vmatpush1.msra.mxu0 %v7988
    %8052 = vmatprep.subr.mxu0 0.0
    %8053 = vmatpush1.msra.mxu0 %v7989
    %8054 = vmatprep.subr.mxu0 0.0
    %8055 = vmatpush1.msra.mxu0 %v7990
    %8056 = vmatprep.subr.mxu0 0.0
    %8057 = vmatpush1.msra.mxu0 %v7991
    %8058 = vmatprep.subr.mxu0 0.0
    %8059 = vmatpush1.msra.mxu0 %v7992
    %8060 = vmatprep.subr.mxu0 0.0
    %8061 = vmatpush1.msra.mxu0 %v7993
    %8062 = vmatprep.subr.mxu0 0.0
    %8063 = vmatpush1.msra.mxu0 %v7994
    %8064 = vmatprep.subr.mxu0 0.0
    %8065 = vmatpush1.msra.mxu0 %v7995
    %8066 = vmatprep.subr.mxu0 0.0
    %8067 = vmatpush1.msra.mxu0 %v7996
    %8068 = vmatprep.mubr.f32.mxu0 %v7961
    %8069 = vmatmul.mubr.f32.gmra.mrb[0].mxu0 %v7791
    %v8070 = vpop.f32.mrb[0].mxu0
    %v8071 = vadd.f32 %v8002, %v8070
    %v8072 = vpop.f32.mrb[0].mxu0
    %8073 = vdwg.mxu0
    %8074 = vst [vmem:[#allocation23] sm:$0xff] %v8071
    // Predicated region
    $region70: #{tpu_custom_call.1} parent=1 // pred_check
      _
    $region71: #{tpu_custom_call.1} parent=1 // pred_check_branch
      %8076 = sbr.rel (0) target = $region73
    $region72: #{tpu_custom_call.1} parent=1 // pred_region
      %s8078 = ssub.s32 128, 128
      %8079 = vsyncadd [#allocation16], %s8078
      %s8081 = sshll.u32 [#allocation23], 4
      %s8082 = int_to_ptr.vmem [resolvable:$true] %s8081
      %8084 = dma.vmem_to_hbm [thread:$0]  %s8082, 128, %s12, [#allocation16]
    $region73: #{tpu_custom_call.1} parent=1 // pred_fallthru
      _
    // Predicated region
    $region74: #{tpu_custom_call.1} parent=1 // pred_check
      _
    $region75: #{tpu_custom_call.1} parent=1 // pred_check_branch
      %8086 = sbr.rel (0) target = $region77
    $region76: #{tpu_custom_call.1} parent=1 // pred_region
      %8087 = dma.done [#allocation16], 128
    $region77: #{tpu_custom_call.1} parent=1 // pred_fallthru
      _
    %8088 = vsyncpa [#allocation15], 1
    %8089 = vsyncpa [#allocation18], 1
    %8090 = vsyncpa [#allocation21], 1
    %8091 = vsyncpa [#allocation16], 1
  %8092 = vsyncmov [#allocation13]
  %s8093 = vpop.sfrf %8092
  %p8094 = scmp.eq.s32.totalorder %s8093, 0
  %p8095 = pneg %p8094
  %8097 = shalt.err (%p8095)
  %s8098 = scalar_lea.sflag [#allocation13], 1
  %8099 = vsyncmov %s8098
  %s8100 = vpop.sfrf %8099
  %p8101 = scmp.eq.s32.totalorder %s8100, 0
  %p8102 = pneg %p8101
  %8104 = shalt.err (%p8102)
  %s8105 = scalar_lea.sflag [#allocation13], 2
  %8106 = vsyncmov %s8105
  %s8107 = vpop.sfrf %8106
  %p8108 = scmp.eq.s32.totalorder %s8107, 0
  %p8109 = pneg %p8108
  %8111 = shalt.err (%p8109)
  %s8112 = scalar_lea.sflag [#allocation13], 3
  %8113 = vsyncmov %s8112
  %s8114 = vpop.sfrf %8113
  %p8115 = scmp.eq.s32.totalorder %s8114, 0
  %p8116 = pneg %p8115
  %8118 = shalt.err (%p8116)
  %s8119 = scalar_lea.sflag [#allocation13], 4
  %8120 = vsyncmov %s8119
  %s8121 = vpop.sfrf %8120
  %p8122 = scmp.eq.s32.totalorder %s8121, 0
  %p8123 = pneg %p8122
  %8125 = shalt.err (%p8123)

</llo_original>
